<compile_context>
chip_gen: v6e
topology: v6e:2x2x1
jax: 0.10.0
libtpu: 0.0.40
codegen_flags: <defaults>
</compile_context>

<pallas_src>
import functools

import jax
import jax.numpy as jnp
import numpy as np
from jax import lax
from jax.experimental import pallas as pl
from jax.experimental.pallas import tpu as pltpu


# ---------------------------------------------------------------------------
# Hardware-aware budgets
# ---------------------------------------------------------------------------
def _tpu_vmem_capacity_bytes():
    try:
        info = pltpu.get_tpu_info()
        return int(getattr(info, "vmem_capacity_bytes", 128 << 20))
    except Exception:  # CPU interpret / older runtimes
        return 128 << 20


def _working_set_budget(cap):
    # ~40 MiB on 128 MiB parts (v5e/v6e), ~19 MiB on 64 MiB parts (v7x).
    return min(int(0.30 * cap), 40 << 20)


def _vmem_limit(need, cap):
    # Raise the scoped limit to what we need, but leave headroom: never ask
    # for more than ~70% of physical VMEM (v7x has only 64 MiB per core).
    return int(min(max(int(need), 16 << 20), int(0.70 * cap)))


def _tap_offsets(wp):
    # flattened (padded-row, padded-col) offsets of the 9 conv taps
    return [dy * wp + dx for dy in range(3) for dx in range(3)]


# ---------------------------------------------------------------------------
# Fused kernel: conv_0(relu(pad(x))) -> relu -> conv_1(pad(.)) + shortcut
# Grid = (N,); one batch image's rows per step (whole image fits VMEM).
# ---------------------------------------------------------------------------
def _fused_body(x_ref, w0_ref, w1_ref, ws_ref, bs_ref, o_ref, h_ref, *,
                h, w, mode):
    wp = w + 2
    hp = h + 2
    hwp = h * wp
    offs = _tap_offsets(wp)

    # ---- conv_0: ReLU hoisted (applied once), register accumulation --------
    xr = jnp.maximum(x_ref[0], 0)
    acc0 = jnp.dot(xr[offs[0]:offs[0] + hwp, :], w0_ref[0],
                   preferred_element_type=jnp.float32)
    for k in range(1, 9):
        acc0 = acc0 + jnp.dot(xr[offs[k]:offs[k] + hwp, :], w0_ref[k],
                              preferred_element_type=jnp.float32)
    # conv_1 consumes relu(x_0); relu commutes with reflection padding, so
    # fuse it here and keep the conv_1 tap loop pure matmuls.
    y0 = jnp.maximum(acc0, 0.0).astype(h_ref.dtype)

    # ---- assemble reflection-padded relu(x_0) in VMEM (no HBM round trip) --
    h_ref[hp * wp:, :] = jnp.zeros((8, h_ref.shape[1]), h_ref.dtype)  # tail
    h_ref[wp + 1:wp + 1 + hwp, :] = y0                                # interior

    @pl.loop(1, h + 1)
    def _fix_cols(i):
        row = i * wp
        # left pad col  <- x0[:, 1];  right pad col <- x0[:, W-2]
        h_ref[pl.ds(row, 1), :] = h_ref[pl.ds(row + 2, 1), :]
        h_ref[pl.ds(row + wp - 1, 1), :] = h_ref[pl.ds(row + w - 1, 1), :]

    # top / bottom reflected rows (copied after the column fixes)
    h_ref[0:wp, :] = h_ref[2 * wp:3 * wp, :]
    h_ref[(h + 1) * wp:(h + 2) * wp, :] = h_ref[(h - 1) * wp:h * wp, :]

    # ---- shortcut init + conv_1 taps, register accumulation, single store --
    if mode == "learned":
        xs = x_ref[0, wp + 1:wp + 1 + hwp, :]           # raw (un-ReLU'd) x
        acc1 = (jnp.dot(xs, ws_ref[...], preferred_element_type=jnp.float32)
                + bs_ref[...])
        k0 = 0
    elif mode == "identity":
        acc1 = x_ref[0, wp + 1:wp + 1 + hwp, :].astype(jnp.float32)
        k0 = 0
    else:  # no residual
        acc1 = jnp.dot(h_ref[offs[0]:offs[0] + hwp, :], w1_ref[0],
                       preferred_element_type=jnp.float32)
        k0 = 1
    for k in range(k0, 9):
        acc1 = acc1 + jnp.dot(h_ref[offs[k]:offs[k] + hwp, :], w1_ref[k],
                              preferred_element_type=jnp.float32)
    o_ref[0] = acc1.astype(o_ref.dtype)


def _make_fused_kernel(h, w, mode):
    if mode == "learned":
        def kernel(x_ref, w0_ref, w1_ref, ws_ref, bs_ref, o_ref, h_ref):
            _fused_body(x_ref, w0_ref, w1_ref, ws_ref, bs_ref, o_ref, h_ref,
                        h=h, w=w, mode=mode)
    else:
        def kernel(x_ref, w0_ref, w1_ref, o_ref, h_ref):
            _fused_body(x_ref, w0_ref, w1_ref, None, None, o_ref, h_ref,
                        h=h, w=w, mode=mode)
    return kernel


def _fused_need(h, w, cin, chid, cout, act_bytes):
    wp, hp = w + 2, h + 2
    lx = hp * wp + 8
    x_blk = lx * cin * act_bytes
    out_blk = h * wp * cout * 4
    h_scr = lx * chid * act_bytes
    wts = (9 * (cin * chid + chid * cout) + cin * cout) * act_bytes + cout * 4
    live = h * wp * (chid + cout) * 4 + lx * cin * act_bytes   # f32 accs + relu'd x
    return 2 * (x_blk + wts) + 2 * out_blk + h_scr + live + (2 << 20)


# ---------------------------------------------------------------------------
# Two-stage row-tiled fallback kernels (large images only)
# ---------------------------------------------------------------------------
def _conv0_relu_kernel(x_ref, w_ref, o_ref, *, thwp, wp):
    offs = _tap_offsets(wp)
    xr = jnp.maximum(x_ref[0, 0], 0)                    # ReLU hoisted
    acc = jnp.dot(xr[offs[0]:offs[0] + thwp, :], w_ref[0],
                  preferred_element_type=jnp.float32)
    for k in range(1, 9):
        acc = acc + jnp.dot(xr[offs[k]:offs[k] + thwp, :], w_ref[k],
                            preferred_element_type=jnp.float32)
    # relu(conv_0) stored: conv_1 stage becomes pure matmuls
    o_ref[0, 0] = jnp.maximum(acc, 0.0).astype(o_ref.dtype)


def _make_conv1_kernel(mode, thwp, wp):
    offs = _tap_offsets(wp)

    def _taps(acc, y_ref, w_ref, k0=0):
        for k in range(k0, 9):
            acc = acc + jnp.dot(y_ref[0, 0, offs[k]:offs[k] + thwp, :],
                                w_ref[k], preferred_element_type=jnp.float32)
        return acc

    if mode == "learned":
        def kernel(y_ref, x_ref, w_ref, ws_ref, bs_ref, o_ref):
            xs = x_ref[0, 0, wp + 1:wp + 1 + thwp, :]
            acc = (jnp.dot(xs, ws_ref[...], preferred_element_type=jnp.float32)
                   + bs_ref[...])
            o_ref[0, 0] = _taps(acc, y_ref, w_ref).astype(o_ref.dtype)
    elif mode == "identity":
        def kernel(y_ref, x_ref, w_ref, o_ref):
            acc = x_ref[0, 0, wp + 1:wp + 1 + thwp, :].astype(jnp.float32)
            o_ref[0, 0] = _taps(acc, y_ref, w_ref).astype(o_ref.dtype)
    else:
        def kernel(y_ref, w_ref, o_ref):
            acc = jnp.dot(y_ref[0, 0, offs[0]:offs[0] + thwp, :], w_ref[0],
                          preferred_element_type=jnp.float32)
            o_ref[0, 0] = _taps(acc, y_ref, w_ref, k0=1).astype(o_ref.dtype)
    return kernel


def _call_conv0(x_tiles, w_taps, out_dtype, th, wp, cap):
    n, t, lt, cin = x_tiles.shape
    chid = w_taps.shape[-1]
    thwp = th * wp
    need = (2 * (lt * cin * x_tiles.dtype.itemsize
                 + 9 * cin * chid * w_taps.dtype.itemsize
                 + thwp * chid * jnp.dtype(out_dtype).itemsize)
            + 2 * thwp * chid * 4 + (2 << 20))
    return pl.pallas_call(
        functools.partial(_conv0_relu_kernel, thwp=thwp, wp=wp),
        out_shape=jax.ShapeDtypeStruct((n, t, thwp, chid), out_dtype),
        grid=(n, t),
        in_specs=[pl.BlockSpec((1, 1, lt, cin), lambda i, j: (i, j, 0, 0)),
                  pl.BlockSpec((9, cin, chid), lambda i, j: (0, 0, 0))],
        out_specs=pl.BlockSpec((1, 1, thwp, chid), lambda i, j: (i, j, 0, 0)),
        compiler_params=pltpu.CompilerParams(
            dimension_semantics=("parallel", "parallel"),
            vmem_limit_bytes=_vmem_limit(need, cap)),
    )(x_tiles, w_taps)


def _call_conv1_res(y_tiles, x_tiles, w_taps, ws_mat, bs_2d, mode, th, wp, cap):
    n, t, lt, chid = y_tiles.shape
    cout = w_taps.shape[-1]
    thwp = th * wp

    specs = [pl.BlockSpec((1, 1, lt, chid), lambda i, j: (i, j, 0, 0))]
    args = [y_tiles]
    blk_bytes = lt * chid * y_tiles.dtype.itemsize
    if mode in ("learned", "identity"):
        lt_x, cin = x_tiles.shape[2], x_tiles.shape[3]
        specs.append(pl.BlockSpec((1, 1, lt_x, cin), lambda i, j: (i, j, 0, 0)))
        args.append(x_tiles)
        blk_bytes += lt_x * cin * x_tiles.dtype.itemsize
    specs.append(pl.BlockSpec((9, chid, cout), lambda i, j: (0, 0, 0)))
    args.append(w_taps)
    blk_bytes += 9 * chid * cout * w_taps.dtype.itemsize
    if mode == "learned":
        cin = x_tiles.shape[3]
        specs += [pl.BlockSpec((cin, cout), lambda i, j: (0, 0)),
                  pl.BlockSpec((1, cout), lambda i, j: (0, 0))]
        args += [ws_mat, bs_2d]
        blk_bytes += cin * cout * ws_mat.dtype.itemsize + cout * 4

    need = (2 * (blk_bytes + thwp * cout * 4)
            + 2 * thwp * max(chid, cout) * 4 + (2 << 20))
    return pl.pallas_call(
        _make_conv1_kernel(mode, thwp, wp),
        out_shape=jax.ShapeDtypeStruct((n, t, thwp, cout), jnp.float32),
        grid=(n, t),
        in_specs=specs,
        out_specs=pl.BlockSpec((1, 1, thwp, cout), lambda i, j: (i, j, 0, 0)),
        compiler_params=pltpu.CompilerParams(
            dimension_semantics=("parallel", "parallel"),
            vmem_limit_bytes=_vmem_limit(need, cap)),
    )(*args)


# ---------------------------------------------------------------------------
# JAX glue (fallback path): overlapping row tiles, margin strip, tile picker
# ---------------------------------------------------------------------------
def _retile_padded(xpad, th):
    """(N, H+2, W+2, C) -> (N, T, (th+2)*(W+2)+8, C) overlapping row tiles."""
    n, hp, wp, c = xpad.shape
    h = hp - 2
    t = h // th
    tiles = jnp.stack([xpad[:, i * th:i * th + th + 2] for i in range(t)], axis=1)
    flat = tiles.reshape(n, t, (th + 2) * wp, c)
    return jnp.pad(flat, ((0, 0), (0, 0), (0, 8), (0, 0)))


def _strip_margin(y_flat, th, h, w):
    """(N, T, th*(W+2), C) -> (N, H, W, C): drop the 2 margin cols per row."""
    n, t, _, c = y_flat.shape
    wp = w + 2
    return y_flat.reshape(n, t, th, wp, c)[:, :, :, :w, :].reshape(n, h, w, c)


def _pick_tile_rows(n, h, w, cin, chid, cout, act_bytes, budget, force=None):
    if force is not None:
        assert h % force == 0, "force_tile_rows must divide H"
        return force
    wp = w + 2

    def need(th):
        lt = (th + 2) * wp + 8
        in_blk = lt * (cin + chid) * act_bytes           # stage-2 worst case
        out_blk = th * wp * max(chid * act_bytes, cout * 4)
        live = 2 * th * wp * max(chid, cout) * 4
        return 2 * in_blk + 2 * out_blk + live + (1 << 20)

    fits = [d for d in range(1, h + 1) if h % d == 0 and need(d) <= budget]
    if not fits:
        return 1   # TODO(synk): remainder tiles for awkward H / very wide W
    th = fits[-1]
    # prefer >= 4 total grid steps so both v7x TensorCores get balanced work
    # and each still has >= 2 steps to pipeline
    smaller = [d for d in fits if n * (h // d) >= 4]
    if n * (h // th) < 4 and smaller:
        th = smaller[-1]
    return th


def _spectral_normalize(w, key, n_power_iterations=1, eps=1e-12):
    """Forward-time emulation of torch.nn.utils.spectral_norm (one power
    iteration, deterministic random u; torch's persistent u/v buffers are not
    bit-matched)."""
    out = w.shape[0]
    wm = w.reshape(out, -1)
    u = jax.random.normal(key, (out,), jnp.float32)
    u = u / (jnp.linalg.norm(u) + eps)
    v = jnp.zeros((wm.shape[1],), jnp.float32)
    for _ in range(n_power_iterations):
        v = wm.T @ u
        v = v / (jnp.linalg.norm(v) + eps)
        u = wm @ v
        u = u / (jnp.linalg.norm(u) + eps)
    sigma = u @ (wm @ v)
    return w / sigma


# ---------------------------------------------------------------------------
# ResBlock
# ---------------------------------------------------------------------------
class ResBlockPallas:
    """Pallas port of ResBlock(input_nc, output_nc, norm_type='none',
    activation='ReLU', dilation=1, bias=False, use_spect=True, use_res=True)."""

    def __init__(self, input_nc, output_nc, key, use_res=True,
                 compute_dtype=jnp.bfloat16, force_two_stage=False,
                 force_tile_rows=None):
        hidden_nc = min(input_nc, output_nc)
        self.input_nc, self.hidden_nc, self.output_nc = input_nc, hidden_nc, output_nc
        self.use_res = use_res
        self.learned_short = input_nc != output_nc
        self.mode = ("learned" if (use_res and self.learned_short)
                     else ("identity" if use_res else "none"))
        self.compute_dtype = jnp.dtype(compute_dtype)
        self.force_two_stage = force_two_stage
        self.force_tile_rows = force_tile_rows

        k0, k1, ks, kb, u0, u1, us = jax.random.split(key, 7)
        # deterministic synthetic weights, PyTorch OIHW layout (f32 masters)
        w0 = 0.2 * jax.random.normal(k0, (hidden_nc, input_nc, 3, 3), jnp.float32)
        w1 = 0.2 * jax.random.normal(k1, (output_nc, hidden_nc, 3, 3), jnp.float32)
        self.w0_oihw = _spectral_normalize(w0, u0)
        self.w1_oihw = _spectral_normalize(w1, u1)
        # OIHW -> HWIO -> (9, Cin, Cout) tap-major mats (k = dy*3 + dx)
        self.w0_taps = jnp.transpose(self.w0_oihw, (2, 3, 1, 0)).reshape(
            9, input_nc, hidden_nc).astype(self.compute_dtype)
        self.w1_taps = jnp.transpose(self.w1_oihw, (2, 3, 1, 0)).reshape(
            9, hidden_nc, output_nc).astype(self.compute_dtype)
        # TODO(synk): zero-pad Cin/Chid/Cout to multiples of 128 (lane-dense
        # stores, full MXU tiles) for production channel counts >= ~64; at the
        # tiny channel counts used here that would be 16-32x dead MXU work.

        if self.mode == "learned":
            ws = 0.2 * jax.random.normal(ks, (output_nc, input_nc, 1, 1),
                                         jnp.float32)
            self.ws_oihw = _spectral_normalize(ws, us)
            self.bs = 0.1 * jax.random.normal(kb, (output_nc,), jnp.float32)
            self.ws_mat = self.ws_oihw[:, :, 0, 0].T.astype(self.compute_dtype)
            self.bs_2d = self.bs.reshape(1, output_nc).astype(jnp.float32)

    # ---- fused single-kernel path ----------------------------------------
    def _run_fused(self, x_flat, h, w, cap):
        n, lx, cin = x_flat.shape
        chid, cout, wp = self.hidden_nc, self.output_nc, w + 2
        specs = [pl.BlockSpec((1, lx, cin), lambda b: (b, 0, 0)),
                 pl.BlockSpec((9, cin, chid), lambda b: (0, 0, 0)),
                 pl.BlockSpec((9, chid, cout), lambda b: (0, 0, 0))]
        args = [x_flat, self.w0_taps, self.w1_taps]
        if self.mode == "learned":
            specs += [pl.BlockSpec((cin, cout), lambda b: (0, 0)),
                      pl.BlockSpec((1, cout), lambda b: (0, 0))]
            args += [self.ws_mat, self.bs_2d]
        need = _fused_need(h, w, cin, chid, cout, self.compute_dtype.itemsize)
        return pl.pallas_call(
            _make_fused_kernel(h, w, self.mode),
            out_shape=jax.ShapeDtypeStruct((n, h * wp, cout), jnp.float32),
            grid=(n,),
            in_specs=specs,
            out_specs=pl.BlockSpec((1, h * wp, cout), lambda b: (b, 0, 0)),
            scratch_shapes=[pltpu.VMEM(((h + 2) * wp + 8, chid),
                                       self.compute_dtype)],
            compiler_params=pltpu.CompilerParams(
                dimension_semantics=("parallel",),
                vmem_limit_bytes=_vmem_limit(need, cap)),
        )(*args)

    # ---- forward ----------------------------------------------------------
    def apply_nhwc(self, x_nhwc):
        n, h, w, cin = x_nhwc.shape
        assert cin == self.input_nc and h >= 2 and w >= 2
        cap = _tpu_vmem_capacity_bytes()
        budget = _working_set_budget(cap)
        wp, hp = w + 2, h + 2

        x = x_nhwc.astype(self.compute_dtype)
        xpad = jnp.pad(x, ((0, 0), (1, 1), (1, 1), (0, 0)), mode="reflect")

        fused_need = _fused_need(h, w, self.input_nc, self.hidden_nc,
                                 self.output_nc, self.compute_dtype.itemsize)
        if (not self.force_two_stage) and fused_need <= budget:
            x_flat = jnp.pad(xpad.reshape(n, hp * wp, cin),
                             ((0, 0), (0, 8), (0, 0)))
            out_flat = self._run_fused(x_flat, h, w, cap)      # (n, h*wp, cout)
            # TODO(synk): fold this final margin strip into the kernel store.
            return out_flat.reshape(n, h, wp, self.output_nc)[:, :, :w, :]

        # ---- row-tiled two-stage fallback (image too big for one block) ---
        # TODO(synk): replace the overlapping-tile JAX staging with pl.ANY +
        # manual DMA halos, and fuse conv_0 -> conv_1 per row tile.
        th = _pick_tile_rows(n, h, w, self.input_nc, self.hidden_nc,
                             self.output_nc, self.compute_dtype.itemsize,
                             budget, self.force_tile_rows)
        x_tiles = _retile_padded(xpad, th)
        y0_flat = _call_conv0(x_tiles, self.w0_taps, self.compute_dtype,
                              th, wp, cap)
        y0 = _strip_margin(y0_flat, th, h, w)            # relu(conv_0(...))
        y0pad = jnp.pad(y0, ((0, 0), (1, 1), (1, 1), (0, 0)), mode="reflect")
        y0_tiles = _retile_padded(y0pad, th)
        out_flat = _call_conv1_res(y0_tiles, x_tiles, self.w1_taps,
                                   getattr(self, "ws_mat", None),
                                   getattr(self, "bs_2d", None),
                                   self.mode, th, wp, cap)
        return _strip_margin(out_flat, th, h, w)

    def __call__(self, x_nchw):
        # TODO(synk): expose apply_nhwc to callers whose surrounding graph is
        # already NHWC so these two full-activation transposes disappear.
        x = jnp.transpose(x_nchw, (0, 2, 3, 1))
        y = self.apply_nhwc(x)
        return jnp.transpose(y, (0, 3, 1, 2))

    # Pure-JAX reference (lax.conv, f32 masters) for correctness checking.
    def reference(self, x_nchw):
        dn = ("NCHW", "OIHW", "NCHW")
        pad = lambda t: jnp.pad(t, ((0, 0), (0, 0), (1, 1), (1, 1)),
                                mode="reflect")
        conv = lambda t, w_: lax.conv_general_dilated(
            t, w_, (1, 1), "VALID", dimension_numbers=dn)
        x0 = conv(jax.nn.relu(pad(x_nchw)), self.w0_oihw)
        x1 = conv(jax.nn.relu(pad(x0)), self.w1_oihw)
        if not self.use_res:
            return x1
        if self.learned_short:
            xs = conv(x_nchw, self.ws_oihw) + self.bs[None, :, None, None]
        else:
            xs = x_nchw
        return x1 + xs


if __name__ == "__main__":
    key = jax.random.PRNGKey(0)
    kx, kp1, kp2 = jax.random.split(key, 3)
    N, Cin, H, W = 2, 4, 16, 16
    Cout = 8                       # != Cin -> exercises the learned 1x1 shortcut
    x = jax.random.normal(kx, (N, Cin, H, W), jnp.float32)

    # 1) learned shortcut, f32 compute, fused single-kernel path: tight check
    blk_f32 = ResBlockPallas(Cin, Cout, kp1, compute_dtype=jnp.float32)
    y = jax.block_until_ready(blk_f32(x))
    assert y.shape == (N, Cout, H, W)
    np.testing.assert_allclose(np.asarray(y), np.asarray(blk_f32.reference(x)),
                               rtol=1e-3, atol=1e-3)

    # 2) same weights, bf16 MXU path (fused): looser check (bf16 rounding)
    blk_bf16 = ResBlockPallas(Cin, Cout, kp1, compute_dtype=jnp.bfloat16)
    y16 = jax.block_until_ready(blk_bf16(x))
    np.testing.assert_allclose(np.asarray(y16),
                               np.asarray(blk_bf16.reference(x)),
                               rtol=1e-1, atol=1e-1)

    # 3) identity-shortcut variant (input_nc == output_nc), bf16, fused
    x2 = jax.random.normal(kx, (N, Cout, H, W), jnp.float32)
    blk_id = ResBlockPallas(Cout, Cout, kp2, compute_dtype=jnp.bfloat16)
    y2 = jax.block_until_ready(blk_id(x2))
    assert y2.shape == (N, Cout, H, W)
    np.testing.assert_allclose(np.asarray(y2),
                               np.asarray(blk_id.reference(x2)),
                               rtol=1e-1, atol=1e-1)

    # 4) forced row-tiled two-stage fallback (th=8 -> 4 grid steps), f32, tight
    blk_ts = ResBlockPallas(Cin, Cout, kp1, compute_dtype=jnp.float32,
                            force_two_stage=True, force_tile_rows=8)
    y_ts = jax.block_until_ready(blk_ts(x))
    np.testing.assert_allclose(np.asarray(y_ts),
                               np.asarray(blk_ts.reference(x)),
                               rtol=1e-3, atol=1e-3)

    print("KERNEL_OK")
</pallas_src>

<mosaic_0001>
module attributes {stable_mosaic.version = 11 : i64} {
  func.func @kernel(%arg0: i32, %arg1: memref<1x332x4xf32, #tpu.memory_space<vmem>>, %arg2: memref<9x4x4xf32, #tpu.memory_space<vmem>>, %arg3: memref<9x4x8xf32, #tpu.memory_space<vmem>>, %arg4: memref<4x8xf32, #tpu.memory_space<vmem>>, %arg5: memref<1x8xf32, #tpu.memory_space<vmem>>, %arg6: memref<1x288x8xf32, #tpu.memory_space<vmem>>, %arg7: memref<332x4xf32, #tpu.memory_space<vmem>>) attributes {dimension_semantics = [#tpu.dimension_semantics<parallel>], iteration_bounds = array<i64: 2>, scalar_prefetch = 0 : i64, scratch_operands = 1 : i64, tpu.core_type = #tpu.core_type<tc>, window_params = [{transform_indices = @transform_0, window_bounds = array<i64: 1, 332, 4>}, {pipeline_mode = #tpu.pipeline_mode<synchronous>, transform_indices = @transform_1, window_bounds = array<i64: 9, 4, 4>}, {pipeline_mode = #tpu.pipeline_mode<synchronous>, transform_indices = @transform_2, window_bounds = array<i64: 9, 4, 8>}, {pipeline_mode = #tpu.pipeline_mode<synchronous>, transform_indices = @transform_3, window_bounds = array<i64: 4, 8>}, {pipeline_mode = #tpu.pipeline_mode<synchronous>, transform_indices = @transform_4, window_bounds = array<i64: 1, 8>}, {transform_indices = @transform_5, window_bounds = array<i64: 1, 288, 8>}]} {
    %c0 = arith.constant 0 : index
    %c0_0 = arith.constant 0 : index
    %c0_1 = arith.constant 0 : index
    %0 = vector.load %arg1[%c0, %c0_0, %c0_1] : memref<1x332x4xf32, #tpu.memory_space<vmem>>, vector<1x332x4xf32>
    %1 = vector.shape_cast %0 : vector<1x332x4xf32> to vector<332x4xf32>
    %cst = arith.constant 0.000000e+00 : f32
    %2 = vector.broadcast %cst : f32 to vector<332x4xf32>
    %3 = arith.maximumf %1, %2 : vector<332x4xf32>
    %4 = vector.extract_strided_slice %3 {offsets = [0, 0], sizes = [288, 4], strides = [1, 1]} : vector<332x4xf32> to vector<288x4xf32>
    %c0_2 = arith.constant 0 : index
    %c0_3 = arith.constant 0 : index
    %c0_4 = arith.constant 0 : index
    %5 = vector.load %arg2[%c0_2, %c0_3, %c0_4] : memref<9x4x4xf32, #tpu.memory_space<vmem>>, vector<1x4x4xf32>
    %6 = vector.shape_cast %5 : vector<1x4x4xf32> to vector<4x4xf32>
    %cst_5 = arith.constant dense<0.000000e+00> : vector<288x4xf32>
    %7 = tpu.matmul %4, %6, %cst_5 {dimension_numbers = #tpu.dot_dimension_numbers<[1], [0], [0], [1], [0, 0, 1, 1], [], []>} : vector<288x4xf32>, vector<4x4xf32>, vector<288x4xf32> -> vector<288x4xf32>
    %8 = vector.extract_strided_slice %3 {offsets = [1, 0], sizes = [288, 4], strides = [1, 1]} : vector<332x4xf32> to vector<288x4xf32>
    %c1 = arith.constant 1 : index
    %c0_6 = arith.constant 0 : index
    %c0_7 = arith.constant 0 : index
    %9 = vector.load %arg2[%c1, %c0_6, %c0_7] : memref<9x4x4xf32, #tpu.memory_space<vmem>>, vector<1x4x4xf32>
    %10 = vector.shape_cast %9 : vector<1x4x4xf32> to vector<4x4xf32>
    %cst_8 = arith.constant dense<0.000000e+00> : vector<288x4xf32>
    %11 = tpu.matmul %8, %10, %cst_8 {dimension_numbers = #tpu.dot_dimension_numbers<[1], [0], [0], [1], [0, 0, 1, 1], [], []>} : vector<288x4xf32>, vector<4x4xf32>, vector<288x4xf32> -> vector<288x4xf32>
    %12 = arith.addf %7, %11 : vector<288x4xf32>
    %13 = vector.extract_strided_slice %3 {offsets = [2, 0], sizes = [288, 4], strides = [1, 1]} : vector<332x4xf32> to vector<288x4xf32>
    %c2 = arith.constant 2 : index
    %c0_9 = arith.constant 0 : index
    %c0_10 = arith.constant 0 : index
    %14 = vector.load %arg2[%c2, %c0_9, %c0_10] : memref<9x4x4xf32, #tpu.memory_space<vmem>>, vector<1x4x4xf32>
    %15 = vector.shape_cast %14 : vector<1x4x4xf32> to vector<4x4xf32>
    %cst_11 = arith.constant dense<0.000000e+00> : vector<288x4xf32>
    %16 = tpu.matmul %13, %15, %cst_11 {dimension_numbers = #tpu.dot_dimension_numbers<[1], [0], [0], [1], [0, 0, 1, 1], [], []>} : vector<288x4xf32>, vector<4x4xf32>, vector<288x4xf32> -> vector<288x4xf32>
    %17 = arith.addf %12, %16 : vector<288x4xf32>
    %18 = vector.extract_strided_slice %3 {offsets = [18, 0], sizes = [288, 4], strides = [1, 1]} : vector<332x4xf32> to vector<288x4xf32>
    %c3 = arith.constant 3 : index
    %c0_12 = arith.constant 0 : index
    %c0_13 = arith.constant 0 : index
    %19 = vector.load %arg2[%c3, %c0_12, %c0_13] : memref<9x4x4xf32, #tpu.memory_space<vmem>>, vector<1x4x4xf32>
    %20 = vector.shape_cast %19 : vector<1x4x4xf32> to vector<4x4xf32>
    %cst_14 = arith.constant dense<0.000000e+00> : vector<288x4xf32>
    %21 = tpu.matmul %18, %20, %cst_14 {dimension_numbers = #tpu.dot_dimension_numbers<[1], [0], [0], [1], [0, 0, 1, 1], [], []>} : vector<288x4xf32>, vector<4x4xf32>, vector<288x4xf32> -> vector<288x4xf32>
    %22 = arith.addf %17, %21 : vector<288x4xf32>
    %23 = vector.extract_strided_slice %3 {offsets = [19, 0], sizes = [288, 4], strides = [1, 1]} : vector<332x4xf32> to vector<288x4xf32>
    %c4 = arith.constant 4 : index
    %c0_15 = arith.constant 0 : index
    %c0_16 = arith.constant 0 : index
    %24 = vector.load %arg2[%c4, %c0_15, %c0_16] : memref<9x4x4xf32, #tpu.memory_space<vmem>>, vector<1x4x4xf32>
    %25 = vector.shape_cast %24 : vector<1x4x4xf32> to vector<4x4xf32>
    %cst_17 = arith.constant dense<0.000000e+00> : vector<288x4xf32>
    %26 = tpu.matmul %23, %25, %cst_17 {dimension_numbers = #tpu.dot_dimension_numbers<[1], [0], [0], [1], [0, 0, 1, 1], [], []>} : vector<288x4xf32>, vector<4x4xf32>, vector<288x4xf32> -> vector<288x4xf32>
    %27 = arith.addf %22, %26 : vector<288x4xf32>
    %28 = vector.extract_strided_slice %3 {offsets = [20, 0], sizes = [288, 4], strides = [1, 1]} : vector<332x4xf32> to vector<288x4xf32>
    %c5 = arith.constant 5 : index
    %c0_18 = arith.constant 0 : index
    %c0_19 = arith.constant 0 : index
    %29 = vector.load %arg2[%c5, %c0_18, %c0_19] : memref<9x4x4xf32, #tpu.memory_space<vmem>>, vector<1x4x4xf32>
    %30 = vector.shape_cast %29 : vector<1x4x4xf32> to vector<4x4xf32>
    %cst_20 = arith.constant dense<0.000000e+00> : vector<288x4xf32>
    %31 = tpu.matmul %28, %30, %cst_20 {dimension_numbers = #tpu.dot_dimension_numbers<[1], [0], [0], [1], [0, 0, 1, 1], [], []>} : vector<288x4xf32>, vector<4x4xf32>, vector<288x4xf32> -> vector<288x4xf32>
    %32 = arith.addf %27, %31 : vector<288x4xf32>
    %33 = vector.extract_strided_slice %3 {offsets = [36, 0], sizes = [288, 4], strides = [1, 1]} : vector<332x4xf32> to vector<288x4xf32>
    %c6 = arith.constant 6 : index
    %c0_21 = arith.constant 0 : index
    %c0_22 = arith.constant 0 : index
    %34 = vector.load %arg2[%c6, %c0_21, %c0_22] : memref<9x4x4xf32, #tpu.memory_space<vmem>>, vector<1x4x4xf32>
    %35 = vector.shape_cast %34 : vector<1x4x4xf32> to vector<4x4xf32>
    %cst_23 = arith.constant dense<0.000000e+00> : vector<288x4xf32>
    %36 = tpu.matmul %33, %35, %cst_23 {dimension_numbers = #tpu.dot_dimension_numbers<[1], [0], [0], [1], [0, 0, 1, 1], [], []>} : vector<288x4xf32>, vector<4x4xf32>, vector<288x4xf32> -> vector<288x4xf32>
    %37 = arith.addf %32, %36 : vector<288x4xf32>
    %38 = vector.extract_strided_slice %3 {offsets = [37, 0], sizes = [288, 4], strides = [1, 1]} : vector<332x4xf32> to vector<288x4xf32>
    %c7 = arith.constant 7 : index
    %c0_24 = arith.constant 0 : index
    %c0_25 = arith.constant 0 : index
    %39 = vector.load %arg2[%c7, %c0_24, %c0_25] : memref<9x4x4xf32, #tpu.memory_space<vmem>>, vector<1x4x4xf32>
    %40 = vector.shape_cast %39 : vector<1x4x4xf32> to vector<4x4xf32>
    %cst_26 = arith.constant dense<0.000000e+00> : vector<288x4xf32>
    %41 = tpu.matmul %38, %40, %cst_26 {dimension_numbers = #tpu.dot_dimension_numbers<[1], [0], [0], [1], [0, 0, 1, 1], [], []>} : vector<288x4xf32>, vector<4x4xf32>, vector<288x4xf32> -> vector<288x4xf32>
    %42 = arith.addf %37, %41 : vector<288x4xf32>
    %43 = vector.extract_strided_slice %3 {offsets = [38, 0], sizes = [288, 4], strides = [1, 1]} : vector<332x4xf32> to vector<288x4xf32>
    %c8 = arith.constant 8 : index
    %c0_27 = arith.constant 0 : index
    %c0_28 = arith.constant 0 : index
    %44 = vector.load %arg2[%c8, %c0_27, %c0_28] : memref<9x4x4xf32, #tpu.memory_space<vmem>>, vector<1x4x4xf32>
    %45 = vector.shape_cast %44 : vector<1x4x4xf32> to vector<4x4xf32>
    %cst_29 = arith.constant dense<0.000000e+00> : vector<288x4xf32>
    %46 = tpu.matmul %43, %45, %cst_29 {dimension_numbers = #tpu.dot_dimension_numbers<[1], [0], [0], [1], [0, 0, 1, 1], [], []>} : vector<288x4xf32>, vector<4x4xf32>, vector<288x4xf32> -> vector<288x4xf32>
    %47 = arith.addf %42, %46 : vector<288x4xf32>
    %cst_30 = arith.constant 0.000000e+00 : f32
    %48 = vector.broadcast %cst_30 : f32 to vector<288x4xf32>
    %49 = arith.maximumf %47, %48 : vector<288x4xf32>
    %cst_31 = arith.constant 0.000000e+00 : f32
    %50 = vector.broadcast %cst_31 : f32 to vector<8x4xf32>
    %c324 = arith.constant 324 : index
    %c0_32 = arith.constant 0 : index
    %51 = vector.load %arg7[%c324, %c0_32] : memref<332x4xf32, #tpu.memory_space<vmem>>, vector<8x4xf32>
    tpu.vector_store %arg7[%c324, %c0_32], %50 {strides = array<i32>} : memref<332x4xf32, #tpu.memory_space<vmem>>, vector<8x4xf32>,
    %c19 = arith.constant 19 : index
    %c0_33 = arith.constant 0 : index
    %52 = vector.load %arg7[%c19, %c0_33] : memref<332x4xf32, #tpu.memory_space<vmem>>, vector<288x4xf32>
    tpu.vector_store %arg7[%c19, %c0_33], %49 {strides = array<i32>} : memref<332x4xf32, #tpu.memory_space<vmem>>, vector<288x4xf32>,
    %c0_i32 = arith.constant 0 : i32
    %c16_i32 = arith.constant 16 : i32
    %53 = arith.addi %c0_i32, %c16_i32 : i32
    %c1_i32 = arith.constant 1 : i32
    scf.for %arg8 = %c0_i32 to %53 step %c1_i32  : i32 {
      %c1_i32_101 = arith.constant 1 : i32
      %113 = arith.muli %arg8, %c1_i32_101 : i32
      %c1_i32_102 = arith.constant 1 : i32
      %114 = arith.addi %c1_i32_102, %113 : i32
      %c18_i32 = arith.constant 18 : i32
      %115 = arith.muli %114, %c18_i32 : i32
      %c2_i32 = arith.constant 2 : i32
      %116 = arith.addi %115, %c2_i32 : i32
      %117 = arith.index_cast %116 : i32 to index
      %c0_103 = arith.constant 0 : index
      %118 = vector.load %arg7[%117, %c0_103] : memref<332x4xf32, #tpu.memory_space<vmem>>, vector<1x4xf32>
      %119 = arith.index_cast %115 : i32 to index
      %c0_104 = arith.constant 0 : index
      %120 = vector.load %arg7[%119, %c0_104] : memref<332x4xf32, #tpu.memory_space<vmem>>, vector<1x4xf32>
      tpu.vector_store %arg7[%119, %c0_104], %118 {strides = array<i32>} : memref<332x4xf32, #tpu.memory_space<vmem>>, vector<1x4xf32>,
      %c16_i32_105 = arith.constant 16 : i32
      %121 = arith.addi %115, %c16_i32_105 : i32
      %c1_i32_106 = arith.constant 1 : i32
      %122 = arith.subi %121, %c1_i32_106 : i32
      %123 = arith.index_cast %122 : i32 to index
      %c0_107 = arith.constant 0 : index
      %124 = vector.load %arg7[%123, %c0_107] : memref<332x4xf32, #tpu.memory_space<vmem>>, vector<1x4xf32>
      %c18_i32_108 = arith.constant 18 : i32
      %125 = arith.addi %115, %c18_i32_108 : i32
      %c1_i32_109 = arith.constant 1 : i32
      %126 = arith.subi %125, %c1_i32_109 : i32
      %127 = arith.index_cast %126 : i32 to index
      %c0_110 = arith.constant 0 : index
      %128 = vector.load %arg7[%127, %c0_110] : memref<332x4xf32, #tpu.memory_space<vmem>>, vector<1x4xf32>
      tpu.vector_store %arg7[%127, %c0_110], %124 {strides = array<i32>} : memref<332x4xf32, #tpu.memory_space<vmem>>, vector<1x4xf32>,
    }
    %c16_i32_34 = arith.constant 16 : i32
    %c36 = arith.constant 36 : index
    %c0_35 = arith.constant 0 : index
    %54 = vector.load %arg7[%c36, %c0_35] : memref<332x4xf32, #tpu.memory_space<vmem>>, vector<18x4xf32>
    %c0_36 = arith.constant 0 : index
    %c0_37 = arith.constant 0 : index
    %55 = vector.load %arg7[%c0_36, %c0_37] : memref<332x4xf32, #tpu.memory_space<vmem>>, vector<18x4xf32>
    tpu.vector_store %arg7[%c0_36, %c0_37], %54 {strides = array<i32>} : memref<332x4xf32, #tpu.memory_space<vmem>>, vector<18x4xf32>,
    %c270 = arith.constant 270 : index
    %c0_38 = arith.constant 0 : index
    %56 = vector.load %arg7[%c270, %c0_38] : memref<332x4xf32, #tpu.memory_space<vmem>>, vector<18x4xf32>
    %c306 = arith.constant 306 : index
    %c0_39 = arith.constant 0 : index
    %57 = vector.load %arg7[%c306, %c0_39] : memref<332x4xf32, #tpu.memory_space<vmem>>, vector<18x4xf32>
    tpu.vector_store %arg7[%c306, %c0_39], %56 {strides = array<i32>} : memref<332x4xf32, #tpu.memory_space<vmem>>, vector<18x4xf32>,
    %c0_40 = arith.constant 0 : index
    %c19_41 = arith.constant 19 : index
    %c0_42 = arith.constant 0 : index
    %58 = vector.load %arg1[%c0_40, %c19_41, %c0_42] : memref<1x332x4xf32, #tpu.memory_space<vmem>>, vector<1x288x4xf32>
    %59 = vector.shape_cast %58 : vector<1x288x4xf32> to vector<288x4xf32>
    %c0_43 = arith.constant 0 : index
    %c0_44 = arith.constant 0 : index
    %60 = vector.load %arg4[%c0_43, %c0_44] : memref<4x8xf32, #tpu.memory_space<vmem>>, vector<4x8xf32>
    %cst_45 = arith.constant dense<0.000000e+00> : vector<288x8xf32>
    %61 = tpu.matmul %59, %60, %cst_45 {dimension_numbers = #tpu.dot_dimension_numbers<[1], [0], [0], [1], [0, 0, 1, 1], [], []>} : vector<288x4xf32>, vector<4x8xf32>, vector<288x8xf32> -> vector<288x8xf32>
    %c0_46 = arith.constant 0 : index
    %c0_47 = arith.constant 0 : index
    %62 = vector.load %arg5[%c0_46, %c0_47] : memref<1x8xf32, #tpu.memory_space<vmem>>, vector<1x8xf32>
    %63 = vector.broadcast %62 : vector<1x8xf32> to vector<288x8xf32>
    %64 = arith.addf %61, %63 : vector<288x8xf32>
    %c0_48 = arith.constant 0 : index
    %c0_49 = arith.constant 0 : index
    %65 = vector.load %arg7[%c0_48, %c0_49] : memref<332x4xf32, #tpu.memory_space<vmem>>, vector<288x4xf32>
    %c0_50 = arith.constant 0 : index
    %c0_51 = arith.constant 0 : index
    %c0_52 = arith.constant 0 : index
    %66 = vector.load %arg3[%c0_50, %c0_51, %c0_52] : memref<9x4x8xf32, #tpu.memory_space<vmem>>, vector<1x4x8xf32>
    %67 = vector.shape_cast %66 : vector<1x4x8xf32> to vector<4x8xf32>
    %cst_53 = arith.constant dense<0.000000e+00> : vector<288x8xf32>
    %68 = tpu.matmul %65, %67, %cst_53 {dimension_numbers = #tpu.dot_dimension_numbers<[1], [0], [0], [1], [0, 0, 1, 1], [], []>} : vector<288x4xf32>, vector<4x8xf32>, vector<288x8xf32> -> vector<288x8xf32>
    %69 = arith.addf %64, %68 : vector<288x8xf32>
    %c1_54 = arith.constant 1 : index
    %c0_55 = arith.constant 0 : index
    %70 = vector.load %arg7[%c1_54, %c0_55] : memref<332x4xf32, #tpu.memory_space<vmem>>, vector<288x4xf32>
    %c1_56 = arith.constant 1 : index
    %c0_57 = arith.constant 0 : index
    %c0_58 = arith.constant 0 : index
    %71 = vector.load %arg3[%c1_56, %c0_57, %c0_58] : memref<9x4x8xf32, #tpu.memory_space<vmem>>, vector<1x4x8xf32>
    %72 = vector.shape_cast %71 : vector<1x4x8xf32> to vector<4x8xf32>
    %cst_59 = arith.constant dense<0.000000e+00> : vector<288x8xf32>
    %73 = tpu.matmul %70, %72, %cst_59 {dimension_numbers = #tpu.dot_dimension_numbers<[1], [0], [0], [1], [0, 0, 1, 1], [], []>} : vector<288x4xf32>, vector<4x8xf32>, vector<288x8xf32> -> vector<288x8xf32>
    %74 = arith.addf %69, %73 : vector<288x8xf32>
    %c2_60 = arith.constant 2 : index
    %c0_61 = arith.constant 0 : index
    %75 = vector.load %arg7[%c2_60, %c0_61] : memref<332x4xf32, #tpu.memory_space<vmem>>, vector<288x4xf32>
    %c2_62 = arith.constant 2 : index
    %c0_63 = arith.constant 0 : index
    %c0_64 = arith.constant 0 : index
    %76 = vector.load %arg3[%c2_62, %c0_63, %c0_64] : memref<9x4x8xf32, #tpu.memory_space<vmem>>, vector<1x4x8xf32>
    %77 = vector.shape_cast %76 : vector<1x4x8xf32> to vector<4x8xf32>
    %cst_65 = arith.constant dense<0.000000e+00> : vector<288x8xf32>
    %78 = tpu.matmul %75, %77, %cst_65 {dimension_numbers = #tpu.dot_dimension_numbers<[1], [0], [0], [1], [0, 0, 1, 1], [], []>} : vector<288x4xf32>, vector<4x8xf32>, vector<288x8xf32> -> vector<288x8xf32>
    %79 = arith.addf %74, %78 : vector<288x8xf32>
    %c18 = arith.constant 18 : index
    %c0_66 = arith.constant 0 : index
    %80 = vector.load %arg7[%c18, %c0_66] : memref<332x4xf32, #tpu.memory_space<vmem>>, vector<288x4xf32>
    %c3_67 = arith.constant 3 : index
    %c0_68 = arith.constant 0 : index
    %c0_69 = arith.constant 0 : index
    %81 = vector.load %arg3[%c3_67, %c0_68, %c0_69] : memref<9x4x8xf32, #tpu.memory_space<vmem>>, vector<1x4x8xf32>
    %82 = vector.shape_cast %81 : vector<1x4x8xf32> to vector<4x8xf32>
    %cst_70 = arith.constant dense<0.000000e+00> : vector<288x8xf32>
    %83 = tpu.matmul %80, %82, %cst_70 {dimension_numbers = #tpu.dot_dimension_numbers<[1], [0], [0], [1], [0, 0, 1, 1], [], []>} : vector<288x4xf32>, vector<4x8xf32>, vector<288x8xf32> -> vector<288x8xf32>
    %84 = arith.addf %79, %83 : vector<288x8xf32>
    %c19_71 = arith.constant 19 : index
    %c0_72 = arith.constant 0 : index
    %85 = vector.load %arg7[%c19_71, %c0_72] : memref<332x4xf32, #tpu.memory_space<vmem>>, vector<288x4xf32>
    %c4_73 = arith.constant 4 : index
    %c0_74 = arith.constant 0 : index
    %c0_75 = arith.constant 0 : index
    %86 = vector.load %arg3[%c4_73, %c0_74, %c0_75] : memref<9x4x8xf32, #tpu.memory_space<vmem>>, vector<1x4x8xf32>
    %87 = vector.shape_cast %86 : vector<1x4x8xf32> to vector<4x8xf32>
    %cst_76 = arith.constant dense<0.000000e+00> : vector<288x8xf32>
    %88 = tpu.matmul %85, %87, %cst_76 {dimension_numbers = #tpu.dot_dimension_numbers<[1], [0], [0], [1], [0, 0, 1, 1], [], []>} : vector<288x4xf32>, vector<4x8xf32>, vector<288x8xf32> -> vector<288x8xf32>
    %89 = arith.addf %84, %88 : vector<288x8xf32>
    %c20 = arith.constant 20 : index
    %c0_77 = arith.constant 0 : index
    %90 = vector.load %arg7[%c20, %c0_77] : memref<332x4xf32, #tpu.memory_space<vmem>>, vector<288x4xf32>
    %c5_78 = arith.constant 5 : index
    %c0_79 = arith.constant 0 : index
    %c0_80 = arith.constant 0 : index
    %91 = vector.load %arg3[%c5_78, %c0_79, %c0_80] : memref<9x4x8xf32, #tpu.memory_space<vmem>>, vector<1x4x8xf32>
    %92 = vector.shape_cast %91 : vector<1x4x8xf32> to vector<4x8xf32>
    %cst_81 = arith.constant dense<0.000000e+00> : vector<288x8xf32>
    %93 = tpu.matmul %90, %92, %cst_81 {dimension_numbers = #tpu.dot_dimension_numbers<[1], [0], [0], [1], [0, 0, 1, 1], [], []>} : vector<288x4xf32>, vector<4x8xf32>, vector<288x8xf32> -> vector<288x8xf32>
    %94 = arith.addf %89, %93 : vector<288x8xf32>
    %c36_82 = arith.constant 36 : index
    %c0_83 = arith.constant 0 : index
    %95 = vector.load %arg7[%c36_82, %c0_83] : memref<332x4xf32, #tpu.memory_space<vmem>>, vector<288x4xf32>
    %c6_84 = arith.constant 6 : index
    %c0_85 = arith.constant 0 : index
    %c0_86 = arith.constant 0 : index
    %96 = vector.load %arg3[%c6_84, %c0_85, %c0_86] : memref<9x4x8xf32, #tpu.memory_space<vmem>>, vector<1x4x8xf32>
    %97 = vector.shape_cast %96 : vector<1x4x8xf32> to vector<4x8xf32>
    %cst_87 = arith.constant dense<0.000000e+00> : vector<288x8xf32>
    %98 = tpu.matmul %95, %97, %cst_87 {dimension_numbers = #tpu.dot_dimension_numbers<[1], [0], [0], [1], [0, 0, 1, 1], [], []>} : vector<288x4xf32>, vector<4x8xf32>, vector<288x8xf32> -> vector<288x8xf32>
    %99 = arith.addf %94, %98 : vector<288x8xf32>
    %c37 = arith.constant 37 : index
    %c0_88 = arith.constant 0 : index
    %100 = vector.load %arg7[%c37, %c0_88] : memref<332x4xf32, #tpu.memory_space<vmem>>, vector<288x4xf32>
    %c7_89 = arith.constant 7 : index
    %c0_90 = arith.constant 0 : index
    %c0_91 = arith.constant 0 : index
    %101 = vector.load %arg3[%c7_89, %c0_90, %c0_91] : memref<9x4x8xf32, #tpu.memory_space<vmem>>, vector<1x4x8xf32>
    %102 = vector.shape_cast %101 : vector<1x4x8xf32> to vector<4x8xf32>
    %cst_92 = arith.constant dense<0.000000e+00> : vector<288x8xf32>
    %103 = tpu.matmul %100, %102, %cst_92 {dimension_numbers = #tpu.dot_dimension_numbers<[1], [0], [0], [1], [0, 0, 1, 1], [], []>} : vector<288x4xf32>, vector<4x8xf32>, vector<288x8xf32> -> vector<288x8xf32>
    %104 = arith.addf %99, %103 : vector<288x8xf32>
    %c38 = arith.constant 38 : index
    %c0_93 = arith.constant 0 : index
    %105 = vector.load %arg7[%c38, %c0_93] : memref<332x4xf32, #tpu.memory_space<vmem>>, vector<288x4xf32>
    %c8_94 = arith.constant 8 : index
    %c0_95 = arith.constant 0 : index
    %c0_96 = arith.constant 0 : index
    %106 = vector.load %arg3[%c8_94, %c0_95, %c0_96] : memref<9x4x8xf32, #tpu.memory_space<vmem>>, vector<1x4x8xf32>
    %107 = vector.shape_cast %106 : vector<1x4x8xf32> to vector<4x8xf32>
    %cst_97 = arith.constant dense<0.000000e+00> : vector<288x8xf32>
    %108 = tpu.matmul %105, %107, %cst_97 {dimension_numbers = #tpu.dot_dimension_numbers<[1], [0], [0], [1], [0, 0, 1, 1], [], []>} : vector<288x4xf32>, vector<4x8xf32>, vector<288x8xf32> -> vector<288x8xf32>
    %109 = arith.addf %104, %108 : vector<288x8xf32>
    %c0_98 = arith.constant 0 : index
    %c0_99 = arith.constant 0 : index
    %c0_100 = arith.constant 0 : index
    %110 = vector.load %arg6[%c0_98, %c0_99, %c0_100] : memref<1x288x8xf32, #tpu.memory_space<vmem>>, vector<1x288x8xf32>
    %111 = vector.shape_cast %110 : vector<1x288x8xf32> to vector<288x8xf32>
    %112 = vector.shape_cast %109 : vector<288x8xf32> to vector<1x288x8xf32>
    tpu.vector_store %arg6[%c0_98, %c0_99, %c0_100], %112 {strides = array<i32>} : memref<1x288x8xf32, #tpu.memory_space<vmem>>, vector<1x288x8xf32>,
    return
  }
  func.func @transform_0(%arg0: i32) -> (i32, i32, i32) {
    %c0_i32 = arith.constant 0 : i32
    %c0_i32_0 = arith.constant 0 : i32
    %c0_i32_1 = arith.constant 0 : i32
    return %arg0, %c0_i32, %c0_i32_0 : i32, i32, i32
  }
  func.func @transform_1(%arg0: i32) -> (i32, i32, i32) {
    %c0_i32 = arith.constant 0 : i32
    %c0_i32_0 = arith.constant 0 : i32
    %c0_i32_1 = arith.constant 0 : i32
    %c0_i32_2 = arith.constant 0 : i32
    return %c0_i32, %c0_i32_0, %c0_i32_1 : i32, i32, i32
  }
  func.func @transform_2(%arg0: i32) -> (i32, i32, i32) {
    %c0_i32 = arith.constant 0 : i32
    %c0_i32_0 = arith.constant 0 : i32
    %c0_i32_1 = arith.constant 0 : i32
    %c0_i32_2 = arith.constant 0 : i32
    return %c0_i32, %c0_i32_0, %c0_i32_1 : i32, i32, i32
  }
  func.func @transform_3(%arg0: i32) -> (i32, i32) {
    %c0_i32 = arith.constant 0 : i32
    %c0_i32_0 = arith.constant 0 : i32
    %c0_i32_1 = arith.constant 0 : i32
    return %c0_i32, %c0_i32_0 : i32, i32
  }
  func.func @transform_4(%arg0: i32) -> (i32, i32) {
    %c0_i32 = arith.constant 0 : i32
    %c0_i32_0 = arith.constant 0 : i32
    %c0_i32_1 = arith.constant 0 : i32
    return %c0_i32, %c0_i32_0 : i32, i32
  }
  func.func @transform_5(%arg0: i32) -> (i32, i32, i32) {
    %c0_i32 = arith.constant 0 : i32
    %c0_i32_0 = arith.constant 0 : i32
    %c0_i32_1 = arith.constant 0 : i32
    return %arg0, %c0_i32, %c0_i32_0 : i32, i32, i32
  }
}

</mosaic_0001>

<llo_original>
// kernel: tpu_custom_call.1
$region0: #{tpu_custom_call.1}
  #allocation0 [shape = 'u32[]', space=smem, size = 0x4, offset = 0x4, fixed_abs, tag = 'smem constant byte address 0x4 - core index']
  #allocation1 [shape = 'u32[144,128]{1,0:T(1,128)}', space=vmem, size = 0x12000, scoped, tag = 'internal scratch']
  #allocation2 [shape = 'f32[332,4]{1,0:T(8,128)}', space=vmem, size = 0x2a000, scoped, tag = 'scratch operand']
  %s0 = inlined_call_operand.vmem [shape: f32[2,332,4], index: 0, kind: input, shape index: {}]
  %s1 = inlined_call_operand.vmem [shape: f32[9,4,4], index: 1, kind: input, shape index: {}]
  %s2 = inlined_call_operand.vmem [shape: f32[9,4,8], index: 2, kind: input, shape index: {}]
  %s3 = inlined_call_operand.vmem [shape: f32[4,8], index: 3, kind: input, shape index: {}]
  %s4 = inlined_call_operand.vmem [shape: f32[1,8], index: 4, kind: input, shape index: {}]
  %s5 = inlined_call_operand.vmem [shape: f32[2,288,8], index: 5, kind: output, shape index: {}]
  %s6 = sld [smem:[#allocation0]]
  $region60: #{tpu_custom_call.1} parent=0
    _
  %s8 = ssub.s32 1, %s6
  %s9 = scalar_select 0, %s8, %s6
  loop: start=0, step=1, limit=4
  $region2: #{tpu_custom_call.1} parent=0 // loop_pre_header
    _
  $region3: #{tpu_custom_call.1} parent=0 // loop_header
    %s11 = sphi 0, %s15
    %p12 = scmp.ge.s32.totalorder %s11, 4
    %s21 = sphi 0, %s23
    %s24 = sphi 0, %s21
    %s25 = sphi 0, %s24
    %s41 = sphi 0, %s25
    %s45 = sphi 0, %s45
    %s47 = sphi 0, %s45
    %s48 = sphi 0, %s47
    %s62 = sphi 0, %s48
    %s66 = sphi 0, %s66
    %s68 = sphi 0, %s66
    %s69 = sphi 0, %s68
    %s83 = sphi 0, %s69
    %s87 = sphi 0, %s87
    %s89 = sphi 0, %s87
    %s90 = sphi 0, %s89
    %s104 = sphi 0, %s90
    %s108 = sphi 0, %s108
    %s110 = sphi 0, %s108
    %s111 = sphi 0, %s110
    %s125 = sphi 0, %s111
    %s131 = sphi 0, %s133
    %s134 = sphi 0, %s131
    %s135 = sphi 0, %s134
    %s151 = sphi 0, %s135
  $region4: #{tpu_custom_call.1} parent=0 // loop_header_branch
    %14 = sbr.rel (%p12) target = $region8
  $region5: #{tpu_custom_call.1} parent=0 // loop_body
    %s16 = ssub.s32 %s11, 1
    %s17 = ssub.s32 %s11, 2
    %s18 = sadd.s32 %s11, 1
    %s19 = ssub.s32 %s11, %s18
    %p20 = scmp.eq.s32.totalorder %s19, 0
    %s22 = sadd.s32 %s21, 1
    %s23 = scalar_select %p20, %s21, %s22
    %p26 = pneg %p20
    %p27 = scmp.eq.s32.totalorder %s11, 1
    %p28 = por %p26, %p27
    %p29 = scmp.ne.s32.totalorder %s21, %s24
    %p30 = scmp.eq.s32.totalorder %s11, 0
    %p31 = por %p29, %p30
    %p32 = scmp.ne.s32.totalorder %s21, %s24
    %p33 = scmp.eq.s32.totalorder %s16, 1
    %p34 = por %p32, %p33
    %p35 = scmp.ne.s32.totalorder %s24, %s25
    %p36 = scmp.eq.s32.totalorder %s16, 0
    %p37 = por %p35, %p36
    %p38 = scmp.ne.s32.totalorder %s24, %s25
    %p39 = scmp.eq.s32.totalorder %s17, 1
    %p40 = por %p38, %p39
    %p42 = scmp.ne.s32.totalorder %s25, %s41
    %p43 = scmp.eq.s32.totalorder %s17, 0
    %p44 = por %p42, %p43
    %s46 = sadd.s32 %s45, 1
    %p49 = scmp.eq.s32.totalorder %s11, 1
    %p50 = scmp.ne.s32.totalorder %s45, %s47
    %p51 = scmp.eq.s32.totalorder %s11, 0
    %p52 = por %p50, %p51
    %p53 = scmp.ne.s32.totalorder %s45, %s47
    %p54 = scmp.eq.s32.totalorder %s16, 1
    %p55 = por %p53, %p54
    %p56 = scmp.ne.s32.totalorder %s47, %s48
    %p57 = scmp.eq.s32.totalorder %s16, 0
    %p58 = por %p56, %p57
    %p59 = scmp.ne.s32.totalorder %s47, %s48
    %p60 = scmp.eq.s32.totalorder %s17, 1
    %p61 = por %p59, %p60
    %p63 = scmp.ne.s32.totalorder %s48, %s62
    %p64 = scmp.eq.s32.totalorder %s17, 0
    %p65 = por %p63, %p64
    %s67 = sadd.s32 %s66, 1
    %p70 = scmp.eq.s32.totalorder %s11, 1
    %p71 = scmp.ne.s32.totalorder %s66, %s68
    %p72 = scmp.eq.s32.totalorder %s11, 0
    %p73 = por %p71, %p72
    %p74 = scmp.ne.s32.totalorder %s66, %s68
    %p75 = scmp.eq.s32.totalorder %s16, 1
    %p76 = por %p74, %p75
    %p77 = scmp.ne.s32.totalorder %s68, %s69
    %p78 = scmp.eq.s32.totalorder %s16, 0
    %p79 = por %p77, %p78
    %p80 = scmp.ne.s32.totalorder %s68, %s69
    %p81 = scmp.eq.s32.totalorder %s17, 1
    %p82 = por %p80, %p81
    %p84 = scmp.ne.s32.totalorder %s69, %s83
    %p85 = scmp.eq.s32.totalorder %s17, 0
    %p86 = por %p84, %p85
    %s88 = sadd.s32 %s87, 1
    %p91 = scmp.eq.s32.totalorder %s11, 1
    %p92 = scmp.ne.s32.totalorder %s87, %s89
    %p93 = scmp.eq.s32.totalorder %s11, 0
    %p94 = por %p92, %p93
    %p95 = scmp.ne.s32.totalorder %s87, %s89
    %p96 = scmp.eq.s32.totalorder %s16, 1
    %p97 = por %p95, %p96
    %p98 = scmp.ne.s32.totalorder %s89, %s90
    %p99 = scmp.eq.s32.totalorder %s16, 0
    %p100 = por %p98, %p99
    %p101 = scmp.ne.s32.totalorder %s89, %s90
    %p102 = scmp.eq.s32.totalorder %s17, 1
    %p103 = por %p101, %p102
    %p105 = scmp.ne.s32.totalorder %s90, %s104
    %p106 = scmp.eq.s32.totalorder %s17, 0
    %p107 = por %p105, %p106
    %s109 = sadd.s32 %s108, 1
    %p112 = scmp.eq.s32.totalorder %s11, 1
    %p113 = scmp.ne.s32.totalorder %s108, %s110
    %p114 = scmp.eq.s32.totalorder %s11, 0
    %p115 = por %p113, %p114
    %p116 = scmp.ne.s32.totalorder %s108, %s110
    %p117 = scmp.eq.s32.totalorder %s16, 1
    %p118 = por %p116, %p117
    %p119 = scmp.ne.s32.totalorder %s110, %s111
    %p120 = scmp.eq.s32.totalorder %s16, 0
    %p121 = por %p119, %p120
    %p122 = scmp.ne.s32.totalorder %s110, %s111
    %p123 = scmp.eq.s32.totalorder %s17, 1
    %p124 = por %p122, %p123
    %p126 = scmp.ne.s32.totalorder %s111, %s125
    %p127 = scmp.eq.s32.totalorder %s17, 0
    %p128 = por %p126, %p127
    %s129 = ssub.s32 %s11, %s18
    %p130 = scmp.eq.s32.totalorder %s129, 0
    %s132 = sadd.s32 %s131, 1
    %s133 = scalar_select %p130, %s131, %s132
    %p136 = pneg %p130
    %p137 = scmp.eq.s32.totalorder %s11, 1
    %p138 = por %p136, %p137
    %p139 = scmp.ne.s32.totalorder %s131, %s134
    %p140 = scmp.eq.s32.totalorder %s11, 0
    %p141 = por %p139, %p140
    %p142 = scmp.ne.s32.totalorder %s131, %s134
    %p143 = scmp.eq.s32.totalorder %s16, 1
    %p144 = por %p142, %p143
    %p145 = scmp.ne.s32.totalorder %s134, %s135
    %p146 = scmp.eq.s32.totalorder %s16, 0
    %p147 = por %p145, %p146
    %p148 = scmp.ne.s32.totalorder %s134, %s135
    %p149 = scmp.eq.s32.totalorder %s17, 1
    %p150 = por %p148, %p149
    %p152 = scmp.ne.s32.totalorder %s135, %s151
    %p153 = scmp.eq.s32.totalorder %s17, 0
    %p154 = por %p152, %p153
    %p155 = scmp.le.s32.totalorder 1, %s11
    %p156 = scmp.lt.s32.totalorder %s11, 3
    %p157 = pnand %p155, %p156
    %p158 = pneg %p157
    // Predicated region
    $region9: #{tpu_custom_call.1} parent=5 // pred_check
      _
    $region10: #{tpu_custom_call.1} parent=5 // pred_check_branch
      %160 = sbr.rel (%p157) target = $region12
    $region11: #{tpu_custom_call.1} parent=5 // pred_region
      %s161 = ssub.s32 %s11, 1
      // Predicated region
      $region13: #{tpu_custom_call.1} parent=11 // pred_check
        %p162 = pneg %p58
      $region14: #{tpu_custom_call.1} parent=11 // pred_check_branch
        %164 = sbr.rel (%p162) target = $region16
      $region15: #{tpu_custom_call.1} parent=11 // pred_region
        _
      $region16: #{tpu_custom_call.1} parent=11 // pred_fallthru
        _
      // Predicated region
      $region17: #{tpu_custom_call.1} parent=11 // pred_check
        %p165 = pneg %p79
      $region18: #{tpu_custom_call.1} parent=11 // pred_check_branch
        %167 = sbr.rel (%p165) target = $region20
      $region19: #{tpu_custom_call.1} parent=11 // pred_region
        _
      $region20: #{tpu_custom_call.1} parent=11 // pred_fallthru
        _
      // Predicated region
      $region21: #{tpu_custom_call.1} parent=11 // pred_check
        %p168 = pneg %p100
      $region22: #{tpu_custom_call.1} parent=11 // pred_check_branch
        %170 = sbr.rel (%p168) target = $region24
      $region23: #{tpu_custom_call.1} parent=11 // pred_region
        _
      $region24: #{tpu_custom_call.1} parent=11 // pred_fallthru
        _
      // Predicated region
      $region25: #{tpu_custom_call.1} parent=11 // pred_check
        %p171 = pneg %p121
      $region26: #{tpu_custom_call.1} parent=11 // pred_check_branch
        %173 = sbr.rel (%p171) target = $region28
      $region27: #{tpu_custom_call.1} parent=11 // pred_region
        _
      $region28: #{tpu_custom_call.1} parent=11 // pred_fallthru
        _
    $region12: #{tpu_custom_call.1} parent=5 // pred_fallthru
      _
    %p174 = scmp.lt.s32.totalorder %s11, 2
    // Predicated region
    $region29: #{tpu_custom_call.1} parent=5 // pred_check
      %p175 = pneg %p174
    $region30: #{tpu_custom_call.1} parent=5 // pred_check_branch
      %177 = sbr.rel (%p175) target = $region32
    $region31: #{tpu_custom_call.1} parent=5 // pred_region
      // Predicated region
      $region33: #{tpu_custom_call.1} parent=31 // pred_check
        %p178 = pneg %p31
      $region34: #{tpu_custom_call.1} parent=31 // pred_check_branch
        %180 = sbr.rel (%p178) target = $region36
      $region35: #{tpu_custom_call.1} parent=31 // pred_region
        %p181 = scmp.lt.s32.totalorder %s11, 1
        %s182 = scalar_select %p181, %s11, 1
        %s183 = smul.addr %s182, 42
        %s184 = smul.addr %s183, 8
        %s185 = scalar_lea.vmem %s0, %s184
      $region36: #{tpu_custom_call.1} parent=31 // pred_fallthru
        _
    $region32: #{tpu_custom_call.1} parent=5 // pred_fallthru
      _
    %p186 = scmp.le.s32.totalorder 1, %s11
    %p187 = scmp.lt.s32.totalorder %s11, 3
    %p188 = pnand %p186, %p187
    %p189 = pneg %p188
    // Predicated region
    $region37: #{tpu_custom_call.1} parent=5 // pred_check
      _
    $region38: #{tpu_custom_call.1} parent=5 // pred_check_branch
      %191 = sbr.rel (%p188) target = $region40
    $region39: #{tpu_custom_call.1} parent=5 // pred_region
      %s192 = ssub.s32 %s11, 1
      %p193 = scmp.lt.s32.totalorder %s16, 1
      %s194 = scalar_select %p193, %s16, 1
      %s195 = smul.addr %s194, 42
      %s196 = smul.addr %s195, 8
      %s197 = scalar_lea.vmem %s0, %s196
      %p198 = pneg %p37
      %p199 = pneg %p34
      %p200 = pneg %p58
      %p201 = pneg %p55
      %p202 = pneg %p79
      %p203 = pneg %p76
      %p204 = pneg %p100
      %p205 = pneg %p97
      %p206 = pneg %p121
      %p207 = pneg %p118
      %p208 = pneg %p147
      %p209 = pneg %p144
      %p210 = scmp.lt.s32.totalorder %s16, 1
      %s211 = scalar_select %p210, %s16, 1
      %s212 = smul.addr %s211, 36
      %s213 = smul.addr %s212, 8
      %s214 = scalar_lea.vmem %s5, %s213
      %p215 = scmp.lt.s32.totalorder %s16, 1
      %s216 = scalar_select %p215, %s16, 1
      %s217 = smul.addr %s216, 42
      %s218 = smul.addr %s217, 8
      %s219 = scalar_lea.vmem %s0, %s218
      %p220 = scmp.lt.s32.totalorder %s16, 1
      %s221 = scalar_select %p220, %s16, 1
      %s222 = smul.addr %s221, 36
      %s223 = smul.addr %s222, 8
      %s224 = scalar_lea.vmem %s5, %s223
      %v225 = vld [vmem:[%s219] sm:$0xff]
      %v226 = vld [vmem:[%s219 + $0x8] sm:$0xff]
      %v227 = vld [vmem:[%s219 + $0x10] sm:$0xff]
      %v228 = vld [vmem:[%s219 + $0x18] sm:$0xff]
      %v229 = vld [vmem:[%s219 + $0x20] sm:$0xff]
      %v230 = vld [vmem:[%s219 + $0x28] sm:$0xff]
      %v231 = vld [vmem:[%s219 + $0x30] sm:$0xff]
      %v232 = vld [vmem:[%s219 + $0x38] sm:$0xff]
      %v233 = vld [vmem:[%s219 + $0x40] sm:$0xff]
      %v234 = vld [vmem:[%s219 + $0x48] sm:$0xff]
      %v235 = vld [vmem:[%s219 + $0x50] sm:$0xff]
      %v236 = vld [vmem:[%s219 + $0x58] sm:$0xff]
      %v237 = vld [vmem:[%s219 + $0x60] sm:$0xff]
      %v238 = vld [vmem:[%s219 + $0x68] sm:$0xff]
      %v239 = vld [vmem:[%s219 + $0x70] sm:$0xff]
      %v240 = vld [vmem:[%s219 + $0x78] sm:$0xff]
      %v241 = vld [vmem:[%s219 + $0x80] sm:$0xff]
      %v242 = vld [vmem:[%s219 + $0x88] sm:$0xff]
      %v243 = vld [vmem:[%s219 + $0x90] sm:$0xff]
      %v244 = vld [vmem:[%s219 + $0x98] sm:$0xff]
      %v245 = vld [vmem:[%s219 + $0xa0] sm:$0xff]
      %v246 = vld [vmem:[%s219 + $0xa8] sm:$0xff]
      %v247 = vld [vmem:[%s219 + $0xb0] sm:$0xff]
      %v248 = vld [vmem:[%s219 + $0xb8] sm:$0xff]
      %v249 = vld [vmem:[%s219 + $0xc0] sm:$0xff]
      %v250 = vld [vmem:[%s219 + $0xc8] sm:$0xff]
      %v251 = vld [vmem:[%s219 + $0xd0] sm:$0xff]
      %v252 = vld [vmem:[%s219 + $0xd8] sm:$0xff]
      %v253 = vld [vmem:[%s219 + $0xe0] sm:$0xff]
      %v254 = vld [vmem:[%s219 + $0xe8] sm:$0xff]
      %v255 = vld [vmem:[%s219 + $0xf0] sm:$0xff]
      %v256 = vld [vmem:[%s219 + $0xf8] sm:$0xff]
      %v257 = vld [vmem:[%s219 + $0x100] sm:$0xff]
      %v258 = vld [vmem:[%s219 + $0x108] sm:$0xff]
      %v259 = vld [vmem:[%s219 + $0x110] sm:$0xff]
      %v260 = vld [vmem:[%s219 + $0x118] sm:$0xff]
      %v261 = vld [vmem:[%s219 + $0x120] sm:$0xff]
      %v262 = vld [vmem:[%s219 + $0x128] sm:$0xff]
      %v263 = vld [vmem:[%s219 + $0x130] sm:$0xff]
      %v264 = vld [vmem:[%s219 + $0x138] sm:$0xff]
      %v265 = vld [vmem:[%s219 + $0x140] sm:$0xff]
      %v266 = vmax.f32 %v225, 0.0
      %v267 = vmax.f32 %v226, 0.0
      %v268 = vmax.f32 %v227, 0.0
      %v269 = vmax.f32 %v228, 0.0
      %v270 = vmax.f32 %v229, 0.0
      %v271 = vmax.f32 %v230, 0.0
      %v272 = vmax.f32 %v231, 0.0
      %v273 = vmax.f32 %v232, 0.0
      %v274 = vmax.f32 %v233, 0.0
      %v275 = vmax.f32 %v234, 0.0
      %v276 = vmax.f32 %v235, 0.0
      %v277 = vmax.f32 %v236, 0.0
      %v278 = vmax.f32 %v237, 0.0
      %v279 = vmax.f32 %v238, 0.0
      %v280 = vmax.f32 %v239, 0.0
      %v281 = vmax.f32 %v240, 0.0
      %v282 = vmax.f32 %v241, 0.0
      %v283 = vmax.f32 %v242, 0.0
      %v284 = vmax.f32 %v243, 0.0
      %v285 = vmax.f32 %v244, 0.0
      %v286 = vmax.f32 %v245, 0.0
      %v287 = vmax.f32 %v246, 0.0
      %v288 = vmax.f32 %v247, 0.0
      %v289 = vmax.f32 %v248, 0.0
      %v290 = vmax.f32 %v249, 0.0
      %v291 = vmax.f32 %v250, 0.0
      %v292 = vmax.f32 %v251, 0.0
      %v293 = vmax.f32 %v252, 0.0
      %v294 = vmax.f32 %v253, 0.0
      %v295 = vmax.f32 %v254, 0.0
      %v296 = vmax.f32 %v255, 0.0
      %v297 = vmax.f32 %v256, 0.0
      %v298 = vmax.f32 %v257, 0.0
      %v299 = vmax.f32 %v258, 0.0
      %v300 = vmax.f32 %v259, 0.0
      %v301 = vmax.f32 %v260, 0.0
      %v302 = vmax.f32 %v261, 0.0
      %v303 = vmax.f32 %v262, 0.0
      %v304 = vmax.f32 %v263, 0.0
      %v305 = vmax.f32 %v264, 0.0
      %v306 = vmax.f32 %v265, 0.0
      %v307 = vld [vmem:[%s1] sm:$0xf]
      %s308 = scalar_lea.vmem %s1, 4
      %v309 = vld [vmem:[%s308] sm:$0xf]
      %vm347 = vcmask 1046528
      %v348 = vrot.slane %v266, 1
      %v349 = vrot.slane %v267, 1
      %v350 = vsel %vm347, %v348, %v349
      %v351 = vrot.slane %v268, 1
      %v352 = vsel %vm347, %v349, %v351
      %v353 = vrot.slane %v269, 1
      %v354 = vsel %vm347, %v351, %v353
      %v355 = vrot.slane %v270, 1
      %v356 = vsel %vm347, %v353, %v355
      %v357 = vrot.slane %v271, 1
      %v358 = vsel %vm347, %v355, %v357
      %v359 = vrot.slane %v272, 1
      %v360 = vsel %vm347, %v357, %v359
      %v361 = vrot.slane %v273, 1
      %v362 = vsel %vm347, %v359, %v361
      %v363 = vrot.slane %v274, 1
      %v364 = vsel %vm347, %v361, %v363
      %v365 = vrot.slane %v275, 1
      %v366 = vsel %vm347, %v363, %v365
      %v367 = vrot.slane %v276, 1
      %v368 = vsel %vm347, %v365, %v367
      %v369 = vrot.slane %v277, 1
      %v370 = vsel %vm347, %v367, %v369
      %v371 = vrot.slane %v278, 1
      %v372 = vsel %vm347, %v369, %v371
      %v373 = vrot.slane %v279, 1
      %v374 = vsel %vm347, %v371, %v373
      %v375 = vrot.slane %v280, 1
      %v376 = vsel %vm347, %v373, %v375
      %v377 = vrot.slane %v281, 1
      %v378 = vsel %vm347, %v375, %v377
      %v379 = vrot.slane %v282, 1
      %v380 = vsel %vm347, %v377, %v379
      %v381 = vrot.slane %v283, 1
      %v382 = vsel %vm347, %v379, %v381
      %v383 = vrot.slane %v284, 1
      %v384 = vsel %vm347, %v381, %v383
      %v385 = vrot.slane %v285, 1
      %v386 = vsel %vm347, %v383, %v385
      %v387 = vrot.slane %v286, 1
      %v388 = vsel %vm347, %v385, %v387
      %v389 = vrot.slane %v287, 1
      %v390 = vsel %vm347, %v387, %v389
      %v391 = vrot.slane %v288, 1
      %v392 = vsel %vm347, %v389, %v391
      %v393 = vrot.slane %v289, 1
      %v394 = vsel %vm347, %v391, %v393
      %v395 = vrot.slane %v290, 1
      %v396 = vsel %vm347, %v393, %v395
      %v397 = vrot.slane %v291, 1
      %v398 = vsel %vm347, %v395, %v397
      %v399 = vrot.slane %v292, 1
      %v400 = vsel %vm347, %v397, %v399
      %v401 = vrot.slane %v293, 1
      %v402 = vsel %vm347, %v399, %v401
      %v403 = vrot.slane %v294, 1
      %v404 = vsel %vm347, %v401, %v403
      %v405 = vrot.slane %v295, 1
      %v406 = vsel %vm347, %v403, %v405
      %v407 = vrot.slane %v296, 1
      %v408 = vsel %vm347, %v405, %v407
      %v409 = vrot.slane %v297, 1
      %v410 = vsel %vm347, %v407, %v409
      %v411 = vrot.slane %v298, 1
      %v412 = vsel %vm347, %v409, %v411
      %v413 = vrot.slane %v299, 1
      %v414 = vsel %vm347, %v411, %v413
      %v415 = vrot.slane %v300, 1
      %v416 = vsel %vm347, %v413, %v415
      %v417 = vrot.slane %v301, 1
      %v418 = vsel %vm347, %v415, %v417
      %v419 = vrot.slane %v302, 1
      %v420 = vsel %vm347, %v417, %v419
      %vm421 = vcmask 31744
      %v422 = vsel %vm421, %v350, 0
      %v424 = vsel %vm421, %v352, 0
      %v426 = vsel %vm421, %v354, 0
      %v428 = vsel %vm421, %v356, 0
      %v430 = vsel %vm421, %v358, 0
      %v432 = vsel %vm421, %v360, 0
      %v434 = vsel %vm421, %v362, 0
      %v436 = vsel %vm421, %v364, 0
      %v438 = vsel %vm421, %v366, 0
      %v440 = vsel %vm421, %v368, 0
      %v442 = vsel %vm421, %v370, 0
      %v444 = vsel %vm421, %v372, 0
      %v446 = vsel %vm421, %v374, 0
      %v448 = vsel %vm421, %v376, 0
      %v450 = vsel %vm421, %v378, 0
      %v452 = vsel %vm421, %v380, 0
      %v454 = vsel %vm421, %v382, 0
      %v456 = vsel %vm421, %v384, 0
      %v458 = vsel %vm421, %v386, 0
      %v460 = vsel %vm421, %v388, 0
      %v462 = vsel %vm421, %v390, 0
      %v464 = vsel %vm421, %v392, 0
      %v466 = vsel %vm421, %v394, 0
      %v468 = vsel %vm421, %v396, 0
      %v470 = vsel %vm421, %v398, 0
      %v472 = vsel %vm421, %v400, 0
      %v474 = vsel %vm421, %v402, 0
      %v476 = vsel %vm421, %v404, 0
      %v478 = vsel %vm421, %v406, 0
      %v480 = vsel %vm421, %v408, 0
      %v482 = vsel %vm421, %v410, 0
      %v484 = vsel %vm421, %v412, 0
      %v486 = vsel %vm421, %v414, 0
      %v488 = vsel %vm421, %v416, 0
      %v490 = vsel %vm421, %v418, 0
      %v492 = vsel %vm421, %v420, 0
      %vm494 = vcmask 1043456
      %v496 = vsel %vm494, %v309, 0
      %498 = vmatprep.subr.mxu0 0.0
      %499 = vmatpush1.msra.mxu0 0.0
      %500 = vmatprep.subr.mxu0 0.0
      %501 = vmatpush1.msra.mxu0 0.0
      %502 = vmatprep.subr.mxu0 0.0
      %503 = vmatpush1.msra.mxu0 0.0
      %504 = vmatprep.subr.mxu0 0.0
      %505 = vmatpush1.msra.mxu0 0.0
      %506 = vmatprep.subr.mxu0 0.0
      %507 = vmatpush1.msra.mxu0 0.0
      %508 = vmatprep.subr.mxu0 0.0
      %509 = vmatpush1.msra.mxu0 0.0
      %510 = vmatprep.subr.mxu0 0.0
      %511 = vmatpush1.msra.mxu0 0.0
      %512 = vmatprep.subr.mxu0 0.0
      %513 = vmatpush1.msra.mxu0 0.0
      %514 = vmatprep.subr.mxu0 0.0
      %515 = vmatpush1.msra.mxu0 0.0
      %516 = vmatprep.subr.mxu0 0.0
      %517 = vmatpush1.msra.mxu0 0.0
      %518 = vmatprep.subr.mxu0 0.0
      %519 = vmatpush1.msra.mxu0 0.0
      %520 = vmatprep.subr.mxu0 0.0
      %521 = vmatpush1.msra.mxu0 0.0
      %522 = vmatprep.subr.mxu0 0.0
      %523 = vmatpush1.msra.mxu0 0.0
      %524 = vmatprep.subr.mxu0 0.0
      %525 = vmatpush1.msra.mxu0 0.0
      %526 = vmatprep.subr.mxu0 0.0
      %527 = vmatpush1.msra.mxu0 0.0
      %528 = vmatprep.subr.mxu0 0.0
      %529 = vmatpush1.msra.mxu0 %v496
      %530 = vmatprep.subr.mxu0 0.0
      %531 = vmatpush2.msra.mxu0 0.0
      %532 = vmatprep.subr.mxu0 0.0
      %533 = vmatpush2.msra.mxu0 0.0
      %534 = vmatprep.subr.mxu0 0.0
      %535 = vmatpush2.msra.mxu0 0.0
      %536 = vmatprep.subr.mxu0 0.0
      %537 = vmatpush2.msra.mxu0 0.0
      %538 = vmatprep.subr.mxu0 0.0
      %539 = vmatpush2.msra.mxu0 0.0
      %540 = vmatprep.subr.mxu0 0.0
      %541 = vmatpush2.msra.mxu0 0.0
      %542 = vmatprep.subr.mxu0 0.0
      %543 = vmatpush2.msra.mxu0 0.0
      %544 = vmatprep.subr.mxu0 0.0
      %545 = vmatpush2.msra.mxu0 0.0
      %546 = vmatprep.subr.mxu0 0.0
      %547 = vmatpush2.msra.mxu0 0.0
      %548 = vmatprep.subr.mxu0 0.0
      %549 = vmatpush2.msra.mxu0 0.0
      %550 = vmatprep.subr.mxu0 0.0
      %551 = vmatpush2.msra.mxu0 0.0
      %552 = vmatprep.subr.mxu0 0.0
      %553 = vmatpush2.msra.mxu0 0.0
      %554 = vmatprep.subr.mxu0 0.0
      %555 = vmatpush2.msra.mxu0 0.0
      %556 = vmatprep.subr.mxu0 0.0
      %557 = vmatpush2.msra.mxu0 0.0
      %558 = vmatprep.subr.mxu0 0.0
      %559 = vmatpush2.msra.mxu0 0.0
      %560 = vmatprep.subr.mxu0 0.0
      %561 = vmatpush2.msra.mxu0 0.0
      %562 = vmatprep.mubr.f32.mxu0 0.0
      %563 = vmatmul.mubr.f32.gmra.mxu0 %v422
      %v564 = vpop.f32.mrf.mxu0
      %v565 = vadd.f32 0.0, %v564
      %v566 = vpop.f32.mrf.mxu0
      %567 = vmatprep.mubr.f32.mxu0 0.0
      %568 = vmatmul.mubr.f32.gmra.mxu0 %v424
      %v569 = vpop.f32.mrf.mxu0
      %v570 = vadd.f32 0.0, %v569
      %v571 = vpop.f32.mrf.mxu0
      %572 = vmatprep.mubr.f32.mxu0 0.0
      %573 = vmatmul.mubr.f32.gmra.mxu0 %v426
      %v574 = vpop.f32.mrf.mxu0
      %v575 = vadd.f32 0.0, %v574
      %v576 = vpop.f32.mrf.mxu0
      %577 = vmatprep.mubr.f32.mxu0 0.0
      %578 = vmatmul.mubr.f32.gmra.mxu0 %v428
      %v579 = vpop.f32.mrf.mxu0
      %v580 = vadd.f32 0.0, %v579
      %v581 = vpop.f32.mrf.mxu0
      %582 = vmatprep.mubr.f32.mxu0 0.0
      %583 = vmatmul.mubr.f32.gmra.mxu0 %v430
      %v584 = vpop.f32.mrf.mxu0
      %v585 = vadd.f32 0.0, %v584
      %v586 = vpop.f32.mrf.mxu0
      %587 = vmatprep.mubr.f32.mxu0 0.0
      %588 = vmatmul.mubr.f32.gmra.mxu0 %v432
      %v589 = vpop.f32.mrf.mxu0
      %v590 = vadd.f32 0.0, %v589
      %v591 = vpop.f32.mrf.mxu0
      %592 = vmatprep.mubr.f32.mxu0 0.0
      %593 = vmatmul.mubr.f32.gmra.mxu0 %v434
      %v594 = vpop.f32.mrf.mxu0
      %v595 = vadd.f32 0.0, %v594
      %v596 = vpop.f32.mrf.mxu0
      %597 = vmatprep.mubr.f32.mxu0 0.0
      %598 = vmatmul.mubr.f32.gmra.mxu0 %v436
      %v599 = vpop.f32.mrf.mxu0
      %v600 = vadd.f32 0.0, %v599
      %v601 = vpop.f32.mrf.mxu0
      %602 = vmatprep.mubr.f32.mxu0 0.0
      %603 = vmatmul.mubr.f32.gmra.mxu0 %v438
      %v604 = vpop.f32.mrf.mxu0
      %v605 = vadd.f32 0.0, %v604
      %v606 = vpop.f32.mrf.mxu0
      %607 = vmatprep.mubr.f32.mxu0 0.0
      %608 = vmatmul.mubr.f32.gmra.mxu0 %v440
      %v609 = vpop.f32.mrf.mxu0
      %v610 = vadd.f32 0.0, %v609
      %v611 = vpop.f32.mrf.mxu0
      %612 = vmatprep.mubr.f32.mxu0 0.0
      %613 = vmatmul.mubr.f32.gmra.mxu0 %v442
      %v614 = vpop.f32.mrf.mxu0
      %v615 = vadd.f32 0.0, %v614
      %v616 = vpop.f32.mrf.mxu0
      %617 = vmatprep.mubr.f32.mxu0 0.0
      %618 = vmatmul.mubr.f32.gmra.mxu0 %v444
      %v619 = vpop.f32.mrf.mxu0
      %v620 = vadd.f32 0.0, %v619
      %v621 = vpop.f32.mrf.mxu0
      %622 = vmatprep.mubr.f32.mxu0 0.0
      %623 = vmatmul.mubr.f32.gmra.mxu0 %v446
      %v624 = vpop.f32.mrf.mxu0
      %v625 = vadd.f32 0.0, %v624
      %v626 = vpop.f32.mrf.mxu0
      %627 = vmatprep.mubr.f32.mxu0 0.0
      %628 = vmatmul.mubr.f32.gmra.mxu0 %v448
      %v629 = vpop.f32.mrf.mxu0
      %v630 = vadd.f32 0.0, %v629
      %v631 = vpop.f32.mrf.mxu0
      %632 = vmatprep.mubr.f32.mxu0 0.0
      %633 = vmatmul.mubr.f32.gmra.mxu0 %v450
      %v634 = vpop.f32.mrf.mxu0
      %v635 = vadd.f32 0.0, %v634
      %v636 = vpop.f32.mrf.mxu0
      %637 = vmatprep.mubr.f32.mxu0 0.0
      %638 = vmatmul.mubr.f32.gmra.mxu0 %v452
      %v639 = vpop.f32.mrf.mxu0
      %v640 = vadd.f32 0.0, %v639
      %v641 = vpop.f32.mrf.mxu0
      %642 = vmatprep.mubr.f32.mxu0 0.0
      %643 = vmatmul.mubr.f32.gmra.mxu0 %v454
      %v644 = vpop.f32.mrf.mxu0
      %v645 = vadd.f32 0.0, %v644
      %v646 = vpop.f32.mrf.mxu0
      %647 = vmatprep.mubr.f32.mxu0 0.0
      %648 = vmatmul.mubr.f32.gmra.mxu0 %v456
      %v649 = vpop.f32.mrf.mxu0
      %v650 = vadd.f32 0.0, %v649
      %v651 = vpop.f32.mrf.mxu0
      %652 = vmatprep.mubr.f32.mxu0 0.0
      %653 = vmatmul.mubr.f32.gmra.mxu0 %v458
      %v654 = vpop.f32.mrf.mxu0
      %v655 = vadd.f32 0.0, %v654
      %v656 = vpop.f32.mrf.mxu0
      %657 = vmatprep.mubr.f32.mxu0 0.0
      %658 = vmatmul.mubr.f32.gmra.mxu0 %v460
      %v659 = vpop.f32.mrf.mxu0
      %v660 = vadd.f32 0.0, %v659
      %v661 = vpop.f32.mrf.mxu0
      %662 = vmatprep.mubr.f32.mxu0 0.0
      %663 = vmatmul.mubr.f32.gmra.mxu0 %v462
      %v664 = vpop.f32.mrf.mxu0
      %v665 = vadd.f32 0.0, %v664
      %v666 = vpop.f32.mrf.mxu0
      %667 = vmatprep.mubr.f32.mxu0 0.0
      %668 = vmatmul.mubr.f32.gmra.mxu0 %v464
      %v669 = vpop.f32.mrf.mxu0
      %v670 = vadd.f32 0.0, %v669
      %v671 = vpop.f32.mrf.mxu0
      %672 = vmatprep.mubr.f32.mxu0 0.0
      %673 = vmatmul.mubr.f32.gmra.mxu0 %v466
      %v674 = vpop.f32.mrf.mxu0
      %v675 = vadd.f32 0.0, %v674
      %v676 = vpop.f32.mrf.mxu0
      %677 = vmatprep.mubr.f32.mxu0 0.0
      %678 = vmatmul.mubr.f32.gmra.mxu0 %v468
      %v679 = vpop.f32.mrf.mxu0
      %v680 = vadd.f32 0.0, %v679
      %v681 = vpop.f32.mrf.mxu0
      %682 = vmatprep.mubr.f32.mxu0 0.0
      %683 = vmatmul.mubr.f32.gmra.mxu0 %v470
      %v684 = vpop.f32.mrf.mxu0
      %v685 = vadd.f32 0.0, %v684
      %v686 = vpop.f32.mrf.mxu0
      %687 = vmatprep.mubr.f32.mxu0 0.0
      %688 = vmatmul.mubr.f32.gmra.mxu0 %v472
      %v689 = vpop.f32.mrf.mxu0
      %v690 = vadd.f32 0.0, %v689
      %v691 = vpop.f32.mrf.mxu0
      %692 = vmatprep.mubr.f32.mxu0 0.0
      %693 = vmatmul.mubr.f32.gmra.mxu0 %v474
      %v694 = vpop.f32.mrf.mxu0
      %v695 = vadd.f32 0.0, %v694
      %v696 = vpop.f32.mrf.mxu0
      %697 = vmatprep.mubr.f32.mxu0 0.0
      %698 = vmatmul.mubr.f32.gmra.mxu0 %v476
      %v699 = vpop.f32.mrf.mxu0
      %v700 = vadd.f32 0.0, %v699
      %v701 = vpop.f32.mrf.mxu0
      %702 = vmatprep.mubr.f32.mxu0 0.0
      %703 = vmatmul.mubr.f32.gmra.mxu0 %v478
      %v704 = vpop.f32.mrf.mxu0
      %v705 = vadd.f32 0.0, %v704
      %v706 = vpop.f32.mrf.mxu0
      %707 = vmatprep.mubr.f32.mxu0 0.0
      %708 = vmatmul.mubr.f32.gmra.mxu0 %v480
      %v709 = vpop.f32.mrf.mxu0
      %v710 = vadd.f32 0.0, %v709
      %v711 = vpop.f32.mrf.mxu0
      %712 = vmatprep.mubr.f32.mxu0 0.0
      %713 = vmatmul.mubr.f32.gmra.mxu0 %v482
      %v714 = vpop.f32.mrf.mxu0
      %v715 = vadd.f32 0.0, %v714
      %v716 = vpop.f32.mrf.mxu0
      %717 = vmatprep.mubr.f32.mxu0 0.0
      %718 = vmatmul.mubr.f32.gmra.mxu0 %v484
      %v719 = vpop.f32.mrf.mxu0
      %v720 = vadd.f32 0.0, %v719
      %v721 = vpop.f32.mrf.mxu0
      %722 = vmatprep.mubr.f32.mxu0 0.0
      %723 = vmatmul.mubr.f32.gmra.mxu0 %v486
      %v724 = vpop.f32.mrf.mxu0
      %v725 = vadd.f32 0.0, %v724
      %v726 = vpop.f32.mrf.mxu0
      %727 = vmatprep.mubr.f32.mxu0 0.0
      %728 = vmatmul.mubr.f32.gmra.mxu0 %v488
      %v729 = vpop.f32.mrf.mxu0
      %v730 = vadd.f32 0.0, %v729
      %v731 = vpop.f32.mrf.mxu0
      %732 = vmatprep.mubr.f32.mxu0 0.0
      %733 = vmatmul.mubr.f32.gmra.mxu0 %v490
      %v734 = vpop.f32.mrf.mxu0
      %v735 = vadd.f32 0.0, %v734
      %v736 = vpop.f32.mrf.mxu0
      %737 = vmatprep.mubr.f32.mxu0 0.0
      %738 = vmatmul.mubr.f32.gmra.mxu0 %v492
      %v739 = vpop.f32.mrf.mxu0
      %v740 = vadd.f32 0.0, %v739
      %v741 = vpop.f32.mrf.mxu0
      %742 = vdwg.mxu0
      %v743 = vsel %vm421, %v266, 0
      %v745 = vsel %vm421, %v267, 0
      %v747 = vsel %vm421, %v268, 0
      %v749 = vsel %vm421, %v269, 0
      %v751 = vsel %vm421, %v270, 0
      %v753 = vsel %vm421, %v271, 0
      %v755 = vsel %vm421, %v272, 0
      %v757 = vsel %vm421, %v273, 0
      %v759 = vsel %vm421, %v274, 0
      %v761 = vsel %vm421, %v275, 0
      %v763 = vsel %vm421, %v276, 0
      %v765 = vsel %vm421, %v277, 0
      %v767 = vsel %vm421, %v278, 0
      %v769 = vsel %vm421, %v279, 0
      %v771 = vsel %vm421, %v280, 0
      %v773 = vsel %vm421, %v281, 0
      %v775 = vsel %vm421, %v282, 0
      %v777 = vsel %vm421, %v283, 0
      %v779 = vsel %vm421, %v284, 0
      %v781 = vsel %vm421, %v285, 0
      %v783 = vsel %vm421, %v286, 0
      %v785 = vsel %vm421, %v287, 0
      %v787 = vsel %vm421, %v288, 0
      %v789 = vsel %vm421, %v289, 0
      %v791 = vsel %vm421, %v290, 0
      %v793 = vsel %vm421, %v291, 0
      %v795 = vsel %vm421, %v292, 0
      %v797 = vsel %vm421, %v293, 0
      %v799 = vsel %vm421, %v294, 0
      %v801 = vsel %vm421, %v295, 0
      %v803 = vsel %vm421, %v296, 0
      %v805 = vsel %vm421, %v297, 0
      %v807 = vsel %vm421, %v298, 0
      %v809 = vsel %vm421, %v299, 0
      %v811 = vsel %vm421, %v300, 0
      %v813 = vsel %vm421, %v301, 0
      %v816 = vsel %vm494, %v307, 0
      %818 = vmatprep.subr.mxu0 0.0
      %819 = vmatpush1.msra.mxu0 0.0
      %820 = vmatprep.subr.mxu0 0.0
      %821 = vmatpush1.msra.mxu0 0.0
      %822 = vmatprep.subr.mxu0 0.0
      %823 = vmatpush1.msra.mxu0 0.0
      %824 = vmatprep.subr.mxu0 0.0
      %825 = vmatpush1.msra.mxu0 0.0
      %826 = vmatprep.subr.mxu0 0.0
      %827 = vmatpush1.msra.mxu0 0.0
      %828 = vmatprep.subr.mxu0 0.0
      %829 = vmatpush1.msra.mxu0 0.0
      %830 = vmatprep.subr.mxu0 0.0
      %831 = vmatpush1.msra.mxu0 0.0
      %832 = vmatprep.subr.mxu0 0.0
      %833 = vmatpush1.msra.mxu0 0.0
      %834 = vmatprep.subr.mxu0 0.0
      %835 = vmatpush1.msra.mxu0 0.0
      %836 = vmatprep.subr.mxu0 0.0
      %837 = vmatpush1.msra.mxu0 0.0
      %838 = vmatprep.subr.mxu0 0.0
      %839 = vmatpush1.msra.mxu0 0.0
      %840 = vmatprep.subr.mxu0 0.0
      %841 = vmatpush1.msra.mxu0 0.0
      %842 = vmatprep.subr.mxu0 0.0
      %843 = vmatpush1.msra.mxu0 0.0
      %844 = vmatprep.subr.mxu0 0.0
      %845 = vmatpush1.msra.mxu0 0.0
      %846 = vmatprep.subr.mxu0 0.0
      %847 = vmatpush1.msra.mxu0 0.0
      %848 = vmatprep.subr.mxu0 0.0
      %849 = vmatpush1.msra.mxu0 %v816
      %850 = vmatprep.subr.mxu0 0.0
      %851 = vmatpush2.msra.mxu0 0.0
      %852 = vmatprep.subr.mxu0 0.0
      %853 = vmatpush2.msra.mxu0 0.0
      %854 = vmatprep.subr.mxu0 0.0
      %855 = vmatpush2.msra.mxu0 0.0
      %856 = vmatprep.subr.mxu0 0.0
      %857 = vmatpush2.msra.mxu0 0.0
      %858 = vmatprep.subr.mxu0 0.0
      %859 = vmatpush2.msra.mxu0 0.0
      %860 = vmatprep.subr.mxu0 0.0
      %861 = vmatpush2.msra.mxu0 0.0
      %862 = vmatprep.subr.mxu0 0.0
      %863 = vmatpush2.msra.mxu0 0.0
      %864 = vmatprep.subr.mxu0 0.0
      %865 = vmatpush2.msra.mxu0 0.0
      %866 = vmatprep.subr.mxu0 0.0
      %867 = vmatpush2.msra.mxu0 0.0
      %868 = vmatprep.subr.mxu0 0.0
      %869 = vmatpush2.msra.mxu0 0.0
      %870 = vmatprep.subr.mxu0 0.0
      %871 = vmatpush2.msra.mxu0 0.0
      %872 = vmatprep.subr.mxu0 0.0
      %873 = vmatpush2.msra.mxu0 0.0
      %874 = vmatprep.subr.mxu0 0.0
      %875 = vmatpush2.msra.mxu0 0.0
      %876 = vmatprep.subr.mxu0 0.0
      %877 = vmatpush2.msra.mxu0 0.0
      %878 = vmatprep.subr.mxu0 0.0
      %879 = vmatpush2.msra.mxu0 0.0
      %880 = vmatprep.subr.mxu0 0.0
      %881 = vmatpush2.msra.mxu0 0.0
      %882 = vmatprep.mubr.f32.mxu0 0.0
      %883 = vmatmul.mubr.f32.gmra.mxu0 %v743
      %v884 = vpop.f32.mrf.mxu0
      %v885 = vadd.f32 %v565, %v884
      %v886 = vpop.f32.mrf.mxu0
      %887 = vmatprep.mubr.f32.mxu0 0.0
      %888 = vmatmul.mubr.f32.gmra.mxu0 %v745
      %v889 = vpop.f32.mrf.mxu0
      %v890 = vadd.f32 %v570, %v889
      %v891 = vpop.f32.mrf.mxu0
      %892 = vmatprep.mubr.f32.mxu0 0.0
      %893 = vmatmul.mubr.f32.gmra.mxu0 %v747
      %v894 = vpop.f32.mrf.mxu0
      %v895 = vadd.f32 %v575, %v894
      %v896 = vpop.f32.mrf.mxu0
      %897 = vmatprep.mubr.f32.mxu0 0.0
      %898 = vmatmul.mubr.f32.gmra.mxu0 %v749
      %v899 = vpop.f32.mrf.mxu0
      %v900 = vadd.f32 %v580, %v899
      %v901 = vpop.f32.mrf.mxu0
      %902 = vmatprep.mubr.f32.mxu0 0.0
      %903 = vmatmul.mubr.f32.gmra.mxu0 %v751
      %v904 = vpop.f32.mrf.mxu0
      %v905 = vadd.f32 %v585, %v904
      %v906 = vpop.f32.mrf.mxu0
      %907 = vmatprep.mubr.f32.mxu0 0.0
      %908 = vmatmul.mubr.f32.gmra.mxu0 %v753
      %v909 = vpop.f32.mrf.mxu0
      %v910 = vadd.f32 %v590, %v909
      %v911 = vpop.f32.mrf.mxu0
      %912 = vmatprep.mubr.f32.mxu0 0.0
      %913 = vmatmul.mubr.f32.gmra.mxu0 %v755
      %v914 = vpop.f32.mrf.mxu0
      %v915 = vadd.f32 %v595, %v914
      %v916 = vpop.f32.mrf.mxu0
      %917 = vmatprep.mubr.f32.mxu0 0.0
      %918 = vmatmul.mubr.f32.gmra.mxu0 %v757
      %v919 = vpop.f32.mrf.mxu0
      %v920 = vadd.f32 %v600, %v919
      %v921 = vpop.f32.mrf.mxu0
      %922 = vmatprep.mubr.f32.mxu0 0.0
      %923 = vmatmul.mubr.f32.gmra.mxu0 %v759
      %v924 = vpop.f32.mrf.mxu0
      %v925 = vadd.f32 %v605, %v924
      %v926 = vpop.f32.mrf.mxu0
      %927 = vmatprep.mubr.f32.mxu0 0.0
      %928 = vmatmul.mubr.f32.gmra.mxu0 %v761
      %v929 = vpop.f32.mrf.mxu0
      %v930 = vadd.f32 %v610, %v929
      %v931 = vpop.f32.mrf.mxu0
      %932 = vmatprep.mubr.f32.mxu0 0.0
      %933 = vmatmul.mubr.f32.gmra.mxu0 %v763
      %v934 = vpop.f32.mrf.mxu0
      %v935 = vadd.f32 %v615, %v934
      %v936 = vpop.f32.mrf.mxu0
      %937 = vmatprep.mubr.f32.mxu0 0.0
      %938 = vmatmul.mubr.f32.gmra.mxu0 %v765
      %v939 = vpop.f32.mrf.mxu0
      %v940 = vadd.f32 %v620, %v939
      %v941 = vpop.f32.mrf.mxu0
      %942 = vmatprep.mubr.f32.mxu0 0.0
      %943 = vmatmul.mubr.f32.gmra.mxu0 %v767
      %v944 = vpop.f32.mrf.mxu0
      %v945 = vadd.f32 %v625, %v944
      %v946 = vpop.f32.mrf.mxu0
      %947 = vmatprep.mubr.f32.mxu0 0.0
      %948 = vmatmul.mubr.f32.gmra.mxu0 %v769
      %v949 = vpop.f32.mrf.mxu0
      %v950 = vadd.f32 %v630, %v949
      %v951 = vpop.f32.mrf.mxu0
      %952 = vmatprep.mubr.f32.mxu0 0.0
      %953 = vmatmul.mubr.f32.gmra.mxu0 %v771
      %v954 = vpop.f32.mrf.mxu0
      %v955 = vadd.f32 %v635, %v954
      %v956 = vpop.f32.mrf.mxu0
      %957 = vmatprep.mubr.f32.mxu0 0.0
      %958 = vmatmul.mubr.f32.gmra.mxu0 %v773
      %v959 = vpop.f32.mrf.mxu0
      %v960 = vadd.f32 %v640, %v959
      %v961 = vpop.f32.mrf.mxu0
      %962 = vmatprep.mubr.f32.mxu0 0.0
      %963 = vmatmul.mubr.f32.gmra.mxu0 %v775
      %v964 = vpop.f32.mrf.mxu0
      %v965 = vadd.f32 %v645, %v964
      %v966 = vpop.f32.mrf.mxu0
      %967 = vmatprep.mubr.f32.mxu0 0.0
      %968 = vmatmul.mubr.f32.gmra.mxu0 %v777
      %v969 = vpop.f32.mrf.mxu0
      %v970 = vadd.f32 %v650, %v969
      %v971 = vpop.f32.mrf.mxu0
      %972 = vmatprep.mubr.f32.mxu0 0.0
      %973 = vmatmul.mubr.f32.gmra.mxu0 %v779
      %v974 = vpop.f32.mrf.mxu0
      %v975 = vadd.f32 %v655, %v974
      %v976 = vpop.f32.mrf.mxu0
      %977 = vmatprep.mubr.f32.mxu0 0.0
      %978 = vmatmul.mubr.f32.gmra.mxu0 %v781
      %v979 = vpop.f32.mrf.mxu0
      %v980 = vadd.f32 %v660, %v979
      %v981 = vpop.f32.mrf.mxu0
      %982 = vmatprep.mubr.f32.mxu0 0.0
      %983 = vmatmul.mubr.f32.gmra.mxu0 %v783
      %v984 = vpop.f32.mrf.mxu0
      %v985 = vadd.f32 %v665, %v984
      %v986 = vpop.f32.mrf.mxu0
      %987 = vmatprep.mubr.f32.mxu0 0.0
      %988 = vmatmul.mubr.f32.gmra.mxu0 %v785
      %v989 = vpop.f32.mrf.mxu0
      %v990 = vadd.f32 %v670, %v989
      %v991 = vpop.f32.mrf.mxu0
      %992 = vmatprep.mubr.f32.mxu0 0.0
      %993 = vmatmul.mubr.f32.gmra.mxu0 %v787
      %v994 = vpop.f32.mrf.mxu0
      %v995 = vadd.f32 %v675, %v994
      %v996 = vpop.f32.mrf.mxu0
      %997 = vmatprep.mubr.f32.mxu0 0.0
      %998 = vmatmul.mubr.f32.gmra.mxu0 %v789
      %v999 = vpop.f32.mrf.mxu0
      %v1000 = vadd.f32 %v680, %v999
      %v1001 = vpop.f32.mrf.mxu0
      %1002 = vmatprep.mubr.f32.mxu0 0.0
      %1003 = vmatmul.mubr.f32.gmra.mxu0 %v791
      %v1004 = vpop.f32.mrf.mxu0
      %v1005 = vadd.f32 %v685, %v1004
      %v1006 = vpop.f32.mrf.mxu0
      %1007 = vmatprep.mubr.f32.mxu0 0.0
      %1008 = vmatmul.mubr.f32.gmra.mxu0 %v793
      %v1009 = vpop.f32.mrf.mxu0
      %v1010 = vadd.f32 %v690, %v1009
      %v1011 = vpop.f32.mrf.mxu0
      %1012 = vmatprep.mubr.f32.mxu0 0.0
      %1013 = vmatmul.mubr.f32.gmra.mxu0 %v795
      %v1014 = vpop.f32.mrf.mxu0
      %v1015 = vadd.f32 %v695, %v1014
      %v1016 = vpop.f32.mrf.mxu0
      %1017 = vmatprep.mubr.f32.mxu0 0.0
      %1018 = vmatmul.mubr.f32.gmra.mxu0 %v797
      %v1019 = vpop.f32.mrf.mxu0
      %v1020 = vadd.f32 %v700, %v1019
      %v1021 = vpop.f32.mrf.mxu0
      %1022 = vmatprep.mubr.f32.mxu0 0.0
      %1023 = vmatmul.mubr.f32.gmra.mxu0 %v799
      %v1024 = vpop.f32.mrf.mxu0
      %v1025 = vadd.f32 %v705, %v1024
      %v1026 = vpop.f32.mrf.mxu0
      %1027 = vmatprep.mubr.f32.mxu0 0.0
      %1028 = vmatmul.mubr.f32.gmra.mxu0 %v801
      %v1029 = vpop.f32.mrf.mxu0
      %v1030 = vadd.f32 %v710, %v1029
      %v1031 = vpop.f32.mrf.mxu0
      %1032 = vmatprep.mubr.f32.mxu0 0.0
      %1033 = vmatmul.mubr.f32.gmra.mxu0 %v803
      %v1034 = vpop.f32.mrf.mxu0
      %v1035 = vadd.f32 %v715, %v1034
      %v1036 = vpop.f32.mrf.mxu0
      %1037 = vmatprep.mubr.f32.mxu0 0.0
      %1038 = vmatmul.mubr.f32.gmra.mxu0 %v805
      %v1039 = vpop.f32.mrf.mxu0
      %v1040 = vadd.f32 %v720, %v1039
      %v1041 = vpop.f32.mrf.mxu0
      %1042 = vmatprep.mubr.f32.mxu0 0.0
      %1043 = vmatmul.mubr.f32.gmra.mxu0 %v807
      %v1044 = vpop.f32.mrf.mxu0
      %v1045 = vadd.f32 %v725, %v1044
      %v1046 = vpop.f32.mrf.mxu0
      %1047 = vmatprep.mubr.f32.mxu0 0.0
      %1048 = vmatmul.mubr.f32.gmra.mxu0 %v809
      %v1049 = vpop.f32.mrf.mxu0
      %v1050 = vadd.f32 %v730, %v1049
      %v1051 = vpop.f32.mrf.mxu0
      %1052 = vmatprep.mubr.f32.mxu0 0.0
      %1053 = vmatmul.mubr.f32.gmra.mxu0 %v811
      %v1054 = vpop.f32.mrf.mxu0
      %v1055 = vadd.f32 %v735, %v1054
      %v1056 = vpop.f32.mrf.mxu0
      %1057 = vmatprep.mubr.f32.mxu0 0.0
      %1058 = vmatmul.mubr.f32.gmra.mxu0 %v813
      %v1059 = vpop.f32.mrf.mxu0
      %v1060 = vadd.f32 %v740, %v1059
      %v1061 = vpop.f32.mrf.mxu0
      %1062 = vdwg.mxu0
      %s1063 = scalar_lea.vmem %s1, 8
      %v1064 = vld [vmem:[%s1063] sm:$0xf]
      %vm1065 = vcmask 1045504
      %v1066 = vrot.slane %v266, 2
      %v1067 = vrot.slane %v267, 2
      %v1068 = vsel %vm1065, %v1066, %v1067
      %v1069 = vrot.slane %v268, 2
      %v1070 = vsel %vm1065, %v1067, %v1069
      %v1071 = vrot.slane %v269, 2
      %v1072 = vsel %vm1065, %v1069, %v1071
      %v1073 = vrot.slane %v270, 2
      %v1074 = vsel %vm1065, %v1071, %v1073
      %v1075 = vrot.slane %v271, 2
      %v1076 = vsel %vm1065, %v1073, %v1075
      %v1077 = vrot.slane %v272, 2
      %v1078 = vsel %vm1065, %v1075, %v1077
      %v1079 = vrot.slane %v273, 2
      %v1080 = vsel %vm1065, %v1077, %v1079
      %v1081 = vrot.slane %v274, 2
      %v1082 = vsel %vm1065, %v1079, %v1081
      %v1083 = vrot.slane %v275, 2
      %v1084 = vsel %vm1065, %v1081, %v1083
      %v1085 = vrot.slane %v276, 2
      %v1086 = vsel %vm1065, %v1083, %v1085
      %v1087 = vrot.slane %v277, 2
      %v1088 = vsel %vm1065, %v1085, %v1087
      %v1089 = vrot.slane %v278, 2
      %v1090 = vsel %vm1065, %v1087, %v1089
      %v1091 = vrot.slane %v279, 2
      %v1092 = vsel %vm1065, %v1089, %v1091
      %v1093 = vrot.slane %v280, 2
      %v1094 = vsel %vm1065, %v1091, %v1093
      %v1095 = vrot.slane %v281, 2
      %v1096 = vsel %vm1065, %v1093, %v1095
      %v1097 = vrot.slane %v282, 2
      %v1098 = vsel %vm1065, %v1095, %v1097
      %v1099 = vrot.slane %v283, 2
      %v1100 = vsel %vm1065, %v1097, %v1099
      %v1101 = vrot.slane %v284, 2
      %v1102 = vsel %vm1065, %v1099, %v1101
      %v1103 = vrot.slane %v285, 2
      %v1104 = vsel %vm1065, %v1101, %v1103
      %v1105 = vrot.slane %v286, 2
      %v1106 = vsel %vm1065, %v1103, %v1105
      %v1107 = vrot.slane %v287, 2
      %v1108 = vsel %vm1065, %v1105, %v1107
      %v1109 = vrot.slane %v288, 2
      %v1110 = vsel %vm1065, %v1107, %v1109
      %v1111 = vrot.slane %v289, 2
      %v1112 = vsel %vm1065, %v1109, %v1111
      %v1113 = vrot.slane %v290, 2
      %v1114 = vsel %vm1065, %v1111, %v1113
      %v1115 = vrot.slane %v291, 2
      %v1116 = vsel %vm1065, %v1113, %v1115
      %v1117 = vrot.slane %v292, 2
      %v1118 = vsel %vm1065, %v1115, %v1117
      %v1119 = vrot.slane %v293, 2
      %v1120 = vsel %vm1065, %v1117, %v1119
      %v1121 = vrot.slane %v294, 2
      %v1122 = vsel %vm1065, %v1119, %v1121
      %v1123 = vrot.slane %v295, 2
      %v1124 = vsel %vm1065, %v1121, %v1123
      %v1125 = vrot.slane %v296, 2
      %v1126 = vsel %vm1065, %v1123, %v1125
      %v1127 = vrot.slane %v297, 2
      %v1128 = vsel %vm1065, %v1125, %v1127
      %v1129 = vrot.slane %v298, 2
      %v1130 = vsel %vm1065, %v1127, %v1129
      %v1131 = vrot.slane %v299, 2
      %v1132 = vsel %vm1065, %v1129, %v1131
      %v1133 = vrot.slane %v300, 2
      %v1134 = vsel %vm1065, %v1131, %v1133
      %v1135 = vrot.slane %v301, 2
      %v1136 = vsel %vm1065, %v1133, %v1135
      %v1137 = vrot.slane %v302, 2
      %v1138 = vsel %vm1065, %v1135, %v1137
      %v1139 = vsel %vm421, %v1068, 0
      %v1141 = vsel %vm421, %v1070, 0
      %v1143 = vsel %vm421, %v1072, 0
      %v1145 = vsel %vm421, %v1074, 0
      %v1147 = vsel %vm421, %v1076, 0
      %v1149 = vsel %vm421, %v1078, 0
      %v1151 = vsel %vm421, %v1080, 0
      %v1153 = vsel %vm421, %v1082, 0
      %v1155 = vsel %vm421, %v1084, 0
      %v1157 = vsel %vm421, %v1086, 0
      %v1159 = vsel %vm421, %v1088, 0
      %v1161 = vsel %vm421, %v1090, 0
      %v1163 = vsel %vm421, %v1092, 0
      %v1165 = vsel %vm421, %v1094, 0
      %v1167 = vsel %vm421, %v1096, 0
      %v1169 = vsel %vm421, %v1098, 0
      %v1171 = vsel %vm421, %v1100, 0
      %v1173 = vsel %vm421, %v1102, 0
      %v1175 = vsel %vm421, %v1104, 0
      %v1177 = vsel %vm421, %v1106, 0
      %v1179 = vsel %vm421, %v1108, 0
      %v1181 = vsel %vm421, %v1110, 0
      %v1183 = vsel %vm421, %v1112, 0
      %v1185 = vsel %vm421, %v1114, 0
      %v1187 = vsel %vm421, %v1116, 0
      %v1189 = vsel %vm421, %v1118, 0
      %v1191 = vsel %vm421, %v1120, 0
      %v1193 = vsel %vm421, %v1122, 0
      %v1195 = vsel %vm421, %v1124, 0
      %v1197 = vsel %vm421, %v1126, 0
      %v1199 = vsel %vm421, %v1128, 0
      %v1201 = vsel %vm421, %v1130, 0
      %v1203 = vsel %vm421, %v1132, 0
      %v1205 = vsel %vm421, %v1134, 0
      %v1207 = vsel %vm421, %v1136, 0
      %v1209 = vsel %vm421, %v1138, 0
      %v1212 = vsel %vm494, %v1064, 0
      %1214 = vmatprep.subr.mxu0 0.0
      %1215 = vmatpush1.msra.mxu0 0.0
      %1216 = vmatprep.subr.mxu0 0.0
      %1217 = vmatpush1.msra.mxu0 0.0
      %1218 = vmatprep.subr.mxu0 0.0
      %1219 = vmatpush1.msra.mxu0 0.0
      %1220 = vmatprep.subr.mxu0 0.0
      %1221 = vmatpush1.msra.mxu0 0.0
      %1222 = vmatprep.subr.mxu0 0.0
      %1223 = vmatpush1.msra.mxu0 0.0
      %1224 = vmatprep.subr.mxu0 0.0
      %1225 = vmatpush1.msra.mxu0 0.0
      %1226 = vmatprep.subr.mxu0 0.0
      %1227 = vmatpush1.msra.mxu0 0.0
      %1228 = vmatprep.subr.mxu0 0.0
      %1229 = vmatpush1.msra.mxu0 0.0
      %1230 = vmatprep.subr.mxu0 0.0
      %1231 = vmatpush1.msra.mxu0 0.0
      %1232 = vmatprep.subr.mxu0 0.0
      %1233 = vmatpush1.msra.mxu0 0.0
      %1234 = vmatprep.subr.mxu0 0.0
      %1235 = vmatpush1.msra.mxu0 0.0
      %1236 = vmatprep.subr.mxu0 0.0
      %1237 = vmatpush1.msra.mxu0 0.0
      %1238 = vmatprep.subr.mxu0 0.0
      %1239 = vmatpush1.msra.mxu0 0.0
      %1240 = vmatprep.subr.mxu0 0.0
      %1241 = vmatpush1.msra.mxu0 0.0
      %1242 = vmatprep.subr.mxu0 0.0
      %1243 = vmatpush1.msra.mxu0 0.0
      %1244 = vmatprep.subr.mxu0 0.0
      %1245 = vmatpush1.msra.mxu0 %v1212
      %1246 = vmatprep.subr.mxu0 0.0
      %1247 = vmatpush2.msra.mxu0 0.0
      %1248 = vmatprep.subr.mxu0 0.0
      %1249 = vmatpush2.msra.mxu0 0.0
      %1250 = vmatprep.subr.mxu0 0.0
      %1251 = vmatpush2.msra.mxu0 0.0
      %1252 = vmatprep.subr.mxu0 0.0
      %1253 = vmatpush2.msra.mxu0 0.0
      %1254 = vmatprep.subr.mxu0 0.0
      %1255 = vmatpush2.msra.mxu0 0.0
      %1256 = vmatprep.subr.mxu0 0.0
      %1257 = vmatpush2.msra.mxu0 0.0
      %1258 = vmatprep.subr.mxu0 0.0
      %1259 = vmatpush2.msra.mxu0 0.0
      %1260 = vmatprep.subr.mxu0 0.0
      %1261 = vmatpush2.msra.mxu0 0.0
      %1262 = vmatprep.subr.mxu0 0.0
      %1263 = vmatpush2.msra.mxu0 0.0
      %1264 = vmatprep.subr.mxu0 0.0
      %1265 = vmatpush2.msra.mxu0 0.0
      %1266 = vmatprep.subr.mxu0 0.0
      %1267 = vmatpush2.msra.mxu0 0.0
      %1268 = vmatprep.subr.mxu0 0.0
      %1269 = vmatpush2.msra.mxu0 0.0
      %1270 = vmatprep.subr.mxu0 0.0
      %1271 = vmatpush2.msra.mxu0 0.0
      %1272 = vmatprep.subr.mxu0 0.0
      %1273 = vmatpush2.msra.mxu0 0.0
      %1274 = vmatprep.subr.mxu0 0.0
      %1275 = vmatpush2.msra.mxu0 0.0
      %1276 = vmatprep.subr.mxu0 0.0
      %1277 = vmatpush2.msra.mxu0 0.0
      %1278 = vmatprep.mubr.f32.mxu0 0.0
      %1279 = vmatmul.mubr.f32.gmra.mxu0 %v1139
      %v1280 = vpop.f32.mrf.mxu0
      %v1281 = vadd.f32 0.0, %v1280
      %v1282 = vpop.f32.mrf.mxu0
      %1283 = vmatprep.mubr.f32.mxu0 0.0
      %1284 = vmatmul.mubr.f32.gmra.mxu0 %v1141
      %v1285 = vpop.f32.mrf.mxu0
      %v1286 = vadd.f32 0.0, %v1285
      %v1287 = vpop.f32.mrf.mxu0
      %1288 = vmatprep.mubr.f32.mxu0 0.0
      %1289 = vmatmul.mubr.f32.gmra.mxu0 %v1143
      %v1290 = vpop.f32.mrf.mxu0
      %v1291 = vadd.f32 0.0, %v1290
      %v1292 = vpop.f32.mrf.mxu0
      %1293 = vmatprep.mubr.f32.mxu0 0.0
      %1294 = vmatmul.mubr.f32.gmra.mxu0 %v1145
      %v1295 = vpop.f32.mrf.mxu0
      %v1296 = vadd.f32 0.0, %v1295
      %v1297 = vpop.f32.mrf.mxu0
      %1298 = vmatprep.mubr.f32.mxu0 0.0
      %1299 = vmatmul.mubr.f32.gmra.mxu0 %v1147
      %v1300 = vpop.f32.mrf.mxu0
      %v1301 = vadd.f32 0.0, %v1300
      %v1302 = vpop.f32.mrf.mxu0
      %1303 = vmatprep.mubr.f32.mxu0 0.0
      %1304 = vmatmul.mubr.f32.gmra.mxu0 %v1149
      %v1305 = vpop.f32.mrf.mxu0
      %v1306 = vadd.f32 0.0, %v1305
      %v1307 = vpop.f32.mrf.mxu0
      %1308 = vmatprep.mubr.f32.mxu0 0.0
      %1309 = vmatmul.mubr.f32.gmra.mxu0 %v1151
      %v1310 = vpop.f32.mrf.mxu0
      %v1311 = vadd.f32 0.0, %v1310
      %v1312 = vpop.f32.mrf.mxu0
      %1313 = vmatprep.mubr.f32.mxu0 0.0
      %1314 = vmatmul.mubr.f32.gmra.mxu0 %v1153
      %v1315 = vpop.f32.mrf.mxu0
      %v1316 = vadd.f32 0.0, %v1315
      %v1317 = vpop.f32.mrf.mxu0
      %1318 = vmatprep.mubr.f32.mxu0 0.0
      %1319 = vmatmul.mubr.f32.gmra.mxu0 %v1155
      %v1320 = vpop.f32.mrf.mxu0
      %v1321 = vadd.f32 0.0, %v1320
      %v1322 = vpop.f32.mrf.mxu0
      %1323 = vmatprep.mubr.f32.mxu0 0.0
      %1324 = vmatmul.mubr.f32.gmra.mxu0 %v1157
      %v1325 = vpop.f32.mrf.mxu0
      %v1326 = vadd.f32 0.0, %v1325
      %v1327 = vpop.f32.mrf.mxu0
      %1328 = vmatprep.mubr.f32.mxu0 0.0
      %1329 = vmatmul.mubr.f32.gmra.mxu0 %v1159
      %v1330 = vpop.f32.mrf.mxu0
      %v1331 = vadd.f32 0.0, %v1330
      %v1332 = vpop.f32.mrf.mxu0
      %1333 = vmatprep.mubr.f32.mxu0 0.0
      %1334 = vmatmul.mubr.f32.gmra.mxu0 %v1161
      %v1335 = vpop.f32.mrf.mxu0
      %v1336 = vadd.f32 0.0, %v1335
      %v1337 = vpop.f32.mrf.mxu0
      %1338 = vmatprep.mubr.f32.mxu0 0.0
      %1339 = vmatmul.mubr.f32.gmra.mxu0 %v1163
      %v1340 = vpop.f32.mrf.mxu0
      %v1341 = vadd.f32 0.0, %v1340
      %v1342 = vpop.f32.mrf.mxu0
      %1343 = vmatprep.mubr.f32.mxu0 0.0
      %1344 = vmatmul.mubr.f32.gmra.mxu0 %v1165
      %v1345 = vpop.f32.mrf.mxu0
      %v1346 = vadd.f32 0.0, %v1345
      %v1347 = vpop.f32.mrf.mxu0
      %1348 = vmatprep.mubr.f32.mxu0 0.0
      %1349 = vmatmul.mubr.f32.gmra.mxu0 %v1167
      %v1350 = vpop.f32.mrf.mxu0
      %v1351 = vadd.f32 0.0, %v1350
      %v1352 = vpop.f32.mrf.mxu0
      %1353 = vmatprep.mubr.f32.mxu0 0.0
      %1354 = vmatmul.mubr.f32.gmra.mxu0 %v1169
      %v1355 = vpop.f32.mrf.mxu0
      %v1356 = vadd.f32 0.0, %v1355
      %v1357 = vpop.f32.mrf.mxu0
      %1358 = vmatprep.mubr.f32.mxu0 0.0
      %1359 = vmatmul.mubr.f32.gmra.mxu0 %v1171
      %v1360 = vpop.f32.mrf.mxu0
      %v1361 = vadd.f32 0.0, %v1360
      %v1362 = vpop.f32.mrf.mxu0
      %1363 = vmatprep.mubr.f32.mxu0 0.0
      %1364 = vmatmul.mubr.f32.gmra.mxu0 %v1173
      %v1365 = vpop.f32.mrf.mxu0
      %v1366 = vadd.f32 0.0, %v1365
      %v1367 = vpop.f32.mrf.mxu0
      %1368 = vmatprep.mubr.f32.mxu0 0.0
      %1369 = vmatmul.mubr.f32.gmra.mxu0 %v1175
      %v1370 = vpop.f32.mrf.mxu0
      %v1371 = vadd.f32 0.0, %v1370
      %v1372 = vpop.f32.mrf.mxu0
      %1373 = vmatprep.mubr.f32.mxu0 0.0
      %1374 = vmatmul.mubr.f32.gmra.mxu0 %v1177
      %v1375 = vpop.f32.mrf.mxu0
      %v1376 = vadd.f32 0.0, %v1375
      %v1377 = vpop.f32.mrf.mxu0
      %1378 = vmatprep.mubr.f32.mxu0 0.0
      %1379 = vmatmul.mubr.f32.gmra.mxu0 %v1179
      %v1380 = vpop.f32.mrf.mxu0
      %v1381 = vadd.f32 0.0, %v1380
      %v1382 = vpop.f32.mrf.mxu0
      %1383 = vmatprep.mubr.f32.mxu0 0.0
      %1384 = vmatmul.mubr.f32.gmra.mxu0 %v1181
      %v1385 = vpop.f32.mrf.mxu0
      %v1386 = vadd.f32 0.0, %v1385
      %v1387 = vpop.f32.mrf.mxu0
      %1388 = vmatprep.mubr.f32.mxu0 0.0
      %1389 = vmatmul.mubr.f32.gmra.mxu0 %v1183
      %v1390 = vpop.f32.mrf.mxu0
      %v1391 = vadd.f32 0.0, %v1390
      %v1392 = vpop.f32.mrf.mxu0
      %1393 = vmatprep.mubr.f32.mxu0 0.0
      %1394 = vmatmul.mubr.f32.gmra.mxu0 %v1185
      %v1395 = vpop.f32.mrf.mxu0
      %v1396 = vadd.f32 0.0, %v1395
      %v1397 = vpop.f32.mrf.mxu0
      %1398 = vmatprep.mubr.f32.mxu0 0.0
      %1399 = vmatmul.mubr.f32.gmra.mxu0 %v1187
      %v1400 = vpop.f32.mrf.mxu0
      %v1401 = vadd.f32 0.0, %v1400
      %v1402 = vpop.f32.mrf.mxu0
      %1403 = vmatprep.mubr.f32.mxu0 0.0
      %1404 = vmatmul.mubr.f32.gmra.mxu0 %v1189
      %v1405 = vpop.f32.mrf.mxu0
      %v1406 = vadd.f32 0.0, %v1405
      %v1407 = vpop.f32.mrf.mxu0
      %1408 = vmatprep.mubr.f32.mxu0 0.0
      %1409 = vmatmul.mubr.f32.gmra.mxu0 %v1191
      %v1410 = vpop.f32.mrf.mxu0
      %v1411 = vadd.f32 0.0, %v1410
      %v1412 = vpop.f32.mrf.mxu0
      %1413 = vmatprep.mubr.f32.mxu0 0.0
      %1414 = vmatmul.mubr.f32.gmra.mxu0 %v1193
      %v1415 = vpop.f32.mrf.mxu0
      %v1416 = vadd.f32 0.0, %v1415
      %v1417 = vpop.f32.mrf.mxu0
      %1418 = vmatprep.mubr.f32.mxu0 0.0
      %1419 = vmatmul.mubr.f32.gmra.mxu0 %v1195
      %v1420 = vpop.f32.mrf.mxu0
      %v1421 = vadd.f32 0.0, %v1420
      %v1422 = vpop.f32.mrf.mxu0
      %1423 = vmatprep.mubr.f32.mxu0 0.0
      %1424 = vmatmul.mubr.f32.gmra.mxu0 %v1197
      %v1425 = vpop.f32.mrf.mxu0
      %v1426 = vadd.f32 0.0, %v1425
      %v1427 = vpop.f32.mrf.mxu0
      %1428 = vmatprep.mubr.f32.mxu0 0.0
      %1429 = vmatmul.mubr.f32.gmra.mxu0 %v1199
      %v1430 = vpop.f32.mrf.mxu0
      %v1431 = vadd.f32 0.0, %v1430
      %v1432 = vpop.f32.mrf.mxu0
      %1433 = vmatprep.mubr.f32.mxu0 0.0
      %1434 = vmatmul.mubr.f32.gmra.mxu0 %v1201
      %v1435 = vpop.f32.mrf.mxu0
      %v1436 = vadd.f32 0.0, %v1435
      %v1437 = vpop.f32.mrf.mxu0
      %1438 = vmatprep.mubr.f32.mxu0 0.0
      %1439 = vmatmul.mubr.f32.gmra.mxu0 %v1203
      %v1440 = vpop.f32.mrf.mxu0
      %v1441 = vadd.f32 0.0, %v1440
      %v1442 = vpop.f32.mrf.mxu0
      %1443 = vmatprep.mubr.f32.mxu0 0.0
      %1444 = vmatmul.mubr.f32.gmra.mxu0 %v1205
      %v1445 = vpop.f32.mrf.mxu0
      %v1446 = vadd.f32 0.0, %v1445
      %v1447 = vpop.f32.mrf.mxu0
      %1448 = vmatprep.mubr.f32.mxu0 0.0
      %1449 = vmatmul.mubr.f32.gmra.mxu0 %v1207
      %v1450 = vpop.f32.mrf.mxu0
      %v1451 = vadd.f32 0.0, %v1450
      %v1452 = vpop.f32.mrf.mxu0
      %1453 = vmatprep.mubr.f32.mxu0 0.0
      %1454 = vmatmul.mubr.f32.gmra.mxu0 %v1209
      %v1455 = vpop.f32.mrf.mxu0
      %v1456 = vadd.f32 0.0, %v1455
      %v1457 = vpop.f32.mrf.mxu0
      %1458 = vdwg.mxu0
      %v1459 = vadd.f32 %v885, %v1281
      %v1460 = vadd.f32 %v890, %v1286
      %v1461 = vadd.f32 %v895, %v1291
      %v1462 = vadd.f32 %v900, %v1296
      %v1463 = vadd.f32 %v905, %v1301
      %v1464 = vadd.f32 %v910, %v1306
      %v1465 = vadd.f32 %v915, %v1311
      %v1466 = vadd.f32 %v920, %v1316
      %v1467 = vadd.f32 %v925, %v1321
      %v1468 = vadd.f32 %v930, %v1326
      %v1469 = vadd.f32 %v935, %v1331
      %v1470 = vadd.f32 %v940, %v1336
      %v1471 = vadd.f32 %v945, %v1341
      %v1472 = vadd.f32 %v950, %v1346
      %v1473 = vadd.f32 %v955, %v1351
      %v1474 = vadd.f32 %v960, %v1356
      %v1475 = vadd.f32 %v965, %v1361
      %v1476 = vadd.f32 %v970, %v1366
      %v1477 = vadd.f32 %v975, %v1371
      %v1478 = vadd.f32 %v980, %v1376
      %v1479 = vadd.f32 %v985, %v1381
      %v1480 = vadd.f32 %v990, %v1386
      %v1481 = vadd.f32 %v995, %v1391
      %v1482 = vadd.f32 %v1000, %v1396
      %v1483 = vadd.f32 %v1005, %v1401
      %v1484 = vadd.f32 %v1010, %v1406
      %v1485 = vadd.f32 %v1015, %v1411
      %v1486 = vadd.f32 %v1020, %v1416
      %v1487 = vadd.f32 %v1025, %v1421
      %v1488 = vadd.f32 %v1030, %v1426
      %v1489 = vadd.f32 %v1035, %v1431
      %v1490 = vadd.f32 %v1040, %v1436
      %v1491 = vadd.f32 %v1045, %v1441
      %v1492 = vadd.f32 %v1050, %v1446
      %v1493 = vadd.f32 %v1055, %v1451
      %v1494 = vadd.f32 %v1060, %v1456
      %s1495 = scalar_lea.vmem %s1, 12
      %v1496 = vld [vmem:[%s1495] sm:$0xf]
      %v1499 = vrot.slane %v303, 2
      %v1500 = vsel %vm1065, %v1137, %v1499
      %v1501 = vrot.slane %v304, 2
      %v1502 = vsel %vm1065, %v1499, %v1501
      %v1503 = vsel %vm421, %v1500, 0
      %v1505 = vsel %vm421, %v1502, 0
      %v1508 = vsel %vm494, %v1496, 0
      %1510 = vmatprep.subr.mxu0 0.0
      %1511 = vmatpush1.msra.mxu0 0.0
      %1512 = vmatprep.subr.mxu0 0.0
      %1513 = vmatpush1.msra.mxu0 0.0
      %1514 = vmatprep.subr.mxu0 0.0
      %1515 = vmatpush1.msra.mxu0 0.0
      %1516 = vmatprep.subr.mxu0 0.0
      %1517 = vmatpush1.msra.mxu0 0.0
      %1518 = vmatprep.subr.mxu0 0.0
      %1519 = vmatpush1.msra.mxu0 0.0
      %1520 = vmatprep.subr.mxu0 0.0
      %1521 = vmatpush1.msra.mxu0 0.0
      %1522 = vmatprep.subr.mxu0 0.0
      %1523 = vmatpush1.msra.mxu0 0.0
      %1524 = vmatprep.subr.mxu0 0.0
      %1525 = vmatpush1.msra.mxu0 0.0
      %1526 = vmatprep.subr.mxu0 0.0
      %1527 = vmatpush1.msra.mxu0 0.0
      %1528 = vmatprep.subr.mxu0 0.0
      %1529 = vmatpush1.msra.mxu0 0.0
      %1530 = vmatprep.subr.mxu0 0.0
      %1531 = vmatpush1.msra.mxu0 0.0
      %1532 = vmatprep.subr.mxu0 0.0
      %1533 = vmatpush1.msra.mxu0 0.0
      %1534 = vmatprep.subr.mxu0 0.0
      %1535 = vmatpush1.msra.mxu0 0.0
      %1536 = vmatprep.subr.mxu0 0.0
      %1537 = vmatpush1.msra.mxu0 0.0
      %1538 = vmatprep.subr.mxu0 0.0
      %1539 = vmatpush1.msra.mxu0 0.0
      %1540 = vmatprep.subr.mxu0 0.0
      %1541 = vmatpush1.msra.mxu0 %v1508
      %1542 = vmatprep.subr.mxu0 0.0
      %1543 = vmatpush2.msra.mxu0 0.0
      %1544 = vmatprep.subr.mxu0 0.0
      %1545 = vmatpush2.msra.mxu0 0.0
      %1546 = vmatprep.subr.mxu0 0.0
      %1547 = vmatpush2.msra.mxu0 0.0
      %1548 = vmatprep.subr.mxu0 0.0
      %1549 = vmatpush2.msra.mxu0 0.0
      %1550 = vmatprep.subr.mxu0 0.0
      %1551 = vmatpush2.msra.mxu0 0.0
      %1552 = vmatprep.subr.mxu0 0.0
      %1553 = vmatpush2.msra.mxu0 0.0
      %1554 = vmatprep.subr.mxu0 0.0
      %1555 = vmatpush2.msra.mxu0 0.0
      %1556 = vmatprep.subr.mxu0 0.0
      %1557 = vmatpush2.msra.mxu0 0.0
      %1558 = vmatprep.subr.mxu0 0.0
      %1559 = vmatpush2.msra.mxu0 0.0
      %1560 = vmatprep.subr.mxu0 0.0
      %1561 = vmatpush2.msra.mxu0 0.0
      %1562 = vmatprep.subr.mxu0 0.0
      %1563 = vmatpush2.msra.mxu0 0.0
      %1564 = vmatprep.subr.mxu0 0.0
      %1565 = vmatpush2.msra.mxu0 0.0
      %1566 = vmatprep.subr.mxu0 0.0
      %1567 = vmatpush2.msra.mxu0 0.0
      %1568 = vmatprep.subr.mxu0 0.0
      %1569 = vmatpush2.msra.mxu0 0.0
      %1570 = vmatprep.subr.mxu0 0.0
      %1571 = vmatpush2.msra.mxu0 0.0
      %1572 = vmatprep.subr.mxu0 0.0
      %1573 = vmatpush2.msra.mxu0 0.0
      %1574 = vmatprep.mubr.f32.mxu0 0.0
      %1575 = vmatmul.mubr.f32.gmra.mxu0 %v1143
      %v1576 = vpop.f32.mrf.mxu0
      %v1577 = vadd.f32 0.0, %v1576
      %v1578 = vpop.f32.mrf.mxu0
      %1579 = vmatprep.mubr.f32.mxu0 0.0
      %1580 = vmatmul.mubr.f32.gmra.mxu0 %v1145
      %v1581 = vpop.f32.mrf.mxu0
      %v1582 = vadd.f32 0.0, %v1581
      %v1583 = vpop.f32.mrf.mxu0
      %1584 = vmatprep.mubr.f32.mxu0 0.0
      %1585 = vmatmul.mubr.f32.gmra.mxu0 %v1147
      %v1586 = vpop.f32.mrf.mxu0
      %v1587 = vadd.f32 0.0, %v1586
      %v1588 = vpop.f32.mrf.mxu0
      %1589 = vmatprep.mubr.f32.mxu0 0.0
      %1590 = vmatmul.mubr.f32.gmra.mxu0 %v1149
      %v1591 = vpop.f32.mrf.mxu0
      %v1592 = vadd.f32 0.0, %v1591
      %v1593 = vpop.f32.mrf.mxu0
      %1594 = vmatprep.mubr.f32.mxu0 0.0
      %1595 = vmatmul.mubr.f32.gmra.mxu0 %v1151
      %v1596 = vpop.f32.mrf.mxu0
      %v1597 = vadd.f32 0.0, %v1596
      %v1598 = vpop.f32.mrf.mxu0
      %1599 = vmatprep.mubr.f32.mxu0 0.0
      %1600 = vmatmul.mubr.f32.gmra.mxu0 %v1153
      %v1601 = vpop.f32.mrf.mxu0
      %v1602 = vadd.f32 0.0, %v1601
      %v1603 = vpop.f32.mrf.mxu0
      %1604 = vmatprep.mubr.f32.mxu0 0.0
      %1605 = vmatmul.mubr.f32.gmra.mxu0 %v1155
      %v1606 = vpop.f32.mrf.mxu0
      %v1607 = vadd.f32 0.0, %v1606
      %v1608 = vpop.f32.mrf.mxu0
      %1609 = vmatprep.mubr.f32.mxu0 0.0
      %1610 = vmatmul.mubr.f32.gmra.mxu0 %v1157
      %v1611 = vpop.f32.mrf.mxu0
      %v1612 = vadd.f32 0.0, %v1611
      %v1613 = vpop.f32.mrf.mxu0
      %1614 = vmatprep.mubr.f32.mxu0 0.0
      %1615 = vmatmul.mubr.f32.gmra.mxu0 %v1159
      %v1616 = vpop.f32.mrf.mxu0
      %v1617 = vadd.f32 0.0, %v1616
      %v1618 = vpop.f32.mrf.mxu0
      %1619 = vmatprep.mubr.f32.mxu0 0.0
      %1620 = vmatmul.mubr.f32.gmra.mxu0 %v1161
      %v1621 = vpop.f32.mrf.mxu0
      %v1622 = vadd.f32 0.0, %v1621
      %v1623 = vpop.f32.mrf.mxu0
      %1624 = vmatprep.mubr.f32.mxu0 0.0
      %1625 = vmatmul.mubr.f32.gmra.mxu0 %v1163
      %v1626 = vpop.f32.mrf.mxu0
      %v1627 = vadd.f32 0.0, %v1626
      %v1628 = vpop.f32.mrf.mxu0
      %1629 = vmatprep.mubr.f32.mxu0 0.0
      %1630 = vmatmul.mubr.f32.gmra.mxu0 %v1165
      %v1631 = vpop.f32.mrf.mxu0
      %v1632 = vadd.f32 0.0, %v1631
      %v1633 = vpop.f32.mrf.mxu0
      %1634 = vmatprep.mubr.f32.mxu0 0.0
      %1635 = vmatmul.mubr.f32.gmra.mxu0 %v1167
      %v1636 = vpop.f32.mrf.mxu0
      %v1637 = vadd.f32 0.0, %v1636
      %v1638 = vpop.f32.mrf.mxu0
      %1639 = vmatprep.mubr.f32.mxu0 0.0
      %1640 = vmatmul.mubr.f32.gmra.mxu0 %v1169
      %v1641 = vpop.f32.mrf.mxu0
      %v1642 = vadd.f32 0.0, %v1641
      %v1643 = vpop.f32.mrf.mxu0
      %1644 = vmatprep.mubr.f32.mxu0 0.0
      %1645 = vmatmul.mubr.f32.gmra.mxu0 %v1171
      %v1646 = vpop.f32.mrf.mxu0
      %v1647 = vadd.f32 0.0, %v1646
      %v1648 = vpop.f32.mrf.mxu0
      %1649 = vmatprep.mubr.f32.mxu0 0.0
      %1650 = vmatmul.mubr.f32.gmra.mxu0 %v1173
      %v1651 = vpop.f32.mrf.mxu0
      %v1652 = vadd.f32 0.0, %v1651
      %v1653 = vpop.f32.mrf.mxu0
      %1654 = vmatprep.mubr.f32.mxu0 0.0
      %1655 = vmatmul.mubr.f32.gmra.mxu0 %v1175
      %v1656 = vpop.f32.mrf.mxu0
      %v1657 = vadd.f32 0.0, %v1656
      %v1658 = vpop.f32.mrf.mxu0
      %1659 = vmatprep.mubr.f32.mxu0 0.0
      %1660 = vmatmul.mubr.f32.gmra.mxu0 %v1177
      %v1661 = vpop.f32.mrf.mxu0
      %v1662 = vadd.f32 0.0, %v1661
      %v1663 = vpop.f32.mrf.mxu0
      %1664 = vmatprep.mubr.f32.mxu0 0.0
      %1665 = vmatmul.mubr.f32.gmra.mxu0 %v1179
      %v1666 = vpop.f32.mrf.mxu0
      %v1667 = vadd.f32 0.0, %v1666
      %v1668 = vpop.f32.mrf.mxu0
      %1669 = vmatprep.mubr.f32.mxu0 0.0
      %1670 = vmatmul.mubr.f32.gmra.mxu0 %v1181
      %v1671 = vpop.f32.mrf.mxu0
      %v1672 = vadd.f32 0.0, %v1671
      %v1673 = vpop.f32.mrf.mxu0
      %1674 = vmatprep.mubr.f32.mxu0 0.0
      %1675 = vmatmul.mubr.f32.gmra.mxu0 %v1183
      %v1676 = vpop.f32.mrf.mxu0
      %v1677 = vadd.f32 0.0, %v1676
      %v1678 = vpop.f32.mrf.mxu0
      %1679 = vmatprep.mubr.f32.mxu0 0.0
      %1680 = vmatmul.mubr.f32.gmra.mxu0 %v1185
      %v1681 = vpop.f32.mrf.mxu0
      %v1682 = vadd.f32 0.0, %v1681
      %v1683 = vpop.f32.mrf.mxu0
      %1684 = vmatprep.mubr.f32.mxu0 0.0
      %1685 = vmatmul.mubr.f32.gmra.mxu0 %v1187
      %v1686 = vpop.f32.mrf.mxu0
      %v1687 = vadd.f32 0.0, %v1686
      %v1688 = vpop.f32.mrf.mxu0
      %1689 = vmatprep.mubr.f32.mxu0 0.0
      %1690 = vmatmul.mubr.f32.gmra.mxu0 %v1189
      %v1691 = vpop.f32.mrf.mxu0
      %v1692 = vadd.f32 0.0, %v1691
      %v1693 = vpop.f32.mrf.mxu0
      %1694 = vmatprep.mubr.f32.mxu0 0.0
      %1695 = vmatmul.mubr.f32.gmra.mxu0 %v1191
      %v1696 = vpop.f32.mrf.mxu0
      %v1697 = vadd.f32 0.0, %v1696
      %v1698 = vpop.f32.mrf.mxu0
      %1699 = vmatprep.mubr.f32.mxu0 0.0
      %1700 = vmatmul.mubr.f32.gmra.mxu0 %v1193
      %v1701 = vpop.f32.mrf.mxu0
      %v1702 = vadd.f32 0.0, %v1701
      %v1703 = vpop.f32.mrf.mxu0
      %1704 = vmatprep.mubr.f32.mxu0 0.0
      %1705 = vmatmul.mubr.f32.gmra.mxu0 %v1195
      %v1706 = vpop.f32.mrf.mxu0
      %v1707 = vadd.f32 0.0, %v1706
      %v1708 = vpop.f32.mrf.mxu0
      %1709 = vmatprep.mubr.f32.mxu0 0.0
      %1710 = vmatmul.mubr.f32.gmra.mxu0 %v1197
      %v1711 = vpop.f32.mrf.mxu0
      %v1712 = vadd.f32 0.0, %v1711
      %v1713 = vpop.f32.mrf.mxu0
      %1714 = vmatprep.mubr.f32.mxu0 0.0
      %1715 = vmatmul.mubr.f32.gmra.mxu0 %v1199
      %v1716 = vpop.f32.mrf.mxu0
      %v1717 = vadd.f32 0.0, %v1716
      %v1718 = vpop.f32.mrf.mxu0
      %1719 = vmatprep.mubr.f32.mxu0 0.0
      %1720 = vmatmul.mubr.f32.gmra.mxu0 %v1201
      %v1721 = vpop.f32.mrf.mxu0
      %v1722 = vadd.f32 0.0, %v1721
      %v1723 = vpop.f32.mrf.mxu0
      %1724 = vmatprep.mubr.f32.mxu0 0.0
      %1725 = vmatmul.mubr.f32.gmra.mxu0 %v1203
      %v1726 = vpop.f32.mrf.mxu0
      %v1727 = vadd.f32 0.0, %v1726
      %v1728 = vpop.f32.mrf.mxu0
      %1729 = vmatprep.mubr.f32.mxu0 0.0
      %1730 = vmatmul.mubr.f32.gmra.mxu0 %v1205
      %v1731 = vpop.f32.mrf.mxu0
      %v1732 = vadd.f32 0.0, %v1731
      %v1733 = vpop.f32.mrf.mxu0
      %1734 = vmatprep.mubr.f32.mxu0 0.0
      %1735 = vmatmul.mubr.f32.gmra.mxu0 %v1207
      %v1736 = vpop.f32.mrf.mxu0
      %v1737 = vadd.f32 0.0, %v1736
      %v1738 = vpop.f32.mrf.mxu0
      %1739 = vmatprep.mubr.f32.mxu0 0.0
      %1740 = vmatmul.mubr.f32.gmra.mxu0 %v1209
      %v1741 = vpop.f32.mrf.mxu0
      %v1742 = vadd.f32 0.0, %v1741
      %v1743 = vpop.f32.mrf.mxu0
      %1744 = vmatprep.mubr.f32.mxu0 0.0
      %1745 = vmatmul.mubr.f32.gmra.mxu0 %v1503
      %v1746 = vpop.f32.mrf.mxu0
      %v1747 = vadd.f32 0.0, %v1746
      %v1748 = vpop.f32.mrf.mxu0
      %1749 = vmatprep.mubr.f32.mxu0 0.0
      %1750 = vmatmul.mubr.f32.gmra.mxu0 %v1505
      %v1751 = vpop.f32.mrf.mxu0
      %v1752 = vadd.f32 0.0, %v1751
      %v1753 = vpop.f32.mrf.mxu0
      %1754 = vdwg.mxu0
      %v1755 = vadd.f32 %v1459, %v1577
      %v1756 = vadd.f32 %v1460, %v1582
      %v1757 = vadd.f32 %v1461, %v1587
      %v1758 = vadd.f32 %v1462, %v1592
      %v1759 = vadd.f32 %v1463, %v1597
      %v1760 = vadd.f32 %v1464, %v1602
      %v1761 = vadd.f32 %v1465, %v1607
      %v1762 = vadd.f32 %v1466, %v1612
      %v1763 = vadd.f32 %v1467, %v1617
      %v1764 = vadd.f32 %v1468, %v1622
      %v1765 = vadd.f32 %v1469, %v1627
      %v1766 = vadd.f32 %v1470, %v1632
      %v1767 = vadd.f32 %v1471, %v1637
      %v1768 = vadd.f32 %v1472, %v1642
      %v1769 = vadd.f32 %v1473, %v1647
      %v1770 = vadd.f32 %v1474, %v1652
      %v1771 = vadd.f32 %v1475, %v1657
      %v1772 = vadd.f32 %v1476, %v1662
      %v1773 = vadd.f32 %v1477, %v1667
      %v1774 = vadd.f32 %v1478, %v1672
      %v1775 = vadd.f32 %v1479, %v1677
      %v1776 = vadd.f32 %v1480, %v1682
      %v1777 = vadd.f32 %v1481, %v1687
      %v1778 = vadd.f32 %v1482, %v1692
      %v1779 = vadd.f32 %v1483, %v1697
      %v1780 = vadd.f32 %v1484, %v1702
      %v1781 = vadd.f32 %v1485, %v1707
      %v1782 = vadd.f32 %v1486, %v1712
      %v1783 = vadd.f32 %v1487, %v1717
      %v1784 = vadd.f32 %v1488, %v1722
      %v1785 = vadd.f32 %v1489, %v1727
      %v1786 = vadd.f32 %v1490, %v1732
      %v1787 = vadd.f32 %v1491, %v1737
      %v1788 = vadd.f32 %v1492, %v1742
      %v1789 = vadd.f32 %v1493, %v1747
      %v1790 = vadd.f32 %v1494, %v1752
      %s1791 = scalar_lea.vmem %s1, 16
      %v1792 = vld [vmem:[%s1791] sm:$0xf]
      %vm1793 = vcmask 1044480
      %v1794 = vrot.slane %v268, 3
      %v1795 = vrot.slane %v269, 3
      %v1796 = vsel %vm1793, %v1794, %v1795
      %v1797 = vrot.slane %v270, 3
      %v1798 = vsel %vm1793, %v1795, %v1797
      %v1799 = vrot.slane %v271, 3
      %v1800 = vsel %vm1793, %v1797, %v1799
      %v1801 = vrot.slane %v272, 3
      %v1802 = vsel %vm1793, %v1799, %v1801
      %v1803 = vrot.slane %v273, 3
      %v1804 = vsel %vm1793, %v1801, %v1803
      %v1805 = vrot.slane %v274, 3
      %v1806 = vsel %vm1793, %v1803, %v1805
      %v1807 = vrot.slane %v275, 3
      %v1808 = vsel %vm1793, %v1805, %v1807
      %v1809 = vrot.slane %v276, 3
      %v1810 = vsel %vm1793, %v1807, %v1809
      %v1811 = vrot.slane %v277, 3
      %v1812 = vsel %vm1793, %v1809, %v1811
      %v1813 = vrot.slane %v278, 3
      %v1814 = vsel %vm1793, %v1811, %v1813
      %v1815 = vrot.slane %v279, 3
      %v1816 = vsel %vm1793, %v1813, %v1815
      %v1817 = vrot.slane %v280, 3
      %v1818 = vsel %vm1793, %v1815, %v1817
      %v1819 = vrot.slane %v281, 3
      %v1820 = vsel %vm1793, %v1817, %v1819
      %v1821 = vrot.slane %v282, 3
      %v1822 = vsel %vm1793, %v1819, %v1821
      %v1823 = vrot.slane %v283, 3
      %v1824 = vsel %vm1793, %v1821, %v1823
      %v1825 = vrot.slane %v284, 3
      %v1826 = vsel %vm1793, %v1823, %v1825
      %v1827 = vrot.slane %v285, 3
      %v1828 = vsel %vm1793, %v1825, %v1827
      %v1829 = vrot.slane %v286, 3
      %v1830 = vsel %vm1793, %v1827, %v1829
      %v1831 = vrot.slane %v287, 3
      %v1832 = vsel %vm1793, %v1829, %v1831
      %v1833 = vrot.slane %v288, 3
      %v1834 = vsel %vm1793, %v1831, %v1833
      %v1835 = vrot.slane %v289, 3
      %v1836 = vsel %vm1793, %v1833, %v1835
      %v1837 = vrot.slane %v290, 3
      %v1838 = vsel %vm1793, %v1835, %v1837
      %v1839 = vrot.slane %v291, 3
      %v1840 = vsel %vm1793, %v1837, %v1839
      %v1841 = vrot.slane %v292, 3
      %v1842 = vsel %vm1793, %v1839, %v1841
      %v1843 = vrot.slane %v293, 3
      %v1844 = vsel %vm1793, %v1841, %v1843
      %v1845 = vrot.slane %v294, 3
      %v1846 = vsel %vm1793, %v1843, %v1845
      %v1847 = vrot.slane %v295, 3
      %v1848 = vsel %vm1793, %v1845, %v1847
      %v1849 = vrot.slane %v296, 3
      %v1850 = vsel %vm1793, %v1847, %v1849
      %v1851 = vrot.slane %v297, 3
      %v1852 = vsel %vm1793, %v1849, %v1851
      %v1853 = vrot.slane %v298, 3
      %v1854 = vsel %vm1793, %v1851, %v1853
      %v1855 = vrot.slane %v299, 3
      %v1856 = vsel %vm1793, %v1853, %v1855
      %v1857 = vrot.slane %v300, 3
      %v1858 = vsel %vm1793, %v1855, %v1857
      %v1859 = vrot.slane %v301, 3
      %v1860 = vsel %vm1793, %v1857, %v1859
      %v1861 = vrot.slane %v302, 3
      %v1862 = vsel %vm1793, %v1859, %v1861
      %v1863 = vrot.slane %v303, 3
      %v1864 = vsel %vm1793, %v1861, %v1863
      %v1865 = vrot.slane %v304, 3
      %v1866 = vsel %vm1793, %v1863, %v1865
      %v1867 = vsel %vm421, %v1796, 0
      %v1869 = vsel %vm421, %v1798, 0
      %v1871 = vsel %vm421, %v1800, 0
      %v1873 = vsel %vm421, %v1802, 0
      %v1875 = vsel %vm421, %v1804, 0
      %v1877 = vsel %vm421, %v1806, 0
      %v1879 = vsel %vm421, %v1808, 0
      %v1881 = vsel %vm421, %v1810, 0
      %v1883 = vsel %vm421, %v1812, 0
      %v1885 = vsel %vm421, %v1814, 0
      %v1887 = vsel %vm421, %v1816, 0
      %v1889 = vsel %vm421, %v1818, 0
      %v1891 = vsel %vm421, %v1820, 0
      %v1893 = vsel %vm421, %v1822, 0
      %v1895 = vsel %vm421, %v1824, 0
      %v1897 = vsel %vm421, %v1826, 0
      %v1899 = vsel %vm421, %v1828, 0
      %v1901 = vsel %vm421, %v1830, 0
      %v1903 = vsel %vm421, %v1832, 0
      %v1905 = vsel %vm421, %v1834, 0
      %v1907 = vsel %vm421, %v1836, 0
      %v1909 = vsel %vm421, %v1838, 0
      %v1911 = vsel %vm421, %v1840, 0
      %v1913 = vsel %vm421, %v1842, 0
      %v1915 = vsel %vm421, %v1844, 0
      %v1917 = vsel %vm421, %v1846, 0
      %v1919 = vsel %vm421, %v1848, 0
      %v1921 = vsel %vm421, %v1850, 0
      %v1923 = vsel %vm421, %v1852, 0
      %v1925 = vsel %vm421, %v1854, 0
      %v1927 = vsel %vm421, %v1856, 0
      %v1929 = vsel %vm421, %v1858, 0
      %v1931 = vsel %vm421, %v1860, 0
      %v1933 = vsel %vm421, %v1862, 0
      %v1935 = vsel %vm421, %v1864, 0
      %v1937 = vsel %vm421, %v1866, 0
      %v1940 = vsel %vm494, %v1792, 0
      %1942 = vmatprep.subr.mxu0 0.0
      %1943 = vmatpush1.msra.mxu0 0.0
      %1944 = vmatprep.subr.mxu0 0.0
      %1945 = vmatpush1.msra.mxu0 0.0
      %1946 = vmatprep.subr.mxu0 0.0
      %1947 = vmatpush1.msra.mxu0 0.0
      %1948 = vmatprep.subr.mxu0 0.0
      %1949 = vmatpush1.msra.mxu0 0.0
      %1950 = vmatprep.subr.mxu0 0.0
      %1951 = vmatpush1.msra.mxu0 0.0
      %1952 = vmatprep.subr.mxu0 0.0
      %1953 = vmatpush1.msra.mxu0 0.0
      %1954 = vmatprep.subr.mxu0 0.0
      %1955 = vmatpush1.msra.mxu0 0.0
      %1956 = vmatprep.subr.mxu0 0.0
      %1957 = vmatpush1.msra.mxu0 0.0
      %1958 = vmatprep.subr.mxu0 0.0
      %1959 = vmatpush1.msra.mxu0 0.0
      %1960 = vmatprep.subr.mxu0 0.0
      %1961 = vmatpush1.msra.mxu0 0.0
      %1962 = vmatprep.subr.mxu0 0.0
      %1963 = vmatpush1.msra.mxu0 0.0
      %1964 = vmatprep.subr.mxu0 0.0
      %1965 = vmatpush1.msra.mxu0 0.0
      %1966 = vmatprep.subr.mxu0 0.0
      %1967 = vmatpush1.msra.mxu0 0.0
      %1968 = vmatprep.subr.mxu0 0.0
      %1969 = vmatpush1.msra.mxu0 0.0
      %1970 = vmatprep.subr.mxu0 0.0
      %1971 = vmatpush1.msra.mxu0 0.0
      %1972 = vmatprep.subr.mxu0 0.0
      %1973 = vmatpush1.msra.mxu0 %v1940
      %1974 = vmatprep.subr.mxu0 0.0
      %1975 = vmatpush2.msra.mxu0 0.0
      %1976 = vmatprep.subr.mxu0 0.0
      %1977 = vmatpush2.msra.mxu0 0.0
      %1978 = vmatprep.subr.mxu0 0.0
      %1979 = vmatpush2.msra.mxu0 0.0
      %1980 = vmatprep.subr.mxu0 0.0
      %1981 = vmatpush2.msra.mxu0 0.0
      %1982 = vmatprep.subr.mxu0 0.0
      %1983 = vmatpush2.msra.mxu0 0.0
      %1984 = vmatprep.subr.mxu0 0.0
      %1985 = vmatpush2.msra.mxu0 0.0
      %1986 = vmatprep.subr.mxu0 0.0
      %1987 = vmatpush2.msra.mxu0 0.0
      %1988 = vmatprep.subr.mxu0 0.0
      %1989 = vmatpush2.msra.mxu0 0.0
      %1990 = vmatprep.subr.mxu0 0.0
      %1991 = vmatpush2.msra.mxu0 0.0
      %1992 = vmatprep.subr.mxu0 0.0
      %1993 = vmatpush2.msra.mxu0 0.0
      %1994 = vmatprep.subr.mxu0 0.0
      %1995 = vmatpush2.msra.mxu0 0.0
      %1996 = vmatprep.subr.mxu0 0.0
      %1997 = vmatpush2.msra.mxu0 0.0
      %1998 = vmatprep.subr.mxu0 0.0
      %1999 = vmatpush2.msra.mxu0 0.0
      %2000 = vmatprep.subr.mxu0 0.0
      %2001 = vmatpush2.msra.mxu0 0.0
      %2002 = vmatprep.subr.mxu0 0.0
      %2003 = vmatpush2.msra.mxu0 0.0
      %2004 = vmatprep.subr.mxu0 0.0
      %2005 = vmatpush2.msra.mxu0 0.0
      %2006 = vmatprep.mubr.f32.mxu0 0.0
      %2007 = vmatmul.mubr.f32.gmra.mxu0 %v1867
      %v2008 = vpop.f32.mrf.mxu0
      %v2009 = vadd.f32 0.0, %v2008
      %v2010 = vpop.f32.mrf.mxu0
      %2011 = vmatprep.mubr.f32.mxu0 0.0
      %2012 = vmatmul.mubr.f32.gmra.mxu0 %v1869
      %v2013 = vpop.f32.mrf.mxu0
      %v2014 = vadd.f32 0.0, %v2013
      %v2015 = vpop.f32.mrf.mxu0
      %2016 = vmatprep.mubr.f32.mxu0 0.0
      %2017 = vmatmul.mubr.f32.gmra.mxu0 %v1871
      %v2018 = vpop.f32.mrf.mxu0
      %v2019 = vadd.f32 0.0, %v2018
      %v2020 = vpop.f32.mrf.mxu0
      %2021 = vmatprep.mubr.f32.mxu0 0.0
      %2022 = vmatmul.mubr.f32.gmra.mxu0 %v1873
      %v2023 = vpop.f32.mrf.mxu0
      %v2024 = vadd.f32 0.0, %v2023
      %v2025 = vpop.f32.mrf.mxu0
      %2026 = vmatprep.mubr.f32.mxu0 0.0
      %2027 = vmatmul.mubr.f32.gmra.mxu0 %v1875
      %v2028 = vpop.f32.mrf.mxu0
      %v2029 = vadd.f32 0.0, %v2028
      %v2030 = vpop.f32.mrf.mxu0
      %2031 = vmatprep.mubr.f32.mxu0 0.0
      %2032 = vmatmul.mubr.f32.gmra.mxu0 %v1877
      %v2033 = vpop.f32.mrf.mxu0
      %v2034 = vadd.f32 0.0, %v2033
      %v2035 = vpop.f32.mrf.mxu0
      %2036 = vmatprep.mubr.f32.mxu0 0.0
      %2037 = vmatmul.mubr.f32.gmra.mxu0 %v1879
      %v2038 = vpop.f32.mrf.mxu0
      %v2039 = vadd.f32 0.0, %v2038
      %v2040 = vpop.f32.mrf.mxu0
      %2041 = vmatprep.mubr.f32.mxu0 0.0
      %2042 = vmatmul.mubr.f32.gmra.mxu0 %v1881
      %v2043 = vpop.f32.mrf.mxu0
      %v2044 = vadd.f32 0.0, %v2043
      %v2045 = vpop.f32.mrf.mxu0
      %2046 = vmatprep.mubr.f32.mxu0 0.0
      %2047 = vmatmul.mubr.f32.gmra.mxu0 %v1883
      %v2048 = vpop.f32.mrf.mxu0
      %v2049 = vadd.f32 0.0, %v2048
      %v2050 = vpop.f32.mrf.mxu0
      %2051 = vmatprep.mubr.f32.mxu0 0.0
      %2052 = vmatmul.mubr.f32.gmra.mxu0 %v1885
      %v2053 = vpop.f32.mrf.mxu0
      %v2054 = vadd.f32 0.0, %v2053
      %v2055 = vpop.f32.mrf.mxu0
      %2056 = vmatprep.mubr.f32.mxu0 0.0
      %2057 = vmatmul.mubr.f32.gmra.mxu0 %v1887
      %v2058 = vpop.f32.mrf.mxu0
      %v2059 = vadd.f32 0.0, %v2058
      %v2060 = vpop.f32.mrf.mxu0
      %2061 = vmatprep.mubr.f32.mxu0 0.0
      %2062 = vmatmul.mubr.f32.gmra.mxu0 %v1889
      %v2063 = vpop.f32.mrf.mxu0
      %v2064 = vadd.f32 0.0, %v2063
      %v2065 = vpop.f32.mrf.mxu0
      %2066 = vmatprep.mubr.f32.mxu0 0.0
      %2067 = vmatmul.mubr.f32.gmra.mxu0 %v1891
      %v2068 = vpop.f32.mrf.mxu0
      %v2069 = vadd.f32 0.0, %v2068
      %v2070 = vpop.f32.mrf.mxu0
      %2071 = vmatprep.mubr.f32.mxu0 0.0
      %2072 = vmatmul.mubr.f32.gmra.mxu0 %v1893
      %v2073 = vpop.f32.mrf.mxu0
      %v2074 = vadd.f32 0.0, %v2073
      %v2075 = vpop.f32.mrf.mxu0
      %2076 = vmatprep.mubr.f32.mxu0 0.0
      %2077 = vmatmul.mubr.f32.gmra.mxu0 %v1895
      %v2078 = vpop.f32.mrf.mxu0
      %v2079 = vadd.f32 0.0, %v2078
      %v2080 = vpop.f32.mrf.mxu0
      %2081 = vmatprep.mubr.f32.mxu0 0.0
      %2082 = vmatmul.mubr.f32.gmra.mxu0 %v1897
      %v2083 = vpop.f32.mrf.mxu0
      %v2084 = vadd.f32 0.0, %v2083
      %v2085 = vpop.f32.mrf.mxu0
      %2086 = vmatprep.mubr.f32.mxu0 0.0
      %2087 = vmatmul.mubr.f32.gmra.mxu0 %v1899
      %v2088 = vpop.f32.mrf.mxu0
      %v2089 = vadd.f32 0.0, %v2088
      %v2090 = vpop.f32.mrf.mxu0
      %2091 = vmatprep.mubr.f32.mxu0 0.0
      %2092 = vmatmul.mubr.f32.gmra.mxu0 %v1901
      %v2093 = vpop.f32.mrf.mxu0
      %v2094 = vadd.f32 0.0, %v2093
      %v2095 = vpop.f32.mrf.mxu0
      %2096 = vmatprep.mubr.f32.mxu0 0.0
      %2097 = vmatmul.mubr.f32.gmra.mxu0 %v1903
      %v2098 = vpop.f32.mrf.mxu0
      %v2099 = vadd.f32 0.0, %v2098
      %v2100 = vpop.f32.mrf.mxu0
      %2101 = vmatprep.mubr.f32.mxu0 0.0
      %2102 = vmatmul.mubr.f32.gmra.mxu0 %v1905
      %v2103 = vpop.f32.mrf.mxu0
      %v2104 = vadd.f32 0.0, %v2103
      %v2105 = vpop.f32.mrf.mxu0
      %2106 = vmatprep.mubr.f32.mxu0 0.0
      %2107 = vmatmul.mubr.f32.gmra.mxu0 %v1907
      %v2108 = vpop.f32.mrf.mxu0
      %v2109 = vadd.f32 0.0, %v2108
      %v2110 = vpop.f32.mrf.mxu0
      %2111 = vmatprep.mubr.f32.mxu0 0.0
      %2112 = vmatmul.mubr.f32.gmra.mxu0 %v1909
      %v2113 = vpop.f32.mrf.mxu0
      %v2114 = vadd.f32 0.0, %v2113
      %v2115 = vpop.f32.mrf.mxu0
      %2116 = vmatprep.mubr.f32.mxu0 0.0
      %2117 = vmatmul.mubr.f32.gmra.mxu0 %v1911
      %v2118 = vpop.f32.mrf.mxu0
      %v2119 = vadd.f32 0.0, %v2118
      %v2120 = vpop.f32.mrf.mxu0
      %2121 = vmatprep.mubr.f32.mxu0 0.0
      %2122 = vmatmul.mubr.f32.gmra.mxu0 %v1913
      %v2123 = vpop.f32.mrf.mxu0
      %v2124 = vadd.f32 0.0, %v2123
      %v2125 = vpop.f32.mrf.mxu0
      %2126 = vmatprep.mubr.f32.mxu0 0.0
      %2127 = vmatmul.mubr.f32.gmra.mxu0 %v1915
      %v2128 = vpop.f32.mrf.mxu0
      %v2129 = vadd.f32 0.0, %v2128
      %v2130 = vpop.f32.mrf.mxu0
      %2131 = vmatprep.mubr.f32.mxu0 0.0
      %2132 = vmatmul.mubr.f32.gmra.mxu0 %v1917
      %v2133 = vpop.f32.mrf.mxu0
      %v2134 = vadd.f32 0.0, %v2133
      %v2135 = vpop.f32.mrf.mxu0
      %2136 = vmatprep.mubr.f32.mxu0 0.0
      %2137 = vmatmul.mubr.f32.gmra.mxu0 %v1919
      %v2138 = vpop.f32.mrf.mxu0
      %v2139 = vadd.f32 0.0, %v2138
      %v2140 = vpop.f32.mrf.mxu0
      %2141 = vmatprep.mubr.f32.mxu0 0.0
      %2142 = vmatmul.mubr.f32.gmra.mxu0 %v1921
      %v2143 = vpop.f32.mrf.mxu0
      %v2144 = vadd.f32 0.0, %v2143
      %v2145 = vpop.f32.mrf.mxu0
      %2146 = vmatprep.mubr.f32.mxu0 0.0
      %2147 = vmatmul.mubr.f32.gmra.mxu0 %v1923
      %v2148 = vpop.f32.mrf.mxu0
      %v2149 = vadd.f32 0.0, %v2148
      %v2150 = vpop.f32.mrf.mxu0
      %2151 = vmatprep.mubr.f32.mxu0 0.0
      %2152 = vmatmul.mubr.f32.gmra.mxu0 %v1925
      %v2153 = vpop.f32.mrf.mxu0
      %v2154 = vadd.f32 0.0, %v2153
      %v2155 = vpop.f32.mrf.mxu0
      %2156 = vmatprep.mubr.f32.mxu0 0.0
      %2157 = vmatmul.mubr.f32.gmra.mxu0 %v1927
      %v2158 = vpop.f32.mrf.mxu0
      %v2159 = vadd.f32 0.0, %v2158
      %v2160 = vpop.f32.mrf.mxu0
      %2161 = vmatprep.mubr.f32.mxu0 0.0
      %2162 = vmatmul.mubr.f32.gmra.mxu0 %v1929
      %v2163 = vpop.f32.mrf.mxu0
      %v2164 = vadd.f32 0.0, %v2163
      %v2165 = vpop.f32.mrf.mxu0
      %2166 = vmatprep.mubr.f32.mxu0 0.0
      %2167 = vmatmul.mubr.f32.gmra.mxu0 %v1931
      %v2168 = vpop.f32.mrf.mxu0
      %v2169 = vadd.f32 0.0, %v2168
      %v2170 = vpop.f32.mrf.mxu0
      %2171 = vmatprep.mubr.f32.mxu0 0.0
      %2172 = vmatmul.mubr.f32.gmra.mxu0 %v1933
      %v2173 = vpop.f32.mrf.mxu0
      %v2174 = vadd.f32 0.0, %v2173
      %v2175 = vpop.f32.mrf.mxu0
      %2176 = vmatprep.mubr.f32.mxu0 0.0
      %2177 = vmatmul.mubr.f32.gmra.mxu0 %v1935
      %v2178 = vpop.f32.mrf.mxu0
      %v2179 = vadd.f32 0.0, %v2178
      %v2180 = vpop.f32.mrf.mxu0
      %2181 = vmatprep.mubr.f32.mxu0 0.0
      %2182 = vmatmul.mubr.f32.gmra.mxu0 %v1937
      %v2183 = vpop.f32.mrf.mxu0
      %v2184 = vadd.f32 0.0, %v2183
      %v2185 = vpop.f32.mrf.mxu0
      %2186 = vdwg.mxu0
      %v2187 = vadd.f32 %v1755, %v2009
      %v2188 = vadd.f32 %v1756, %v2014
      %v2189 = vadd.f32 %v1757, %v2019
      %v2190 = vadd.f32 %v1758, %v2024
      %v2191 = vadd.f32 %v1759, %v2029
      %v2192 = vadd.f32 %v1760, %v2034
      %v2193 = vadd.f32 %v1761, %v2039
      %v2194 = vadd.f32 %v1762, %v2044
      %v2195 = vadd.f32 %v1763, %v2049
      %v2196 = vadd.f32 %v1764, %v2054
      %v2197 = vadd.f32 %v1765, %v2059
      %v2198 = vadd.f32 %v1766, %v2064
      %v2199 = vadd.f32 %v1767, %v2069
      %v2200 = vadd.f32 %v1768, %v2074
      %v2201 = vadd.f32 %v1769, %v2079
      %v2202 = vadd.f32 %v1770, %v2084
      %v2203 = vadd.f32 %v1771, %v2089
      %v2204 = vadd.f32 %v1772, %v2094
      %v2205 = vadd.f32 %v1773, %v2099
      %v2206 = vadd.f32 %v1774, %v2104
      %v2207 = vadd.f32 %v1775, %v2109
      %v2208 = vadd.f32 %v1776, %v2114
      %v2209 = vadd.f32 %v1777, %v2119
      %v2210 = vadd.f32 %v1778, %v2124
      %v2211 = vadd.f32 %v1779, %v2129
      %v2212 = vadd.f32 %v1780, %v2134
      %v2213 = vadd.f32 %v1781, %v2139
      %v2214 = vadd.f32 %v1782, %v2144
      %v2215 = vadd.f32 %v1783, %v2149
      %v2216 = vadd.f32 %v1784, %v2154
      %v2217 = vadd.f32 %v1785, %v2159
      %v2218 = vadd.f32 %v1786, %v2164
      %v2219 = vadd.f32 %v1787, %v2169
      %v2220 = vadd.f32 %v1788, %v2174
      %v2221 = vadd.f32 %v1789, %v2179
      %v2222 = vadd.f32 %v1790, %v2184
      %s2223 = scalar_lea.vmem %s1, 20
      %v2224 = vld [vmem:[%s2223] sm:$0xf]
      %v2225 = vrot.slane %v268, 4
      %v2226 = vrot.slane %v269, 4
      %v2227 = vsel %vm494, %v2225, %v2226
      %v2228 = vrot.slane %v270, 4
      %v2229 = vsel %vm494, %v2226, %v2228
      %v2230 = vrot.slane %v271, 4
      %v2231 = vsel %vm494, %v2228, %v2230
      %v2232 = vrot.slane %v272, 4
      %v2233 = vsel %vm494, %v2230, %v2232
      %v2234 = vrot.slane %v273, 4
      %v2235 = vsel %vm494, %v2232, %v2234
      %v2236 = vrot.slane %v274, 4
      %v2237 = vsel %vm494, %v2234, %v2236
      %v2238 = vrot.slane %v275, 4
      %v2239 = vsel %vm494, %v2236, %v2238
      %v2240 = vrot.slane %v276, 4
      %v2241 = vsel %vm494, %v2238, %v2240
      %v2242 = vrot.slane %v277, 4
      %v2243 = vsel %vm494, %v2240, %v2242
      %v2244 = vrot.slane %v278, 4
      %v2245 = vsel %vm494, %v2242, %v2244
      %v2246 = vrot.slane %v279, 4
      %v2247 = vsel %vm494, %v2244, %v2246
      %v2248 = vrot.slane %v280, 4
      %v2249 = vsel %vm494, %v2246, %v2248
      %v2250 = vrot.slane %v281, 4
      %v2251 = vsel %vm494, %v2248, %v2250
      %v2252 = vrot.slane %v282, 4
      %v2253 = vsel %vm494, %v2250, %v2252
      %v2254 = vrot.slane %v283, 4
      %v2255 = vsel %vm494, %v2252, %v2254
      %v2256 = vrot.slane %v284, 4
      %v2257 = vsel %vm494, %v2254, %v2256
      %v2258 = vrot.slane %v285, 4
      %v2259 = vsel %vm494, %v2256, %v2258
      %v2260 = vrot.slane %v286, 4
      %v2261 = vsel %vm494, %v2258, %v2260
      %v2262 = vrot.slane %v287, 4
      %v2263 = vsel %vm494, %v2260, %v2262
      %v2264 = vrot.slane %v288, 4
      %v2265 = vsel %vm494, %v2262, %v2264
      %v2266 = vrot.slane %v289, 4
      %v2267 = vsel %vm494, %v2264, %v2266
      %v2268 = vrot.slane %v290, 4
      %v2269 = vsel %vm494, %v2266, %v2268
      %v2270 = vrot.slane %v291, 4
      %v2271 = vsel %vm494, %v2268, %v2270
      %v2272 = vrot.slane %v292, 4
      %v2273 = vsel %vm494, %v2270, %v2272
      %v2274 = vrot.slane %v293, 4
      %v2275 = vsel %vm494, %v2272, %v2274
      %v2276 = vrot.slane %v294, 4
      %v2277 = vsel %vm494, %v2274, %v2276
      %v2278 = vrot.slane %v295, 4
      %v2279 = vsel %vm494, %v2276, %v2278
      %v2280 = vrot.slane %v296, 4
      %v2281 = vsel %vm494, %v2278, %v2280
      %v2282 = vrot.slane %v297, 4
      %v2283 = vsel %vm494, %v2280, %v2282
      %v2284 = vrot.slane %v298, 4
      %v2285 = vsel %vm494, %v2282, %v2284
      %v2286 = vrot.slane %v299, 4
      %v2287 = vsel %vm494, %v2284, %v2286
      %v2288 = vrot.slane %v300, 4
      %v2289 = vsel %vm494, %v2286, %v2288
      %v2290 = vrot.slane %v301, 4
      %v2291 = vsel %vm494, %v2288, %v2290
      %v2292 = vrot.slane %v302, 4
      %v2293 = vsel %vm494, %v2290, %v2292
      %v2294 = vrot.slane %v303, 4
      %v2295 = vsel %vm494, %v2292, %v2294
      %v2296 = vrot.slane %v304, 4
      %v2297 = vsel %vm494, %v2294, %v2296
      %v2298 = vsel %vm421, %v2227, 0
      %v2300 = vsel %vm421, %v2229, 0
      %v2302 = vsel %vm421, %v2231, 0
      %v2304 = vsel %vm421, %v2233, 0
      %v2306 = vsel %vm421, %v2235, 0
      %v2308 = vsel %vm421, %v2237, 0
      %v2310 = vsel %vm421, %v2239, 0
      %v2312 = vsel %vm421, %v2241, 0
      %v2314 = vsel %vm421, %v2243, 0
      %v2316 = vsel %vm421, %v2245, 0
      %v2318 = vsel %vm421, %v2247, 0
      %v2320 = vsel %vm421, %v2249, 0
      %v2322 = vsel %vm421, %v2251, 0
      %v2324 = vsel %vm421, %v2253, 0
      %v2326 = vsel %vm421, %v2255, 0
      %v2328 = vsel %vm421, %v2257, 0
      %v2330 = vsel %vm421, %v2259, 0
      %v2332 = vsel %vm421, %v2261, 0
      %v2334 = vsel %vm421, %v2263, 0
      %v2336 = vsel %vm421, %v2265, 0
      %v2338 = vsel %vm421, %v2267, 0
      %v2340 = vsel %vm421, %v2269, 0
      %v2342 = vsel %vm421, %v2271, 0
      %v2344 = vsel %vm421, %v2273, 0
      %v2346 = vsel %vm421, %v2275, 0
      %v2348 = vsel %vm421, %v2277, 0
      %v2350 = vsel %vm421, %v2279, 0
      %v2352 = vsel %vm421, %v2281, 0
      %v2354 = vsel %vm421, %v2283, 0
      %v2356 = vsel %vm421, %v2285, 0
      %v2358 = vsel %vm421, %v2287, 0
      %v2360 = vsel %vm421, %v2289, 0
      %v2362 = vsel %vm421, %v2291, 0
      %v2364 = vsel %vm421, %v2293, 0
      %v2366 = vsel %vm421, %v2295, 0
      %v2368 = vsel %vm421, %v2297, 0
      %v2371 = vsel %vm494, %v2224, 0
      %2373 = vmatprep.subr.mxu0 0.0
      %2374 = vmatpush1.msra.mxu0 0.0
      %2375 = vmatprep.subr.mxu0 0.0
      %2376 = vmatpush1.msra.mxu0 0.0
      %2377 = vmatprep.subr.mxu0 0.0
      %2378 = vmatpush1.msra.mxu0 0.0
      %2379 = vmatprep.subr.mxu0 0.0
      %2380 = vmatpush1.msra.mxu0 0.0
      %2381 = vmatprep.subr.mxu0 0.0
      %2382 = vmatpush1.msra.mxu0 0.0
      %2383 = vmatprep.subr.mxu0 0.0
      %2384 = vmatpush1.msra.mxu0 0.0
      %2385 = vmatprep.subr.mxu0 0.0
      %2386 = vmatpush1.msra.mxu0 0.0
      %2387 = vmatprep.subr.mxu0 0.0
      %2388 = vmatpush1.msra.mxu0 0.0
      %2389 = vmatprep.subr.mxu0 0.0
      %2390 = vmatpush1.msra.mxu0 0.0
      %2391 = vmatprep.subr.mxu0 0.0
      %2392 = vmatpush1.msra.mxu0 0.0
      %2393 = vmatprep.subr.mxu0 0.0
      %2394 = vmatpush1.msra.mxu0 0.0
      %2395 = vmatprep.subr.mxu0 0.0
      %2396 = vmatpush1.msra.mxu0 0.0
      %2397 = vmatprep.subr.mxu0 0.0
      %2398 = vmatpush1.msra.mxu0 0.0
      %2399 = vmatprep.subr.mxu0 0.0
      %2400 = vmatpush1.msra.mxu0 0.0
      %2401 = vmatprep.subr.mxu0 0.0
      %2402 = vmatpush1.msra.mxu0 0.0
      %2403 = vmatprep.subr.mxu0 0.0
      %2404 = vmatpush1.msra.mxu0 %v2371
      %2405 = vmatprep.subr.mxu0 0.0
      %2406 = vmatpush2.msra.mxu0 0.0
      %2407 = vmatprep.subr.mxu0 0.0
      %2408 = vmatpush2.msra.mxu0 0.0
      %2409 = vmatprep.subr.mxu0 0.0
      %2410 = vmatpush2.msra.mxu0 0.0
      %2411 = vmatprep.subr.mxu0 0.0
      %2412 = vmatpush2.msra.mxu0 0.0
      %2413 = vmatprep.subr.mxu0 0.0
      %2414 = vmatpush2.msra.mxu0 0.0
      %2415 = vmatprep.subr.mxu0 0.0
      %2416 = vmatpush2.msra.mxu0 0.0
      %2417 = vmatprep.subr.mxu0 0.0
      %2418 = vmatpush2.msra.mxu0 0.0
      %2419 = vmatprep.subr.mxu0 0.0
      %2420 = vmatpush2.msra.mxu0 0.0
      %2421 = vmatprep.subr.mxu0 0.0
      %2422 = vmatpush2.msra.mxu0 0.0
      %2423 = vmatprep.subr.mxu0 0.0
      %2424 = vmatpush2.msra.mxu0 0.0
      %2425 = vmatprep.subr.mxu0 0.0
      %2426 = vmatpush2.msra.mxu0 0.0
      %2427 = vmatprep.subr.mxu0 0.0
      %2428 = vmatpush2.msra.mxu0 0.0
      %2429 = vmatprep.subr.mxu0 0.0
      %2430 = vmatpush2.msra.mxu0 0.0
      %2431 = vmatprep.subr.mxu0 0.0
      %2432 = vmatpush2.msra.mxu0 0.0
      %2433 = vmatprep.subr.mxu0 0.0
      %2434 = vmatpush2.msra.mxu0 0.0
      %2435 = vmatprep.subr.mxu0 0.0
      %2436 = vmatpush2.msra.mxu0 0.0
      %2437 = vmatprep.mubr.f32.mxu0 0.0
      %2438 = vmatmul.mubr.f32.gmra.mxu0 %v2298
      %v2439 = vpop.f32.mrf.mxu0
      %v2440 = vadd.f32 0.0, %v2439
      %v2441 = vpop.f32.mrf.mxu0
      %2442 = vmatprep.mubr.f32.mxu0 0.0
      %2443 = vmatmul.mubr.f32.gmra.mxu0 %v2300
      %v2444 = vpop.f32.mrf.mxu0
      %v2445 = vadd.f32 0.0, %v2444
      %v2446 = vpop.f32.mrf.mxu0
      %2447 = vmatprep.mubr.f32.mxu0 0.0
      %2448 = vmatmul.mubr.f32.gmra.mxu0 %v2302
      %v2449 = vpop.f32.mrf.mxu0
      %v2450 = vadd.f32 0.0, %v2449
      %v2451 = vpop.f32.mrf.mxu0
      %2452 = vmatprep.mubr.f32.mxu0 0.0
      %2453 = vmatmul.mubr.f32.gmra.mxu0 %v2304
      %v2454 = vpop.f32.mrf.mxu0
      %v2455 = vadd.f32 0.0, %v2454
      %v2456 = vpop.f32.mrf.mxu0
      %2457 = vmatprep.mubr.f32.mxu0 0.0
      %2458 = vmatmul.mubr.f32.gmra.mxu0 %v2306
      %v2459 = vpop.f32.mrf.mxu0
      %v2460 = vadd.f32 0.0, %v2459
      %v2461 = vpop.f32.mrf.mxu0
      %2462 = vmatprep.mubr.f32.mxu0 0.0
      %2463 = vmatmul.mubr.f32.gmra.mxu0 %v2308
      %v2464 = vpop.f32.mrf.mxu0
      %v2465 = vadd.f32 0.0, %v2464
      %v2466 = vpop.f32.mrf.mxu0
      %2467 = vmatprep.mubr.f32.mxu0 0.0
      %2468 = vmatmul.mubr.f32.gmra.mxu0 %v2310
      %v2469 = vpop.f32.mrf.mxu0
      %v2470 = vadd.f32 0.0, %v2469
      %v2471 = vpop.f32.mrf.mxu0
      %2472 = vmatprep.mubr.f32.mxu0 0.0
      %2473 = vmatmul.mubr.f32.gmra.mxu0 %v2312
      %v2474 = vpop.f32.mrf.mxu0
      %v2475 = vadd.f32 0.0, %v2474
      %v2476 = vpop.f32.mrf.mxu0
      %2477 = vmatprep.mubr.f32.mxu0 0.0
      %2478 = vmatmul.mubr.f32.gmra.mxu0 %v2314
      %v2479 = vpop.f32.mrf.mxu0
      %v2480 = vadd.f32 0.0, %v2479
      %v2481 = vpop.f32.mrf.mxu0
      %2482 = vmatprep.mubr.f32.mxu0 0.0
      %2483 = vmatmul.mubr.f32.gmra.mxu0 %v2316
      %v2484 = vpop.f32.mrf.mxu0
      %v2485 = vadd.f32 0.0, %v2484
      %v2486 = vpop.f32.mrf.mxu0
      %2487 = vmatprep.mubr.f32.mxu0 0.0
      %2488 = vmatmul.mubr.f32.gmra.mxu0 %v2318
      %v2489 = vpop.f32.mrf.mxu0
      %v2490 = vadd.f32 0.0, %v2489
      %v2491 = vpop.f32.mrf.mxu0
      %2492 = vmatprep.mubr.f32.mxu0 0.0
      %2493 = vmatmul.mubr.f32.gmra.mxu0 %v2320
      %v2494 = vpop.f32.mrf.mxu0
      %v2495 = vadd.f32 0.0, %v2494
      %v2496 = vpop.f32.mrf.mxu0
      %2497 = vmatprep.mubr.f32.mxu0 0.0
      %2498 = vmatmul.mubr.f32.gmra.mxu0 %v2322
      %v2499 = vpop.f32.mrf.mxu0
      %v2500 = vadd.f32 0.0, %v2499
      %v2501 = vpop.f32.mrf.mxu0
      %2502 = vmatprep.mubr.f32.mxu0 0.0
      %2503 = vmatmul.mubr.f32.gmra.mxu0 %v2324
      %v2504 = vpop.f32.mrf.mxu0
      %v2505 = vadd.f32 0.0, %v2504
      %v2506 = vpop.f32.mrf.mxu0
      %2507 = vmatprep.mubr.f32.mxu0 0.0
      %2508 = vmatmul.mubr.f32.gmra.mxu0 %v2326
      %v2509 = vpop.f32.mrf.mxu0
      %v2510 = vadd.f32 0.0, %v2509
      %v2511 = vpop.f32.mrf.mxu0
      %2512 = vmatprep.mubr.f32.mxu0 0.0
      %2513 = vmatmul.mubr.f32.gmra.mxu0 %v2328
      %v2514 = vpop.f32.mrf.mxu0
      %v2515 = vadd.f32 0.0, %v2514
      %v2516 = vpop.f32.mrf.mxu0
      %2517 = vmatprep.mubr.f32.mxu0 0.0
      %2518 = vmatmul.mubr.f32.gmra.mxu0 %v2330
      %v2519 = vpop.f32.mrf.mxu0
      %v2520 = vadd.f32 0.0, %v2519
      %v2521 = vpop.f32.mrf.mxu0
      %2522 = vmatprep.mubr.f32.mxu0 0.0
      %2523 = vmatmul.mubr.f32.gmra.mxu0 %v2332
      %v2524 = vpop.f32.mrf.mxu0
      %v2525 = vadd.f32 0.0, %v2524
      %v2526 = vpop.f32.mrf.mxu0
      %2527 = vmatprep.mubr.f32.mxu0 0.0
      %2528 = vmatmul.mubr.f32.gmra.mxu0 %v2334
      %v2529 = vpop.f32.mrf.mxu0
      %v2530 = vadd.f32 0.0, %v2529
      %v2531 = vpop.f32.mrf.mxu0
      %2532 = vmatprep.mubr.f32.mxu0 0.0
      %2533 = vmatmul.mubr.f32.gmra.mxu0 %v2336
      %v2534 = vpop.f32.mrf.mxu0
      %v2535 = vadd.f32 0.0, %v2534
      %v2536 = vpop.f32.mrf.mxu0
      %2537 = vmatprep.mubr.f32.mxu0 0.0
      %2538 = vmatmul.mubr.f32.gmra.mxu0 %v2338
      %v2539 = vpop.f32.mrf.mxu0
      %v2540 = vadd.f32 0.0, %v2539
      %v2541 = vpop.f32.mrf.mxu0
      %2542 = vmatprep.mubr.f32.mxu0 0.0
      %2543 = vmatmul.mubr.f32.gmra.mxu0 %v2340
      %v2544 = vpop.f32.mrf.mxu0
      %v2545 = vadd.f32 0.0, %v2544
      %v2546 = vpop.f32.mrf.mxu0
      %2547 = vmatprep.mubr.f32.mxu0 0.0
      %2548 = vmatmul.mubr.f32.gmra.mxu0 %v2342
      %v2549 = vpop.f32.mrf.mxu0
      %v2550 = vadd.f32 0.0, %v2549
      %v2551 = vpop.f32.mrf.mxu0
      %2552 = vmatprep.mubr.f32.mxu0 0.0
      %2553 = vmatmul.mubr.f32.gmra.mxu0 %v2344
      %v2554 = vpop.f32.mrf.mxu0
      %v2555 = vadd.f32 0.0, %v2554
      %v2556 = vpop.f32.mrf.mxu0
      %2557 = vmatprep.mubr.f32.mxu0 0.0
      %2558 = vmatmul.mubr.f32.gmra.mxu0 %v2346
      %v2559 = vpop.f32.mrf.mxu0
      %v2560 = vadd.f32 0.0, %v2559
      %v2561 = vpop.f32.mrf.mxu0
      %2562 = vmatprep.mubr.f32.mxu0 0.0
      %2563 = vmatmul.mubr.f32.gmra.mxu0 %v2348
      %v2564 = vpop.f32.mrf.mxu0
      %v2565 = vadd.f32 0.0, %v2564
      %v2566 = vpop.f32.mrf.mxu0
      %2567 = vmatprep.mubr.f32.mxu0 0.0
      %2568 = vmatmul.mubr.f32.gmra.mxu0 %v2350
      %v2569 = vpop.f32.mrf.mxu0
      %v2570 = vadd.f32 0.0, %v2569
      %v2571 = vpop.f32.mrf.mxu0
      %2572 = vmatprep.mubr.f32.mxu0 0.0
      %2573 = vmatmul.mubr.f32.gmra.mxu0 %v2352
      %v2574 = vpop.f32.mrf.mxu0
      %v2575 = vadd.f32 0.0, %v2574
      %v2576 = vpop.f32.mrf.mxu0
      %2577 = vmatprep.mubr.f32.mxu0 0.0
      %2578 = vmatmul.mubr.f32.gmra.mxu0 %v2354
      %v2579 = vpop.f32.mrf.mxu0
      %v2580 = vadd.f32 0.0, %v2579
      %v2581 = vpop.f32.mrf.mxu0
      %2582 = vmatprep.mubr.f32.mxu0 0.0
      %2583 = vmatmul.mubr.f32.gmra.mxu0 %v2356
      %v2584 = vpop.f32.mrf.mxu0
      %v2585 = vadd.f32 0.0, %v2584
      %v2586 = vpop.f32.mrf.mxu0
      %2587 = vmatprep.mubr.f32.mxu0 0.0
      %2588 = vmatmul.mubr.f32.gmra.mxu0 %v2358
      %v2589 = vpop.f32.mrf.mxu0
      %v2590 = vadd.f32 0.0, %v2589
      %v2591 = vpop.f32.mrf.mxu0
      %2592 = vmatprep.mubr.f32.mxu0 0.0
      %2593 = vmatmul.mubr.f32.gmra.mxu0 %v2360
      %v2594 = vpop.f32.mrf.mxu0
      %v2595 = vadd.f32 0.0, %v2594
      %v2596 = vpop.f32.mrf.mxu0
      %2597 = vmatprep.mubr.f32.mxu0 0.0
      %2598 = vmatmul.mubr.f32.gmra.mxu0 %v2362
      %v2599 = vpop.f32.mrf.mxu0
      %v2600 = vadd.f32 0.0, %v2599
      %v2601 = vpop.f32.mrf.mxu0
      %2602 = vmatprep.mubr.f32.mxu0 0.0
      %2603 = vmatmul.mubr.f32.gmra.mxu0 %v2364
      %v2604 = vpop.f32.mrf.mxu0
      %v2605 = vadd.f32 0.0, %v2604
      %v2606 = vpop.f32.mrf.mxu0
      %2607 = vmatprep.mubr.f32.mxu0 0.0
      %2608 = vmatmul.mubr.f32.gmra.mxu0 %v2366
      %v2609 = vpop.f32.mrf.mxu0
      %v2610 = vadd.f32 0.0, %v2609
      %v2611 = vpop.f32.mrf.mxu0
      %2612 = vmatprep.mubr.f32.mxu0 0.0
      %2613 = vmatmul.mubr.f32.gmra.mxu0 %v2368
      %v2614 = vpop.f32.mrf.mxu0
      %v2615 = vadd.f32 0.0, %v2614
      %v2616 = vpop.f32.mrf.mxu0
      %2617 = vdwg.mxu0
      %v2618 = vadd.f32 %v2187, %v2440
      %v2619 = vadd.f32 %v2188, %v2445
      %v2620 = vadd.f32 %v2189, %v2450
      %v2621 = vadd.f32 %v2190, %v2455
      %v2622 = vadd.f32 %v2191, %v2460
      %v2623 = vadd.f32 %v2192, %v2465
      %v2624 = vadd.f32 %v2193, %v2470
      %v2625 = vadd.f32 %v2194, %v2475
      %v2626 = vadd.f32 %v2195, %v2480
      %v2627 = vadd.f32 %v2196, %v2485
      %v2628 = vadd.f32 %v2197, %v2490
      %v2629 = vadd.f32 %v2198, %v2495
      %v2630 = vadd.f32 %v2199, %v2500
      %v2631 = vadd.f32 %v2200, %v2505
      %v2632 = vadd.f32 %v2201, %v2510
      %v2633 = vadd.f32 %v2202, %v2515
      %v2634 = vadd.f32 %v2203, %v2520
      %v2635 = vadd.f32 %v2204, %v2525
      %v2636 = vadd.f32 %v2205, %v2530
      %v2637 = vadd.f32 %v2206, %v2535
      %v2638 = vadd.f32 %v2207, %v2540
      %v2639 = vadd.f32 %v2208, %v2545
      %v2640 = vadd.f32 %v2209, %v2550
      %v2641 = vadd.f32 %v2210, %v2555
      %v2642 = vadd.f32 %v2211, %v2560
      %v2643 = vadd.f32 %v2212, %v2565
      %v2644 = vadd.f32 %v2213, %v2570
      %v2645 = vadd.f32 %v2214, %v2575
      %v2646 = vadd.f32 %v2215, %v2580
      %v2647 = vadd.f32 %v2216, %v2585
      %v2648 = vadd.f32 %v2217, %v2590
      %v2649 = vadd.f32 %v2218, %v2595
      %v2650 = vadd.f32 %v2219, %v2600
      %v2651 = vadd.f32 %v2220, %v2605
      %v2652 = vadd.f32 %v2221, %v2610
      %v2653 = vadd.f32 %v2222, %v2615
      %s2654 = scalar_lea.vmem %s1, 24
      %v2655 = vld [vmem:[%s2654] sm:$0xf]
      %v2658 = vrot.slane %v305, 4
      %v2659 = vsel %vm494, %v2296, %v2658
      %v2660 = vrot.slane %v306, 4
      %v2661 = vsel %vm494, %v2658, %v2660
      %v2662 = vsel %vm421, %v2659, 0
      %v2664 = vsel %vm421, %v2661, 0
      %v2667 = vsel %vm494, %v2655, 0
      %2669 = vmatprep.subr.mxu0 0.0
      %2670 = vmatpush1.msra.mxu0 0.0
      %2671 = vmatprep.subr.mxu0 0.0
      %2672 = vmatpush1.msra.mxu0 0.0
      %2673 = vmatprep.subr.mxu0 0.0
      %2674 = vmatpush1.msra.mxu0 0.0
      %2675 = vmatprep.subr.mxu0 0.0
      %2676 = vmatpush1.msra.mxu0 0.0
      %2677 = vmatprep.subr.mxu0 0.0
      %2678 = vmatpush1.msra.mxu0 0.0
      %2679 = vmatprep.subr.mxu0 0.0
      %2680 = vmatpush1.msra.mxu0 0.0
      %2681 = vmatprep.subr.mxu0 0.0
      %2682 = vmatpush1.msra.mxu0 0.0
      %2683 = vmatprep.subr.mxu0 0.0
      %2684 = vmatpush1.msra.mxu0 0.0
      %2685 = vmatprep.subr.mxu0 0.0
      %2686 = vmatpush1.msra.mxu0 0.0
      %2687 = vmatprep.subr.mxu0 0.0
      %2688 = vmatpush1.msra.mxu0 0.0
      %2689 = vmatprep.subr.mxu0 0.0
      %2690 = vmatpush1.msra.mxu0 0.0
      %2691 = vmatprep.subr.mxu0 0.0
      %2692 = vmatpush1.msra.mxu0 0.0
      %2693 = vmatprep.subr.mxu0 0.0
      %2694 = vmatpush1.msra.mxu0 0.0
      %2695 = vmatprep.subr.mxu0 0.0
      %2696 = vmatpush1.msra.mxu0 0.0
      %2697 = vmatprep.subr.mxu0 0.0
      %2698 = vmatpush1.msra.mxu0 0.0
      %2699 = vmatprep.subr.mxu0 0.0
      %2700 = vmatpush1.msra.mxu0 %v2667
      %2701 = vmatprep.subr.mxu0 0.0
      %2702 = vmatpush2.msra.mxu0 0.0
      %2703 = vmatprep.subr.mxu0 0.0
      %2704 = vmatpush2.msra.mxu0 0.0
      %2705 = vmatprep.subr.mxu0 0.0
      %2706 = vmatpush2.msra.mxu0 0.0
      %2707 = vmatprep.subr.mxu0 0.0
      %2708 = vmatpush2.msra.mxu0 0.0
      %2709 = vmatprep.subr.mxu0 0.0
      %2710 = vmatpush2.msra.mxu0 0.0
      %2711 = vmatprep.subr.mxu0 0.0
      %2712 = vmatpush2.msra.mxu0 0.0
      %2713 = vmatprep.subr.mxu0 0.0
      %2714 = vmatpush2.msra.mxu0 0.0
      %2715 = vmatprep.subr.mxu0 0.0
      %2716 = vmatpush2.msra.mxu0 0.0
      %2717 = vmatprep.subr.mxu0 0.0
      %2718 = vmatpush2.msra.mxu0 0.0
      %2719 = vmatprep.subr.mxu0 0.0
      %2720 = vmatpush2.msra.mxu0 0.0
      %2721 = vmatprep.subr.mxu0 0.0
      %2722 = vmatpush2.msra.mxu0 0.0
      %2723 = vmatprep.subr.mxu0 0.0
      %2724 = vmatpush2.msra.mxu0 0.0
      %2725 = vmatprep.subr.mxu0 0.0
      %2726 = vmatpush2.msra.mxu0 0.0
      %2727 = vmatprep.subr.mxu0 0.0
      %2728 = vmatpush2.msra.mxu0 0.0
      %2729 = vmatprep.subr.mxu0 0.0
      %2730 = vmatpush2.msra.mxu0 0.0
      %2731 = vmatprep.subr.mxu0 0.0
      %2732 = vmatpush2.msra.mxu0 0.0
      %2733 = vmatprep.mubr.f32.mxu0 0.0
      %2734 = vmatmul.mubr.f32.gmra.mxu0 %v2302
      %v2735 = vpop.f32.mrf.mxu0
      %v2736 = vadd.f32 0.0, %v2735
      %v2737 = vpop.f32.mrf.mxu0
      %2738 = vmatprep.mubr.f32.mxu0 0.0
      %2739 = vmatmul.mubr.f32.gmra.mxu0 %v2304
      %v2740 = vpop.f32.mrf.mxu0
      %v2741 = vadd.f32 0.0, %v2740
      %v2742 = vpop.f32.mrf.mxu0
      %2743 = vmatprep.mubr.f32.mxu0 0.0
      %2744 = vmatmul.mubr.f32.gmra.mxu0 %v2306
      %v2745 = vpop.f32.mrf.mxu0
      %v2746 = vadd.f32 0.0, %v2745
      %v2747 = vpop.f32.mrf.mxu0
      %2748 = vmatprep.mubr.f32.mxu0 0.0
      %2749 = vmatmul.mubr.f32.gmra.mxu0 %v2308
      %v2750 = vpop.f32.mrf.mxu0
      %v2751 = vadd.f32 0.0, %v2750
      %v2752 = vpop.f32.mrf.mxu0
      %2753 = vmatprep.mubr.f32.mxu0 0.0
      %2754 = vmatmul.mubr.f32.gmra.mxu0 %v2310
      %v2755 = vpop.f32.mrf.mxu0
      %v2756 = vadd.f32 0.0, %v2755
      %v2757 = vpop.f32.mrf.mxu0
      %2758 = vmatprep.mubr.f32.mxu0 0.0
      %2759 = vmatmul.mubr.f32.gmra.mxu0 %v2312
      %v2760 = vpop.f32.mrf.mxu0
      %v2761 = vadd.f32 0.0, %v2760
      %v2762 = vpop.f32.mrf.mxu0
      %2763 = vmatprep.mubr.f32.mxu0 0.0
      %2764 = vmatmul.mubr.f32.gmra.mxu0 %v2314
      %v2765 = vpop.f32.mrf.mxu0
      %v2766 = vadd.f32 0.0, %v2765
      %v2767 = vpop.f32.mrf.mxu0
      %2768 = vmatprep.mubr.f32.mxu0 0.0
      %2769 = vmatmul.mubr.f32.gmra.mxu0 %v2316
      %v2770 = vpop.f32.mrf.mxu0
      %v2771 = vadd.f32 0.0, %v2770
      %v2772 = vpop.f32.mrf.mxu0
      %2773 = vmatprep.mubr.f32.mxu0 0.0
      %2774 = vmatmul.mubr.f32.gmra.mxu0 %v2318
      %v2775 = vpop.f32.mrf.mxu0
      %v2776 = vadd.f32 0.0, %v2775
      %v2777 = vpop.f32.mrf.mxu0
      %2778 = vmatprep.mubr.f32.mxu0 0.0
      %2779 = vmatmul.mubr.f32.gmra.mxu0 %v2320
      %v2780 = vpop.f32.mrf.mxu0
      %v2781 = vadd.f32 0.0, %v2780
      %v2782 = vpop.f32.mrf.mxu0
      %2783 = vmatprep.mubr.f32.mxu0 0.0
      %2784 = vmatmul.mubr.f32.gmra.mxu0 %v2322
      %v2785 = vpop.f32.mrf.mxu0
      %v2786 = vadd.f32 0.0, %v2785
      %v2787 = vpop.f32.mrf.mxu0
      %2788 = vmatprep.mubr.f32.mxu0 0.0
      %2789 = vmatmul.mubr.f32.gmra.mxu0 %v2324
      %v2790 = vpop.f32.mrf.mxu0
      %v2791 = vadd.f32 0.0, %v2790
      %v2792 = vpop.f32.mrf.mxu0
      %2793 = vmatprep.mubr.f32.mxu0 0.0
      %2794 = vmatmul.mubr.f32.gmra.mxu0 %v2326
      %v2795 = vpop.f32.mrf.mxu0
      %v2796 = vadd.f32 0.0, %v2795
      %v2797 = vpop.f32.mrf.mxu0
      %2798 = vmatprep.mubr.f32.mxu0 0.0
      %2799 = vmatmul.mubr.f32.gmra.mxu0 %v2328
      %v2800 = vpop.f32.mrf.mxu0
      %v2801 = vadd.f32 0.0, %v2800
      %v2802 = vpop.f32.mrf.mxu0
      %2803 = vmatprep.mubr.f32.mxu0 0.0
      %2804 = vmatmul.mubr.f32.gmra.mxu0 %v2330
      %v2805 = vpop.f32.mrf.mxu0
      %v2806 = vadd.f32 0.0, %v2805
      %v2807 = vpop.f32.mrf.mxu0
      %2808 = vmatprep.mubr.f32.mxu0 0.0
      %2809 = vmatmul.mubr.f32.gmra.mxu0 %v2332
      %v2810 = vpop.f32.mrf.mxu0
      %v2811 = vadd.f32 0.0, %v2810
      %v2812 = vpop.f32.mrf.mxu0
      %2813 = vmatprep.mubr.f32.mxu0 0.0
      %2814 = vmatmul.mubr.f32.gmra.mxu0 %v2334
      %v2815 = vpop.f32.mrf.mxu0
      %v2816 = vadd.f32 0.0, %v2815
      %v2817 = vpop.f32.mrf.mxu0
      %2818 = vmatprep.mubr.f32.mxu0 0.0
      %2819 = vmatmul.mubr.f32.gmra.mxu0 %v2336
      %v2820 = vpop.f32.mrf.mxu0
      %v2821 = vadd.f32 0.0, %v2820
      %v2822 = vpop.f32.mrf.mxu0
      %2823 = vmatprep.mubr.f32.mxu0 0.0
      %2824 = vmatmul.mubr.f32.gmra.mxu0 %v2338
      %v2825 = vpop.f32.mrf.mxu0
      %v2826 = vadd.f32 0.0, %v2825
      %v2827 = vpop.f32.mrf.mxu0
      %2828 = vmatprep.mubr.f32.mxu0 0.0
      %2829 = vmatmul.mubr.f32.gmra.mxu0 %v2340
      %v2830 = vpop.f32.mrf.mxu0
      %v2831 = vadd.f32 0.0, %v2830
      %v2832 = vpop.f32.mrf.mxu0
      %2833 = vmatprep.mubr.f32.mxu0 0.0
      %2834 = vmatmul.mubr.f32.gmra.mxu0 %v2342
      %v2835 = vpop.f32.mrf.mxu0
      %v2836 = vadd.f32 0.0, %v2835
      %v2837 = vpop.f32.mrf.mxu0
      %2838 = vmatprep.mubr.f32.mxu0 0.0
      %2839 = vmatmul.mubr.f32.gmra.mxu0 %v2344
      %v2840 = vpop.f32.mrf.mxu0
      %v2841 = vadd.f32 0.0, %v2840
      %v2842 = vpop.f32.mrf.mxu0
      %2843 = vmatprep.mubr.f32.mxu0 0.0
      %2844 = vmatmul.mubr.f32.gmra.mxu0 %v2346
      %v2845 = vpop.f32.mrf.mxu0
      %v2846 = vadd.f32 0.0, %v2845
      %v2847 = vpop.f32.mrf.mxu0
      %2848 = vmatprep.mubr.f32.mxu0 0.0
      %2849 = vmatmul.mubr.f32.gmra.mxu0 %v2348
      %v2850 = vpop.f32.mrf.mxu0
      %v2851 = vadd.f32 0.0, %v2850
      %v2852 = vpop.f32.mrf.mxu0
      %2853 = vmatprep.mubr.f32.mxu0 0.0
      %2854 = vmatmul.mubr.f32.gmra.mxu0 %v2350
      %v2855 = vpop.f32.mrf.mxu0
      %v2856 = vadd.f32 0.0, %v2855
      %v2857 = vpop.f32.mrf.mxu0
      %2858 = vmatprep.mubr.f32.mxu0 0.0
      %2859 = vmatmul.mubr.f32.gmra.mxu0 %v2352
      %v2860 = vpop.f32.mrf.mxu0
      %v2861 = vadd.f32 0.0, %v2860
      %v2862 = vpop.f32.mrf.mxu0
      %2863 = vmatprep.mubr.f32.mxu0 0.0
      %2864 = vmatmul.mubr.f32.gmra.mxu0 %v2354
      %v2865 = vpop.f32.mrf.mxu0
      %v2866 = vadd.f32 0.0, %v2865
      %v2867 = vpop.f32.mrf.mxu0
      %2868 = vmatprep.mubr.f32.mxu0 0.0
      %2869 = vmatmul.mubr.f32.gmra.mxu0 %v2356
      %v2870 = vpop.f32.mrf.mxu0
      %v2871 = vadd.f32 0.0, %v2870
      %v2872 = vpop.f32.mrf.mxu0
      %2873 = vmatprep.mubr.f32.mxu0 0.0
      %2874 = vmatmul.mubr.f32.gmra.mxu0 %v2358
      %v2875 = vpop.f32.mrf.mxu0
      %v2876 = vadd.f32 0.0, %v2875
      %v2877 = vpop.f32.mrf.mxu0
      %2878 = vmatprep.mubr.f32.mxu0 0.0
      %2879 = vmatmul.mubr.f32.gmra.mxu0 %v2360
      %v2880 = vpop.f32.mrf.mxu0
      %v2881 = vadd.f32 0.0, %v2880
      %v2882 = vpop.f32.mrf.mxu0
      %2883 = vmatprep.mubr.f32.mxu0 0.0
      %2884 = vmatmul.mubr.f32.gmra.mxu0 %v2362
      %v2885 = vpop.f32.mrf.mxu0
      %v2886 = vadd.f32 0.0, %v2885
      %v2887 = vpop.f32.mrf.mxu0
      %2888 = vmatprep.mubr.f32.mxu0 0.0
      %2889 = vmatmul.mubr.f32.gmra.mxu0 %v2364
      %v2890 = vpop.f32.mrf.mxu0
      %v2891 = vadd.f32 0.0, %v2890
      %v2892 = vpop.f32.mrf.mxu0
      %2893 = vmatprep.mubr.f32.mxu0 0.0
      %2894 = vmatmul.mubr.f32.gmra.mxu0 %v2366
      %v2895 = vpop.f32.mrf.mxu0
      %v2896 = vadd.f32 0.0, %v2895
      %v2897 = vpop.f32.mrf.mxu0
      %2898 = vmatprep.mubr.f32.mxu0 0.0
      %2899 = vmatmul.mubr.f32.gmra.mxu0 %v2368
      %v2900 = vpop.f32.mrf.mxu0
      %v2901 = vadd.f32 0.0, %v2900
      %v2902 = vpop.f32.mrf.mxu0
      %2903 = vmatprep.mubr.f32.mxu0 0.0
      %2904 = vmatmul.mubr.f32.gmra.mxu0 %v2662
      %v2905 = vpop.f32.mrf.mxu0
      %v2906 = vadd.f32 0.0, %v2905
      %v2907 = vpop.f32.mrf.mxu0
      %2908 = vmatprep.mubr.f32.mxu0 0.0
      %2909 = vmatmul.mubr.f32.gmra.mxu0 %v2664
      %v2910 = vpop.f32.mrf.mxu0
      %v2911 = vadd.f32 0.0, %v2910
      %v2912 = vpop.f32.mrf.mxu0
      %2913 = vdwg.mxu0
      %v2914 = vadd.f32 %v2618, %v2736
      %v2915 = vadd.f32 %v2619, %v2741
      %v2916 = vadd.f32 %v2620, %v2746
      %v2917 = vadd.f32 %v2621, %v2751
      %v2918 = vadd.f32 %v2622, %v2756
      %v2919 = vadd.f32 %v2623, %v2761
      %v2920 = vadd.f32 %v2624, %v2766
      %v2921 = vadd.f32 %v2625, %v2771
      %v2922 = vadd.f32 %v2626, %v2776
      %v2923 = vadd.f32 %v2627, %v2781
      %v2924 = vadd.f32 %v2628, %v2786
      %v2925 = vadd.f32 %v2629, %v2791
      %v2926 = vadd.f32 %v2630, %v2796
      %v2927 = vadd.f32 %v2631, %v2801
      %v2928 = vadd.f32 %v2632, %v2806
      %v2929 = vadd.f32 %v2633, %v2811
      %v2930 = vadd.f32 %v2634, %v2816
      %v2931 = vadd.f32 %v2635, %v2821
      %v2932 = vadd.f32 %v2636, %v2826
      %v2933 = vadd.f32 %v2637, %v2831
      %v2934 = vadd.f32 %v2638, %v2836
      %v2935 = vadd.f32 %v2639, %v2841
      %v2936 = vadd.f32 %v2640, %v2846
      %v2937 = vadd.f32 %v2641, %v2851
      %v2938 = vadd.f32 %v2642, %v2856
      %v2939 = vadd.f32 %v2643, %v2861
      %v2940 = vadd.f32 %v2644, %v2866
      %v2941 = vadd.f32 %v2645, %v2871
      %v2942 = vadd.f32 %v2646, %v2876
      %v2943 = vadd.f32 %v2647, %v2881
      %v2944 = vadd.f32 %v2648, %v2886
      %v2945 = vadd.f32 %v2649, %v2891
      %v2946 = vadd.f32 %v2650, %v2896
      %v2947 = vadd.f32 %v2651, %v2901
      %v2948 = vadd.f32 %v2652, %v2906
      %v2949 = vadd.f32 %v2653, %v2911
      %s2950 = scalar_lea.vmem %s1, 28
      %v2951 = vld [vmem:[%s2950] sm:$0xf]
      %vm2952 = vcmask 1042432
      %v2953 = vrot.slane %v270, 5
      %v2954 = vrot.slane %v271, 5
      %v2955 = vsel %vm2952, %v2953, %v2954
      %v2956 = vrot.slane %v272, 5
      %v2957 = vsel %vm2952, %v2954, %v2956
      %v2958 = vrot.slane %v273, 5
      %v2959 = vsel %vm2952, %v2956, %v2958
      %v2960 = vrot.slane %v274, 5
      %v2961 = vsel %vm2952, %v2958, %v2960
      %v2962 = vrot.slane %v275, 5
      %v2963 = vsel %vm2952, %v2960, %v2962
      %v2964 = vrot.slane %v276, 5
      %v2965 = vsel %vm2952, %v2962, %v2964
      %v2966 = vrot.slane %v277, 5
      %v2967 = vsel %vm2952, %v2964, %v2966
      %v2968 = vrot.slane %v278, 5
      %v2969 = vsel %vm2952, %v2966, %v2968
      %v2970 = vrot.slane %v279, 5
      %v2971 = vsel %vm2952, %v2968, %v2970
      %v2972 = vrot.slane %v280, 5
      %v2973 = vsel %vm2952, %v2970, %v2972
      %v2974 = vrot.slane %v281, 5
      %v2975 = vsel %vm2952, %v2972, %v2974
      %v2976 = vrot.slane %v282, 5
      %v2977 = vsel %vm2952, %v2974, %v2976
      %v2978 = vrot.slane %v283, 5
      %v2979 = vsel %vm2952, %v2976, %v2978
      %v2980 = vrot.slane %v284, 5
      %v2981 = vsel %vm2952, %v2978, %v2980
      %v2982 = vrot.slane %v285, 5
      %v2983 = vsel %vm2952, %v2980, %v2982
      %v2984 = vrot.slane %v286, 5
      %v2985 = vsel %vm2952, %v2982, %v2984
      %v2986 = vrot.slane %v287, 5
      %v2987 = vsel %vm2952, %v2984, %v2986
      %v2988 = vrot.slane %v288, 5
      %v2989 = vsel %vm2952, %v2986, %v2988
      %v2990 = vrot.slane %v289, 5
      %v2991 = vsel %vm2952, %v2988, %v2990
      %v2992 = vrot.slane %v290, 5
      %v2993 = vsel %vm2952, %v2990, %v2992
      %v2994 = vrot.slane %v291, 5
      %v2995 = vsel %vm2952, %v2992, %v2994
      %v2996 = vrot.slane %v292, 5
      %v2997 = vsel %vm2952, %v2994, %v2996
      %v2998 = vrot.slane %v293, 5
      %v2999 = vsel %vm2952, %v2996, %v2998
      %v3000 = vrot.slane %v294, 5
      %v3001 = vsel %vm2952, %v2998, %v3000
      %v3002 = vrot.slane %v295, 5
      %v3003 = vsel %vm2952, %v3000, %v3002
      %v3004 = vrot.slane %v296, 5
      %v3005 = vsel %vm2952, %v3002, %v3004
      %v3006 = vrot.slane %v297, 5
      %v3007 = vsel %vm2952, %v3004, %v3006
      %v3008 = vrot.slane %v298, 5
      %v3009 = vsel %vm2952, %v3006, %v3008
      %v3010 = vrot.slane %v299, 5
      %v3011 = vsel %vm2952, %v3008, %v3010
      %v3012 = vrot.slane %v300, 5
      %v3013 = vsel %vm2952, %v3010, %v3012
      %v3014 = vrot.slane %v301, 5
      %v3015 = vsel %vm2952, %v3012, %v3014
      %v3016 = vrot.slane %v302, 5
      %v3017 = vsel %vm2952, %v3014, %v3016
      %v3018 = vrot.slane %v303, 5
      %v3019 = vsel %vm2952, %v3016, %v3018
      %v3020 = vrot.slane %v304, 5
      %v3021 = vsel %vm2952, %v3018, %v3020
      %v3022 = vrot.slane %v305, 5
      %v3023 = vsel %vm2952, %v3020, %v3022
      %v3024 = vrot.slane %v306, 5
      %v3025 = vsel %vm2952, %v3022, %v3024
      %v3026 = vsel %vm421, %v2955, 0
      %v3028 = vsel %vm421, %v2957, 0
      %v3030 = vsel %vm421, %v2959, 0
      %v3032 = vsel %vm421, %v2961, 0
      %v3034 = vsel %vm421, %v2963, 0
      %v3036 = vsel %vm421, %v2965, 0
      %v3038 = vsel %vm421, %v2967, 0
      %v3040 = vsel %vm421, %v2969, 0
      %v3042 = vsel %vm421, %v2971, 0
      %v3044 = vsel %vm421, %v2973, 0
      %v3046 = vsel %vm421, %v2975, 0
      %v3048 = vsel %vm421, %v2977, 0
      %v3050 = vsel %vm421, %v2979, 0
      %v3052 = vsel %vm421, %v2981, 0
      %v3054 = vsel %vm421, %v2983, 0
      %v3056 = vsel %vm421, %v2985, 0
      %v3058 = vsel %vm421, %v2987, 0
      %v3060 = vsel %vm421, %v2989, 0
      %v3062 = vsel %vm421, %v2991, 0
      %v3064 = vsel %vm421, %v2993, 0
      %v3066 = vsel %vm421, %v2995, 0
      %v3068 = vsel %vm421, %v2997, 0
      %v3070 = vsel %vm421, %v2999, 0
      %v3072 = vsel %vm421, %v3001, 0
      %v3074 = vsel %vm421, %v3003, 0
      %v3076 = vsel %vm421, %v3005, 0
      %v3078 = vsel %vm421, %v3007, 0
      %v3080 = vsel %vm421, %v3009, 0
      %v3082 = vsel %vm421, %v3011, 0
      %v3084 = vsel %vm421, %v3013, 0
      %v3086 = vsel %vm421, %v3015, 0
      %v3088 = vsel %vm421, %v3017, 0
      %v3090 = vsel %vm421, %v3019, 0
      %v3092 = vsel %vm421, %v3021, 0
      %v3094 = vsel %vm421, %v3023, 0
      %v3096 = vsel %vm421, %v3025, 0
      %v3099 = vsel %vm494, %v2951, 0
      %3101 = vmatprep.subr.mxu0 0.0
      %3102 = vmatpush1.msra.mxu0 0.0
      %3103 = vmatprep.subr.mxu0 0.0
      %3104 = vmatpush1.msra.mxu0 0.0
      %3105 = vmatprep.subr.mxu0 0.0
      %3106 = vmatpush1.msra.mxu0 0.0
      %3107 = vmatprep.subr.mxu0 0.0
      %3108 = vmatpush1.msra.mxu0 0.0
      %3109 = vmatprep.subr.mxu0 0.0
      %3110 = vmatpush1.msra.mxu0 0.0
      %3111 = vmatprep.subr.mxu0 0.0
      %3112 = vmatpush1.msra.mxu0 0.0
      %3113 = vmatprep.subr.mxu0 0.0
      %3114 = vmatpush1.msra.mxu0 0.0
      %3115 = vmatprep.subr.mxu0 0.0
      %3116 = vmatpush1.msra.mxu0 0.0
      %3117 = vmatprep.subr.mxu0 0.0
      %3118 = vmatpush1.msra.mxu0 0.0
      %3119 = vmatprep.subr.mxu0 0.0
      %3120 = vmatpush1.msra.mxu0 0.0
      %3121 = vmatprep.subr.mxu0 0.0
      %3122 = vmatpush1.msra.mxu0 0.0
      %3123 = vmatprep.subr.mxu0 0.0
      %3124 = vmatpush1.msra.mxu0 0.0
      %3125 = vmatprep.subr.mxu0 0.0
      %3126 = vmatpush1.msra.mxu0 0.0
      %3127 = vmatprep.subr.mxu0 0.0
      %3128 = vmatpush1.msra.mxu0 0.0
      %3129 = vmatprep.subr.mxu0 0.0
      %3130 = vmatpush1.msra.mxu0 0.0
      %3131 = vmatprep.subr.mxu0 0.0
      %3132 = vmatpush1.msra.mxu0 %v3099
      %3133 = vmatprep.subr.mxu0 0.0
      %3134 = vmatpush2.msra.mxu0 0.0
      %3135 = vmatprep.subr.mxu0 0.0
      %3136 = vmatpush2.msra.mxu0 0.0
      %3137 = vmatprep.subr.mxu0 0.0
      %3138 = vmatpush2.msra.mxu0 0.0
      %3139 = vmatprep.subr.mxu0 0.0
      %3140 = vmatpush2.msra.mxu0 0.0
      %3141 = vmatprep.subr.mxu0 0.0
      %3142 = vmatpush2.msra.mxu0 0.0
      %3143 = vmatprep.subr.mxu0 0.0
      %3144 = vmatpush2.msra.mxu0 0.0
      %3145 = vmatprep.subr.mxu0 0.0
      %3146 = vmatpush2.msra.mxu0 0.0
      %3147 = vmatprep.subr.mxu0 0.0
      %3148 = vmatpush2.msra.mxu0 0.0
      %3149 = vmatprep.subr.mxu0 0.0
      %3150 = vmatpush2.msra.mxu0 0.0
      %3151 = vmatprep.subr.mxu0 0.0
      %3152 = vmatpush2.msra.mxu0 0.0
      %3153 = vmatprep.subr.mxu0 0.0
      %3154 = vmatpush2.msra.mxu0 0.0
      %3155 = vmatprep.subr.mxu0 0.0
      %3156 = vmatpush2.msra.mxu0 0.0
      %3157 = vmatprep.subr.mxu0 0.0
      %3158 = vmatpush2.msra.mxu0 0.0
      %3159 = vmatprep.subr.mxu0 0.0
      %3160 = vmatpush2.msra.mxu0 0.0
      %3161 = vmatprep.subr.mxu0 0.0
      %3162 = vmatpush2.msra.mxu0 0.0
      %3163 = vmatprep.subr.mxu0 0.0
      %3164 = vmatpush2.msra.mxu0 0.0
      %3165 = vmatprep.mubr.f32.mxu0 0.0
      %3166 = vmatmul.mubr.f32.gmra.mxu0 %v3026
      %v3167 = vpop.f32.mrf.mxu0
      %v3168 = vadd.f32 0.0, %v3167
      %v3169 = vpop.f32.mrf.mxu0
      %3170 = vmatprep.mubr.f32.mxu0 0.0
      %3171 = vmatmul.mubr.f32.gmra.mxu0 %v3028
      %v3172 = vpop.f32.mrf.mxu0
      %v3173 = vadd.f32 0.0, %v3172
      %v3174 = vpop.f32.mrf.mxu0
      %3175 = vmatprep.mubr.f32.mxu0 0.0
      %3176 = vmatmul.mubr.f32.gmra.mxu0 %v3030
      %v3177 = vpop.f32.mrf.mxu0
      %v3178 = vadd.f32 0.0, %v3177
      %v3179 = vpop.f32.mrf.mxu0
      %3180 = vmatprep.mubr.f32.mxu0 0.0
      %3181 = vmatmul.mubr.f32.gmra.mxu0 %v3032
      %v3182 = vpop.f32.mrf.mxu0
      %v3183 = vadd.f32 0.0, %v3182
      %v3184 = vpop.f32.mrf.mxu0
      %3185 = vmatprep.mubr.f32.mxu0 0.0
      %3186 = vmatmul.mubr.f32.gmra.mxu0 %v3034
      %v3187 = vpop.f32.mrf.mxu0
      %v3188 = vadd.f32 0.0, %v3187
      %v3189 = vpop.f32.mrf.mxu0
      %3190 = vmatprep.mubr.f32.mxu0 0.0
      %3191 = vmatmul.mubr.f32.gmra.mxu0 %v3036
      %v3192 = vpop.f32.mrf.mxu0
      %v3193 = vadd.f32 0.0, %v3192
      %v3194 = vpop.f32.mrf.mxu0
      %3195 = vmatprep.mubr.f32.mxu0 0.0
      %3196 = vmatmul.mubr.f32.gmra.mxu0 %v3038
      %v3197 = vpop.f32.mrf.mxu0
      %v3198 = vadd.f32 0.0, %v3197
      %v3199 = vpop.f32.mrf.mxu0
      %3200 = vmatprep.mubr.f32.mxu0 0.0
      %3201 = vmatmul.mubr.f32.gmra.mxu0 %v3040
      %v3202 = vpop.f32.mrf.mxu0
      %v3203 = vadd.f32 0.0, %v3202
      %v3204 = vpop.f32.mrf.mxu0
      %3205 = vmatprep.mubr.f32.mxu0 0.0
      %3206 = vmatmul.mubr.f32.gmra.mxu0 %v3042
      %v3207 = vpop.f32.mrf.mxu0
      %v3208 = vadd.f32 0.0, %v3207
      %v3209 = vpop.f32.mrf.mxu0
      %3210 = vmatprep.mubr.f32.mxu0 0.0
      %3211 = vmatmul.mubr.f32.gmra.mxu0 %v3044
      %v3212 = vpop.f32.mrf.mxu0
      %v3213 = vadd.f32 0.0, %v3212
      %v3214 = vpop.f32.mrf.mxu0
      %3215 = vmatprep.mubr.f32.mxu0 0.0
      %3216 = vmatmul.mubr.f32.gmra.mxu0 %v3046
      %v3217 = vpop.f32.mrf.mxu0
      %v3218 = vadd.f32 0.0, %v3217
      %v3219 = vpop.f32.mrf.mxu0
      %3220 = vmatprep.mubr.f32.mxu0 0.0
      %3221 = vmatmul.mubr.f32.gmra.mxu0 %v3048
      %v3222 = vpop.f32.mrf.mxu0
      %v3223 = vadd.f32 0.0, %v3222
      %v3224 = vpop.f32.mrf.mxu0
      %3225 = vmatprep.mubr.f32.mxu0 0.0
      %3226 = vmatmul.mubr.f32.gmra.mxu0 %v3050
      %v3227 = vpop.f32.mrf.mxu0
      %v3228 = vadd.f32 0.0, %v3227
      %v3229 = vpop.f32.mrf.mxu0
      %3230 = vmatprep.mubr.f32.mxu0 0.0
      %3231 = vmatmul.mubr.f32.gmra.mxu0 %v3052
      %v3232 = vpop.f32.mrf.mxu0
      %v3233 = vadd.f32 0.0, %v3232
      %v3234 = vpop.f32.mrf.mxu0
      %3235 = vmatprep.mubr.f32.mxu0 0.0
      %3236 = vmatmul.mubr.f32.gmra.mxu0 %v3054
      %v3237 = vpop.f32.mrf.mxu0
      %v3238 = vadd.f32 0.0, %v3237
      %v3239 = vpop.f32.mrf.mxu0
      %3240 = vmatprep.mubr.f32.mxu0 0.0
      %3241 = vmatmul.mubr.f32.gmra.mxu0 %v3056
      %v3242 = vpop.f32.mrf.mxu0
      %v3243 = vadd.f32 0.0, %v3242
      %v3244 = vpop.f32.mrf.mxu0
      %3245 = vmatprep.mubr.f32.mxu0 0.0
      %3246 = vmatmul.mubr.f32.gmra.mxu0 %v3058
      %v3247 = vpop.f32.mrf.mxu0
      %v3248 = vadd.f32 0.0, %v3247
      %v3249 = vpop.f32.mrf.mxu0
      %3250 = vmatprep.mubr.f32.mxu0 0.0
      %3251 = vmatmul.mubr.f32.gmra.mxu0 %v3060
      %v3252 = vpop.f32.mrf.mxu0
      %v3253 = vadd.f32 0.0, %v3252
      %v3254 = vpop.f32.mrf.mxu0
      %3255 = vmatprep.mubr.f32.mxu0 0.0
      %3256 = vmatmul.mubr.f32.gmra.mxu0 %v3062
      %v3257 = vpop.f32.mrf.mxu0
      %v3258 = vadd.f32 0.0, %v3257
      %v3259 = vpop.f32.mrf.mxu0
      %3260 = vmatprep.mubr.f32.mxu0 0.0
      %3261 = vmatmul.mubr.f32.gmra.mxu0 %v3064
      %v3262 = vpop.f32.mrf.mxu0
      %v3263 = vadd.f32 0.0, %v3262
      %v3264 = vpop.f32.mrf.mxu0
      %3265 = vmatprep.mubr.f32.mxu0 0.0
      %3266 = vmatmul.mubr.f32.gmra.mxu0 %v3066
      %v3267 = vpop.f32.mrf.mxu0
      %v3268 = vadd.f32 0.0, %v3267
      %v3269 = vpop.f32.mrf.mxu0
      %3270 = vmatprep.mubr.f32.mxu0 0.0
      %3271 = vmatmul.mubr.f32.gmra.mxu0 %v3068
      %v3272 = vpop.f32.mrf.mxu0
      %v3273 = vadd.f32 0.0, %v3272
      %v3274 = vpop.f32.mrf.mxu0
      %3275 = vmatprep.mubr.f32.mxu0 0.0
      %3276 = vmatmul.mubr.f32.gmra.mxu0 %v3070
      %v3277 = vpop.f32.mrf.mxu0
      %v3278 = vadd.f32 0.0, %v3277
      %v3279 = vpop.f32.mrf.mxu0
      %3280 = vmatprep.mubr.f32.mxu0 0.0
      %3281 = vmatmul.mubr.f32.gmra.mxu0 %v3072
      %v3282 = vpop.f32.mrf.mxu0
      %v3283 = vadd.f32 0.0, %v3282
      %v3284 = vpop.f32.mrf.mxu0
      %3285 = vmatprep.mubr.f32.mxu0 0.0
      %3286 = vmatmul.mubr.f32.gmra.mxu0 %v3074
      %v3287 = vpop.f32.mrf.mxu0
      %v3288 = vadd.f32 0.0, %v3287
      %v3289 = vpop.f32.mrf.mxu0
      %3290 = vmatprep.mubr.f32.mxu0 0.0
      %3291 = vmatmul.mubr.f32.gmra.mxu0 %v3076
      %v3292 = vpop.f32.mrf.mxu0
      %v3293 = vadd.f32 0.0, %v3292
      %v3294 = vpop.f32.mrf.mxu0
      %3295 = vmatprep.mubr.f32.mxu0 0.0
      %3296 = vmatmul.mubr.f32.gmra.mxu0 %v3078
      %v3297 = vpop.f32.mrf.mxu0
      %v3298 = vadd.f32 0.0, %v3297
      %v3299 = vpop.f32.mrf.mxu0
      %3300 = vmatprep.mubr.f32.mxu0 0.0
      %3301 = vmatmul.mubr.f32.gmra.mxu0 %v3080
      %v3302 = vpop.f32.mrf.mxu0
      %v3303 = vadd.f32 0.0, %v3302
      %v3304 = vpop.f32.mrf.mxu0
      %3305 = vmatprep.mubr.f32.mxu0 0.0
      %3306 = vmatmul.mubr.f32.gmra.mxu0 %v3082
      %v3307 = vpop.f32.mrf.mxu0
      %v3308 = vadd.f32 0.0, %v3307
      %v3309 = vpop.f32.mrf.mxu0
      %3310 = vmatprep.mubr.f32.mxu0 0.0
      %3311 = vmatmul.mubr.f32.gmra.mxu0 %v3084
      %v3312 = vpop.f32.mrf.mxu0
      %v3313 = vadd.f32 0.0, %v3312
      %v3314 = vpop.f32.mrf.mxu0
      %3315 = vmatprep.mubr.f32.mxu0 0.0
      %3316 = vmatmul.mubr.f32.gmra.mxu0 %v3086
      %v3317 = vpop.f32.mrf.mxu0
      %v3318 = vadd.f32 0.0, %v3317
      %v3319 = vpop.f32.mrf.mxu0
      %3320 = vmatprep.mubr.f32.mxu0 0.0
      %3321 = vmatmul.mubr.f32.gmra.mxu0 %v3088
      %v3322 = vpop.f32.mrf.mxu0
      %v3323 = vadd.f32 0.0, %v3322
      %v3324 = vpop.f32.mrf.mxu0
      %3325 = vmatprep.mubr.f32.mxu0 0.0
      %3326 = vmatmul.mubr.f32.gmra.mxu0 %v3090
      %v3327 = vpop.f32.mrf.mxu0
      %v3328 = vadd.f32 0.0, %v3327
      %v3329 = vpop.f32.mrf.mxu0
      %3330 = vmatprep.mubr.f32.mxu0 0.0
      %3331 = vmatmul.mubr.f32.gmra.mxu0 %v3092
      %v3332 = vpop.f32.mrf.mxu0
      %v3333 = vadd.f32 0.0, %v3332
      %v3334 = vpop.f32.mrf.mxu0
      %3335 = vmatprep.mubr.f32.mxu0 0.0
      %3336 = vmatmul.mubr.f32.gmra.mxu0 %v3094
      %v3337 = vpop.f32.mrf.mxu0
      %v3338 = vadd.f32 0.0, %v3337
      %v3339 = vpop.f32.mrf.mxu0
      %3340 = vmatprep.mubr.f32.mxu0 0.0
      %3341 = vmatmul.mubr.f32.gmra.mxu0 %v3096
      %v3342 = vpop.f32.mrf.mxu0
      %v3343 = vadd.f32 0.0, %v3342
      %v3344 = vpop.f32.mrf.mxu0
      %3345 = vdwg.mxu0
      %v3346 = vadd.f32 %v2914, %v3168
      %v3347 = vadd.f32 %v2915, %v3173
      %v3348 = vadd.f32 %v2916, %v3178
      %v3349 = vadd.f32 %v2917, %v3183
      %v3350 = vadd.f32 %v2918, %v3188
      %v3351 = vadd.f32 %v2919, %v3193
      %v3352 = vadd.f32 %v2920, %v3198
      %v3353 = vadd.f32 %v2921, %v3203
      %v3354 = vadd.f32 %v2922, %v3208
      %v3355 = vadd.f32 %v2923, %v3213
      %v3356 = vadd.f32 %v2924, %v3218
      %v3357 = vadd.f32 %v2925, %v3223
      %v3358 = vadd.f32 %v2926, %v3228
      %v3359 = vadd.f32 %v2927, %v3233
      %v3360 = vadd.f32 %v2928, %v3238
      %v3361 = vadd.f32 %v2929, %v3243
      %v3362 = vadd.f32 %v2930, %v3248
      %v3363 = vadd.f32 %v2931, %v3253
      %v3364 = vadd.f32 %v2932, %v3258
      %v3365 = vadd.f32 %v2933, %v3263
      %v3366 = vadd.f32 %v2934, %v3268
      %v3367 = vadd.f32 %v2935, %v3273
      %v3368 = vadd.f32 %v2936, %v3278
      %v3369 = vadd.f32 %v2937, %v3283
      %v3370 = vadd.f32 %v2938, %v3288
      %v3371 = vadd.f32 %v2939, %v3293
      %v3372 = vadd.f32 %v2940, %v3298
      %v3373 = vadd.f32 %v2941, %v3303
      %v3374 = vadd.f32 %v2942, %v3308
      %v3375 = vadd.f32 %v2943, %v3313
      %v3376 = vadd.f32 %v2944, %v3318
      %v3377 = vadd.f32 %v2945, %v3323
      %v3378 = vadd.f32 %v2946, %v3328
      %v3379 = vadd.f32 %v2947, %v3333
      %v3380 = vadd.f32 %v2948, %v3338
      %v3381 = vadd.f32 %v2949, %v3343
      %s3382 = scalar_lea.vmem %s1, 32
      %v3383 = vld [vmem:[%s3382] sm:$0xf]
      %vm3384 = vcmask 1041408
      %v3385 = vrot.slane %v270, 6
      %v3386 = vrot.slane %v271, 6
      %v3387 = vsel %vm3384, %v3385, %v3386
      %v3388 = vrot.slane %v272, 6
      %v3389 = vsel %vm3384, %v3386, %v3388
      %v3390 = vrot.slane %v273, 6
      %v3391 = vsel %vm3384, %v3388, %v3390
      %v3392 = vrot.slane %v274, 6
      %v3393 = vsel %vm3384, %v3390, %v3392
      %v3394 = vrot.slane %v275, 6
      %v3395 = vsel %vm3384, %v3392, %v3394
      %v3396 = vrot.slane %v276, 6
      %v3397 = vsel %vm3384, %v3394, %v3396
      %v3398 = vrot.slane %v277, 6
      %v3399 = vsel %vm3384, %v3396, %v3398
      %v3400 = vrot.slane %v278, 6
      %v3401 = vsel %vm3384, %v3398, %v3400
      %v3402 = vrot.slane %v279, 6
      %v3403 = vsel %vm3384, %v3400, %v3402
      %v3404 = vrot.slane %v280, 6
      %v3405 = vsel %vm3384, %v3402, %v3404
      %v3406 = vrot.slane %v281, 6
      %v3407 = vsel %vm3384, %v3404, %v3406
      %v3408 = vrot.slane %v282, 6
      %v3409 = vsel %vm3384, %v3406, %v3408
      %v3410 = vrot.slane %v283, 6
      %v3411 = vsel %vm3384, %v3408, %v3410
      %v3412 = vrot.slane %v284, 6
      %v3413 = vsel %vm3384, %v3410, %v3412
      %v3414 = vrot.slane %v285, 6
      %v3415 = vsel %vm3384, %v3412, %v3414
      %v3416 = vrot.slane %v286, 6
      %v3417 = vsel %vm3384, %v3414, %v3416
      %v3418 = vrot.slane %v287, 6
      %v3419 = vsel %vm3384, %v3416, %v3418
      %v3420 = vrot.slane %v288, 6
      %v3421 = vsel %vm3384, %v3418, %v3420
      %v3422 = vrot.slane %v289, 6
      %v3423 = vsel %vm3384, %v3420, %v3422
      %v3424 = vrot.slane %v290, 6
      %v3425 = vsel %vm3384, %v3422, %v3424
      %v3426 = vrot.slane %v291, 6
      %v3427 = vsel %vm3384, %v3424, %v3426
      %v3428 = vrot.slane %v292, 6
      %v3429 = vsel %vm3384, %v3426, %v3428
      %v3430 = vrot.slane %v293, 6
      %v3431 = vsel %vm3384, %v3428, %v3430
      %v3432 = vrot.slane %v294, 6
      %v3433 = vsel %vm3384, %v3430, %v3432
      %v3434 = vrot.slane %v295, 6
      %v3435 = vsel %vm3384, %v3432, %v3434
      %v3436 = vrot.slane %v296, 6
      %v3437 = vsel %vm3384, %v3434, %v3436
      %v3438 = vrot.slane %v297, 6
      %v3439 = vsel %vm3384, %v3436, %v3438
      %v3440 = vrot.slane %v298, 6
      %v3441 = vsel %vm3384, %v3438, %v3440
      %v3442 = vrot.slane %v299, 6
      %v3443 = vsel %vm3384, %v3440, %v3442
      %v3444 = vrot.slane %v300, 6
      %v3445 = vsel %vm3384, %v3442, %v3444
      %v3446 = vrot.slane %v301, 6
      %v3447 = vsel %vm3384, %v3444, %v3446
      %v3448 = vrot.slane %v302, 6
      %v3449 = vsel %vm3384, %v3446, %v3448
      %v3450 = vrot.slane %v303, 6
      %v3451 = vsel %vm3384, %v3448, %v3450
      %v3452 = vrot.slane %v304, 6
      %v3453 = vsel %vm3384, %v3450, %v3452
      %v3454 = vrot.slane %v305, 6
      %v3455 = vsel %vm3384, %v3452, %v3454
      %v3456 = vrot.slane %v306, 6
      %v3457 = vsel %vm3384, %v3454, %v3456
      %v3458 = vsel %vm421, %v3387, 0
      %v3460 = vsel %vm421, %v3389, 0
      %v3462 = vsel %vm421, %v3391, 0
      %v3464 = vsel %vm421, %v3393, 0
      %v3466 = vsel %vm421, %v3395, 0
      %v3468 = vsel %vm421, %v3397, 0
      %v3470 = vsel %vm421, %v3399, 0
      %v3472 = vsel %vm421, %v3401, 0
      %v3474 = vsel %vm421, %v3403, 0
      %v3476 = vsel %vm421, %v3405, 0
      %v3478 = vsel %vm421, %v3407, 0
      %v3480 = vsel %vm421, %v3409, 0
      %v3482 = vsel %vm421, %v3411, 0
      %v3484 = vsel %vm421, %v3413, 0
      %v3486 = vsel %vm421, %v3415, 0
      %v3488 = vsel %vm421, %v3417, 0
      %v3490 = vsel %vm421, %v3419, 0
      %v3492 = vsel %vm421, %v3421, 0
      %v3494 = vsel %vm421, %v3423, 0
      %v3496 = vsel %vm421, %v3425, 0
      %v3498 = vsel %vm421, %v3427, 0
      %v3500 = vsel %vm421, %v3429, 0
      %v3502 = vsel %vm421, %v3431, 0
      %v3504 = vsel %vm421, %v3433, 0
      %v3506 = vsel %vm421, %v3435, 0
      %v3508 = vsel %vm421, %v3437, 0
      %v3510 = vsel %vm421, %v3439, 0
      %v3512 = vsel %vm421, %v3441, 0
      %v3514 = vsel %vm421, %v3443, 0
      %v3516 = vsel %vm421, %v3445, 0
      %v3518 = vsel %vm421, %v3447, 0
      %v3520 = vsel %vm421, %v3449, 0
      %v3522 = vsel %vm421, %v3451, 0
      %v3524 = vsel %vm421, %v3453, 0
      %v3526 = vsel %vm421, %v3455, 0
      %v3528 = vsel %vm421, %v3457, 0
      %v3531 = vsel %vm494, %v3383, 0
      %3533 = vmatprep.subr.mxu0 0.0
      %3534 = vmatpush1.msra.mxu0 0.0
      %3535 = vmatprep.subr.mxu0 0.0
      %3536 = vmatpush1.msra.mxu0 0.0
      %3537 = vmatprep.subr.mxu0 0.0
      %3538 = vmatpush1.msra.mxu0 0.0
      %3539 = vmatprep.subr.mxu0 0.0
      %3540 = vmatpush1.msra.mxu0 0.0
      %3541 = vmatprep.subr.mxu0 0.0
      %3542 = vmatpush1.msra.mxu0 0.0
      %3543 = vmatprep.subr.mxu0 0.0
      %3544 = vmatpush1.msra.mxu0 0.0
      %3545 = vmatprep.subr.mxu0 0.0
      %3546 = vmatpush1.msra.mxu0 0.0
      %3547 = vmatprep.subr.mxu0 0.0
      %3548 = vmatpush1.msra.mxu0 0.0
      %3549 = vmatprep.subr.mxu0 0.0
      %3550 = vmatpush1.msra.mxu0 0.0
      %3551 = vmatprep.subr.mxu0 0.0
      %3552 = vmatpush1.msra.mxu0 0.0
      %3553 = vmatprep.subr.mxu0 0.0
      %3554 = vmatpush1.msra.mxu0 0.0
      %3555 = vmatprep.subr.mxu0 0.0
      %3556 = vmatpush1.msra.mxu0 0.0
      %3557 = vmatprep.subr.mxu0 0.0
      %3558 = vmatpush1.msra.mxu0 0.0
      %3559 = vmatprep.subr.mxu0 0.0
      %3560 = vmatpush1.msra.mxu0 0.0
      %3561 = vmatprep.subr.mxu0 0.0
      %3562 = vmatpush1.msra.mxu0 0.0
      %3563 = vmatprep.subr.mxu0 0.0
      %3564 = vmatpush1.msra.mxu0 %v3531
      %3565 = vmatprep.subr.mxu0 0.0
      %3566 = vmatpush2.msra.mxu0 0.0
      %3567 = vmatprep.subr.mxu0 0.0
      %3568 = vmatpush2.msra.mxu0 0.0
      %3569 = vmatprep.subr.mxu0 0.0
      %3570 = vmatpush2.msra.mxu0 0.0
      %3571 = vmatprep.subr.mxu0 0.0
      %3572 = vmatpush2.msra.mxu0 0.0
      %3573 = vmatprep.subr.mxu0 0.0
      %3574 = vmatpush2.msra.mxu0 0.0
      %3575 = vmatprep.subr.mxu0 0.0
      %3576 = vmatpush2.msra.mxu0 0.0
      %3577 = vmatprep.subr.mxu0 0.0
      %3578 = vmatpush2.msra.mxu0 0.0
      %3579 = vmatprep.subr.mxu0 0.0
      %3580 = vmatpush2.msra.mxu0 0.0
      %3581 = vmatprep.subr.mxu0 0.0
      %3582 = vmatpush2.msra.mxu0 0.0
      %3583 = vmatprep.subr.mxu0 0.0
      %3584 = vmatpush2.msra.mxu0 0.0
      %3585 = vmatprep.subr.mxu0 0.0
      %3586 = vmatpush2.msra.mxu0 0.0
      %3587 = vmatprep.subr.mxu0 0.0
      %3588 = vmatpush2.msra.mxu0 0.0
      %3589 = vmatprep.subr.mxu0 0.0
      %3590 = vmatpush2.msra.mxu0 0.0
      %3591 = vmatprep.subr.mxu0 0.0
      %3592 = vmatpush2.msra.mxu0 0.0
      %3593 = vmatprep.subr.mxu0 0.0
      %3594 = vmatpush2.msra.mxu0 0.0
      %3595 = vmatprep.subr.mxu0 0.0
      %3596 = vmatpush2.msra.mxu0 0.0
      %3597 = vmatprep.mubr.f32.mxu0 0.0
      %3598 = vmatmul.mubr.f32.gmra.mxu0 %v3458
      %v3599 = vpop.f32.mrf.mxu0
      %v3600 = vadd.f32 0.0, %v3599
      %v3601 = vpop.f32.mrf.mxu0
      %3602 = vmatprep.mubr.f32.mxu0 0.0
      %3603 = vmatmul.mubr.f32.gmra.mxu0 %v3460
      %v3604 = vpop.f32.mrf.mxu0
      %v3605 = vadd.f32 0.0, %v3604
      %v3606 = vpop.f32.mrf.mxu0
      %3607 = vmatprep.mubr.f32.mxu0 0.0
      %3608 = vmatmul.mubr.f32.gmra.mxu0 %v3462
      %v3609 = vpop.f32.mrf.mxu0
      %v3610 = vadd.f32 0.0, %v3609
      %v3611 = vpop.f32.mrf.mxu0
      %3612 = vmatprep.mubr.f32.mxu0 0.0
      %3613 = vmatmul.mubr.f32.gmra.mxu0 %v3464
      %v3614 = vpop.f32.mrf.mxu0
      %v3615 = vadd.f32 0.0, %v3614
      %v3616 = vpop.f32.mrf.mxu0
      %3617 = vmatprep.mubr.f32.mxu0 0.0
      %3618 = vmatmul.mubr.f32.gmra.mxu0 %v3466
      %v3619 = vpop.f32.mrf.mxu0
      %v3620 = vadd.f32 0.0, %v3619
      %v3621 = vpop.f32.mrf.mxu0
      %3622 = vmatprep.mubr.f32.mxu0 0.0
      %3623 = vmatmul.mubr.f32.gmra.mxu0 %v3468
      %v3624 = vpop.f32.mrf.mxu0
      %v3625 = vadd.f32 0.0, %v3624
      %v3626 = vpop.f32.mrf.mxu0
      %3627 = vmatprep.mubr.f32.mxu0 0.0
      %3628 = vmatmul.mubr.f32.gmra.mxu0 %v3470
      %v3629 = vpop.f32.mrf.mxu0
      %v3630 = vadd.f32 0.0, %v3629
      %v3631 = vpop.f32.mrf.mxu0
      %3632 = vmatprep.mubr.f32.mxu0 0.0
      %3633 = vmatmul.mubr.f32.gmra.mxu0 %v3472
      %v3634 = vpop.f32.mrf.mxu0
      %v3635 = vadd.f32 0.0, %v3634
      %v3636 = vpop.f32.mrf.mxu0
      %3637 = vmatprep.mubr.f32.mxu0 0.0
      %3638 = vmatmul.mubr.f32.gmra.mxu0 %v3474
      %v3639 = vpop.f32.mrf.mxu0
      %v3640 = vadd.f32 0.0, %v3639
      %v3641 = vpop.f32.mrf.mxu0
      %3642 = vmatprep.mubr.f32.mxu0 0.0
      %3643 = vmatmul.mubr.f32.gmra.mxu0 %v3476
      %v3644 = vpop.f32.mrf.mxu0
      %v3645 = vadd.f32 0.0, %v3644
      %v3646 = vpop.f32.mrf.mxu0
      %3647 = vmatprep.mubr.f32.mxu0 0.0
      %3648 = vmatmul.mubr.f32.gmra.mxu0 %v3478
      %v3649 = vpop.f32.mrf.mxu0
      %v3650 = vadd.f32 0.0, %v3649
      %v3651 = vpop.f32.mrf.mxu0
      %3652 = vmatprep.mubr.f32.mxu0 0.0
      %3653 = vmatmul.mubr.f32.gmra.mxu0 %v3480
      %v3654 = vpop.f32.mrf.mxu0
      %v3655 = vadd.f32 0.0, %v3654
      %v3656 = vpop.f32.mrf.mxu0
      %3657 = vmatprep.mubr.f32.mxu0 0.0
      %3658 = vmatmul.mubr.f32.gmra.mxu0 %v3482
      %v3659 = vpop.f32.mrf.mxu0
      %v3660 = vadd.f32 0.0, %v3659
      %v3661 = vpop.f32.mrf.mxu0
      %3662 = vmatprep.mubr.f32.mxu0 0.0
      %3663 = vmatmul.mubr.f32.gmra.mxu0 %v3484
      %v3664 = vpop.f32.mrf.mxu0
      %v3665 = vadd.f32 0.0, %v3664
      %v3666 = vpop.f32.mrf.mxu0
      %3667 = vmatprep.mubr.f32.mxu0 0.0
      %3668 = vmatmul.mubr.f32.gmra.mxu0 %v3486
      %v3669 = vpop.f32.mrf.mxu0
      %v3670 = vadd.f32 0.0, %v3669
      %v3671 = vpop.f32.mrf.mxu0
      %3672 = vmatprep.mubr.f32.mxu0 0.0
      %3673 = vmatmul.mubr.f32.gmra.mxu0 %v3488
      %v3674 = vpop.f32.mrf.mxu0
      %v3675 = vadd.f32 0.0, %v3674
      %v3676 = vpop.f32.mrf.mxu0
      %3677 = vmatprep.mubr.f32.mxu0 0.0
      %3678 = vmatmul.mubr.f32.gmra.mxu0 %v3490
      %v3679 = vpop.f32.mrf.mxu0
      %v3680 = vadd.f32 0.0, %v3679
      %v3681 = vpop.f32.mrf.mxu0
      %3682 = vmatprep.mubr.f32.mxu0 0.0
      %3683 = vmatmul.mubr.f32.gmra.mxu0 %v3492
      %v3684 = vpop.f32.mrf.mxu0
      %v3685 = vadd.f32 0.0, %v3684
      %v3686 = vpop.f32.mrf.mxu0
      %3687 = vmatprep.mubr.f32.mxu0 0.0
      %3688 = vmatmul.mubr.f32.gmra.mxu0 %v3494
      %v3689 = vpop.f32.mrf.mxu0
      %v3690 = vadd.f32 0.0, %v3689
      %v3691 = vpop.f32.mrf.mxu0
      %3692 = vmatprep.mubr.f32.mxu0 0.0
      %3693 = vmatmul.mubr.f32.gmra.mxu0 %v3496
      %v3694 = vpop.f32.mrf.mxu0
      %v3695 = vadd.f32 0.0, %v3694
      %v3696 = vpop.f32.mrf.mxu0
      %3697 = vmatprep.mubr.f32.mxu0 0.0
      %3698 = vmatmul.mubr.f32.gmra.mxu0 %v3498
      %v3699 = vpop.f32.mrf.mxu0
      %v3700 = vadd.f32 0.0, %v3699
      %v3701 = vpop.f32.mrf.mxu0
      %3702 = vmatprep.mubr.f32.mxu0 0.0
      %3703 = vmatmul.mubr.f32.gmra.mxu0 %v3500
      %v3704 = vpop.f32.mrf.mxu0
      %v3705 = vadd.f32 0.0, %v3704
      %v3706 = vpop.f32.mrf.mxu0
      %3707 = vmatprep.mubr.f32.mxu0 0.0
      %3708 = vmatmul.mubr.f32.gmra.mxu0 %v3502
      %v3709 = vpop.f32.mrf.mxu0
      %v3710 = vadd.f32 0.0, %v3709
      %v3711 = vpop.f32.mrf.mxu0
      %3712 = vmatprep.mubr.f32.mxu0 0.0
      %3713 = vmatmul.mubr.f32.gmra.mxu0 %v3504
      %v3714 = vpop.f32.mrf.mxu0
      %v3715 = vadd.f32 0.0, %v3714
      %v3716 = vpop.f32.mrf.mxu0
      %3717 = vmatprep.mubr.f32.mxu0 0.0
      %3718 = vmatmul.mubr.f32.gmra.mxu0 %v3506
      %v3719 = vpop.f32.mrf.mxu0
      %v3720 = vadd.f32 0.0, %v3719
      %v3721 = vpop.f32.mrf.mxu0
      %3722 = vmatprep.mubr.f32.mxu0 0.0
      %3723 = vmatmul.mubr.f32.gmra.mxu0 %v3508
      %v3724 = vpop.f32.mrf.mxu0
      %v3725 = vadd.f32 0.0, %v3724
      %v3726 = vpop.f32.mrf.mxu0
      %3727 = vmatprep.mubr.f32.mxu0 0.0
      %3728 = vmatmul.mubr.f32.gmra.mxu0 %v3510
      %v3729 = vpop.f32.mrf.mxu0
      %v3730 = vadd.f32 0.0, %v3729
      %v3731 = vpop.f32.mrf.mxu0
      %3732 = vmatprep.mubr.f32.mxu0 0.0
      %3733 = vmatmul.mubr.f32.gmra.mxu0 %v3512
      %v3734 = vpop.f32.mrf.mxu0
      %v3735 = vadd.f32 0.0, %v3734
      %v3736 = vpop.f32.mrf.mxu0
      %3737 = vmatprep.mubr.f32.mxu0 0.0
      %3738 = vmatmul.mubr.f32.gmra.mxu0 %v3514
      %v3739 = vpop.f32.mrf.mxu0
      %v3740 = vadd.f32 0.0, %v3739
      %v3741 = vpop.f32.mrf.mxu0
      %3742 = vmatprep.mubr.f32.mxu0 0.0
      %3743 = vmatmul.mubr.f32.gmra.mxu0 %v3516
      %v3744 = vpop.f32.mrf.mxu0
      %v3745 = vadd.f32 0.0, %v3744
      %v3746 = vpop.f32.mrf.mxu0
      %3747 = vmatprep.mubr.f32.mxu0 0.0
      %3748 = vmatmul.mubr.f32.gmra.mxu0 %v3518
      %v3749 = vpop.f32.mrf.mxu0
      %v3750 = vadd.f32 0.0, %v3749
      %v3751 = vpop.f32.mrf.mxu0
      %3752 = vmatprep.mubr.f32.mxu0 0.0
      %3753 = vmatmul.mubr.f32.gmra.mxu0 %v3520
      %v3754 = vpop.f32.mrf.mxu0
      %v3755 = vadd.f32 0.0, %v3754
      %v3756 = vpop.f32.mrf.mxu0
      %3757 = vmatprep.mubr.f32.mxu0 0.0
      %3758 = vmatmul.mubr.f32.gmra.mxu0 %v3522
      %v3759 = vpop.f32.mrf.mxu0
      %v3760 = vadd.f32 0.0, %v3759
      %v3761 = vpop.f32.mrf.mxu0
      %3762 = vmatprep.mubr.f32.mxu0 0.0
      %3763 = vmatmul.mubr.f32.gmra.mxu0 %v3524
      %v3764 = vpop.f32.mrf.mxu0
      %v3765 = vadd.f32 0.0, %v3764
      %v3766 = vpop.f32.mrf.mxu0
      %3767 = vmatprep.mubr.f32.mxu0 0.0
      %3768 = vmatmul.mubr.f32.gmra.mxu0 %v3526
      %v3769 = vpop.f32.mrf.mxu0
      %v3770 = vadd.f32 0.0, %v3769
      %v3771 = vpop.f32.mrf.mxu0
      %3772 = vmatprep.mubr.f32.mxu0 0.0
      %3773 = vmatmul.mubr.f32.gmra.mxu0 %v3528
      %v3774 = vpop.f32.mrf.mxu0
      %v3775 = vadd.f32 0.0, %v3774
      %v3776 = vpop.f32.mrf.mxu0
      %3777 = vdwg.mxu0
      %v3778 = vadd.f32 %v3346, %v3600
      %v3779 = vadd.f32 %v3347, %v3605
      %v3780 = vadd.f32 %v3348, %v3610
      %v3781 = vadd.f32 %v3349, %v3615
      %v3782 = vadd.f32 %v3350, %v3620
      %v3783 = vadd.f32 %v3351, %v3625
      %v3784 = vadd.f32 %v3352, %v3630
      %v3785 = vadd.f32 %v3353, %v3635
      %v3786 = vadd.f32 %v3354, %v3640
      %v3787 = vadd.f32 %v3355, %v3645
      %v3788 = vadd.f32 %v3356, %v3650
      %v3789 = vadd.f32 %v3357, %v3655
      %v3790 = vadd.f32 %v3358, %v3660
      %v3791 = vadd.f32 %v3359, %v3665
      %v3792 = vadd.f32 %v3360, %v3670
      %v3793 = vadd.f32 %v3361, %v3675
      %v3794 = vadd.f32 %v3362, %v3680
      %v3795 = vadd.f32 %v3363, %v3685
      %v3796 = vadd.f32 %v3364, %v3690
      %v3797 = vadd.f32 %v3365, %v3695
      %v3798 = vadd.f32 %v3366, %v3700
      %v3799 = vadd.f32 %v3367, %v3705
      %v3800 = vadd.f32 %v3368, %v3710
      %v3801 = vadd.f32 %v3369, %v3715
      %v3802 = vadd.f32 %v3370, %v3720
      %v3803 = vadd.f32 %v3371, %v3725
      %v3804 = vadd.f32 %v3372, %v3730
      %v3805 = vadd.f32 %v3373, %v3735
      %v3806 = vadd.f32 %v3374, %v3740
      %v3807 = vadd.f32 %v3375, %v3745
      %v3808 = vadd.f32 %v3376, %v3750
      %v3809 = vadd.f32 %v3377, %v3755
      %v3810 = vadd.f32 %v3378, %v3760
      %v3811 = vadd.f32 %v3379, %v3765
      %v3812 = vadd.f32 %v3380, %v3770
      %v3813 = vadd.f32 %v3381, %v3775
      %v3814 = vmax.f32 %v3778, 0.0
      %v3815 = vmax.f32 %v3779, 0.0
      %v3816 = vmax.f32 %v3780, 0.0
      %v3817 = vmax.f32 %v3781, 0.0
      %v3818 = vmax.f32 %v3782, 0.0
      %v3819 = vmax.f32 %v3783, 0.0
      %v3820 = vmax.f32 %v3784, 0.0
      %v3821 = vmax.f32 %v3785, 0.0
      %v3822 = vmax.f32 %v3786, 0.0
      %v3823 = vmax.f32 %v3787, 0.0
      %v3824 = vmax.f32 %v3788, 0.0
      %v3825 = vmax.f32 %v3789, 0.0
      %v3826 = vmax.f32 %v3790, 0.0
      %v3827 = vmax.f32 %v3791, 0.0
      %v3828 = vmax.f32 %v3792, 0.0
      %v3829 = vmax.f32 %v3793, 0.0
      %v3830 = vmax.f32 %v3794, 0.0
      %v3831 = vmax.f32 %v3795, 0.0
      %v3832 = vmax.f32 %v3796, 0.0
      %v3833 = vmax.f32 %v3797, 0.0
      %v3834 = vmax.f32 %v3798, 0.0
      %v3835 = vmax.f32 %v3799, 0.0
      %v3836 = vmax.f32 %v3800, 0.0
      %v3837 = vmax.f32 %v3801, 0.0
      %v3838 = vmax.f32 %v3802, 0.0
      %v3839 = vmax.f32 %v3803, 0.0
      %v3840 = vmax.f32 %v3804, 0.0
      %v3841 = vmax.f32 %v3805, 0.0
      %v3842 = vmax.f32 %v3806, 0.0
      %v3843 = vmax.f32 %v3807, 0.0
      %v3844 = vmax.f32 %v3808, 0.0
      %v3845 = vmax.f32 %v3809, 0.0
      %v3846 = vmax.f32 %v3810, 0.0
      %v3847 = vmax.f32 %v3811, 0.0
      %v3848 = vmax.f32 %v3812, 0.0
      %v3849 = vmax.f32 %v3813, 0.0
      %3850 = vst.msk [vmem:[#allocation2 + $0x144] sm:$0xff] %vm421, 0.0
      %3851 = vst.msk [vmem:[#allocation2 + $0x13] sm:$0xff] %vm421, %v3814
      %3852 = vst.msk [vmem:[#allocation2 + $0x1b] sm:$0xff] %vm421, %v3815
      %3853 = vst.msk [vmem:[#allocation2 + $0x23] sm:$0xff] %vm421, %v3816
      %3854 = vst.msk [vmem:[#allocation2 + $0x2b] sm:$0xff] %vm421, %v3817
      %3855 = vst.msk [vmem:[#allocation2 + $0x33] sm:$0xff] %vm421, %v3818
      %3856 = vst.msk [vmem:[#allocation2 + $0x3b] sm:$0xff] %vm421, %v3819
      %3857 = vst.msk [vmem:[#allocation2 + $0x43] sm:$0xff] %vm421, %v3820
      %3858 = vst.msk [vmem:[#allocation2 + $0x4b] sm:$0xff] %vm421, %v3821
      %3859 = vst.msk [vmem:[#allocation2 + $0x53] sm:$0xff] %vm421, %v3822
      %3860 = vst.msk [vmem:[#allocation2 + $0x5b] sm:$0xff] %vm421, %v3823
      %3861 = vst.msk [vmem:[#allocation2 + $0x63] sm:$0xff] %vm421, %v3824
      %3862 = vst.msk [vmem:[#allocation2 + $0x6b] sm:$0xff] %vm421, %v3825
      %3863 = vst.msk [vmem:[#allocation2 + $0x73] sm:$0xff] %vm421, %v3826
      %3864 = vst.msk [vmem:[#allocation2 + $0x7b] sm:$0xff] %vm421, %v3827
      %3865 = vst.msk [vmem:[#allocation2 + $0x83] sm:$0xff] %vm421, %v3828
      %3866 = vst.msk [vmem:[#allocation2 + $0x8b] sm:$0xff] %vm421, %v3829
      %3867 = vst.msk [vmem:[#allocation2 + $0x93] sm:$0xff] %vm421, %v3830
      %3868 = vst.msk [vmem:[#allocation2 + $0x9b] sm:$0xff] %vm421, %v3831
      %3869 = vst.msk [vmem:[#allocation2 + $0xa3] sm:$0xff] %vm421, %v3832
      %3870 = vst.msk [vmem:[#allocation2 + $0xab] sm:$0xff] %vm421, %v3833
      %3871 = vst.msk [vmem:[#allocation2 + $0xb3] sm:$0xff] %vm421, %v3834
      %3872 = vst.msk [vmem:[#allocation2 + $0xbb] sm:$0xff] %vm421, %v3835
      %3873 = vst.msk [vmem:[#allocation2 + $0xc3] sm:$0xff] %vm421, %v3836
      %3874 = vst.msk [vmem:[#allocation2 + $0xcb] sm:$0xff] %vm421, %v3837
      %3875 = vst.msk [vmem:[#allocation2 + $0xd3] sm:$0xff] %vm421, %v3838
      %3876 = vst.msk [vmem:[#allocation2 + $0xdb] sm:$0xff] %vm421, %v3839
      %3877 = vst.msk [vmem:[#allocation2 + $0xe3] sm:$0xff] %vm421, %v3840
      %3878 = vst.msk [vmem:[#allocation2 + $0xeb] sm:$0xff] %vm421, %v3841
      %3879 = vst.msk [vmem:[#allocation2 + $0xf3] sm:$0xff] %vm421, %v3842
      %3880 = vst.msk [vmem:[#allocation2 + $0xfb] sm:$0xff] %vm421, %v3843
      %3881 = vst.msk [vmem:[#allocation2 + $0x103] sm:$0xff] %vm421, %v3844
      %3882 = vst.msk [vmem:[#allocation2 + $0x10b] sm:$0xff] %vm421, %v3845
      %3883 = vst.msk [vmem:[#allocation2 + $0x113] sm:$0xff] %vm421, %v3846
      %3884 = vst.msk [vmem:[#allocation2 + $0x11b] sm:$0xff] %vm421, %v3847
      %3885 = vst.msk [vmem:[#allocation2 + $0x123] sm:$0xff] %vm421, %v3848
      %3886 = vst.msk [vmem:[#allocation2 + $0x12b] sm:$0xff] %vm421, %v3849
      loop: start=0, step=1, limit=16
      $region41: #{tpu_custom_call.1} parent=39 // loop_pre_header
        _
      $region42: #{tpu_custom_call.1} parent=39 // loop_header
        %s3888 = sphi 0, %s3892
        %p3889 = scmp.ge.s32.totalorder %s3888, 16
      $region43: #{tpu_custom_call.1} parent=39 // loop_header_branch
        %3891 = sbr.rel (%p3889) target = $region47
      $region44: #{tpu_custom_call.1} parent=39 // loop_body
        %s3893 = sadd.s32 %s3888, 1
        %s3894 = smul.u32 %s3893, 18
        %s3895 = sadd.s32 %s3894, 2
        %s3896 = scalar_lea.vmem [#allocation2], %s3895
        %v3897 = vld [vmem:[%s3896] sm:$0x1]
        %s3898 = scalar_lea.vmem [#allocation2], %s3894
        %vm3899 = vcmask 24576
        %3900 = vst.msk [vmem:[%s3898] sm:$0x1] %vm3899, %v3897
        %s3901 = sadd.s32 %s3894, 15
        %s3902 = scalar_lea.vmem [#allocation2], %s3901
        %v3903 = vld [vmem:[%s3902] sm:$0x1]
        %s3904 = sadd.s32 %s3894, 17
        %s3905 = scalar_lea.vmem [#allocation2], %s3904
        %3906 = vst.msk [vmem:[%s3905] sm:$0x1] %vm3899, %v3903
      $region45: #{tpu_custom_call.1} parent=39 // loop_footer
        %s3892 = sadd.s32 1, %s3888
      $region46: #{tpu_custom_call.1} parent=39 // loop_footer_branch
        %3887 = sbr.rel target = $region42
      $region47: #{tpu_custom_call.1} parent=39 // loop_exit
        _
      %v3907 = vld [vmem:[#allocation2 + $0x24] sm:$0xff]
      %v3908 = vld [vmem:[#allocation2 + $0x2c] sm:$0xff]
      %v3909 = vld [vmem:[#allocation2 + $0x34] sm:$0x3]
      %3910 = vst.msk [vmem:[#allocation2] sm:$0xff] %vm421, %v3907
      %3911 = vst.msk [vmem:[#allocation2 + $0x8] sm:$0xff] %vm421, %v3908
      %vm3912 = vcmask 25600
      %3913 = vst.msk [vmem:[#allocation2 + $0x10] sm:$0x3] %vm3912, %v3909
      %v3914 = vld [vmem:[#allocation2 + $0x10e] sm:$0xff]
      %v3915 = vld [vmem:[#allocation2 + $0x116] sm:$0xff]
      %v3916 = vld [vmem:[#allocation2 + $0x11e] sm:$0x3]
      %3917 = vst.msk [vmem:[#allocation2 + $0x132] sm:$0xff] %vm421, %v3914
      %3918 = vst.msk [vmem:[#allocation2 + $0x13a] sm:$0xff] %vm421, %v3915
      %3919 = vst.msk [vmem:[#allocation2 + $0x142] sm:$0x3] %vm3912, %v3916
      %v3920 = vld [vmem:[%s219 + $0x13] sm:$0xff]
      %v3921 = vld [vmem:[%s219 + $0x1b] sm:$0xff]
      %v3922 = vld [vmem:[%s219 + $0x23] sm:$0xff]
      %v3923 = vld [vmem:[%s219 + $0x2b] sm:$0xff]
      %v3924 = vld [vmem:[%s219 + $0x33] sm:$0xff]
      %v3925 = vld [vmem:[%s219 + $0x3b] sm:$0xff]
      %v3926 = vld [vmem:[%s219 + $0x43] sm:$0xff]
      %v3927 = vld [vmem:[%s219 + $0x4b] sm:$0xff]
      %v3928 = vld [vmem:[%s219 + $0x53] sm:$0xff]
      %v3929 = vld [vmem:[%s219 + $0x5b] sm:$0xff]
      %v3930 = vld [vmem:[%s219 + $0x63] sm:$0xff]
      %v3931 = vld [vmem:[%s219 + $0x6b] sm:$0xff]
      %v3932 = vld [vmem:[%s219 + $0x73] sm:$0xff]
      %v3933 = vld [vmem:[%s219 + $0x7b] sm:$0xff]
      %v3934 = vld [vmem:[%s219 + $0x83] sm:$0xff]
      %v3935 = vld [vmem:[%s219 + $0x8b] sm:$0xff]
      %v3936 = vld [vmem:[%s219 + $0x93] sm:$0xff]
      %v3937 = vld [vmem:[%s219 + $0x9b] sm:$0xff]
      %v3938 = vld [vmem:[%s219 + $0xa3] sm:$0xff]
      %v3939 = vld [vmem:[%s219 + $0xab] sm:$0xff]
      %v3940 = vld [vmem:[%s219 + $0xb3] sm:$0xff]
      %v3941 = vld [vmem:[%s219 + $0xbb] sm:$0xff]
      %v3942 = vld [vmem:[%s219 + $0xc3] sm:$0xff]
      %v3943 = vld [vmem:[%s219 + $0xcb] sm:$0xff]
      %v3944 = vld [vmem:[%s219 + $0xd3] sm:$0xff]
      %v3945 = vld [vmem:[%s219 + $0xdb] sm:$0xff]
      %v3946 = vld [vmem:[%s219 + $0xe3] sm:$0xff]
      %v3947 = vld [vmem:[%s219 + $0xeb] sm:$0xff]
      %v3948 = vld [vmem:[%s219 + $0xf3] sm:$0xff]
      %v3949 = vld [vmem:[%s219 + $0xfb] sm:$0xff]
      %v3950 = vld [vmem:[%s219 + $0x103] sm:$0xff]
      %v3951 = vld [vmem:[%s219 + $0x10b] sm:$0xff]
      %v3952 = vld [vmem:[%s219 + $0x113] sm:$0xff]
      %v3953 = vld [vmem:[%s219 + $0x11b] sm:$0xff]
      %v3954 = vld [vmem:[%s219 + $0x123] sm:$0xff]
      %v3955 = vld [vmem:[%s219 + $0x12b] sm:$0xff]
      %v3956 = vld [vmem:[%s3] sm:$0xf]
      %v3957 = vld [vmem:[%s4] sm:$0x1]
      %v3959 = vlaneseq
      %v3960 = vshrl.u32 %v3959, 7
      %v3961 = vsub.s32 0, %v3960
      %v3962 = vrot.slane %v3957, %v3961
      %v3965 = vsel %vm421, %v3920, 0
      %v3968 = vsel %vm421, %v3921, 0
      %v3971 = vsel %vm421, %v3922, 0
      %v3974 = vsel %vm421, %v3923, 0
      %v3977 = vsel %vm421, %v3924, 0
      %v3980 = vsel %vm421, %v3925, 0
      %v3983 = vsel %vm421, %v3926, 0
      %v3986 = vsel %vm421, %v3927, 0
      %v3989 = vsel %vm421, %v3928, 0
      %v3992 = vsel %vm421, %v3929, 0
      %v3995 = vsel %vm421, %v3930, 0
      %v3998 = vsel %vm421, %v3931, 0
      %v4001 = vsel %vm421, %v3932, 0
      %v4004 = vsel %vm421, %v3933, 0
      %v4007 = vsel %vm421, %v3934, 0
      %v4010 = vsel %vm421, %v3935, 0
      %v4013 = vsel %vm421, %v3936, 0
      %v4016 = vsel %vm421, %v3937, 0
      %v4019 = vsel %vm421, %v3938, 0
      %v4022 = vsel %vm421, %v3939, 0
      %v4025 = vsel %vm421, %v3940, 0
      %v4028 = vsel %vm421, %v3941, 0
      %v4031 = vsel %vm421, %v3942, 0
      %v4034 = vsel %vm421, %v3943, 0
      %v4037 = vsel %vm421, %v3944, 0
      %v4040 = vsel %vm421, %v3945, 0
      %v4043 = vsel %vm421, %v3946, 0
      %v4046 = vsel %vm421, %v3947, 0
      %v4049 = vsel %vm421, %v3948, 0
      %v4052 = vsel %vm421, %v3949, 0
      %v4055 = vsel %vm421, %v3950, 0
      %v4058 = vsel %vm421, %v3951, 0
      %v4061 = vsel %vm421, %v3952, 0
      %v4064 = vsel %vm421, %v3953, 0
      %v4067 = vsel %vm421, %v3954, 0
      %v4070 = vsel %vm421, %v3955, 0
      %v4073 = vsel %vm494, %v3956, 0
      %4075 = vmatprep.subr.mxu0 0.0
      %4076 = vmatpush1.msra.mxu0 0.0
      %4077 = vmatprep.subr.mxu0 0.0
      %4078 = vmatpush1.msra.mxu0 0.0
      %4079 = vmatprep.subr.mxu0 0.0
      %4080 = vmatpush1.msra.mxu0 0.0
      %4081 = vmatprep.subr.mxu0 0.0
      %4082 = vmatpush1.msra.mxu0 0.0
      %4083 = vmatprep.subr.mxu0 0.0
      %4084 = vmatpush1.msra.mxu0 0.0
      %4085 = vmatprep.subr.mxu0 0.0
      %4086 = vmatpush1.msra.mxu0 0.0
      %4087 = vmatprep.subr.mxu0 0.0
      %4088 = vmatpush1.msra.mxu0 0.0
      %4089 = vmatprep.subr.mxu0 0.0
      %4090 = vmatpush1.msra.mxu0 0.0
      %4091 = vmatprep.subr.mxu0 0.0
      %4092 = vmatpush1.msra.mxu0 0.0
      %4093 = vmatprep.subr.mxu0 0.0
      %4094 = vmatpush1.msra.mxu0 0.0
      %4095 = vmatprep.subr.mxu0 0.0
      %4096 = vmatpush1.msra.mxu0 0.0
      %4097 = vmatprep.subr.mxu0 0.0
      %4098 = vmatpush1.msra.mxu0 0.0
      %4099 = vmatprep.subr.mxu0 0.0
      %4100 = vmatpush1.msra.mxu0 0.0
      %4101 = vmatprep.subr.mxu0 0.0
      %4102 = vmatpush1.msra.mxu0 0.0
      %4103 = vmatprep.subr.mxu0 0.0
      %4104 = vmatpush1.msra.mxu0 0.0
      %4105 = vmatprep.subr.mxu0 0.0
      %4106 = vmatpush1.msra.mxu0 %v4073
      %4107 = vmatprep.subr.mxu0 0.0
      %4108 = vmatpush2.msra.mxu0 0.0
      %4109 = vmatprep.subr.mxu0 0.0
      %4110 = vmatpush2.msra.mxu0 0.0
      %4111 = vmatprep.subr.mxu0 0.0
      %4112 = vmatpush2.msra.mxu0 0.0
      %4113 = vmatprep.subr.mxu0 0.0
      %4114 = vmatpush2.msra.mxu0 0.0
      %4115 = vmatprep.subr.mxu0 0.0
      %4116 = vmatpush2.msra.mxu0 0.0
      %4117 = vmatprep.subr.mxu0 0.0
      %4118 = vmatpush2.msra.mxu0 0.0
      %4119 = vmatprep.subr.mxu0 0.0
      %4120 = vmatpush2.msra.mxu0 0.0
      %4121 = vmatprep.subr.mxu0 0.0
      %4122 = vmatpush2.msra.mxu0 0.0
      %4123 = vmatprep.subr.mxu0 0.0
      %4124 = vmatpush2.msra.mxu0 0.0
      %4125 = vmatprep.subr.mxu0 0.0
      %4126 = vmatpush2.msra.mxu0 0.0
      %4127 = vmatprep.subr.mxu0 0.0
      %4128 = vmatpush2.msra.mxu0 0.0
      %4129 = vmatprep.subr.mxu0 0.0
      %4130 = vmatpush2.msra.mxu0 0.0
      %4131 = vmatprep.subr.mxu0 0.0
      %4132 = vmatpush2.msra.mxu0 0.0
      %4133 = vmatprep.subr.mxu0 0.0
      %4134 = vmatpush2.msra.mxu0 0.0
      %4135 = vmatprep.subr.mxu0 0.0
      %4136 = vmatpush2.msra.mxu0 0.0
      %4137 = vmatprep.subr.mxu0 0.0
      %4138 = vmatpush2.msra.mxu0 0.0
      %4139 = vmatprep.mubr.f32.mxu0 0.0
      %4140 = vmatmul.mubr.f32.gmra.mxu0 %v3965
      %v4141 = vpop.f32.mrf.mxu0
      %v4142 = vadd.f32 %v3962, %v4141
      %v4143 = vpop.f32.mrf.mxu0
      %4144 = vmatprep.mubr.f32.mxu0 0.0
      %4145 = vmatmul.mubr.f32.gmra.mxu0 %v3968
      %v4146 = vpop.f32.mrf.mxu0
      %v4147 = vadd.f32 %v3962, %v4146
      %v4148 = vpop.f32.mrf.mxu0
      %4149 = vmatprep.mubr.f32.mxu0 0.0
      %4150 = vmatmul.mubr.f32.gmra.mxu0 %v3971
      %v4151 = vpop.f32.mrf.mxu0
      %v4152 = vadd.f32 %v3962, %v4151
      %v4153 = vpop.f32.mrf.mxu0
      %4154 = vmatprep.mubr.f32.mxu0 0.0
      %4155 = vmatmul.mubr.f32.gmra.mxu0 %v3974
      %v4156 = vpop.f32.mrf.mxu0
      %v4157 = vadd.f32 %v3962, %v4156
      %v4158 = vpop.f32.mrf.mxu0
      %4159 = vmatprep.mubr.f32.mxu0 0.0
      %4160 = vmatmul.mubr.f32.gmra.mxu0 %v3977
      %v4161 = vpop.f32.mrf.mxu0
      %v4162 = vadd.f32 %v3962, %v4161
      %v4163 = vpop.f32.mrf.mxu0
      %4164 = vmatprep.mubr.f32.mxu0 0.0
      %4165 = vmatmul.mubr.f32.gmra.mxu0 %v3980
      %v4166 = vpop.f32.mrf.mxu0
      %v4167 = vadd.f32 %v3962, %v4166
      %v4168 = vpop.f32.mrf.mxu0
      %4169 = vmatprep.mubr.f32.mxu0 0.0
      %4170 = vmatmul.mubr.f32.gmra.mxu0 %v3983
      %v4171 = vpop.f32.mrf.mxu0
      %v4172 = vadd.f32 %v3962, %v4171
      %v4173 = vpop.f32.mrf.mxu0
      %4174 = vmatprep.mubr.f32.mxu0 0.0
      %4175 = vmatmul.mubr.f32.gmra.mxu0 %v3986
      %v4176 = vpop.f32.mrf.mxu0
      %v4177 = vadd.f32 %v3962, %v4176
      %v4178 = vpop.f32.mrf.mxu0
      %4179 = vmatprep.mubr.f32.mxu0 0.0
      %4180 = vmatmul.mubr.f32.gmra.mxu0 %v3989
      %v4181 = vpop.f32.mrf.mxu0
      %v4182 = vadd.f32 %v3962, %v4181
      %v4183 = vpop.f32.mrf.mxu0
      %4184 = vmatprep.mubr.f32.mxu0 0.0
      %4185 = vmatmul.mubr.f32.gmra.mxu0 %v3992
      %v4186 = vpop.f32.mrf.mxu0
      %v4187 = vadd.f32 %v3962, %v4186
      %v4188 = vpop.f32.mrf.mxu0
      %4189 = vmatprep.mubr.f32.mxu0 0.0
      %4190 = vmatmul.mubr.f32.gmra.mxu0 %v3995
      %v4191 = vpop.f32.mrf.mxu0
      %v4192 = vadd.f32 %v3962, %v4191
      %v4193 = vpop.f32.mrf.mxu0
      %4194 = vmatprep.mubr.f32.mxu0 0.0
      %4195 = vmatmul.mubr.f32.gmra.mxu0 %v3998
      %v4196 = vpop.f32.mrf.mxu0
      %v4197 = vadd.f32 %v3962, %v4196
      %v4198 = vpop.f32.mrf.mxu0
      %4199 = vmatprep.mubr.f32.mxu0 0.0
      %4200 = vmatmul.mubr.f32.gmra.mxu0 %v4001
      %v4201 = vpop.f32.mrf.mxu0
      %v4202 = vadd.f32 %v3962, %v4201
      %v4203 = vpop.f32.mrf.mxu0
      %4204 = vmatprep.mubr.f32.mxu0 0.0
      %4205 = vmatmul.mubr.f32.gmra.mxu0 %v4004
      %v4206 = vpop.f32.mrf.mxu0
      %v4207 = vadd.f32 %v3962, %v4206
      %v4208 = vpop.f32.mrf.mxu0
      %4209 = vmatprep.mubr.f32.mxu0 0.0
      %4210 = vmatmul.mubr.f32.gmra.mxu0 %v4007
      %v4211 = vpop.f32.mrf.mxu0
      %v4212 = vadd.f32 %v3962, %v4211
      %v4213 = vpop.f32.mrf.mxu0
      %4214 = vmatprep.mubr.f32.mxu0 0.0
      %4215 = vmatmul.mubr.f32.gmra.mxu0 %v4010
      %v4216 = vpop.f32.mrf.mxu0
      %v4217 = vadd.f32 %v3962, %v4216
      %v4218 = vpop.f32.mrf.mxu0
      %4219 = vmatprep.mubr.f32.mxu0 0.0
      %4220 = vmatmul.mubr.f32.gmra.mxu0 %v4013
      %v4221 = vpop.f32.mrf.mxu0
      %v4222 = vadd.f32 %v3962, %v4221
      %v4223 = vpop.f32.mrf.mxu0
      %4224 = vmatprep.mubr.f32.mxu0 0.0
      %4225 = vmatmul.mubr.f32.gmra.mxu0 %v4016
      %v4226 = vpop.f32.mrf.mxu0
      %v4227 = vadd.f32 %v3962, %v4226
      %v4228 = vpop.f32.mrf.mxu0
      %4229 = vmatprep.mubr.f32.mxu0 0.0
      %4230 = vmatmul.mubr.f32.gmra.mxu0 %v4019
      %v4231 = vpop.f32.mrf.mxu0
      %v4232 = vadd.f32 %v3962, %v4231
      %v4233 = vpop.f32.mrf.mxu0
      %4234 = vmatprep.mubr.f32.mxu0 0.0
      %4235 = vmatmul.mubr.f32.gmra.mxu0 %v4022
      %v4236 = vpop.f32.mrf.mxu0
      %v4237 = vadd.f32 %v3962, %v4236
      %v4238 = vpop.f32.mrf.mxu0
      %4239 = vmatprep.mubr.f32.mxu0 0.0
      %4240 = vmatmul.mubr.f32.gmra.mxu0 %v4025
      %v4241 = vpop.f32.mrf.mxu0
      %v4242 = vadd.f32 %v3962, %v4241
      %v4243 = vpop.f32.mrf.mxu0
      %4244 = vmatprep.mubr.f32.mxu0 0.0
      %4245 = vmatmul.mubr.f32.gmra.mxu0 %v4028
      %v4246 = vpop.f32.mrf.mxu0
      %v4247 = vadd.f32 %v3962, %v4246
      %v4248 = vpop.f32.mrf.mxu0
      %4249 = vmatprep.mubr.f32.mxu0 0.0
      %4250 = vmatmul.mubr.f32.gmra.mxu0 %v4031
      %v4251 = vpop.f32.mrf.mxu0
      %v4252 = vadd.f32 %v3962, %v4251
      %v4253 = vpop.f32.mrf.mxu0
      %4254 = vmatprep.mubr.f32.mxu0 0.0
      %4255 = vmatmul.mubr.f32.gmra.mxu0 %v4034
      %v4256 = vpop.f32.mrf.mxu0
      %v4257 = vadd.f32 %v3962, %v4256
      %v4258 = vpop.f32.mrf.mxu0
      %4259 = vmatprep.mubr.f32.mxu0 0.0
      %4260 = vmatmul.mubr.f32.gmra.mxu0 %v4037
      %v4261 = vpop.f32.mrf.mxu0
      %v4262 = vadd.f32 %v3962, %v4261
      %v4263 = vpop.f32.mrf.mxu0
      %4264 = vmatprep.mubr.f32.mxu0 0.0
      %4265 = vmatmul.mubr.f32.gmra.mxu0 %v4040
      %v4266 = vpop.f32.mrf.mxu0
      %v4267 = vadd.f32 %v3962, %v4266
      %v4268 = vpop.f32.mrf.mxu0
      %4269 = vmatprep.mubr.f32.mxu0 0.0
      %4270 = vmatmul.mubr.f32.gmra.mxu0 %v4043
      %v4271 = vpop.f32.mrf.mxu0
      %v4272 = vadd.f32 %v3962, %v4271
      %v4273 = vpop.f32.mrf.mxu0
      %4274 = vmatprep.mubr.f32.mxu0 0.0
      %4275 = vmatmul.mubr.f32.gmra.mxu0 %v4046
      %v4276 = vpop.f32.mrf.mxu0
      %v4277 = vadd.f32 %v3962, %v4276
      %v4278 = vpop.f32.mrf.mxu0
      %4279 = vmatprep.mubr.f32.mxu0 0.0
      %4280 = vmatmul.mubr.f32.gmra.mxu0 %v4049
      %v4281 = vpop.f32.mrf.mxu0
      %v4282 = vadd.f32 %v3962, %v4281
      %v4283 = vpop.f32.mrf.mxu0
      %4284 = vmatprep.mubr.f32.mxu0 0.0
      %4285 = vmatmul.mubr.f32.gmra.mxu0 %v4052
      %v4286 = vpop.f32.mrf.mxu0
      %v4287 = vadd.f32 %v3962, %v4286
      %v4288 = vpop.f32.mrf.mxu0
      %4289 = vmatprep.mubr.f32.mxu0 0.0
      %4290 = vmatmul.mubr.f32.gmra.mxu0 %v4055
      %v4291 = vpop.f32.mrf.mxu0
      %v4292 = vadd.f32 %v3962, %v4291
      %v4293 = vpop.f32.mrf.mxu0
      %4294 = vmatprep.mubr.f32.mxu0 0.0
      %4295 = vmatmul.mubr.f32.gmra.mxu0 %v4058
      %v4296 = vpop.f32.mrf.mxu0
      %v4297 = vadd.f32 %v3962, %v4296
      %v4298 = vpop.f32.mrf.mxu0
      %4299 = vmatprep.mubr.f32.mxu0 0.0
      %4300 = vmatmul.mubr.f32.gmra.mxu0 %v4061
      %v4301 = vpop.f32.mrf.mxu0
      %v4302 = vadd.f32 %v3962, %v4301
      %v4303 = vpop.f32.mrf.mxu0
      %4304 = vmatprep.mubr.f32.mxu0 0.0
      %4305 = vmatmul.mubr.f32.gmra.mxu0 %v4064
      %v4306 = vpop.f32.mrf.mxu0
      %v4307 = vadd.f32 %v3962, %v4306
      %v4308 = vpop.f32.mrf.mxu0
      %4309 = vmatprep.mubr.f32.mxu0 0.0
      %4310 = vmatmul.mubr.f32.gmra.mxu0 %v4067
      %v4311 = vpop.f32.mrf.mxu0
      %v4312 = vadd.f32 %v3962, %v4311
      %v4313 = vpop.f32.mrf.mxu0
      %4314 = vmatprep.mubr.f32.mxu0 0.0
      %4315 = vmatmul.mubr.f32.gmra.mxu0 %v4070
      %v4316 = vpop.f32.mrf.mxu0
      %v4317 = vadd.f32 %v3962, %v4316
      %v4318 = vpop.f32.mrf.mxu0
      %4319 = vdwg.mxu0
      %v4320 = vld [vmem:[#allocation2] sm:$0xff]
      %v4321 = vld [vmem:[#allocation2 + $0x8] sm:$0xff]
      %v4322 = vld [vmem:[#allocation2 + $0x10] sm:$0xff]
      %v4323 = vld [vmem:[#allocation2 + $0x18] sm:$0xff]
      %v4324 = vld [vmem:[#allocation2 + $0x20] sm:$0xff]
      %v4325 = vld [vmem:[#allocation2 + $0x28] sm:$0xff]
      %v4326 = vld [vmem:[#allocation2 + $0x30] sm:$0xff]
      %v4327 = vld [vmem:[#allocation2 + $0x38] sm:$0xff]
      %v4328 = vld [vmem:[#allocation2 + $0x40] sm:$0xff]
      %v4329 = vld [vmem:[#allocation2 + $0x48] sm:$0xff]
      %v4330 = vld [vmem:[#allocation2 + $0x50] sm:$0xff]
      %v4331 = vld [vmem:[#allocation2 + $0x58] sm:$0xff]
      %v4332 = vld [vmem:[#allocation2 + $0x60] sm:$0xff]
      %v4333 = vld [vmem:[#allocation2 + $0x68] sm:$0xff]
      %v4334 = vld [vmem:[#allocation2 + $0x70] sm:$0xff]
      %v4335 = vld [vmem:[#allocation2 + $0x78] sm:$0xff]
      %v4336 = vld [vmem:[#allocation2 + $0x80] sm:$0xff]
      %v4337 = vld [vmem:[#allocation2 + $0x88] sm:$0xff]
      %v4338 = vld [vmem:[#allocation2 + $0x90] sm:$0xff]
      %v4339 = vld [vmem:[#allocation2 + $0x98] sm:$0xff]
      %v4340 = vld [vmem:[#allocation2 + $0xa0] sm:$0xff]
      %v4341 = vld [vmem:[#allocation2 + $0xa8] sm:$0xff]
      %v4342 = vld [vmem:[#allocation2 + $0xb0] sm:$0xff]
      %v4343 = vld [vmem:[#allocation2 + $0xb8] sm:$0xff]
      %v4344 = vld [vmem:[#allocation2 + $0xc0] sm:$0xff]
      %v4345 = vld [vmem:[#allocation2 + $0xc8] sm:$0xff]
      %v4346 = vld [vmem:[#allocation2 + $0xd0] sm:$0xff]
      %v4347 = vld [vmem:[#allocation2 + $0xd8] sm:$0xff]
      %v4348 = vld [vmem:[#allocation2 + $0xe0] sm:$0xff]
      %v4349 = vld [vmem:[#allocation2 + $0xe8] sm:$0xff]
      %v4350 = vld [vmem:[#allocation2 + $0xf0] sm:$0xff]
      %v4351 = vld [vmem:[#allocation2 + $0xf8] sm:$0xff]
      %v4352 = vld [vmem:[#allocation2 + $0x100] sm:$0xff]
      %v4353 = vld [vmem:[#allocation2 + $0x108] sm:$0xff]
      %v4354 = vld [vmem:[#allocation2 + $0x110] sm:$0xff]
      %v4355 = vld [vmem:[#allocation2 + $0x118] sm:$0xff]
      %v4356 = vld [vmem:[%s2] sm:$0xf]
      %v4358 = vsel %vm421, %v4320, 0
      %v4361 = vsel %vm421, %v4321, 0
      %v4364 = vsel %vm421, %v4322, 0
      %v4367 = vsel %vm421, %v4323, 0
      %v4370 = vsel %vm421, %v4324, 0
      %v4373 = vsel %vm421, %v4325, 0
      %v4376 = vsel %vm421, %v4326, 0
      %v4379 = vsel %vm421, %v4327, 0
      %v4382 = vsel %vm421, %v4328, 0
      %v4385 = vsel %vm421, %v4329, 0
      %v4388 = vsel %vm421, %v4330, 0
      %v4391 = vsel %vm421, %v4331, 0
      %v4394 = vsel %vm421, %v4332, 0
      %v4397 = vsel %vm421, %v4333, 0
      %v4400 = vsel %vm421, %v4334, 0
      %v4403 = vsel %vm421, %v4335, 0
      %v4406 = vsel %vm421, %v4336, 0
      %v4409 = vsel %vm421, %v4337, 0
      %v4412 = vsel %vm421, %v4338, 0
      %v4415 = vsel %vm421, %v4339, 0
      %v4418 = vsel %vm421, %v4340, 0
      %v4421 = vsel %vm421, %v4341, 0
      %v4424 = vsel %vm421, %v4342, 0
      %v4427 = vsel %vm421, %v4343, 0
      %v4430 = vsel %vm421, %v4344, 0
      %v4433 = vsel %vm421, %v4345, 0
      %v4436 = vsel %vm421, %v4346, 0
      %v4439 = vsel %vm421, %v4347, 0
      %v4442 = vsel %vm421, %v4348, 0
      %v4445 = vsel %vm421, %v4349, 0
      %v4448 = vsel %vm421, %v4350, 0
      %v4451 = vsel %vm421, %v4351, 0
      %v4454 = vsel %vm421, %v4352, 0
      %v4457 = vsel %vm421, %v4353, 0
      %v4460 = vsel %vm421, %v4354, 0
      %v4463 = vsel %vm421, %v4355, 0
      %v4466 = vsel %vm494, %v4356, 0
      %4468 = vmatprep.subr.mxu0 0.0
      %4469 = vmatpush1.msra.mxu0 0.0
      %4470 = vmatprep.subr.mxu0 0.0
      %4471 = vmatpush1.msra.mxu0 0.0
      %4472 = vmatprep.subr.mxu0 0.0
      %4473 = vmatpush1.msra.mxu0 0.0
      %4474 = vmatprep.subr.mxu0 0.0
      %4475 = vmatpush1.msra.mxu0 0.0
      %4476 = vmatprep.subr.mxu0 0.0
      %4477 = vmatpush1.msra.mxu0 0.0
      %4478 = vmatprep.subr.mxu0 0.0
      %4479 = vmatpush1.msra.mxu0 0.0
      %4480 = vmatprep.subr.mxu0 0.0
      %4481 = vmatpush1.msra.mxu0 0.0
      %4482 = vmatprep.subr.mxu0 0.0
      %4483 = vmatpush1.msra.mxu0 0.0
      %4484 = vmatprep.subr.mxu0 0.0
      %4485 = vmatpush1.msra.mxu0 0.0
      %4486 = vmatprep.subr.mxu0 0.0
      %4487 = vmatpush1.msra.mxu0 0.0
      %4488 = vmatprep.subr.mxu0 0.0
      %4489 = vmatpush1.msra.mxu0 0.0
      %4490 = vmatprep.subr.mxu0 0.0
      %4491 = vmatpush1.msra.mxu0 0.0
      %4492 = vmatprep.subr.mxu0 0.0
      %4493 = vmatpush1.msra.mxu0 0.0
      %4494 = vmatprep.subr.mxu0 0.0
      %4495 = vmatpush1.msra.mxu0 0.0
      %4496 = vmatprep.subr.mxu0 0.0
      %4497 = vmatpush1.msra.mxu0 0.0
      %4498 = vmatprep.subr.mxu0 0.0
      %4499 = vmatpush1.msra.mxu0 %v4466
      %4500 = vmatprep.subr.mxu0 0.0
      %4501 = vmatpush2.msra.mxu0 0.0
      %4502 = vmatprep.subr.mxu0 0.0
      %4503 = vmatpush2.msra.mxu0 0.0
      %4504 = vmatprep.subr.mxu0 0.0
      %4505 = vmatpush2.msra.mxu0 0.0
      %4506 = vmatprep.subr.mxu0 0.0
      %4507 = vmatpush2.msra.mxu0 0.0
      %4508 = vmatprep.subr.mxu0 0.0
      %4509 = vmatpush2.msra.mxu0 0.0
      %4510 = vmatprep.subr.mxu0 0.0
      %4511 = vmatpush2.msra.mxu0 0.0
      %4512 = vmatprep.subr.mxu0 0.0
      %4513 = vmatpush2.msra.mxu0 0.0
      %4514 = vmatprep.subr.mxu0 0.0
      %4515 = vmatpush2.msra.mxu0 0.0
      %4516 = vmatprep.subr.mxu0 0.0
      %4517 = vmatpush2.msra.mxu0 0.0
      %4518 = vmatprep.subr.mxu0 0.0
      %4519 = vmatpush2.msra.mxu0 0.0
      %4520 = vmatprep.subr.mxu0 0.0
      %4521 = vmatpush2.msra.mxu0 0.0
      %4522 = vmatprep.subr.mxu0 0.0
      %4523 = vmatpush2.msra.mxu0 0.0
      %4524 = vmatprep.subr.mxu0 0.0
      %4525 = vmatpush2.msra.mxu0 0.0
      %4526 = vmatprep.subr.mxu0 0.0
      %4527 = vmatpush2.msra.mxu0 0.0
      %4528 = vmatprep.subr.mxu0 0.0
      %4529 = vmatpush2.msra.mxu0 0.0
      %4530 = vmatprep.subr.mxu0 0.0
      %4531 = vmatpush2.msra.mxu0 0.0
      %4532 = vmatprep.mubr.f32.mxu0 0.0
      %4533 = vmatmul.mubr.f32.gmra.mxu0 %v4358
      %v4534 = vpop.f32.mrf.mxu0
      %v4535 = vadd.f32 0.0, %v4534
      %v4536 = vpop.f32.mrf.mxu0
      %4537 = vmatprep.mubr.f32.mxu0 0.0
      %4538 = vmatmul.mubr.f32.gmra.mxu0 %v4361
      %v4539 = vpop.f32.mrf.mxu0
      %v4540 = vadd.f32 0.0, %v4539
      %v4541 = vpop.f32.mrf.mxu0
      %4542 = vmatprep.mubr.f32.mxu0 0.0
      %4543 = vmatmul.mubr.f32.gmra.mxu0 %v4364
      %v4544 = vpop.f32.mrf.mxu0
      %v4545 = vadd.f32 0.0, %v4544
      %v4546 = vpop.f32.mrf.mxu0
      %4547 = vmatprep.mubr.f32.mxu0 0.0
      %4548 = vmatmul.mubr.f32.gmra.mxu0 %v4367
      %v4549 = vpop.f32.mrf.mxu0
      %v4550 = vadd.f32 0.0, %v4549
      %v4551 = vpop.f32.mrf.mxu0
      %4552 = vmatprep.mubr.f32.mxu0 0.0
      %4553 = vmatmul.mubr.f32.gmra.mxu0 %v4370
      %v4554 = vpop.f32.mrf.mxu0
      %v4555 = vadd.f32 0.0, %v4554
      %v4556 = vpop.f32.mrf.mxu0
      %4557 = vmatprep.mubr.f32.mxu0 0.0
      %4558 = vmatmul.mubr.f32.gmra.mxu0 %v4373
      %v4559 = vpop.f32.mrf.mxu0
      %v4560 = vadd.f32 0.0, %v4559
      %v4561 = vpop.f32.mrf.mxu0
      %4562 = vmatprep.mubr.f32.mxu0 0.0
      %4563 = vmatmul.mubr.f32.gmra.mxu0 %v4376
      %v4564 = vpop.f32.mrf.mxu0
      %v4565 = vadd.f32 0.0, %v4564
      %v4566 = vpop.f32.mrf.mxu0
      %4567 = vmatprep.mubr.f32.mxu0 0.0
      %4568 = vmatmul.mubr.f32.gmra.mxu0 %v4379
      %v4569 = vpop.f32.mrf.mxu0
      %v4570 = vadd.f32 0.0, %v4569
      %v4571 = vpop.f32.mrf.mxu0
      %4572 = vmatprep.mubr.f32.mxu0 0.0
      %4573 = vmatmul.mubr.f32.gmra.mxu0 %v4382
      %v4574 = vpop.f32.mrf.mxu0
      %v4575 = vadd.f32 0.0, %v4574
      %v4576 = vpop.f32.mrf.mxu0
      %4577 = vmatprep.mubr.f32.mxu0 0.0
      %4578 = vmatmul.mubr.f32.gmra.mxu0 %v4385
      %v4579 = vpop.f32.mrf.mxu0
      %v4580 = vadd.f32 0.0, %v4579
      %v4581 = vpop.f32.mrf.mxu0
      %4582 = vmatprep.mubr.f32.mxu0 0.0
      %4583 = vmatmul.mubr.f32.gmra.mxu0 %v4388
      %v4584 = vpop.f32.mrf.mxu0
      %v4585 = vadd.f32 0.0, %v4584
      %v4586 = vpop.f32.mrf.mxu0
      %4587 = vmatprep.mubr.f32.mxu0 0.0
      %4588 = vmatmul.mubr.f32.gmra.mxu0 %v4391
      %v4589 = vpop.f32.mrf.mxu0
      %v4590 = vadd.f32 0.0, %v4589
      %v4591 = vpop.f32.mrf.mxu0
      %4592 = vmatprep.mubr.f32.mxu0 0.0
      %4593 = vmatmul.mubr.f32.gmra.mxu0 %v4394
      %v4594 = vpop.f32.mrf.mxu0
      %v4595 = vadd.f32 0.0, %v4594
      %v4596 = vpop.f32.mrf.mxu0
      %4597 = vmatprep.mubr.f32.mxu0 0.0
      %4598 = vmatmul.mubr.f32.gmra.mxu0 %v4397
      %v4599 = vpop.f32.mrf.mxu0
      %v4600 = vadd.f32 0.0, %v4599
      %v4601 = vpop.f32.mrf.mxu0
      %4602 = vmatprep.mubr.f32.mxu0 0.0
      %4603 = vmatmul.mubr.f32.gmra.mxu0 %v4400
      %v4604 = vpop.f32.mrf.mxu0
      %v4605 = vadd.f32 0.0, %v4604
      %v4606 = vpop.f32.mrf.mxu0
      %4607 = vmatprep.mubr.f32.mxu0 0.0
      %4608 = vmatmul.mubr.f32.gmra.mxu0 %v4403
      %v4609 = vpop.f32.mrf.mxu0
      %v4610 = vadd.f32 0.0, %v4609
      %v4611 = vpop.f32.mrf.mxu0
      %4612 = vmatprep.mubr.f32.mxu0 0.0
      %4613 = vmatmul.mubr.f32.gmra.mxu0 %v4406
      %v4614 = vpop.f32.mrf.mxu0
      %v4615 = vadd.f32 0.0, %v4614
      %v4616 = vpop.f32.mrf.mxu0
      %4617 = vmatprep.mubr.f32.mxu0 0.0
      %4618 = vmatmul.mubr.f32.gmra.mxu0 %v4409
      %v4619 = vpop.f32.mrf.mxu0
      %v4620 = vadd.f32 0.0, %v4619
      %v4621 = vpop.f32.mrf.mxu0
      %4622 = vmatprep.mubr.f32.mxu0 0.0
      %4623 = vmatmul.mubr.f32.gmra.mxu0 %v4412
      %v4624 = vpop.f32.mrf.mxu0
      %v4625 = vadd.f32 0.0, %v4624
      %v4626 = vpop.f32.mrf.mxu0
      %4627 = vmatprep.mubr.f32.mxu0 0.0
      %4628 = vmatmul.mubr.f32.gmra.mxu0 %v4415
      %v4629 = vpop.f32.mrf.mxu0
      %v4630 = vadd.f32 0.0, %v4629
      %v4631 = vpop.f32.mrf.mxu0
      %4632 = vmatprep.mubr.f32.mxu0 0.0
      %4633 = vmatmul.mubr.f32.gmra.mxu0 %v4418
      %v4634 = vpop.f32.mrf.mxu0
      %v4635 = vadd.f32 0.0, %v4634
      %v4636 = vpop.f32.mrf.mxu0
      %4637 = vmatprep.mubr.f32.mxu0 0.0
      %4638 = vmatmul.mubr.f32.gmra.mxu0 %v4421
      %v4639 = vpop.f32.mrf.mxu0
      %v4640 = vadd.f32 0.0, %v4639
      %v4641 = vpop.f32.mrf.mxu0
      %4642 = vmatprep.mubr.f32.mxu0 0.0
      %4643 = vmatmul.mubr.f32.gmra.mxu0 %v4424
      %v4644 = vpop.f32.mrf.mxu0
      %v4645 = vadd.f32 0.0, %v4644
      %v4646 = vpop.f32.mrf.mxu0
      %4647 = vmatprep.mubr.f32.mxu0 0.0
      %4648 = vmatmul.mubr.f32.gmra.mxu0 %v4427
      %v4649 = vpop.f32.mrf.mxu0
      %v4650 = vadd.f32 0.0, %v4649
      %v4651 = vpop.f32.mrf.mxu0
      %4652 = vmatprep.mubr.f32.mxu0 0.0
      %4653 = vmatmul.mubr.f32.gmra.mxu0 %v4430
      %v4654 = vpop.f32.mrf.mxu0
      %v4655 = vadd.f32 0.0, %v4654
      %v4656 = vpop.f32.mrf.mxu0
      %4657 = vmatprep.mubr.f32.mxu0 0.0
      %4658 = vmatmul.mubr.f32.gmra.mxu0 %v4433
      %v4659 = vpop.f32.mrf.mxu0
      %v4660 = vadd.f32 0.0, %v4659
      %v4661 = vpop.f32.mrf.mxu0
      %4662 = vmatprep.mubr.f32.mxu0 0.0
      %4663 = vmatmul.mubr.f32.gmra.mxu0 %v4436
      %v4664 = vpop.f32.mrf.mxu0
      %v4665 = vadd.f32 0.0, %v4664
      %v4666 = vpop.f32.mrf.mxu0
      %4667 = vmatprep.mubr.f32.mxu0 0.0
      %4668 = vmatmul.mubr.f32.gmra.mxu0 %v4439
      %v4669 = vpop.f32.mrf.mxu0
      %v4670 = vadd.f32 0.0, %v4669
      %v4671 = vpop.f32.mrf.mxu0
      %4672 = vmatprep.mubr.f32.mxu0 0.0
      %4673 = vmatmul.mubr.f32.gmra.mxu0 %v4442
      %v4674 = vpop.f32.mrf.mxu0
      %v4675 = vadd.f32 0.0, %v4674
      %v4676 = vpop.f32.mrf.mxu0
      %4677 = vmatprep.mubr.f32.mxu0 0.0
      %4678 = vmatmul.mubr.f32.gmra.mxu0 %v4445
      %v4679 = vpop.f32.mrf.mxu0
      %v4680 = vadd.f32 0.0, %v4679
      %v4681 = vpop.f32.mrf.mxu0
      %4682 = vmatprep.mubr.f32.mxu0 0.0
      %4683 = vmatmul.mubr.f32.gmra.mxu0 %v4448
      %v4684 = vpop.f32.mrf.mxu0
      %v4685 = vadd.f32 0.0, %v4684
      %v4686 = vpop.f32.mrf.mxu0
      %4687 = vmatprep.mubr.f32.mxu0 0.0
      %4688 = vmatmul.mubr.f32.gmra.mxu0 %v4451
      %v4689 = vpop.f32.mrf.mxu0
      %v4690 = vadd.f32 0.0, %v4689
      %v4691 = vpop.f32.mrf.mxu0
      %4692 = vmatprep.mubr.f32.mxu0 0.0
      %4693 = vmatmul.mubr.f32.gmra.mxu0 %v4454
      %v4694 = vpop.f32.mrf.mxu0
      %v4695 = vadd.f32 0.0, %v4694
      %v4696 = vpop.f32.mrf.mxu0
      %4697 = vmatprep.mubr.f32.mxu0 0.0
      %4698 = vmatmul.mubr.f32.gmra.mxu0 %v4457
      %v4699 = vpop.f32.mrf.mxu0
      %v4700 = vadd.f32 0.0, %v4699
      %v4701 = vpop.f32.mrf.mxu0
      %4702 = vmatprep.mubr.f32.mxu0 0.0
      %4703 = vmatmul.mubr.f32.gmra.mxu0 %v4460
      %v4704 = vpop.f32.mrf.mxu0
      %v4705 = vadd.f32 0.0, %v4704
      %v4706 = vpop.f32.mrf.mxu0
      %4707 = vmatprep.mubr.f32.mxu0 0.0
      %4708 = vmatmul.mubr.f32.gmra.mxu0 %v4463
      %v4709 = vpop.f32.mrf.mxu0
      %v4710 = vadd.f32 0.0, %v4709
      %v4711 = vpop.f32.mrf.mxu0
      %4712 = vdwg.mxu0
      %v4713 = vadd.f32 %v4142, %v4535
      %v4714 = vadd.f32 %v4147, %v4540
      %v4715 = vadd.f32 %v4152, %v4545
      %v4716 = vadd.f32 %v4157, %v4550
      %v4717 = vadd.f32 %v4162, %v4555
      %v4718 = vadd.f32 %v4167, %v4560
      %v4719 = vadd.f32 %v4172, %v4565
      %v4720 = vadd.f32 %v4177, %v4570
      %v4721 = vadd.f32 %v4182, %v4575
      %v4722 = vadd.f32 %v4187, %v4580
      %v4723 = vadd.f32 %v4192, %v4585
      %v4724 = vadd.f32 %v4197, %v4590
      %v4725 = vadd.f32 %v4202, %v4595
      %v4726 = vadd.f32 %v4207, %v4600
      %v4727 = vadd.f32 %v4212, %v4605
      %v4728 = vadd.f32 %v4217, %v4610
      %v4729 = vadd.f32 %v4222, %v4615
      %v4730 = vadd.f32 %v4227, %v4620
      %v4731 = vadd.f32 %v4232, %v4625
      %v4732 = vadd.f32 %v4237, %v4630
      %v4733 = vadd.f32 %v4242, %v4635
      %v4734 = vadd.f32 %v4247, %v4640
      %v4735 = vadd.f32 %v4252, %v4645
      %v4736 = vadd.f32 %v4257, %v4650
      %v4737 = vadd.f32 %v4262, %v4655
      %v4738 = vadd.f32 %v4267, %v4660
      %v4739 = vadd.f32 %v4272, %v4665
      %v4740 = vadd.f32 %v4277, %v4670
      %v4741 = vadd.f32 %v4282, %v4675
      %v4742 = vadd.f32 %v4287, %v4680
      %v4743 = vadd.f32 %v4292, %v4685
      %v4744 = vadd.f32 %v4297, %v4690
      %v4745 = vadd.f32 %v4302, %v4695
      %v4746 = vadd.f32 %v4307, %v4700
      %v4747 = vadd.f32 %v4312, %v4705
      %v4748 = vadd.f32 %v4317, %v4710
      %v4749 = vld [vmem:[#allocation2 + $0x1] sm:$0xff]
      %v4750 = vld [vmem:[#allocation2 + $0x9] sm:$0xff]
      %v4751 = vld [vmem:[#allocation2 + $0x11] sm:$0xff]
      %v4752 = vld [vmem:[#allocation2 + $0x19] sm:$0xff]
      %v4753 = vld [vmem:[#allocation2 + $0x21] sm:$0xff]
      %v4754 = vld [vmem:[#allocation2 + $0x29] sm:$0xff]
      %v4755 = vld [vmem:[#allocation2 + $0x31] sm:$0xff]
      %v4756 = vld [vmem:[#allocation2 + $0x39] sm:$0xff]
      %v4757 = vld [vmem:[#allocation2 + $0x41] sm:$0xff]
      %v4758 = vld [vmem:[#allocation2 + $0x49] sm:$0xff]
      %v4759 = vld [vmem:[#allocation2 + $0x51] sm:$0xff]
      %v4760 = vld [vmem:[#allocation2 + $0x59] sm:$0xff]
      %v4761 = vld [vmem:[#allocation2 + $0x61] sm:$0xff]
      %v4762 = vld [vmem:[#allocation2 + $0x69] sm:$0xff]
      %v4763 = vld [vmem:[#allocation2 + $0x71] sm:$0xff]
      %v4764 = vld [vmem:[#allocation2 + $0x79] sm:$0xff]
      %v4765 = vld [vmem:[#allocation2 + $0x81] sm:$0xff]
      %v4766 = vld [vmem:[#allocation2 + $0x89] sm:$0xff]
      %v4767 = vld [vmem:[#allocation2 + $0x91] sm:$0xff]
      %v4768 = vld [vmem:[#allocation2 + $0x99] sm:$0xff]
      %v4769 = vld [vmem:[#allocation2 + $0xa1] sm:$0xff]
      %v4770 = vld [vmem:[#allocation2 + $0xa9] sm:$0xff]
      %v4771 = vld [vmem:[#allocation2 + $0xb1] sm:$0xff]
      %v4772 = vld [vmem:[#allocation2 + $0xb9] sm:$0xff]
      %v4773 = vld [vmem:[#allocation2 + $0xc1] sm:$0xff]
      %v4774 = vld [vmem:[#allocation2 + $0xc9] sm:$0xff]
      %v4775 = vld [vmem:[#allocation2 + $0xd1] sm:$0xff]
      %v4776 = vld [vmem:[#allocation2 + $0xd9] sm:$0xff]
      %v4777 = vld [vmem:[#allocation2 + $0xe1] sm:$0xff]
      %v4778 = vld [vmem:[#allocation2 + $0xe9] sm:$0xff]
      %v4779 = vld [vmem:[#allocation2 + $0xf1] sm:$0xff]
      %v4780 = vld [vmem:[#allocation2 + $0xf9] sm:$0xff]
      %v4781 = vld [vmem:[#allocation2 + $0x101] sm:$0xff]
      %v4782 = vld [vmem:[#allocation2 + $0x109] sm:$0xff]
      %v4783 = vld [vmem:[#allocation2 + $0x111] sm:$0xff]
      %v4784 = vld [vmem:[#allocation2 + $0x119] sm:$0xff]
      %s4785 = scalar_lea.vmem %s2, 4
      %v4786 = vld [vmem:[%s4785] sm:$0xf]
      %v4788 = vsel %vm421, %v4749, 0
      %v4791 = vsel %vm421, %v4750, 0
      %v4794 = vsel %vm421, %v4751, 0
      %v4797 = vsel %vm421, %v4752, 0
      %v4800 = vsel %vm421, %v4753, 0
      %v4803 = vsel %vm421, %v4754, 0
      %v4806 = vsel %vm421, %v4755, 0
      %v4809 = vsel %vm421, %v4756, 0
      %v4812 = vsel %vm421, %v4757, 0
      %v4815 = vsel %vm421, %v4758, 0
      %v4818 = vsel %vm421, %v4759, 0
      %v4821 = vsel %vm421, %v4760, 0
      %v4824 = vsel %vm421, %v4761, 0
      %v4827 = vsel %vm421, %v4762, 0
      %v4830 = vsel %vm421, %v4763, 0
      %v4833 = vsel %vm421, %v4764, 0
      %v4836 = vsel %vm421, %v4765, 0
      %v4839 = vsel %vm421, %v4766, 0
      %v4842 = vsel %vm421, %v4767, 0
      %v4845 = vsel %vm421, %v4768, 0
      %v4848 = vsel %vm421, %v4769, 0
      %v4851 = vsel %vm421, %v4770, 0
      %v4854 = vsel %vm421, %v4771, 0
      %v4857 = vsel %vm421, %v4772, 0
      %v4860 = vsel %vm421, %v4773, 0
      %v4863 = vsel %vm421, %v4774, 0
      %v4866 = vsel %vm421, %v4775, 0
      %v4869 = vsel %vm421, %v4776, 0
      %v4872 = vsel %vm421, %v4777, 0
      %v4875 = vsel %vm421, %v4778, 0
      %v4878 = vsel %vm421, %v4779, 0
      %v4881 = vsel %vm421, %v4780, 0
      %v4884 = vsel %vm421, %v4781, 0
      %v4887 = vsel %vm421, %v4782, 0
      %v4890 = vsel %vm421, %v4783, 0
      %v4893 = vsel %vm421, %v4784, 0
      %v4896 = vsel %vm494, %v4786, 0
      %4898 = vmatprep.subr.mxu0 0.0
      %4899 = vmatpush1.msra.mxu0 0.0
      %4900 = vmatprep.subr.mxu0 0.0
      %4901 = vmatpush1.msra.mxu0 0.0
      %4902 = vmatprep.subr.mxu0 0.0
      %4903 = vmatpush1.msra.mxu0 0.0
      %4904 = vmatprep.subr.mxu0 0.0
      %4905 = vmatpush1.msra.mxu0 0.0
      %4906 = vmatprep.subr.mxu0 0.0
      %4907 = vmatpush1.msra.mxu0 0.0
      %4908 = vmatprep.subr.mxu0 0.0
      %4909 = vmatpush1.msra.mxu0 0.0
      %4910 = vmatprep.subr.mxu0 0.0
      %4911 = vmatpush1.msra.mxu0 0.0
      %4912 = vmatprep.subr.mxu0 0.0
      %4913 = vmatpush1.msra.mxu0 0.0
      %4914 = vmatprep.subr.mxu0 0.0
      %4915 = vmatpush1.msra.mxu0 0.0
      %4916 = vmatprep.subr.mxu0 0.0
      %4917 = vmatpush1.msra.mxu0 0.0
      %4918 = vmatprep.subr.mxu0 0.0
      %4919 = vmatpush1.msra.mxu0 0.0
      %4920 = vmatprep.subr.mxu0 0.0
      %4921 = vmatpush1.msra.mxu0 0.0
      %4922 = vmatprep.subr.mxu0 0.0
      %4923 = vmatpush1.msra.mxu0 0.0
      %4924 = vmatprep.subr.mxu0 0.0
      %4925 = vmatpush1.msra.mxu0 0.0
      %4926 = vmatprep.subr.mxu0 0.0
      %4927 = vmatpush1.msra.mxu0 0.0
      %4928 = vmatprep.subr.mxu0 0.0
      %4929 = vmatpush1.msra.mxu0 %v4896
      %4930 = vmatprep.subr.mxu0 0.0
      %4931 = vmatpush2.msra.mxu0 0.0
      %4932 = vmatprep.subr.mxu0 0.0
      %4933 = vmatpush2.msra.mxu0 0.0
      %4934 = vmatprep.subr.mxu0 0.0
      %4935 = vmatpush2.msra.mxu0 0.0
      %4936 = vmatprep.subr.mxu0 0.0
      %4937 = vmatpush2.msra.mxu0 0.0
      %4938 = vmatprep.subr.mxu0 0.0
      %4939 = vmatpush2.msra.mxu0 0.0
      %4940 = vmatprep.subr.mxu0 0.0
      %4941 = vmatpush2.msra.mxu0 0.0
      %4942 = vmatprep.subr.mxu0 0.0
      %4943 = vmatpush2.msra.mxu0 0.0
      %4944 = vmatprep.subr.mxu0 0.0
      %4945 = vmatpush2.msra.mxu0 0.0
      %4946 = vmatprep.subr.mxu0 0.0
      %4947 = vmatpush2.msra.mxu0 0.0
      %4948 = vmatprep.subr.mxu0 0.0
      %4949 = vmatpush2.msra.mxu0 0.0
      %4950 = vmatprep.subr.mxu0 0.0
      %4951 = vmatpush2.msra.mxu0 0.0
      %4952 = vmatprep.subr.mxu0 0.0
      %4953 = vmatpush2.msra.mxu0 0.0
      %4954 = vmatprep.subr.mxu0 0.0
      %4955 = vmatpush2.msra.mxu0 0.0
      %4956 = vmatprep.subr.mxu0 0.0
      %4957 = vmatpush2.msra.mxu0 0.0
      %4958 = vmatprep.subr.mxu0 0.0
      %4959 = vmatpush2.msra.mxu0 0.0
      %4960 = vmatprep.subr.mxu0 0.0
      %4961 = vmatpush2.msra.mxu0 0.0
      %4962 = vmatprep.mubr.f32.mxu0 0.0
      %4963 = vmatmul.mubr.f32.gmra.mxu0 %v4788
      %v4964 = vpop.f32.mrf.mxu0
      %v4965 = vadd.f32 0.0, %v4964
      %v4966 = vpop.f32.mrf.mxu0
      %4967 = vmatprep.mubr.f32.mxu0 0.0
      %4968 = vmatmul.mubr.f32.gmra.mxu0 %v4791
      %v4969 = vpop.f32.mrf.mxu0
      %v4970 = vadd.f32 0.0, %v4969
      %v4971 = vpop.f32.mrf.mxu0
      %4972 = vmatprep.mubr.f32.mxu0 0.0
      %4973 = vmatmul.mubr.f32.gmra.mxu0 %v4794
      %v4974 = vpop.f32.mrf.mxu0
      %v4975 = vadd.f32 0.0, %v4974
      %v4976 = vpop.f32.mrf.mxu0
      %4977 = vmatprep.mubr.f32.mxu0 0.0
      %4978 = vmatmul.mubr.f32.gmra.mxu0 %v4797
      %v4979 = vpop.f32.mrf.mxu0
      %v4980 = vadd.f32 0.0, %v4979
      %v4981 = vpop.f32.mrf.mxu0
      %4982 = vmatprep.mubr.f32.mxu0 0.0
      %4983 = vmatmul.mubr.f32.gmra.mxu0 %v4800
      %v4984 = vpop.f32.mrf.mxu0
      %v4985 = vadd.f32 0.0, %v4984
      %v4986 = vpop.f32.mrf.mxu0
      %4987 = vmatprep.mubr.f32.mxu0 0.0
      %4988 = vmatmul.mubr.f32.gmra.mxu0 %v4803
      %v4989 = vpop.f32.mrf.mxu0
      %v4990 = vadd.f32 0.0, %v4989
      %v4991 = vpop.f32.mrf.mxu0
      %4992 = vmatprep.mubr.f32.mxu0 0.0
      %4993 = vmatmul.mubr.f32.gmra.mxu0 %v4806
      %v4994 = vpop.f32.mrf.mxu0
      %v4995 = vadd.f32 0.0, %v4994
      %v4996 = vpop.f32.mrf.mxu0
      %4997 = vmatprep.mubr.f32.mxu0 0.0
      %4998 = vmatmul.mubr.f32.gmra.mxu0 %v4809
      %v4999 = vpop.f32.mrf.mxu0
      %v5000 = vadd.f32 0.0, %v4999
      %v5001 = vpop.f32.mrf.mxu0
      %5002 = vmatprep.mubr.f32.mxu0 0.0
      %5003 = vmatmul.mubr.f32.gmra.mxu0 %v4812
      %v5004 = vpop.f32.mrf.mxu0
      %v5005 = vadd.f32 0.0, %v5004
      %v5006 = vpop.f32.mrf.mxu0
      %5007 = vmatprep.mubr.f32.mxu0 0.0
      %5008 = vmatmul.mubr.f32.gmra.mxu0 %v4815
      %v5009 = vpop.f32.mrf.mxu0
      %v5010 = vadd.f32 0.0, %v5009
      %v5011 = vpop.f32.mrf.mxu0
      %5012 = vmatprep.mubr.f32.mxu0 0.0
      %5013 = vmatmul.mubr.f32.gmra.mxu0 %v4818
      %v5014 = vpop.f32.mrf.mxu0
      %v5015 = vadd.f32 0.0, %v5014
      %v5016 = vpop.f32.mrf.mxu0
      %5017 = vmatprep.mubr.f32.mxu0 0.0
      %5018 = vmatmul.mubr.f32.gmra.mxu0 %v4821
      %v5019 = vpop.f32.mrf.mxu0
      %v5020 = vadd.f32 0.0, %v5019
      %v5021 = vpop.f32.mrf.mxu0
      %5022 = vmatprep.mubr.f32.mxu0 0.0
      %5023 = vmatmul.mubr.f32.gmra.mxu0 %v4824
      %v5024 = vpop.f32.mrf.mxu0
      %v5025 = vadd.f32 0.0, %v5024
      %v5026 = vpop.f32.mrf.mxu0
      %5027 = vmatprep.mubr.f32.mxu0 0.0
      %5028 = vmatmul.mubr.f32.gmra.mxu0 %v4827
      %v5029 = vpop.f32.mrf.mxu0
      %v5030 = vadd.f32 0.0, %v5029
      %v5031 = vpop.f32.mrf.mxu0
      %5032 = vmatprep.mubr.f32.mxu0 0.0
      %5033 = vmatmul.mubr.f32.gmra.mxu0 %v4830
      %v5034 = vpop.f32.mrf.mxu0
      %v5035 = vadd.f32 0.0, %v5034
      %v5036 = vpop.f32.mrf.mxu0
      %5037 = vmatprep.mubr.f32.mxu0 0.0
      %5038 = vmatmul.mubr.f32.gmra.mxu0 %v4833
      %v5039 = vpop.f32.mrf.mxu0
      %v5040 = vadd.f32 0.0, %v5039
      %v5041 = vpop.f32.mrf.mxu0
      %5042 = vmatprep.mubr.f32.mxu0 0.0
      %5043 = vmatmul.mubr.f32.gmra.mxu0 %v4836
      %v5044 = vpop.f32.mrf.mxu0
      %v5045 = vadd.f32 0.0, %v5044
      %v5046 = vpop.f32.mrf.mxu0
      %5047 = vmatprep.mubr.f32.mxu0 0.0
      %5048 = vmatmul.mubr.f32.gmra.mxu0 %v4839
      %v5049 = vpop.f32.mrf.mxu0
      %v5050 = vadd.f32 0.0, %v5049
      %v5051 = vpop.f32.mrf.mxu0
      %5052 = vmatprep.mubr.f32.mxu0 0.0
      %5053 = vmatmul.mubr.f32.gmra.mxu0 %v4842
      %v5054 = vpop.f32.mrf.mxu0
      %v5055 = vadd.f32 0.0, %v5054
      %v5056 = vpop.f32.mrf.mxu0
      %5057 = vmatprep.mubr.f32.mxu0 0.0
      %5058 = vmatmul.mubr.f32.gmra.mxu0 %v4845
      %v5059 = vpop.f32.mrf.mxu0
      %v5060 = vadd.f32 0.0, %v5059
      %v5061 = vpop.f32.mrf.mxu0
      %5062 = vmatprep.mubr.f32.mxu0 0.0
      %5063 = vmatmul.mubr.f32.gmra.mxu0 %v4848
      %v5064 = vpop.f32.mrf.mxu0
      %v5065 = vadd.f32 0.0, %v5064
      %v5066 = vpop.f32.mrf.mxu0
      %5067 = vmatprep.mubr.f32.mxu0 0.0
      %5068 = vmatmul.mubr.f32.gmra.mxu0 %v4851
      %v5069 = vpop.f32.mrf.mxu0
      %v5070 = vadd.f32 0.0, %v5069
      %v5071 = vpop.f32.mrf.mxu0
      %5072 = vmatprep.mubr.f32.mxu0 0.0
      %5073 = vmatmul.mubr.f32.gmra.mxu0 %v4854
      %v5074 = vpop.f32.mrf.mxu0
      %v5075 = vadd.f32 0.0, %v5074
      %v5076 = vpop.f32.mrf.mxu0
      %5077 = vmatprep.mubr.f32.mxu0 0.0
      %5078 = vmatmul.mubr.f32.gmra.mxu0 %v4857
      %v5079 = vpop.f32.mrf.mxu0
      %v5080 = vadd.f32 0.0, %v5079
      %v5081 = vpop.f32.mrf.mxu0
      %5082 = vmatprep.mubr.f32.mxu0 0.0
      %5083 = vmatmul.mubr.f32.gmra.mxu0 %v4860
      %v5084 = vpop.f32.mrf.mxu0
      %v5085 = vadd.f32 0.0, %v5084
      %v5086 = vpop.f32.mrf.mxu0
      %5087 = vmatprep.mubr.f32.mxu0 0.0
      %5088 = vmatmul.mubr.f32.gmra.mxu0 %v4863
      %v5089 = vpop.f32.mrf.mxu0
      %v5090 = vadd.f32 0.0, %v5089
      %v5091 = vpop.f32.mrf.mxu0
      %5092 = vmatprep.mubr.f32.mxu0 0.0
      %5093 = vmatmul.mubr.f32.gmra.mxu0 %v4866
      %v5094 = vpop.f32.mrf.mxu0
      %v5095 = vadd.f32 0.0, %v5094
      %v5096 = vpop.f32.mrf.mxu0
      %5097 = vmatprep.mubr.f32.mxu0 0.0
      %5098 = vmatmul.mubr.f32.gmra.mxu0 %v4869
      %v5099 = vpop.f32.mrf.mxu0
      %v5100 = vadd.f32 0.0, %v5099
      %v5101 = vpop.f32.mrf.mxu0
      %5102 = vmatprep.mubr.f32.mxu0 0.0
      %5103 = vmatmul.mubr.f32.gmra.mxu0 %v4872
      %v5104 = vpop.f32.mrf.mxu0
      %v5105 = vadd.f32 0.0, %v5104
      %v5106 = vpop.f32.mrf.mxu0
      %5107 = vmatprep.mubr.f32.mxu0 0.0
      %5108 = vmatmul.mubr.f32.gmra.mxu0 %v4875
      %v5109 = vpop.f32.mrf.mxu0
      %v5110 = vadd.f32 0.0, %v5109
      %v5111 = vpop.f32.mrf.mxu0
      %5112 = vmatprep.mubr.f32.mxu0 0.0
      %5113 = vmatmul.mubr.f32.gmra.mxu0 %v4878
      %v5114 = vpop.f32.mrf.mxu0
      %v5115 = vadd.f32 0.0, %v5114
      %v5116 = vpop.f32.mrf.mxu0
      %5117 = vmatprep.mubr.f32.mxu0 0.0
      %5118 = vmatmul.mubr.f32.gmra.mxu0 %v4881
      %v5119 = vpop.f32.mrf.mxu0
      %v5120 = vadd.f32 0.0, %v5119
      %v5121 = vpop.f32.mrf.mxu0
      %5122 = vmatprep.mubr.f32.mxu0 0.0
      %5123 = vmatmul.mubr.f32.gmra.mxu0 %v4884
      %v5124 = vpop.f32.mrf.mxu0
      %v5125 = vadd.f32 0.0, %v5124
      %v5126 = vpop.f32.mrf.mxu0
      %5127 = vmatprep.mubr.f32.mxu0 0.0
      %5128 = vmatmul.mubr.f32.gmra.mxu0 %v4887
      %v5129 = vpop.f32.mrf.mxu0
      %v5130 = vadd.f32 0.0, %v5129
      %v5131 = vpop.f32.mrf.mxu0
      %5132 = vmatprep.mubr.f32.mxu0 0.0
      %5133 = vmatmul.mubr.f32.gmra.mxu0 %v4890
      %v5134 = vpop.f32.mrf.mxu0
      %v5135 = vadd.f32 0.0, %v5134
      %v5136 = vpop.f32.mrf.mxu0
      %5137 = vmatprep.mubr.f32.mxu0 0.0
      %5138 = vmatmul.mubr.f32.gmra.mxu0 %v4893
      %v5139 = vpop.f32.mrf.mxu0
      %v5140 = vadd.f32 0.0, %v5139
      %v5141 = vpop.f32.mrf.mxu0
      %5142 = vdwg.mxu0
      %v5143 = vadd.f32 %v4713, %v4965
      %v5144 = vadd.f32 %v4714, %v4970
      %v5145 = vadd.f32 %v4715, %v4975
      %v5146 = vadd.f32 %v4716, %v4980
      %v5147 = vadd.f32 %v4717, %v4985
      %v5148 = vadd.f32 %v4718, %v4990
      %v5149 = vadd.f32 %v4719, %v4995
      %v5150 = vadd.f32 %v4720, %v5000
      %v5151 = vadd.f32 %v4721, %v5005
      %v5152 = vadd.f32 %v4722, %v5010
      %v5153 = vadd.f32 %v4723, %v5015
      %v5154 = vadd.f32 %v4724, %v5020
      %v5155 = vadd.f32 %v4725, %v5025
      %v5156 = vadd.f32 %v4726, %v5030
      %v5157 = vadd.f32 %v4727, %v5035
      %v5158 = vadd.f32 %v4728, %v5040
      %v5159 = vadd.f32 %v4729, %v5045
      %v5160 = vadd.f32 %v4730, %v5050
      %v5161 = vadd.f32 %v4731, %v5055
      %v5162 = vadd.f32 %v4732, %v5060
      %v5163 = vadd.f32 %v4733, %v5065
      %v5164 = vadd.f32 %v4734, %v5070
      %v5165 = vadd.f32 %v4735, %v5075
      %v5166 = vadd.f32 %v4736, %v5080
      %v5167 = vadd.f32 %v4737, %v5085
      %v5168 = vadd.f32 %v4738, %v5090
      %v5169 = vadd.f32 %v4739, %v5095
      %v5170 = vadd.f32 %v4740, %v5100
      %v5171 = vadd.f32 %v4741, %v5105
      %v5172 = vadd.f32 %v4742, %v5110
      %v5173 = vadd.f32 %v4743, %v5115
      %v5174 = vadd.f32 %v4744, %v5120
      %v5175 = vadd.f32 %v4745, %v5125
      %v5176 = vadd.f32 %v4746, %v5130
      %v5177 = vadd.f32 %v4747, %v5135
      %v5178 = vadd.f32 %v4748, %v5140
      %v5179 = vld [vmem:[#allocation2 + $0x2] sm:$0xff]
      %v5180 = vld [vmem:[#allocation2 + $0xa] sm:$0xff]
      %v5181 = vld [vmem:[#allocation2 + $0x12] sm:$0xff]
      %v5182 = vld [vmem:[#allocation2 + $0x1a] sm:$0xff]
      %v5183 = vld [vmem:[#allocation2 + $0x22] sm:$0xff]
      %v5184 = vld [vmem:[#allocation2 + $0x2a] sm:$0xff]
      %v5185 = vld [vmem:[#allocation2 + $0x32] sm:$0xff]
      %v5186 = vld [vmem:[#allocation2 + $0x3a] sm:$0xff]
      %v5187 = vld [vmem:[#allocation2 + $0x42] sm:$0xff]
      %v5188 = vld [vmem:[#allocation2 + $0x4a] sm:$0xff]
      %v5189 = vld [vmem:[#allocation2 + $0x52] sm:$0xff]
      %v5190 = vld [vmem:[#allocation2 + $0x5a] sm:$0xff]
      %v5191 = vld [vmem:[#allocation2 + $0x62] sm:$0xff]
      %v5192 = vld [vmem:[#allocation2 + $0x6a] sm:$0xff]
      %v5193 = vld [vmem:[#allocation2 + $0x72] sm:$0xff]
      %v5194 = vld [vmem:[#allocation2 + $0x7a] sm:$0xff]
      %v5195 = vld [vmem:[#allocation2 + $0x82] sm:$0xff]
      %v5196 = vld [vmem:[#allocation2 + $0x8a] sm:$0xff]
      %v5197 = vld [vmem:[#allocation2 + $0x92] sm:$0xff]
      %v5198 = vld [vmem:[#allocation2 + $0x9a] sm:$0xff]
      %v5199 = vld [vmem:[#allocation2 + $0xa2] sm:$0xff]
      %v5200 = vld [vmem:[#allocation2 + $0xaa] sm:$0xff]
      %v5201 = vld [vmem:[#allocation2 + $0xb2] sm:$0xff]
      %v5202 = vld [vmem:[#allocation2 + $0xba] sm:$0xff]
      %v5203 = vld [vmem:[#allocation2 + $0xc2] sm:$0xff]
      %v5204 = vld [vmem:[#allocation2 + $0xca] sm:$0xff]
      %v5205 = vld [vmem:[#allocation2 + $0xd2] sm:$0xff]
      %v5206 = vld [vmem:[#allocation2 + $0xda] sm:$0xff]
      %v5207 = vld [vmem:[#allocation2 + $0xe2] sm:$0xff]
      %v5208 = vld [vmem:[#allocation2 + $0xea] sm:$0xff]
      %v5209 = vld [vmem:[#allocation2 + $0xf2] sm:$0xff]
      %v5210 = vld [vmem:[#allocation2 + $0xfa] sm:$0xff]
      %v5211 = vld [vmem:[#allocation2 + $0x102] sm:$0xff]
      %v5212 = vld [vmem:[#allocation2 + $0x10a] sm:$0xff]
      %v5213 = vld [vmem:[#allocation2 + $0x112] sm:$0xff]
      %v5214 = vld [vmem:[#allocation2 + $0x11a] sm:$0xff]
      %s5215 = scalar_lea.vmem %s2, 8
      %v5216 = vld [vmem:[%s5215] sm:$0xf]
      %v5218 = vsel %vm421, %v5179, 0
      %v5221 = vsel %vm421, %v5180, 0
      %v5224 = vsel %vm421, %v5181, 0
      %v5227 = vsel %vm421, %v5182, 0
      %v5230 = vsel %vm421, %v5183, 0
      %v5233 = vsel %vm421, %v5184, 0
      %v5236 = vsel %vm421, %v5185, 0
      %v5239 = vsel %vm421, %v5186, 0
      %v5242 = vsel %vm421, %v5187, 0
      %v5245 = vsel %vm421, %v5188, 0
      %v5248 = vsel %vm421, %v5189, 0
      %v5251 = vsel %vm421, %v5190, 0
      %v5254 = vsel %vm421, %v5191, 0
      %v5257 = vsel %vm421, %v5192, 0
      %v5260 = vsel %vm421, %v5193, 0
      %v5263 = vsel %vm421, %v5194, 0
      %v5266 = vsel %vm421, %v5195, 0
      %v5269 = vsel %vm421, %v5196, 0
      %v5272 = vsel %vm421, %v5197, 0
      %v5275 = vsel %vm421, %v5198, 0
      %v5278 = vsel %vm421, %v5199, 0
      %v5281 = vsel %vm421, %v5200, 0
      %v5284 = vsel %vm421, %v5201, 0
      %v5287 = vsel %vm421, %v5202, 0
      %v5290 = vsel %vm421, %v5203, 0
      %v5293 = vsel %vm421, %v5204, 0
      %v5296 = vsel %vm421, %v5205, 0
      %v5299 = vsel %vm421, %v5206, 0
      %v5302 = vsel %vm421, %v5207, 0
      %v5305 = vsel %vm421, %v5208, 0
      %v5308 = vsel %vm421, %v5209, 0
      %v5311 = vsel %vm421, %v5210, 0
      %v5314 = vsel %vm421, %v5211, 0
      %v5317 = vsel %vm421, %v5212, 0
      %v5320 = vsel %vm421, %v5213, 0
      %v5323 = vsel %vm421, %v5214, 0
      %v5326 = vsel %vm494, %v5216, 0
      %5328 = vmatprep.subr.mxu0 0.0
      %5329 = vmatpush1.msra.mxu0 0.0
      %5330 = vmatprep.subr.mxu0 0.0
      %5331 = vmatpush1.msra.mxu0 0.0
      %5332 = vmatprep.subr.mxu0 0.0
      %5333 = vmatpush1.msra.mxu0 0.0
      %5334 = vmatprep.subr.mxu0 0.0
      %5335 = vmatpush1.msra.mxu0 0.0
      %5336 = vmatprep.subr.mxu0 0.0
      %5337 = vmatpush1.msra.mxu0 0.0
      %5338 = vmatprep.subr.mxu0 0.0
      %5339 = vmatpush1.msra.mxu0 0.0
      %5340 = vmatprep.subr.mxu0 0.0
      %5341 = vmatpush1.msra.mxu0 0.0
      %5342 = vmatprep.subr.mxu0 0.0
      %5343 = vmatpush1.msra.mxu0 0.0
      %5344 = vmatprep.subr.mxu0 0.0
      %5345 = vmatpush1.msra.mxu0 0.0
      %5346 = vmatprep.subr.mxu0 0.0
      %5347 = vmatpush1.msra.mxu0 0.0
      %5348 = vmatprep.subr.mxu0 0.0
      %5349 = vmatpush1.msra.mxu0 0.0
      %5350 = vmatprep.subr.mxu0 0.0
      %5351 = vmatpush1.msra.mxu0 0.0
      %5352 = vmatprep.subr.mxu0 0.0
      %5353 = vmatpush1.msra.mxu0 0.0
      %5354 = vmatprep.subr.mxu0 0.0
      %5355 = vmatpush1.msra.mxu0 0.0
      %5356 = vmatprep.subr.mxu0 0.0
      %5357 = vmatpush1.msra.mxu0 0.0
      %5358 = vmatprep.subr.mxu0 0.0
      %5359 = vmatpush1.msra.mxu0 %v5326
      %5360 = vmatprep.subr.mxu0 0.0
      %5361 = vmatpush2.msra.mxu0 0.0
      %5362 = vmatprep.subr.mxu0 0.0
      %5363 = vmatpush2.msra.mxu0 0.0
      %5364 = vmatprep.subr.mxu0 0.0
      %5365 = vmatpush2.msra.mxu0 0.0
      %5366 = vmatprep.subr.mxu0 0.0
      %5367 = vmatpush2.msra.mxu0 0.0
      %5368 = vmatprep.subr.mxu0 0.0
      %5369 = vmatpush2.msra.mxu0 0.0
      %5370 = vmatprep.subr.mxu0 0.0
      %5371 = vmatpush2.msra.mxu0 0.0
      %5372 = vmatprep.subr.mxu0 0.0
      %5373 = vmatpush2.msra.mxu0 0.0
      %5374 = vmatprep.subr.mxu0 0.0
      %5375 = vmatpush2.msra.mxu0 0.0
      %5376 = vmatprep.subr.mxu0 0.0
      %5377 = vmatpush2.msra.mxu0 0.0
      %5378 = vmatprep.subr.mxu0 0.0
      %5379 = vmatpush2.msra.mxu0 0.0
      %5380 = vmatprep.subr.mxu0 0.0
      %5381 = vmatpush2.msra.mxu0 0.0
      %5382 = vmatprep.subr.mxu0 0.0
      %5383 = vmatpush2.msra.mxu0 0.0
      %5384 = vmatprep.subr.mxu0 0.0
      %5385 = vmatpush2.msra.mxu0 0.0
      %5386 = vmatprep.subr.mxu0 0.0
      %5387 = vmatpush2.msra.mxu0 0.0
      %5388 = vmatprep.subr.mxu0 0.0
      %5389 = vmatpush2.msra.mxu0 0.0
      %5390 = vmatprep.subr.mxu0 0.0
      %5391 = vmatpush2.msra.mxu0 0.0
      %5392 = vmatprep.mubr.f32.mxu0 0.0
      %5393 = vmatmul.mubr.f32.gmra.mxu0 %v5218
      %v5394 = vpop.f32.mrf.mxu0
      %v5395 = vadd.f32 0.0, %v5394
      %v5396 = vpop.f32.mrf.mxu0
      %5397 = vmatprep.mubr.f32.mxu0 0.0
      %5398 = vmatmul.mubr.f32.gmra.mxu0 %v5221
      %v5399 = vpop.f32.mrf.mxu0
      %v5400 = vadd.f32 0.0, %v5399
      %v5401 = vpop.f32.mrf.mxu0
      %5402 = vmatprep.mubr.f32.mxu0 0.0
      %5403 = vmatmul.mubr.f32.gmra.mxu0 %v5224
      %v5404 = vpop.f32.mrf.mxu0
      %v5405 = vadd.f32 0.0, %v5404
      %v5406 = vpop.f32.mrf.mxu0
      %5407 = vmatprep.mubr.f32.mxu0 0.0
      %5408 = vmatmul.mubr.f32.gmra.mxu0 %v5227
      %v5409 = vpop.f32.mrf.mxu0
      %v5410 = vadd.f32 0.0, %v5409
      %v5411 = vpop.f32.mrf.mxu0
      %5412 = vmatprep.mubr.f32.mxu0 0.0
      %5413 = vmatmul.mubr.f32.gmra.mxu0 %v5230
      %v5414 = vpop.f32.mrf.mxu0
      %v5415 = vadd.f32 0.0, %v5414
      %v5416 = vpop.f32.mrf.mxu0
      %5417 = vmatprep.mubr.f32.mxu0 0.0
      %5418 = vmatmul.mubr.f32.gmra.mxu0 %v5233
      %v5419 = vpop.f32.mrf.mxu0
      %v5420 = vadd.f32 0.0, %v5419
      %v5421 = vpop.f32.mrf.mxu0
      %5422 = vmatprep.mubr.f32.mxu0 0.0
      %5423 = vmatmul.mubr.f32.gmra.mxu0 %v5236
      %v5424 = vpop.f32.mrf.mxu0
      %v5425 = vadd.f32 0.0, %v5424
      %v5426 = vpop.f32.mrf.mxu0
      %5427 = vmatprep.mubr.f32.mxu0 0.0
      %5428 = vmatmul.mubr.f32.gmra.mxu0 %v5239
      %v5429 = vpop.f32.mrf.mxu0
      %v5430 = vadd.f32 0.0, %v5429
      %v5431 = vpop.f32.mrf.mxu0
      %5432 = vmatprep.mubr.f32.mxu0 0.0
      %5433 = vmatmul.mubr.f32.gmra.mxu0 %v5242
      %v5434 = vpop.f32.mrf.mxu0
      %v5435 = vadd.f32 0.0, %v5434
      %v5436 = vpop.f32.mrf.mxu0
      %5437 = vmatprep.mubr.f32.mxu0 0.0
      %5438 = vmatmul.mubr.f32.gmra.mxu0 %v5245
      %v5439 = vpop.f32.mrf.mxu0
      %v5440 = vadd.f32 0.0, %v5439
      %v5441 = vpop.f32.mrf.mxu0
      %5442 = vmatprep.mubr.f32.mxu0 0.0
      %5443 = vmatmul.mubr.f32.gmra.mxu0 %v5248
      %v5444 = vpop.f32.mrf.mxu0
      %v5445 = vadd.f32 0.0, %v5444
      %v5446 = vpop.f32.mrf.mxu0
      %5447 = vmatprep.mubr.f32.mxu0 0.0
      %5448 = vmatmul.mubr.f32.gmra.mxu0 %v5251
      %v5449 = vpop.f32.mrf.mxu0
      %v5450 = vadd.f32 0.0, %v5449
      %v5451 = vpop.f32.mrf.mxu0
      %5452 = vmatprep.mubr.f32.mxu0 0.0
      %5453 = vmatmul.mubr.f32.gmra.mxu0 %v5254
      %v5454 = vpop.f32.mrf.mxu0
      %v5455 = vadd.f32 0.0, %v5454
      %v5456 = vpop.f32.mrf.mxu0
      %5457 = vmatprep.mubr.f32.mxu0 0.0
      %5458 = vmatmul.mubr.f32.gmra.mxu0 %v5257
      %v5459 = vpop.f32.mrf.mxu0
      %v5460 = vadd.f32 0.0, %v5459
      %v5461 = vpop.f32.mrf.mxu0
      %5462 = vmatprep.mubr.f32.mxu0 0.0
      %5463 = vmatmul.mubr.f32.gmra.mxu0 %v5260
      %v5464 = vpop.f32.mrf.mxu0
      %v5465 = vadd.f32 0.0, %v5464
      %v5466 = vpop.f32.mrf.mxu0
      %5467 = vmatprep.mubr.f32.mxu0 0.0
      %5468 = vmatmul.mubr.f32.gmra.mxu0 %v5263
      %v5469 = vpop.f32.mrf.mxu0
      %v5470 = vadd.f32 0.0, %v5469
      %v5471 = vpop.f32.mrf.mxu0
      %5472 = vmatprep.mubr.f32.mxu0 0.0
      %5473 = vmatmul.mubr.f32.gmra.mxu0 %v5266
      %v5474 = vpop.f32.mrf.mxu0
      %v5475 = vadd.f32 0.0, %v5474
      %v5476 = vpop.f32.mrf.mxu0
      %5477 = vmatprep.mubr.f32.mxu0 0.0
      %5478 = vmatmul.mubr.f32.gmra.mxu0 %v5269
      %v5479 = vpop.f32.mrf.mxu0
      %v5480 = vadd.f32 0.0, %v5479
      %v5481 = vpop.f32.mrf.mxu0
      %5482 = vmatprep.mubr.f32.mxu0 0.0
      %5483 = vmatmul.mubr.f32.gmra.mxu0 %v5272
      %v5484 = vpop.f32.mrf.mxu0
      %v5485 = vadd.f32 0.0, %v5484
      %v5486 = vpop.f32.mrf.mxu0
      %5487 = vmatprep.mubr.f32.mxu0 0.0
      %5488 = vmatmul.mubr.f32.gmra.mxu0 %v5275
      %v5489 = vpop.f32.mrf.mxu0
      %v5490 = vadd.f32 0.0, %v5489
      %v5491 = vpop.f32.mrf.mxu0
      %5492 = vmatprep.mubr.f32.mxu0 0.0
      %5493 = vmatmul.mubr.f32.gmra.mxu0 %v5278
      %v5494 = vpop.f32.mrf.mxu0
      %v5495 = vadd.f32 0.0, %v5494
      %v5496 = vpop.f32.mrf.mxu0
      %5497 = vmatprep.mubr.f32.mxu0 0.0
      %5498 = vmatmul.mubr.f32.gmra.mxu0 %v5281
      %v5499 = vpop.f32.mrf.mxu0
      %v5500 = vadd.f32 0.0, %v5499
      %v5501 = vpop.f32.mrf.mxu0
      %5502 = vmatprep.mubr.f32.mxu0 0.0
      %5503 = vmatmul.mubr.f32.gmra.mxu0 %v5284
      %v5504 = vpop.f32.mrf.mxu0
      %v5505 = vadd.f32 0.0, %v5504
      %v5506 = vpop.f32.mrf.mxu0
      %5507 = vmatprep.mubr.f32.mxu0 0.0
      %5508 = vmatmul.mubr.f32.gmra.mxu0 %v5287
      %v5509 = vpop.f32.mrf.mxu0
      %v5510 = vadd.f32 0.0, %v5509
      %v5511 = vpop.f32.mrf.mxu0
      %5512 = vmatprep.mubr.f32.mxu0 0.0
      %5513 = vmatmul.mubr.f32.gmra.mxu0 %v5290
      %v5514 = vpop.f32.mrf.mxu0
      %v5515 = vadd.f32 0.0, %v5514
      %v5516 = vpop.f32.mrf.mxu0
      %5517 = vmatprep.mubr.f32.mxu0 0.0
      %5518 = vmatmul.mubr.f32.gmra.mxu0 %v5293
      %v5519 = vpop.f32.mrf.mxu0
      %v5520 = vadd.f32 0.0, %v5519
      %v5521 = vpop.f32.mrf.mxu0
      %5522 = vmatprep.mubr.f32.mxu0 0.0
      %5523 = vmatmul.mubr.f32.gmra.mxu0 %v5296
      %v5524 = vpop.f32.mrf.mxu0
      %v5525 = vadd.f32 0.0, %v5524
      %v5526 = vpop.f32.mrf.mxu0
      %5527 = vmatprep.mubr.f32.mxu0 0.0
      %5528 = vmatmul.mubr.f32.gmra.mxu0 %v5299
      %v5529 = vpop.f32.mrf.mxu0
      %v5530 = vadd.f32 0.0, %v5529
      %v5531 = vpop.f32.mrf.mxu0
      %5532 = vmatprep.mubr.f32.mxu0 0.0
      %5533 = vmatmul.mubr.f32.gmra.mxu0 %v5302
      %v5534 = vpop.f32.mrf.mxu0
      %v5535 = vadd.f32 0.0, %v5534
      %v5536 = vpop.f32.mrf.mxu0
      %5537 = vmatprep.mubr.f32.mxu0 0.0
      %5538 = vmatmul.mubr.f32.gmra.mxu0 %v5305
      %v5539 = vpop.f32.mrf.mxu0
      %v5540 = vadd.f32 0.0, %v5539
      %v5541 = vpop.f32.mrf.mxu0
      %5542 = vmatprep.mubr.f32.mxu0 0.0
      %5543 = vmatmul.mubr.f32.gmra.mxu0 %v5308
      %v5544 = vpop.f32.mrf.mxu0
      %v5545 = vadd.f32 0.0, %v5544
      %v5546 = vpop.f32.mrf.mxu0
      %5547 = vmatprep.mubr.f32.mxu0 0.0
      %5548 = vmatmul.mubr.f32.gmra.mxu0 %v5311
      %v5549 = vpop.f32.mrf.mxu0
      %v5550 = vadd.f32 0.0, %v5549
      %v5551 = vpop.f32.mrf.mxu0
      %5552 = vmatprep.mubr.f32.mxu0 0.0
      %5553 = vmatmul.mubr.f32.gmra.mxu0 %v5314
      %v5554 = vpop.f32.mrf.mxu0
      %v5555 = vadd.f32 0.0, %v5554
      %v5556 = vpop.f32.mrf.mxu0
      %5557 = vmatprep.mubr.f32.mxu0 0.0
      %5558 = vmatmul.mubr.f32.gmra.mxu0 %v5317
      %v5559 = vpop.f32.mrf.mxu0
      %v5560 = vadd.f32 0.0, %v5559
      %v5561 = vpop.f32.mrf.mxu0
      %5562 = vmatprep.mubr.f32.mxu0 0.0
      %5563 = vmatmul.mubr.f32.gmra.mxu0 %v5320
      %v5564 = vpop.f32.mrf.mxu0
      %v5565 = vadd.f32 0.0, %v5564
      %v5566 = vpop.f32.mrf.mxu0
      %5567 = vmatprep.mubr.f32.mxu0 0.0
      %5568 = vmatmul.mubr.f32.gmra.mxu0 %v5323
      %v5569 = vpop.f32.mrf.mxu0
      %v5570 = vadd.f32 0.0, %v5569
      %v5571 = vpop.f32.mrf.mxu0
      %5572 = vdwg.mxu0
      %v5573 = vadd.f32 %v5143, %v5395
      %v5574 = vadd.f32 %v5144, %v5400
      %v5575 = vadd.f32 %v5145, %v5405
      %v5576 = vadd.f32 %v5146, %v5410
      %v5577 = vadd.f32 %v5147, %v5415
      %v5578 = vadd.f32 %v5148, %v5420
      %v5579 = vadd.f32 %v5149, %v5425
      %v5580 = vadd.f32 %v5150, %v5430
      %v5581 = vadd.f32 %v5151, %v5435
      %v5582 = vadd.f32 %v5152, %v5440
      %v5583 = vadd.f32 %v5153, %v5445
      %v5584 = vadd.f32 %v5154, %v5450
      %v5585 = vadd.f32 %v5155, %v5455
      %v5586 = vadd.f32 %v5156, %v5460
      %v5587 = vadd.f32 %v5157, %v5465
      %v5588 = vadd.f32 %v5158, %v5470
      %v5589 = vadd.f32 %v5159, %v5475
      %v5590 = vadd.f32 %v5160, %v5480
      %v5591 = vadd.f32 %v5161, %v5485
      %v5592 = vadd.f32 %v5162, %v5490
      %v5593 = vadd.f32 %v5163, %v5495
      %v5594 = vadd.f32 %v5164, %v5500
      %v5595 = vadd.f32 %v5165, %v5505
      %v5596 = vadd.f32 %v5166, %v5510
      %v5597 = vadd.f32 %v5167, %v5515
      %v5598 = vadd.f32 %v5168, %v5520
      %v5599 = vadd.f32 %v5169, %v5525
      %v5600 = vadd.f32 %v5170, %v5530
      %v5601 = vadd.f32 %v5171, %v5535
      %v5602 = vadd.f32 %v5172, %v5540
      %v5603 = vadd.f32 %v5173, %v5545
      %v5604 = vadd.f32 %v5174, %v5550
      %v5605 = vadd.f32 %v5175, %v5555
      %v5606 = vadd.f32 %v5176, %v5560
      %v5607 = vadd.f32 %v5177, %v5565
      %v5608 = vadd.f32 %v5178, %v5570
      %v5609 = vld [vmem:[#allocation2 + $0x12] sm:$0xff]
      %v5610 = vld [vmem:[#allocation2 + $0x1a] sm:$0xff]
      %v5611 = vld [vmem:[#allocation2 + $0x22] sm:$0xff]
      %v5612 = vld [vmem:[#allocation2 + $0x2a] sm:$0xff]
      %v5613 = vld [vmem:[#allocation2 + $0x32] sm:$0xff]
      %v5614 = vld [vmem:[#allocation2 + $0x3a] sm:$0xff]
      %v5615 = vld [vmem:[#allocation2 + $0x42] sm:$0xff]
      %v5616 = vld [vmem:[#allocation2 + $0x4a] sm:$0xff]
      %v5617 = vld [vmem:[#allocation2 + $0x52] sm:$0xff]
      %v5618 = vld [vmem:[#allocation2 + $0x5a] sm:$0xff]
      %v5619 = vld [vmem:[#allocation2 + $0x62] sm:$0xff]
      %v5620 = vld [vmem:[#allocation2 + $0x6a] sm:$0xff]
      %v5621 = vld [vmem:[#allocation2 + $0x72] sm:$0xff]
      %v5622 = vld [vmem:[#allocation2 + $0x7a] sm:$0xff]
      %v5623 = vld [vmem:[#allocation2 + $0x82] sm:$0xff]
      %v5624 = vld [vmem:[#allocation2 + $0x8a] sm:$0xff]
      %v5625 = vld [vmem:[#allocation2 + $0x92] sm:$0xff]
      %v5626 = vld [vmem:[#allocation2 + $0x9a] sm:$0xff]
      %v5627 = vld [vmem:[#allocation2 + $0xa2] sm:$0xff]
      %v5628 = vld [vmem:[#allocation2 + $0xaa] sm:$0xff]
      %v5629 = vld [vmem:[#allocation2 + $0xb2] sm:$0xff]
      %v5630 = vld [vmem:[#allocation2 + $0xba] sm:$0xff]
      %v5631 = vld [vmem:[#allocation2 + $0xc2] sm:$0xff]
      %v5632 = vld [vmem:[#allocation2 + $0xca] sm:$0xff]
      %v5633 = vld [vmem:[#allocation2 + $0xd2] sm:$0xff]
      %v5634 = vld [vmem:[#allocation2 + $0xda] sm:$0xff]
      %v5635 = vld [vmem:[#allocation2 + $0xe2] sm:$0xff]
      %v5636 = vld [vmem:[#allocation2 + $0xea] sm:$0xff]
      %v5637 = vld [vmem:[#allocation2 + $0xf2] sm:$0xff]
      %v5638 = vld [vmem:[#allocation2 + $0xfa] sm:$0xff]
      %v5639 = vld [vmem:[#allocation2 + $0x102] sm:$0xff]
      %v5640 = vld [vmem:[#allocation2 + $0x10a] sm:$0xff]
      %v5641 = vld [vmem:[#allocation2 + $0x112] sm:$0xff]
      %v5642 = vld [vmem:[#allocation2 + $0x11a] sm:$0xff]
      %v5643 = vld [vmem:[#allocation2 + $0x122] sm:$0xff]
      %v5644 = vld [vmem:[#allocation2 + $0x12a] sm:$0xff]
      %s5645 = scalar_lea.vmem %s2, 12
      %v5646 = vld [vmem:[%s5645] sm:$0xf]
      %v5648 = vsel %vm421, %v5609, 0
      %v5651 = vsel %vm421, %v5610, 0
      %v5654 = vsel %vm421, %v5611, 0
      %v5657 = vsel %vm421, %v5612, 0
      %v5660 = vsel %vm421, %v5613, 0
      %v5663 = vsel %vm421, %v5614, 0
      %v5666 = vsel %vm421, %v5615, 0
      %v5669 = vsel %vm421, %v5616, 0
      %v5672 = vsel %vm421, %v5617, 0
      %v5675 = vsel %vm421, %v5618, 0
      %v5678 = vsel %vm421, %v5619, 0
      %v5681 = vsel %vm421, %v5620, 0
      %v5684 = vsel %vm421, %v5621, 0
      %v5687 = vsel %vm421, %v5622, 0
      %v5690 = vsel %vm421, %v5623, 0
      %v5693 = vsel %vm421, %v5624, 0
      %v5696 = vsel %vm421, %v5625, 0
      %v5699 = vsel %vm421, %v5626, 0
      %v5702 = vsel %vm421, %v5627, 0
      %v5705 = vsel %vm421, %v5628, 0
      %v5708 = vsel %vm421, %v5629, 0
      %v5711 = vsel %vm421, %v5630, 0
      %v5714 = vsel %vm421, %v5631, 0
      %v5717 = vsel %vm421, %v5632, 0
      %v5720 = vsel %vm421, %v5633, 0
      %v5723 = vsel %vm421, %v5634, 0
      %v5726 = vsel %vm421, %v5635, 0
      %v5729 = vsel %vm421, %v5636, 0
      %v5732 = vsel %vm421, %v5637, 0
      %v5735 = vsel %vm421, %v5638, 0
      %v5738 = vsel %vm421, %v5639, 0
      %v5741 = vsel %vm421, %v5640, 0
      %v5744 = vsel %vm421, %v5641, 0
      %v5747 = vsel %vm421, %v5642, 0
      %v5750 = vsel %vm421, %v5643, 0
      %v5753 = vsel %vm421, %v5644, 0
      %v5756 = vsel %vm494, %v5646, 0
      %5758 = vmatprep.subr.mxu0 0.0
      %5759 = vmatpush1.msra.mxu0 0.0
      %5760 = vmatprep.subr.mxu0 0.0
      %5761 = vmatpush1.msra.mxu0 0.0
      %5762 = vmatprep.subr.mxu0 0.0
      %5763 = vmatpush1.msra.mxu0 0.0
      %5764 = vmatprep.subr.mxu0 0.0
      %5765 = vmatpush1.msra.mxu0 0.0
      %5766 = vmatprep.subr.mxu0 0.0
      %5767 = vmatpush1.msra.mxu0 0.0
      %5768 = vmatprep.subr.mxu0 0.0
      %5769 = vmatpush1.msra.mxu0 0.0
      %5770 = vmatprep.subr.mxu0 0.0
      %5771 = vmatpush1.msra.mxu0 0.0
      %5772 = vmatprep.subr.mxu0 0.0
      %5773 = vmatpush1.msra.mxu0 0.0
      %5774 = vmatprep.subr.mxu0 0.0
      %5775 = vmatpush1.msra.mxu0 0.0
      %5776 = vmatprep.subr.mxu0 0.0
      %5777 = vmatpush1.msra.mxu0 0.0
      %5778 = vmatprep.subr.mxu0 0.0
      %5779 = vmatpush1.msra.mxu0 0.0
      %5780 = vmatprep.subr.mxu0 0.0
      %5781 = vmatpush1.msra.mxu0 0.0
      %5782 = vmatprep.subr.mxu0 0.0
      %5783 = vmatpush1.msra.mxu0 0.0
      %5784 = vmatprep.subr.mxu0 0.0
      %5785 = vmatpush1.msra.mxu0 0.0
      %5786 = vmatprep.subr.mxu0 0.0
      %5787 = vmatpush1.msra.mxu0 0.0
      %5788 = vmatprep.subr.mxu0 0.0
      %5789 = vmatpush1.msra.mxu0 %v5756
      %5790 = vmatprep.subr.mxu0 0.0
      %5791 = vmatpush2.msra.mxu0 0.0
      %5792 = vmatprep.subr.mxu0 0.0
      %5793 = vmatpush2.msra.mxu0 0.0
      %5794 = vmatprep.subr.mxu0 0.0
      %5795 = vmatpush2.msra.mxu0 0.0
      %5796 = vmatprep.subr.mxu0 0.0
      %5797 = vmatpush2.msra.mxu0 0.0
      %5798 = vmatprep.subr.mxu0 0.0
      %5799 = vmatpush2.msra.mxu0 0.0
      %5800 = vmatprep.subr.mxu0 0.0
      %5801 = vmatpush2.msra.mxu0 0.0
      %5802 = vmatprep.subr.mxu0 0.0
      %5803 = vmatpush2.msra.mxu0 0.0
      %5804 = vmatprep.subr.mxu0 0.0
      %5805 = vmatpush2.msra.mxu0 0.0
      %5806 = vmatprep.subr.mxu0 0.0
      %5807 = vmatpush2.msra.mxu0 0.0
      %5808 = vmatprep.subr.mxu0 0.0
      %5809 = vmatpush2.msra.mxu0 0.0
      %5810 = vmatprep.subr.mxu0 0.0
      %5811 = vmatpush2.msra.mxu0 0.0
      %5812 = vmatprep.subr.mxu0 0.0
      %5813 = vmatpush2.msra.mxu0 0.0
      %5814 = vmatprep.subr.mxu0 0.0
      %5815 = vmatpush2.msra.mxu0 0.0
      %5816 = vmatprep.subr.mxu0 0.0
      %5817 = vmatpush2.msra.mxu0 0.0
      %5818 = vmatprep.subr.mxu0 0.0
      %5819 = vmatpush2.msra.mxu0 0.0
      %5820 = vmatprep.subr.mxu0 0.0
      %5821 = vmatpush2.msra.mxu0 0.0
      %5822 = vmatprep.mubr.f32.mxu0 0.0
      %5823 = vmatmul.mubr.f32.gmra.mxu0 %v5648
      %v5824 = vpop.f32.mrf.mxu0
      %v5825 = vadd.f32 0.0, %v5824
      %v5826 = vpop.f32.mrf.mxu0
      %5827 = vmatprep.mubr.f32.mxu0 0.0
      %5828 = vmatmul.mubr.f32.gmra.mxu0 %v5651
      %v5829 = vpop.f32.mrf.mxu0
      %v5830 = vadd.f32 0.0, %v5829
      %v5831 = vpop.f32.mrf.mxu0
      %5832 = vmatprep.mubr.f32.mxu0 0.0
      %5833 = vmatmul.mubr.f32.gmra.mxu0 %v5654
      %v5834 = vpop.f32.mrf.mxu0
      %v5835 = vadd.f32 0.0, %v5834
      %v5836 = vpop.f32.mrf.mxu0
      %5837 = vmatprep.mubr.f32.mxu0 0.0
      %5838 = vmatmul.mubr.f32.gmra.mxu0 %v5657
      %v5839 = vpop.f32.mrf.mxu0
      %v5840 = vadd.f32 0.0, %v5839
      %v5841 = vpop.f32.mrf.mxu0
      %5842 = vmatprep.mubr.f32.mxu0 0.0
      %5843 = vmatmul.mubr.f32.gmra.mxu0 %v5660
      %v5844 = vpop.f32.mrf.mxu0
      %v5845 = vadd.f32 0.0, %v5844
      %v5846 = vpop.f32.mrf.mxu0
      %5847 = vmatprep.mubr.f32.mxu0 0.0
      %5848 = vmatmul.mubr.f32.gmra.mxu0 %v5663
      %v5849 = vpop.f32.mrf.mxu0
      %v5850 = vadd.f32 0.0, %v5849
      %v5851 = vpop.f32.mrf.mxu0
      %5852 = vmatprep.mubr.f32.mxu0 0.0
      %5853 = vmatmul.mubr.f32.gmra.mxu0 %v5666
      %v5854 = vpop.f32.mrf.mxu0
      %v5855 = vadd.f32 0.0, %v5854
      %v5856 = vpop.f32.mrf.mxu0
      %5857 = vmatprep.mubr.f32.mxu0 0.0
      %5858 = vmatmul.mubr.f32.gmra.mxu0 %v5669
      %v5859 = vpop.f32.mrf.mxu0
      %v5860 = vadd.f32 0.0, %v5859
      %v5861 = vpop.f32.mrf.mxu0
      %5862 = vmatprep.mubr.f32.mxu0 0.0
      %5863 = vmatmul.mubr.f32.gmra.mxu0 %v5672
      %v5864 = vpop.f32.mrf.mxu0
      %v5865 = vadd.f32 0.0, %v5864
      %v5866 = vpop.f32.mrf.mxu0
      %5867 = vmatprep.mubr.f32.mxu0 0.0
      %5868 = vmatmul.mubr.f32.gmra.mxu0 %v5675
      %v5869 = vpop.f32.mrf.mxu0
      %v5870 = vadd.f32 0.0, %v5869
      %v5871 = vpop.f32.mrf.mxu0
      %5872 = vmatprep.mubr.f32.mxu0 0.0
      %5873 = vmatmul.mubr.f32.gmra.mxu0 %v5678
      %v5874 = vpop.f32.mrf.mxu0
      %v5875 = vadd.f32 0.0, %v5874
      %v5876 = vpop.f32.mrf.mxu0
      %5877 = vmatprep.mubr.f32.mxu0 0.0
      %5878 = vmatmul.mubr.f32.gmra.mxu0 %v5681
      %v5879 = vpop.f32.mrf.mxu0
      %v5880 = vadd.f32 0.0, %v5879
      %v5881 = vpop.f32.mrf.mxu0
      %5882 = vmatprep.mubr.f32.mxu0 0.0
      %5883 = vmatmul.mubr.f32.gmra.mxu0 %v5684
      %v5884 = vpop.f32.mrf.mxu0
      %v5885 = vadd.f32 0.0, %v5884
      %v5886 = vpop.f32.mrf.mxu0
      %5887 = vmatprep.mubr.f32.mxu0 0.0
      %5888 = vmatmul.mubr.f32.gmra.mxu0 %v5687
      %v5889 = vpop.f32.mrf.mxu0
      %v5890 = vadd.f32 0.0, %v5889
      %v5891 = vpop.f32.mrf.mxu0
      %5892 = vmatprep.mubr.f32.mxu0 0.0
      %5893 = vmatmul.mubr.f32.gmra.mxu0 %v5690
      %v5894 = vpop.f32.mrf.mxu0
      %v5895 = vadd.f32 0.0, %v5894
      %v5896 = vpop.f32.mrf.mxu0
      %5897 = vmatprep.mubr.f32.mxu0 0.0
      %5898 = vmatmul.mubr.f32.gmra.mxu0 %v5693
      %v5899 = vpop.f32.mrf.mxu0
      %v5900 = vadd.f32 0.0, %v5899
      %v5901 = vpop.f32.mrf.mxu0
      %5902 = vmatprep.mubr.f32.mxu0 0.0
      %5903 = vmatmul.mubr.f32.gmra.mxu0 %v5696
      %v5904 = vpop.f32.mrf.mxu0
      %v5905 = vadd.f32 0.0, %v5904
      %v5906 = vpop.f32.mrf.mxu0
      %5907 = vmatprep.mubr.f32.mxu0 0.0
      %5908 = vmatmul.mubr.f32.gmra.mxu0 %v5699
      %v5909 = vpop.f32.mrf.mxu0
      %v5910 = vadd.f32 0.0, %v5909
      %v5911 = vpop.f32.mrf.mxu0
      %5912 = vmatprep.mubr.f32.mxu0 0.0
      %5913 = vmatmul.mubr.f32.gmra.mxu0 %v5702
      %v5914 = vpop.f32.mrf.mxu0
      %v5915 = vadd.f32 0.0, %v5914
      %v5916 = vpop.f32.mrf.mxu0
      %5917 = vmatprep.mubr.f32.mxu0 0.0
      %5918 = vmatmul.mubr.f32.gmra.mxu0 %v5705
      %v5919 = vpop.f32.mrf.mxu0
      %v5920 = vadd.f32 0.0, %v5919
      %v5921 = vpop.f32.mrf.mxu0
      %5922 = vmatprep.mubr.f32.mxu0 0.0
      %5923 = vmatmul.mubr.f32.gmra.mxu0 %v5708
      %v5924 = vpop.f32.mrf.mxu0
      %v5925 = vadd.f32 0.0, %v5924
      %v5926 = vpop.f32.mrf.mxu0
      %5927 = vmatprep.mubr.f32.mxu0 0.0
      %5928 = vmatmul.mubr.f32.gmra.mxu0 %v5711
      %v5929 = vpop.f32.mrf.mxu0
      %v5930 = vadd.f32 0.0, %v5929
      %v5931 = vpop.f32.mrf.mxu0
      %5932 = vmatprep.mubr.f32.mxu0 0.0
      %5933 = vmatmul.mubr.f32.gmra.mxu0 %v5714
      %v5934 = vpop.f32.mrf.mxu0
      %v5935 = vadd.f32 0.0, %v5934
      %v5936 = vpop.f32.mrf.mxu0
      %5937 = vmatprep.mubr.f32.mxu0 0.0
      %5938 = vmatmul.mubr.f32.gmra.mxu0 %v5717
      %v5939 = vpop.f32.mrf.mxu0
      %v5940 = vadd.f32 0.0, %v5939
      %v5941 = vpop.f32.mrf.mxu0
      %5942 = vmatprep.mubr.f32.mxu0 0.0
      %5943 = vmatmul.mubr.f32.gmra.mxu0 %v5720
      %v5944 = vpop.f32.mrf.mxu0
      %v5945 = vadd.f32 0.0, %v5944
      %v5946 = vpop.f32.mrf.mxu0
      %5947 = vmatprep.mubr.f32.mxu0 0.0
      %5948 = vmatmul.mubr.f32.gmra.mxu0 %v5723
      %v5949 = vpop.f32.mrf.mxu0
      %v5950 = vadd.f32 0.0, %v5949
      %v5951 = vpop.f32.mrf.mxu0
      %5952 = vmatprep.mubr.f32.mxu0 0.0
      %5953 = vmatmul.mubr.f32.gmra.mxu0 %v5726
      %v5954 = vpop.f32.mrf.mxu0
      %v5955 = vadd.f32 0.0, %v5954
      %v5956 = vpop.f32.mrf.mxu0
      %5957 = vmatprep.mubr.f32.mxu0 0.0
      %5958 = vmatmul.mubr.f32.gmra.mxu0 %v5729
      %v5959 = vpop.f32.mrf.mxu0
      %v5960 = vadd.f32 0.0, %v5959
      %v5961 = vpop.f32.mrf.mxu0
      %5962 = vmatprep.mubr.f32.mxu0 0.0
      %5963 = vmatmul.mubr.f32.gmra.mxu0 %v5732
      %v5964 = vpop.f32.mrf.mxu0
      %v5965 = vadd.f32 0.0, %v5964
      %v5966 = vpop.f32.mrf.mxu0
      %5967 = vmatprep.mubr.f32.mxu0 0.0
      %5968 = vmatmul.mubr.f32.gmra.mxu0 %v5735
      %v5969 = vpop.f32.mrf.mxu0
      %v5970 = vadd.f32 0.0, %v5969
      %v5971 = vpop.f32.mrf.mxu0
      %5972 = vmatprep.mubr.f32.mxu0 0.0
      %5973 = vmatmul.mubr.f32.gmra.mxu0 %v5738
      %v5974 = vpop.f32.mrf.mxu0
      %v5975 = vadd.f32 0.0, %v5974
      %v5976 = vpop.f32.mrf.mxu0
      %5977 = vmatprep.mubr.f32.mxu0 0.0
      %5978 = vmatmul.mubr.f32.gmra.mxu0 %v5741
      %v5979 = vpop.f32.mrf.mxu0
      %v5980 = vadd.f32 0.0, %v5979
      %v5981 = vpop.f32.mrf.mxu0
      %5982 = vmatprep.mubr.f32.mxu0 0.0
      %5983 = vmatmul.mubr.f32.gmra.mxu0 %v5744
      %v5984 = vpop.f32.mrf.mxu0
      %v5985 = vadd.f32 0.0, %v5984
      %v5986 = vpop.f32.mrf.mxu0
      %5987 = vmatprep.mubr.f32.mxu0 0.0
      %5988 = vmatmul.mubr.f32.gmra.mxu0 %v5747
      %v5989 = vpop.f32.mrf.mxu0
      %v5990 = vadd.f32 0.0, %v5989
      %v5991 = vpop.f32.mrf.mxu0
      %5992 = vmatprep.mubr.f32.mxu0 0.0
      %5993 = vmatmul.mubr.f32.gmra.mxu0 %v5750
      %v5994 = vpop.f32.mrf.mxu0
      %v5995 = vadd.f32 0.0, %v5994
      %v5996 = vpop.f32.mrf.mxu0
      %5997 = vmatprep.mubr.f32.mxu0 0.0
      %5998 = vmatmul.mubr.f32.gmra.mxu0 %v5753
      %v5999 = vpop.f32.mrf.mxu0
      %v6000 = vadd.f32 0.0, %v5999
      %v6001 = vpop.f32.mrf.mxu0
      %6002 = vdwg.mxu0
      %v6003 = vadd.f32 %v5573, %v5825
      %v6004 = vadd.f32 %v5574, %v5830
      %v6005 = vadd.f32 %v5575, %v5835
      %v6006 = vadd.f32 %v5576, %v5840
      %v6007 = vadd.f32 %v5577, %v5845
      %v6008 = vadd.f32 %v5578, %v5850
      %v6009 = vadd.f32 %v5579, %v5855
      %v6010 = vadd.f32 %v5580, %v5860
      %v6011 = vadd.f32 %v5581, %v5865
      %v6012 = vadd.f32 %v5582, %v5870
      %v6013 = vadd.f32 %v5583, %v5875
      %v6014 = vadd.f32 %v5584, %v5880
      %v6015 = vadd.f32 %v5585, %v5885
      %v6016 = vadd.f32 %v5586, %v5890
      %v6017 = vadd.f32 %v5587, %v5895
      %v6018 = vadd.f32 %v5588, %v5900
      %v6019 = vadd.f32 %v5589, %v5905
      %v6020 = vadd.f32 %v5590, %v5910
      %v6021 = vadd.f32 %v5591, %v5915
      %v6022 = vadd.f32 %v5592, %v5920
      %v6023 = vadd.f32 %v5593, %v5925
      %v6024 = vadd.f32 %v5594, %v5930
      %v6025 = vadd.f32 %v5595, %v5935
      %v6026 = vadd.f32 %v5596, %v5940
      %v6027 = vadd.f32 %v5597, %v5945
      %v6028 = vadd.f32 %v5598, %v5950
      %v6029 = vadd.f32 %v5599, %v5955
      %v6030 = vadd.f32 %v5600, %v5960
      %v6031 = vadd.f32 %v5601, %v5965
      %v6032 = vadd.f32 %v5602, %v5970
      %v6033 = vadd.f32 %v5603, %v5975
      %v6034 = vadd.f32 %v5604, %v5980
      %v6035 = vadd.f32 %v5605, %v5985
      %v6036 = vadd.f32 %v5606, %v5990
      %v6037 = vadd.f32 %v5607, %v5995
      %v6038 = vadd.f32 %v5608, %v6000
      %v6039 = vld [vmem:[#allocation2 + $0x13] sm:$0xff]
      %v6040 = vld [vmem:[#allocation2 + $0x1b] sm:$0xff]
      %v6041 = vld [vmem:[#allocation2 + $0x23] sm:$0xff]
      %v6042 = vld [vmem:[#allocation2 + $0x2b] sm:$0xff]
      %v6043 = vld [vmem:[#allocation2 + $0x33] sm:$0xff]
      %v6044 = vld [vmem:[#allocation2 + $0x3b] sm:$0xff]
      %v6045 = vld [vmem:[#allocation2 + $0x43] sm:$0xff]
      %v6046 = vld [vmem:[#allocation2 + $0x4b] sm:$0xff]
      %v6047 = vld [vmem:[#allocation2 + $0x53] sm:$0xff]
      %v6048 = vld [vmem:[#allocation2 + $0x5b] sm:$0xff]
      %v6049 = vld [vmem:[#allocation2 + $0x63] sm:$0xff]
      %v6050 = vld [vmem:[#allocation2 + $0x6b] sm:$0xff]
      %v6051 = vld [vmem:[#allocation2 + $0x73] sm:$0xff]
      %v6052 = vld [vmem:[#allocation2 + $0x7b] sm:$0xff]
      %v6053 = vld [vmem:[#allocation2 + $0x83] sm:$0xff]
      %v6054 = vld [vmem:[#allocation2 + $0x8b] sm:$0xff]
      %v6055 = vld [vmem:[#allocation2 + $0x93] sm:$0xff]
      %v6056 = vld [vmem:[#allocation2 + $0x9b] sm:$0xff]
      %v6057 = vld [vmem:[#allocation2 + $0xa3] sm:$0xff]
      %v6058 = vld [vmem:[#allocation2 + $0xab] sm:$0xff]
      %v6059 = vld [vmem:[#allocation2 + $0xb3] sm:$0xff]
      %v6060 = vld [vmem:[#allocation2 + $0xbb] sm:$0xff]
      %v6061 = vld [vmem:[#allocation2 + $0xc3] sm:$0xff]
      %v6062 = vld [vmem:[#allocation2 + $0xcb] sm:$0xff]
      %v6063 = vld [vmem:[#allocation2 + $0xd3] sm:$0xff]
      %v6064 = vld [vmem:[#allocation2 + $0xdb] sm:$0xff]
      %v6065 = vld [vmem:[#allocation2 + $0xe3] sm:$0xff]
      %v6066 = vld [vmem:[#allocation2 + $0xeb] sm:$0xff]
      %v6067 = vld [vmem:[#allocation2 + $0xf3] sm:$0xff]
      %v6068 = vld [vmem:[#allocation2 + $0xfb] sm:$0xff]
      %v6069 = vld [vmem:[#allocation2 + $0x103] sm:$0xff]
      %v6070 = vld [vmem:[#allocation2 + $0x10b] sm:$0xff]
      %v6071 = vld [vmem:[#allocation2 + $0x113] sm:$0xff]
      %v6072 = vld [vmem:[#allocation2 + $0x11b] sm:$0xff]
      %v6073 = vld [vmem:[#allocation2 + $0x123] sm:$0xff]
      %v6074 = vld [vmem:[#allocation2 + $0x12b] sm:$0xff]
      %s6075 = scalar_lea.vmem %s2, 16
      %v6076 = vld [vmem:[%s6075] sm:$0xf]
      %v6078 = vsel %vm421, %v6039, 0
      %v6081 = vsel %vm421, %v6040, 0
      %v6084 = vsel %vm421, %v6041, 0
      %v6087 = vsel %vm421, %v6042, 0
      %v6090 = vsel %vm421, %v6043, 0
      %v6093 = vsel %vm421, %v6044, 0
      %v6096 = vsel %vm421, %v6045, 0
      %v6099 = vsel %vm421, %v6046, 0
      %v6102 = vsel %vm421, %v6047, 0
      %v6105 = vsel %vm421, %v6048, 0
      %v6108 = vsel %vm421, %v6049, 0
      %v6111 = vsel %vm421, %v6050, 0
      %v6114 = vsel %vm421, %v6051, 0
      %v6117 = vsel %vm421, %v6052, 0
      %v6120 = vsel %vm421, %v6053, 0
      %v6123 = vsel %vm421, %v6054, 0
      %v6126 = vsel %vm421, %v6055, 0
      %v6129 = vsel %vm421, %v6056, 0
      %v6132 = vsel %vm421, %v6057, 0
      %v6135 = vsel %vm421, %v6058, 0
      %v6138 = vsel %vm421, %v6059, 0
      %v6141 = vsel %vm421, %v6060, 0
      %v6144 = vsel %vm421, %v6061, 0
      %v6147 = vsel %vm421, %v6062, 0
      %v6150 = vsel %vm421, %v6063, 0
      %v6153 = vsel %vm421, %v6064, 0
      %v6156 = vsel %vm421, %v6065, 0
      %v6159 = vsel %vm421, %v6066, 0
      %v6162 = vsel %vm421, %v6067, 0
      %v6165 = vsel %vm421, %v6068, 0
      %v6168 = vsel %vm421, %v6069, 0
      %v6171 = vsel %vm421, %v6070, 0
      %v6174 = vsel %vm421, %v6071, 0
      %v6177 = vsel %vm421, %v6072, 0
      %v6180 = vsel %vm421, %v6073, 0
      %v6183 = vsel %vm421, %v6074, 0
      %v6186 = vsel %vm494, %v6076, 0
      %6188 = vmatprep.subr.mxu0 0.0
      %6189 = vmatpush1.msra.mxu0 0.0
      %6190 = vmatprep.subr.mxu0 0.0
      %6191 = vmatpush1.msra.mxu0 0.0
      %6192 = vmatprep.subr.mxu0 0.0
      %6193 = vmatpush1.msra.mxu0 0.0
      %6194 = vmatprep.subr.mxu0 0.0
      %6195 = vmatpush1.msra.mxu0 0.0
      %6196 = vmatprep.subr.mxu0 0.0
      %6197 = vmatpush1.msra.mxu0 0.0
      %6198 = vmatprep.subr.mxu0 0.0
      %6199 = vmatpush1.msra.mxu0 0.0
      %6200 = vmatprep.subr.mxu0 0.0
      %6201 = vmatpush1.msra.mxu0 0.0
      %6202 = vmatprep.subr.mxu0 0.0
      %6203 = vmatpush1.msra.mxu0 0.0
      %6204 = vmatprep.subr.mxu0 0.0
      %6205 = vmatpush1.msra.mxu0 0.0
      %6206 = vmatprep.subr.mxu0 0.0
      %6207 = vmatpush1.msra.mxu0 0.0
      %6208 = vmatprep.subr.mxu0 0.0
      %6209 = vmatpush1.msra.mxu0 0.0
      %6210 = vmatprep.subr.mxu0 0.0
      %6211 = vmatpush1.msra.mxu0 0.0
      %6212 = vmatprep.subr.mxu0 0.0
      %6213 = vmatpush1.msra.mxu0 0.0
      %6214 = vmatprep.subr.mxu0 0.0
      %6215 = vmatpush1.msra.mxu0 0.0
      %6216 = vmatprep.subr.mxu0 0.0
      %6217 = vmatpush1.msra.mxu0 0.0
      %6218 = vmatprep.subr.mxu0 0.0
      %6219 = vmatpush1.msra.mxu0 %v6186
      %6220 = vmatprep.subr.mxu0 0.0
      %6221 = vmatpush2.msra.mxu0 0.0
      %6222 = vmatprep.subr.mxu0 0.0
      %6223 = vmatpush2.msra.mxu0 0.0
      %6224 = vmatprep.subr.mxu0 0.0
      %6225 = vmatpush2.msra.mxu0 0.0
      %6226 = vmatprep.subr.mxu0 0.0
      %6227 = vmatpush2.msra.mxu0 0.0
      %6228 = vmatprep.subr.mxu0 0.0
      %6229 = vmatpush2.msra.mxu0 0.0
      %6230 = vmatprep.subr.mxu0 0.0
      %6231 = vmatpush2.msra.mxu0 0.0
      %6232 = vmatprep.subr.mxu0 0.0
      %6233 = vmatpush2.msra.mxu0 0.0
      %6234 = vmatprep.subr.mxu0 0.0
      %6235 = vmatpush2.msra.mxu0 0.0
      %6236 = vmatprep.subr.mxu0 0.0
      %6237 = vmatpush2.msra.mxu0 0.0
      %6238 = vmatprep.subr.mxu0 0.0
      %6239 = vmatpush2.msra.mxu0 0.0
      %6240 = vmatprep.subr.mxu0 0.0
      %6241 = vmatpush2.msra.mxu0 0.0
      %6242 = vmatprep.subr.mxu0 0.0
      %6243 = vmatpush2.msra.mxu0 0.0
      %6244 = vmatprep.subr.mxu0 0.0
      %6245 = vmatpush2.msra.mxu0 0.0
      %6246 = vmatprep.subr.mxu0 0.0
      %6247 = vmatpush2.msra.mxu0 0.0
      %6248 = vmatprep.subr.mxu0 0.0
      %6249 = vmatpush2.msra.mxu0 0.0
      %6250 = vmatprep.subr.mxu0 0.0
      %6251 = vmatpush2.msra.mxu0 0.0
      %6252 = vmatprep.mubr.f32.mxu0 0.0
      %6253 = vmatmul.mubr.f32.gmra.mxu0 %v6078
      %v6254 = vpop.f32.mrf.mxu0
      %v6255 = vadd.f32 0.0, %v6254
      %v6256 = vpop.f32.mrf.mxu0
      %6257 = vmatprep.mubr.f32.mxu0 0.0
      %6258 = vmatmul.mubr.f32.gmra.mxu0 %v6081
      %v6259 = vpop.f32.mrf.mxu0
      %v6260 = vadd.f32 0.0, %v6259
      %v6261 = vpop.f32.mrf.mxu0
      %6262 = vmatprep.mubr.f32.mxu0 0.0
      %6263 = vmatmul.mubr.f32.gmra.mxu0 %v6084
      %v6264 = vpop.f32.mrf.mxu0
      %v6265 = vadd.f32 0.0, %v6264
      %v6266 = vpop.f32.mrf.mxu0
      %6267 = vmatprep.mubr.f32.mxu0 0.0
      %6268 = vmatmul.mubr.f32.gmra.mxu0 %v6087
      %v6269 = vpop.f32.mrf.mxu0
      %v6270 = vadd.f32 0.0, %v6269
      %v6271 = vpop.f32.mrf.mxu0
      %6272 = vmatprep.mubr.f32.mxu0 0.0
      %6273 = vmatmul.mubr.f32.gmra.mxu0 %v6090
      %v6274 = vpop.f32.mrf.mxu0
      %v6275 = vadd.f32 0.0, %v6274
      %v6276 = vpop.f32.mrf.mxu0
      %6277 = vmatprep.mubr.f32.mxu0 0.0
      %6278 = vmatmul.mubr.f32.gmra.mxu0 %v6093
      %v6279 = vpop.f32.mrf.mxu0
      %v6280 = vadd.f32 0.0, %v6279
      %v6281 = vpop.f32.mrf.mxu0
      %6282 = vmatprep.mubr.f32.mxu0 0.0
      %6283 = vmatmul.mubr.f32.gmra.mxu0 %v6096
      %v6284 = vpop.f32.mrf.mxu0
      %v6285 = vadd.f32 0.0, %v6284
      %v6286 = vpop.f32.mrf.mxu0
      %6287 = vmatprep.mubr.f32.mxu0 0.0
      %6288 = vmatmul.mubr.f32.gmra.mxu0 %v6099
      %v6289 = vpop.f32.mrf.mxu0
      %v6290 = vadd.f32 0.0, %v6289
      %v6291 = vpop.f32.mrf.mxu0
      %6292 = vmatprep.mubr.f32.mxu0 0.0
      %6293 = vmatmul.mubr.f32.gmra.mxu0 %v6102
      %v6294 = vpop.f32.mrf.mxu0
      %v6295 = vadd.f32 0.0, %v6294
      %v6296 = vpop.f32.mrf.mxu0
      %6297 = vmatprep.mubr.f32.mxu0 0.0
      %6298 = vmatmul.mubr.f32.gmra.mxu0 %v6105
      %v6299 = vpop.f32.mrf.mxu0
      %v6300 = vadd.f32 0.0, %v6299
      %v6301 = vpop.f32.mrf.mxu0
      %6302 = vmatprep.mubr.f32.mxu0 0.0
      %6303 = vmatmul.mubr.f32.gmra.mxu0 %v6108
      %v6304 = vpop.f32.mrf.mxu0
      %v6305 = vadd.f32 0.0, %v6304
      %v6306 = vpop.f32.mrf.mxu0
      %6307 = vmatprep.mubr.f32.mxu0 0.0
      %6308 = vmatmul.mubr.f32.gmra.mxu0 %v6111
      %v6309 = vpop.f32.mrf.mxu0
      %v6310 = vadd.f32 0.0, %v6309
      %v6311 = vpop.f32.mrf.mxu0
      %6312 = vmatprep.mubr.f32.mxu0 0.0
      %6313 = vmatmul.mubr.f32.gmra.mxu0 %v6114
      %v6314 = vpop.f32.mrf.mxu0
      %v6315 = vadd.f32 0.0, %v6314
      %v6316 = vpop.f32.mrf.mxu0
      %6317 = vmatprep.mubr.f32.mxu0 0.0
      %6318 = vmatmul.mubr.f32.gmra.mxu0 %v6117
      %v6319 = vpop.f32.mrf.mxu0
      %v6320 = vadd.f32 0.0, %v6319
      %v6321 = vpop.f32.mrf.mxu0
      %6322 = vmatprep.mubr.f32.mxu0 0.0
      %6323 = vmatmul.mubr.f32.gmra.mxu0 %v6120
      %v6324 = vpop.f32.mrf.mxu0
      %v6325 = vadd.f32 0.0, %v6324
      %v6326 = vpop.f32.mrf.mxu0
      %6327 = vmatprep.mubr.f32.mxu0 0.0
      %6328 = vmatmul.mubr.f32.gmra.mxu0 %v6123
      %v6329 = vpop.f32.mrf.mxu0
      %v6330 = vadd.f32 0.0, %v6329
      %v6331 = vpop.f32.mrf.mxu0
      %6332 = vmatprep.mubr.f32.mxu0 0.0
      %6333 = vmatmul.mubr.f32.gmra.mxu0 %v6126
      %v6334 = vpop.f32.mrf.mxu0
      %v6335 = vadd.f32 0.0, %v6334
      %v6336 = vpop.f32.mrf.mxu0
      %6337 = vmatprep.mubr.f32.mxu0 0.0
      %6338 = vmatmul.mubr.f32.gmra.mxu0 %v6129
      %v6339 = vpop.f32.mrf.mxu0
      %v6340 = vadd.f32 0.0, %v6339
      %v6341 = vpop.f32.mrf.mxu0
      %6342 = vmatprep.mubr.f32.mxu0 0.0
      %6343 = vmatmul.mubr.f32.gmra.mxu0 %v6132
      %v6344 = vpop.f32.mrf.mxu0
      %v6345 = vadd.f32 0.0, %v6344
      %v6346 = vpop.f32.mrf.mxu0
      %6347 = vmatprep.mubr.f32.mxu0 0.0
      %6348 = vmatmul.mubr.f32.gmra.mxu0 %v6135
      %v6349 = vpop.f32.mrf.mxu0
      %v6350 = vadd.f32 0.0, %v6349
      %v6351 = vpop.f32.mrf.mxu0
      %6352 = vmatprep.mubr.f32.mxu0 0.0
      %6353 = vmatmul.mubr.f32.gmra.mxu0 %v6138
      %v6354 = vpop.f32.mrf.mxu0
      %v6355 = vadd.f32 0.0, %v6354
      %v6356 = vpop.f32.mrf.mxu0
      %6357 = vmatprep.mubr.f32.mxu0 0.0
      %6358 = vmatmul.mubr.f32.gmra.mxu0 %v6141
      %v6359 = vpop.f32.mrf.mxu0
      %v6360 = vadd.f32 0.0, %v6359
      %v6361 = vpop.f32.mrf.mxu0
      %6362 = vmatprep.mubr.f32.mxu0 0.0
      %6363 = vmatmul.mubr.f32.gmra.mxu0 %v6144
      %v6364 = vpop.f32.mrf.mxu0
      %v6365 = vadd.f32 0.0, %v6364
      %v6366 = vpop.f32.mrf.mxu0
      %6367 = vmatprep.mubr.f32.mxu0 0.0
      %6368 = vmatmul.mubr.f32.gmra.mxu0 %v6147
      %v6369 = vpop.f32.mrf.mxu0
      %v6370 = vadd.f32 0.0, %v6369
      %v6371 = vpop.f32.mrf.mxu0
      %6372 = vmatprep.mubr.f32.mxu0 0.0
      %6373 = vmatmul.mubr.f32.gmra.mxu0 %v6150
      %v6374 = vpop.f32.mrf.mxu0
      %v6375 = vadd.f32 0.0, %v6374
      %v6376 = vpop.f32.mrf.mxu0
      %6377 = vmatprep.mubr.f32.mxu0 0.0
      %6378 = vmatmul.mubr.f32.gmra.mxu0 %v6153
      %v6379 = vpop.f32.mrf.mxu0
      %v6380 = vadd.f32 0.0, %v6379
      %v6381 = vpop.f32.mrf.mxu0
      %6382 = vmatprep.mubr.f32.mxu0 0.0
      %6383 = vmatmul.mubr.f32.gmra.mxu0 %v6156
      %v6384 = vpop.f32.mrf.mxu0
      %v6385 = vadd.f32 0.0, %v6384
      %v6386 = vpop.f32.mrf.mxu0
      %6387 = vmatprep.mubr.f32.mxu0 0.0
      %6388 = vmatmul.mubr.f32.gmra.mxu0 %v6159
      %v6389 = vpop.f32.mrf.mxu0
      %v6390 = vadd.f32 0.0, %v6389
      %v6391 = vpop.f32.mrf.mxu0
      %6392 = vmatprep.mubr.f32.mxu0 0.0
      %6393 = vmatmul.mubr.f32.gmra.mxu0 %v6162
      %v6394 = vpop.f32.mrf.mxu0
      %v6395 = vadd.f32 0.0, %v6394
      %v6396 = vpop.f32.mrf.mxu0
      %6397 = vmatprep.mubr.f32.mxu0 0.0
      %6398 = vmatmul.mubr.f32.gmra.mxu0 %v6165
      %v6399 = vpop.f32.mrf.mxu0
      %v6400 = vadd.f32 0.0, %v6399
      %v6401 = vpop.f32.mrf.mxu0
      %6402 = vmatprep.mubr.f32.mxu0 0.0
      %6403 = vmatmul.mubr.f32.gmra.mxu0 %v6168
      %v6404 = vpop.f32.mrf.mxu0
      %v6405 = vadd.f32 0.0, %v6404
      %v6406 = vpop.f32.mrf.mxu0
      %6407 = vmatprep.mubr.f32.mxu0 0.0
      %6408 = vmatmul.mubr.f32.gmra.mxu0 %v6171
      %v6409 = vpop.f32.mrf.mxu0
      %v6410 = vadd.f32 0.0, %v6409
      %v6411 = vpop.f32.mrf.mxu0
      %6412 = vmatprep.mubr.f32.mxu0 0.0
      %6413 = vmatmul.mubr.f32.gmra.mxu0 %v6174
      %v6414 = vpop.f32.mrf.mxu0
      %v6415 = vadd.f32 0.0, %v6414
      %v6416 = vpop.f32.mrf.mxu0
      %6417 = vmatprep.mubr.f32.mxu0 0.0
      %6418 = vmatmul.mubr.f32.gmra.mxu0 %v6177
      %v6419 = vpop.f32.mrf.mxu0
      %v6420 = vadd.f32 0.0, %v6419
      %v6421 = vpop.f32.mrf.mxu0
      %6422 = vmatprep.mubr.f32.mxu0 0.0
      %6423 = vmatmul.mubr.f32.gmra.mxu0 %v6180
      %v6424 = vpop.f32.mrf.mxu0
      %v6425 = vadd.f32 0.0, %v6424
      %v6426 = vpop.f32.mrf.mxu0
      %6427 = vmatprep.mubr.f32.mxu0 0.0
      %6428 = vmatmul.mubr.f32.gmra.mxu0 %v6183
      %v6429 = vpop.f32.mrf.mxu0
      %v6430 = vadd.f32 0.0, %v6429
      %v6431 = vpop.f32.mrf.mxu0
      %6432 = vdwg.mxu0
      %v6433 = vadd.f32 %v6003, %v6255
      %v6434 = vadd.f32 %v6004, %v6260
      %v6435 = vadd.f32 %v6005, %v6265
      %v6436 = vadd.f32 %v6006, %v6270
      %v6437 = vadd.f32 %v6007, %v6275
      %v6438 = vadd.f32 %v6008, %v6280
      %v6439 = vadd.f32 %v6009, %v6285
      %v6440 = vadd.f32 %v6010, %v6290
      %v6441 = vadd.f32 %v6011, %v6295
      %v6442 = vadd.f32 %v6012, %v6300
      %v6443 = vadd.f32 %v6013, %v6305
      %v6444 = vadd.f32 %v6014, %v6310
      %v6445 = vadd.f32 %v6015, %v6315
      %v6446 = vadd.f32 %v6016, %v6320
      %v6447 = vadd.f32 %v6017, %v6325
      %v6448 = vadd.f32 %v6018, %v6330
      %v6449 = vadd.f32 %v6019, %v6335
      %v6450 = vadd.f32 %v6020, %v6340
      %v6451 = vadd.f32 %v6021, %v6345
      %v6452 = vadd.f32 %v6022, %v6350
      %v6453 = vadd.f32 %v6023, %v6355
      %v6454 = vadd.f32 %v6024, %v6360
      %v6455 = vadd.f32 %v6025, %v6365
      %v6456 = vadd.f32 %v6026, %v6370
      %v6457 = vadd.f32 %v6027, %v6375
      %v6458 = vadd.f32 %v6028, %v6380
      %v6459 = vadd.f32 %v6029, %v6385
      %v6460 = vadd.f32 %v6030, %v6390
      %v6461 = vadd.f32 %v6031, %v6395
      %v6462 = vadd.f32 %v6032, %v6400
      %v6463 = vadd.f32 %v6033, %v6405
      %v6464 = vadd.f32 %v6034, %v6410
      %v6465 = vadd.f32 %v6035, %v6415
      %v6466 = vadd.f32 %v6036, %v6420
      %v6467 = vadd.f32 %v6037, %v6425
      %v6468 = vadd.f32 %v6038, %v6430
      %v6469 = vld [vmem:[#allocation2 + $0x14] sm:$0xff]
      %v6470 = vld [vmem:[#allocation2 + $0x1c] sm:$0xff]
      %v6471 = vld [vmem:[#allocation2 + $0x24] sm:$0xff]
      %v6472 = vld [vmem:[#allocation2 + $0x2c] sm:$0xff]
      %v6473 = vld [vmem:[#allocation2 + $0x34] sm:$0xff]
      %v6474 = vld [vmem:[#allocation2 + $0x3c] sm:$0xff]
      %v6475 = vld [vmem:[#allocation2 + $0x44] sm:$0xff]
      %v6476 = vld [vmem:[#allocation2 + $0x4c] sm:$0xff]
      %v6477 = vld [vmem:[#allocation2 + $0x54] sm:$0xff]
      %v6478 = vld [vmem:[#allocation2 + $0x5c] sm:$0xff]
      %v6479 = vld [vmem:[#allocation2 + $0x64] sm:$0xff]
      %v6480 = vld [vmem:[#allocation2 + $0x6c] sm:$0xff]
      %v6481 = vld [vmem:[#allocation2 + $0x74] sm:$0xff]
      %v6482 = vld [vmem:[#allocation2 + $0x7c] sm:$0xff]
      %v6483 = vld [vmem:[#allocation2 + $0x84] sm:$0xff]
      %v6484 = vld [vmem:[#allocation2 + $0x8c] sm:$0xff]
      %v6485 = vld [vmem:[#allocation2 + $0x94] sm:$0xff]
      %v6486 = vld [vmem:[#allocation2 + $0x9c] sm:$0xff]
      %v6487 = vld [vmem:[#allocation2 + $0xa4] sm:$0xff]
      %v6488 = vld [vmem:[#allocation2 + $0xac] sm:$0xff]
      %v6489 = vld [vmem:[#allocation2 + $0xb4] sm:$0xff]
      %v6490 = vld [vmem:[#allocation2 + $0xbc] sm:$0xff]
      %v6491 = vld [vmem:[#allocation2 + $0xc4] sm:$0xff]
      %v6492 = vld [vmem:[#allocation2 + $0xcc] sm:$0xff]
      %v6493 = vld [vmem:[#allocation2 + $0xd4] sm:$0xff]
      %v6494 = vld [vmem:[#allocation2 + $0xdc] sm:$0xff]
      %v6495 = vld [vmem:[#allocation2 + $0xe4] sm:$0xff]
      %v6496 = vld [vmem:[#allocation2 + $0xec] sm:$0xff]
      %v6497 = vld [vmem:[#allocation2 + $0xf4] sm:$0xff]
      %v6498 = vld [vmem:[#allocation2 + $0xfc] sm:$0xff]
      %v6499 = vld [vmem:[#allocation2 + $0x104] sm:$0xff]
      %v6500 = vld [vmem:[#allocation2 + $0x10c] sm:$0xff]
      %v6501 = vld [vmem:[#allocation2 + $0x114] sm:$0xff]
      %v6502 = vld [vmem:[#allocation2 + $0x11c] sm:$0xff]
      %v6503 = vld [vmem:[#allocation2 + $0x124] sm:$0xff]
      %v6504 = vld [vmem:[#allocation2 + $0x12c] sm:$0xff]
      %s6505 = scalar_lea.vmem %s2, 20
      %v6506 = vld [vmem:[%s6505] sm:$0xf]
      %v6508 = vsel %vm421, %v6469, 0
      %v6511 = vsel %vm421, %v6470, 0
      %v6514 = vsel %vm421, %v6471, 0
      %v6517 = vsel %vm421, %v6472, 0
      %v6520 = vsel %vm421, %v6473, 0
      %v6523 = vsel %vm421, %v6474, 0
      %v6526 = vsel %vm421, %v6475, 0
      %v6529 = vsel %vm421, %v6476, 0
      %v6532 = vsel %vm421, %v6477, 0
      %v6535 = vsel %vm421, %v6478, 0
      %v6538 = vsel %vm421, %v6479, 0
      %v6541 = vsel %vm421, %v6480, 0
      %v6544 = vsel %vm421, %v6481, 0
      %v6547 = vsel %vm421, %v6482, 0
      %v6550 = vsel %vm421, %v6483, 0
      %v6553 = vsel %vm421, %v6484, 0
      %v6556 = vsel %vm421, %v6485, 0
      %v6559 = vsel %vm421, %v6486, 0
      %v6562 = vsel %vm421, %v6487, 0
      %v6565 = vsel %vm421, %v6488, 0
      %v6568 = vsel %vm421, %v6489, 0
      %v6571 = vsel %vm421, %v6490, 0
      %v6574 = vsel %vm421, %v6491, 0
      %v6577 = vsel %vm421, %v6492, 0
      %v6580 = vsel %vm421, %v6493, 0
      %v6583 = vsel %vm421, %v6494, 0
      %v6586 = vsel %vm421, %v6495, 0
      %v6589 = vsel %vm421, %v6496, 0
      %v6592 = vsel %vm421, %v6497, 0
      %v6595 = vsel %vm421, %v6498, 0
      %v6598 = vsel %vm421, %v6499, 0
      %v6601 = vsel %vm421, %v6500, 0
      %v6604 = vsel %vm421, %v6501, 0
      %v6607 = vsel %vm421, %v6502, 0
      %v6610 = vsel %vm421, %v6503, 0
      %v6613 = vsel %vm421, %v6504, 0
      %v6616 = vsel %vm494, %v6506, 0
      %6618 = vmatprep.subr.mxu0 0.0
      %6619 = vmatpush1.msra.mxu0 0.0
      %6620 = vmatprep.subr.mxu0 0.0
      %6621 = vmatpush1.msra.mxu0 0.0
      %6622 = vmatprep.subr.mxu0 0.0
      %6623 = vmatpush1.msra.mxu0 0.0
      %6624 = vmatprep.subr.mxu0 0.0
      %6625 = vmatpush1.msra.mxu0 0.0
      %6626 = vmatprep.subr.mxu0 0.0
      %6627 = vmatpush1.msra.mxu0 0.0
      %6628 = vmatprep.subr.mxu0 0.0
      %6629 = vmatpush1.msra.mxu0 0.0
      %6630 = vmatprep.subr.mxu0 0.0
      %6631 = vmatpush1.msra.mxu0 0.0
      %6632 = vmatprep.subr.mxu0 0.0
      %6633 = vmatpush1.msra.mxu0 0.0
      %6634 = vmatprep.subr.mxu0 0.0
      %6635 = vmatpush1.msra.mxu0 0.0
      %6636 = vmatprep.subr.mxu0 0.0
      %6637 = vmatpush1.msra.mxu0 0.0
      %6638 = vmatprep.subr.mxu0 0.0
      %6639 = vmatpush1.msra.mxu0 0.0
      %6640 = vmatprep.subr.mxu0 0.0
      %6641 = vmatpush1.msra.mxu0 0.0
      %6642 = vmatprep.subr.mxu0 0.0
      %6643 = vmatpush1.msra.mxu0 0.0
      %6644 = vmatprep.subr.mxu0 0.0
      %6645 = vmatpush1.msra.mxu0 0.0
      %6646 = vmatprep.subr.mxu0 0.0
      %6647 = vmatpush1.msra.mxu0 0.0
      %6648 = vmatprep.subr.mxu0 0.0
      %6649 = vmatpush1.msra.mxu0 %v6616
      %6650 = vmatprep.subr.mxu0 0.0
      %6651 = vmatpush2.msra.mxu0 0.0
      %6652 = vmatprep.subr.mxu0 0.0
      %6653 = vmatpush2.msra.mxu0 0.0
      %6654 = vmatprep.subr.mxu0 0.0
      %6655 = vmatpush2.msra.mxu0 0.0
      %6656 = vmatprep.subr.mxu0 0.0
      %6657 = vmatpush2.msra.mxu0 0.0
      %6658 = vmatprep.subr.mxu0 0.0
      %6659 = vmatpush2.msra.mxu0 0.0
      %6660 = vmatprep.subr.mxu0 0.0
      %6661 = vmatpush2.msra.mxu0 0.0
      %6662 = vmatprep.subr.mxu0 0.0
      %6663 = vmatpush2.msra.mxu0 0.0
      %6664 = vmatprep.subr.mxu0 0.0
      %6665 = vmatpush2.msra.mxu0 0.0
      %6666 = vmatprep.subr.mxu0 0.0
      %6667 = vmatpush2.msra.mxu0 0.0
      %6668 = vmatprep.subr.mxu0 0.0
      %6669 = vmatpush2.msra.mxu0 0.0
      %6670 = vmatprep.subr.mxu0 0.0
      %6671 = vmatpush2.msra.mxu0 0.0
      %6672 = vmatprep.subr.mxu0 0.0
      %6673 = vmatpush2.msra.mxu0 0.0
      %6674 = vmatprep.subr.mxu0 0.0
      %6675 = vmatpush2.msra.mxu0 0.0
      %6676 = vmatprep.subr.mxu0 0.0
      %6677 = vmatpush2.msra.mxu0 0.0
      %6678 = vmatprep.subr.mxu0 0.0
      %6679 = vmatpush2.msra.mxu0 0.0
      %6680 = vmatprep.subr.mxu0 0.0
      %6681 = vmatpush2.msra.mxu0 0.0
      %6682 = vmatprep.mubr.f32.mxu0 0.0
      %6683 = vmatmul.mubr.f32.gmra.mxu0 %v6508
      %v6684 = vpop.f32.mrf.mxu0
      %v6685 = vadd.f32 0.0, %v6684
      %v6686 = vpop.f32.mrf.mxu0
      %6687 = vmatprep.mubr.f32.mxu0 0.0
      %6688 = vmatmul.mubr.f32.gmra.mxu0 %v6511
      %v6689 = vpop.f32.mrf.mxu0
      %v6690 = vadd.f32 0.0, %v6689
      %v6691 = vpop.f32.mrf.mxu0
      %6692 = vmatprep.mubr.f32.mxu0 0.0
      %6693 = vmatmul.mubr.f32.gmra.mxu0 %v6514
      %v6694 = vpop.f32.mrf.mxu0
      %v6695 = vadd.f32 0.0, %v6694
      %v6696 = vpop.f32.mrf.mxu0
      %6697 = vmatprep.mubr.f32.mxu0 0.0
      %6698 = vmatmul.mubr.f32.gmra.mxu0 %v6517
      %v6699 = vpop.f32.mrf.mxu0
      %v6700 = vadd.f32 0.0, %v6699
      %v6701 = vpop.f32.mrf.mxu0
      %6702 = vmatprep.mubr.f32.mxu0 0.0
      %6703 = vmatmul.mubr.f32.gmra.mxu0 %v6520
      %v6704 = vpop.f32.mrf.mxu0
      %v6705 = vadd.f32 0.0, %v6704
      %v6706 = vpop.f32.mrf.mxu0
      %6707 = vmatprep.mubr.f32.mxu0 0.0
      %6708 = vmatmul.mubr.f32.gmra.mxu0 %v6523
      %v6709 = vpop.f32.mrf.mxu0
      %v6710 = vadd.f32 0.0, %v6709
      %v6711 = vpop.f32.mrf.mxu0
      %6712 = vmatprep.mubr.f32.mxu0 0.0
      %6713 = vmatmul.mubr.f32.gmra.mxu0 %v6526
      %v6714 = vpop.f32.mrf.mxu0
      %v6715 = vadd.f32 0.0, %v6714
      %v6716 = vpop.f32.mrf.mxu0
      %6717 = vmatprep.mubr.f32.mxu0 0.0
      %6718 = vmatmul.mubr.f32.gmra.mxu0 %v6529
      %v6719 = vpop.f32.mrf.mxu0
      %v6720 = vadd.f32 0.0, %v6719
      %v6721 = vpop.f32.mrf.mxu0
      %6722 = vmatprep.mubr.f32.mxu0 0.0
      %6723 = vmatmul.mubr.f32.gmra.mxu0 %v6532
      %v6724 = vpop.f32.mrf.mxu0
      %v6725 = vadd.f32 0.0, %v6724
      %v6726 = vpop.f32.mrf.mxu0
      %6727 = vmatprep.mubr.f32.mxu0 0.0
      %6728 = vmatmul.mubr.f32.gmra.mxu0 %v6535
      %v6729 = vpop.f32.mrf.mxu0
      %v6730 = vadd.f32 0.0, %v6729
      %v6731 = vpop.f32.mrf.mxu0
      %6732 = vmatprep.mubr.f32.mxu0 0.0
      %6733 = vmatmul.mubr.f32.gmra.mxu0 %v6538
      %v6734 = vpop.f32.mrf.mxu0
      %v6735 = vadd.f32 0.0, %v6734
      %v6736 = vpop.f32.mrf.mxu0
      %6737 = vmatprep.mubr.f32.mxu0 0.0
      %6738 = vmatmul.mubr.f32.gmra.mxu0 %v6541
      %v6739 = vpop.f32.mrf.mxu0
      %v6740 = vadd.f32 0.0, %v6739
      %v6741 = vpop.f32.mrf.mxu0
      %6742 = vmatprep.mubr.f32.mxu0 0.0
      %6743 = vmatmul.mubr.f32.gmra.mxu0 %v6544
      %v6744 = vpop.f32.mrf.mxu0
      %v6745 = vadd.f32 0.0, %v6744
      %v6746 = vpop.f32.mrf.mxu0
      %6747 = vmatprep.mubr.f32.mxu0 0.0
      %6748 = vmatmul.mubr.f32.gmra.mxu0 %v6547
      %v6749 = vpop.f32.mrf.mxu0
      %v6750 = vadd.f32 0.0, %v6749
      %v6751 = vpop.f32.mrf.mxu0
      %6752 = vmatprep.mubr.f32.mxu0 0.0
      %6753 = vmatmul.mubr.f32.gmra.mxu0 %v6550
      %v6754 = vpop.f32.mrf.mxu0
      %v6755 = vadd.f32 0.0, %v6754
      %v6756 = vpop.f32.mrf.mxu0
      %6757 = vmatprep.mubr.f32.mxu0 0.0
      %6758 = vmatmul.mubr.f32.gmra.mxu0 %v6553
      %v6759 = vpop.f32.mrf.mxu0
      %v6760 = vadd.f32 0.0, %v6759
      %v6761 = vpop.f32.mrf.mxu0
      %6762 = vmatprep.mubr.f32.mxu0 0.0
      %6763 = vmatmul.mubr.f32.gmra.mxu0 %v6556
      %v6764 = vpop.f32.mrf.mxu0
      %v6765 = vadd.f32 0.0, %v6764
      %v6766 = vpop.f32.mrf.mxu0
      %6767 = vmatprep.mubr.f32.mxu0 0.0
      %6768 = vmatmul.mubr.f32.gmra.mxu0 %v6559
      %v6769 = vpop.f32.mrf.mxu0
      %v6770 = vadd.f32 0.0, %v6769
      %v6771 = vpop.f32.mrf.mxu0
      %6772 = vmatprep.mubr.f32.mxu0 0.0
      %6773 = vmatmul.mubr.f32.gmra.mxu0 %v6562
      %v6774 = vpop.f32.mrf.mxu0
      %v6775 = vadd.f32 0.0, %v6774
      %v6776 = vpop.f32.mrf.mxu0
      %6777 = vmatprep.mubr.f32.mxu0 0.0
      %6778 = vmatmul.mubr.f32.gmra.mxu0 %v6565
      %v6779 = vpop.f32.mrf.mxu0
      %v6780 = vadd.f32 0.0, %v6779
      %v6781 = vpop.f32.mrf.mxu0
      %6782 = vmatprep.mubr.f32.mxu0 0.0
      %6783 = vmatmul.mubr.f32.gmra.mxu0 %v6568
      %v6784 = vpop.f32.mrf.mxu0
      %v6785 = vadd.f32 0.0, %v6784
      %v6786 = vpop.f32.mrf.mxu0
      %6787 = vmatprep.mubr.f32.mxu0 0.0
      %6788 = vmatmul.mubr.f32.gmra.mxu0 %v6571
      %v6789 = vpop.f32.mrf.mxu0
      %v6790 = vadd.f32 0.0, %v6789
      %v6791 = vpop.f32.mrf.mxu0
      %6792 = vmatprep.mubr.f32.mxu0 0.0
      %6793 = vmatmul.mubr.f32.gmra.mxu0 %v6574
      %v6794 = vpop.f32.mrf.mxu0
      %v6795 = vadd.f32 0.0, %v6794
      %v6796 = vpop.f32.mrf.mxu0
      %6797 = vmatprep.mubr.f32.mxu0 0.0
      %6798 = vmatmul.mubr.f32.gmra.mxu0 %v6577
      %v6799 = vpop.f32.mrf.mxu0
      %v6800 = vadd.f32 0.0, %v6799
      %v6801 = vpop.f32.mrf.mxu0
      %6802 = vmatprep.mubr.f32.mxu0 0.0
      %6803 = vmatmul.mubr.f32.gmra.mxu0 %v6580
      %v6804 = vpop.f32.mrf.mxu0
      %v6805 = vadd.f32 0.0, %v6804
      %v6806 = vpop.f32.mrf.mxu0
      %6807 = vmatprep.mubr.f32.mxu0 0.0
      %6808 = vmatmul.mubr.f32.gmra.mxu0 %v6583
      %v6809 = vpop.f32.mrf.mxu0
      %v6810 = vadd.f32 0.0, %v6809
      %v6811 = vpop.f32.mrf.mxu0
      %6812 = vmatprep.mubr.f32.mxu0 0.0
      %6813 = vmatmul.mubr.f32.gmra.mxu0 %v6586
      %v6814 = vpop.f32.mrf.mxu0
      %v6815 = vadd.f32 0.0, %v6814
      %v6816 = vpop.f32.mrf.mxu0
      %6817 = vmatprep.mubr.f32.mxu0 0.0
      %6818 = vmatmul.mubr.f32.gmra.mxu0 %v6589
      %v6819 = vpop.f32.mrf.mxu0
      %v6820 = vadd.f32 0.0, %v6819
      %v6821 = vpop.f32.mrf.mxu0
      %6822 = vmatprep.mubr.f32.mxu0 0.0
      %6823 = vmatmul.mubr.f32.gmra.mxu0 %v6592
      %v6824 = vpop.f32.mrf.mxu0
      %v6825 = vadd.f32 0.0, %v6824
      %v6826 = vpop.f32.mrf.mxu0
      %6827 = vmatprep.mubr.f32.mxu0 0.0
      %6828 = vmatmul.mubr.f32.gmra.mxu0 %v6595
      %v6829 = vpop.f32.mrf.mxu0
      %v6830 = vadd.f32 0.0, %v6829
      %v6831 = vpop.f32.mrf.mxu0
      %6832 = vmatprep.mubr.f32.mxu0 0.0
      %6833 = vmatmul.mubr.f32.gmra.mxu0 %v6598
      %v6834 = vpop.f32.mrf.mxu0
      %v6835 = vadd.f32 0.0, %v6834
      %v6836 = vpop.f32.mrf.mxu0
      %6837 = vmatprep.mubr.f32.mxu0 0.0
      %6838 = vmatmul.mubr.f32.gmra.mxu0 %v6601
      %v6839 = vpop.f32.mrf.mxu0
      %v6840 = vadd.f32 0.0, %v6839
      %v6841 = vpop.f32.mrf.mxu0
      %6842 = vmatprep.mubr.f32.mxu0 0.0
      %6843 = vmatmul.mubr.f32.gmra.mxu0 %v6604
      %v6844 = vpop.f32.mrf.mxu0
      %v6845 = vadd.f32 0.0, %v6844
      %v6846 = vpop.f32.mrf.mxu0
      %6847 = vmatprep.mubr.f32.mxu0 0.0
      %6848 = vmatmul.mubr.f32.gmra.mxu0 %v6607
      %v6849 = vpop.f32.mrf.mxu0
      %v6850 = vadd.f32 0.0, %v6849
      %v6851 = vpop.f32.mrf.mxu0
      %6852 = vmatprep.mubr.f32.mxu0 0.0
      %6853 = vmatmul.mubr.f32.gmra.mxu0 %v6610
      %v6854 = vpop.f32.mrf.mxu0
      %v6855 = vadd.f32 0.0, %v6854
      %v6856 = vpop.f32.mrf.mxu0
      %6857 = vmatprep.mubr.f32.mxu0 0.0
      %6858 = vmatmul.mubr.f32.gmra.mxu0 %v6613
      %v6859 = vpop.f32.mrf.mxu0
      %v6860 = vadd.f32 0.0, %v6859
      %v6861 = vpop.f32.mrf.mxu0
      %6862 = vdwg.mxu0
      %v6863 = vadd.f32 %v6433, %v6685
      %v6864 = vadd.f32 %v6434, %v6690
      %v6865 = vadd.f32 %v6435, %v6695
      %v6866 = vadd.f32 %v6436, %v6700
      %v6867 = vadd.f32 %v6437, %v6705
      %v6868 = vadd.f32 %v6438, %v6710
      %v6869 = vadd.f32 %v6439, %v6715
      %v6870 = vadd.f32 %v6440, %v6720
      %v6871 = vadd.f32 %v6441, %v6725
      %v6872 = vadd.f32 %v6442, %v6730
      %v6873 = vadd.f32 %v6443, %v6735
      %v6874 = vadd.f32 %v6444, %v6740
      %v6875 = vadd.f32 %v6445, %v6745
      %v6876 = vadd.f32 %v6446, %v6750
      %v6877 = vadd.f32 %v6447, %v6755
      %v6878 = vadd.f32 %v6448, %v6760
      %v6879 = vadd.f32 %v6449, %v6765
      %v6880 = vadd.f32 %v6450, %v6770
      %v6881 = vadd.f32 %v6451, %v6775
      %v6882 = vadd.f32 %v6452, %v6780
      %v6883 = vadd.f32 %v6453, %v6785
      %v6884 = vadd.f32 %v6454, %v6790
      %v6885 = vadd.f32 %v6455, %v6795
      %v6886 = vadd.f32 %v6456, %v6800
      %v6887 = vadd.f32 %v6457, %v6805
      %v6888 = vadd.f32 %v6458, %v6810
      %v6889 = vadd.f32 %v6459, %v6815
      %v6890 = vadd.f32 %v6460, %v6820
      %v6891 = vadd.f32 %v6461, %v6825
      %v6892 = vadd.f32 %v6462, %v6830
      %v6893 = vadd.f32 %v6463, %v6835
      %v6894 = vadd.f32 %v6464, %v6840
      %v6895 = vadd.f32 %v6465, %v6845
      %v6896 = vadd.f32 %v6466, %v6850
      %v6897 = vadd.f32 %v6467, %v6855
      %v6898 = vadd.f32 %v6468, %v6860
      %v6899 = vld [vmem:[#allocation2 + $0x24] sm:$0xff]
      %v6900 = vld [vmem:[#allocation2 + $0x2c] sm:$0xff]
      %v6901 = vld [vmem:[#allocation2 + $0x34] sm:$0xff]
      %v6902 = vld [vmem:[#allocation2 + $0x3c] sm:$0xff]
      %v6903 = vld [vmem:[#allocation2 + $0x44] sm:$0xff]
      %v6904 = vld [vmem:[#allocation2 + $0x4c] sm:$0xff]
      %v6905 = vld [vmem:[#allocation2 + $0x54] sm:$0xff]
      %v6906 = vld [vmem:[#allocation2 + $0x5c] sm:$0xff]
      %v6907 = vld [vmem:[#allocation2 + $0x64] sm:$0xff]
      %v6908 = vld [vmem:[#allocation2 + $0x6c] sm:$0xff]
      %v6909 = vld [vmem:[#allocation2 + $0x74] sm:$0xff]
      %v6910 = vld [vmem:[#allocation2 + $0x7c] sm:$0xff]
      %v6911 = vld [vmem:[#allocation2 + $0x84] sm:$0xff]
      %v6912 = vld [vmem:[#allocation2 + $0x8c] sm:$0xff]
      %v6913 = vld [vmem:[#allocation2 + $0x94] sm:$0xff]
      %v6914 = vld [vmem:[#allocation2 + $0x9c] sm:$0xff]
      %v6915 = vld [vmem:[#allocation2 + $0xa4] sm:$0xff]
      %v6916 = vld [vmem:[#allocation2 + $0xac] sm:$0xff]
      %v6917 = vld [vmem:[#allocation2 + $0xb4] sm:$0xff]
      %v6918 = vld [vmem:[#allocation2 + $0xbc] sm:$0xff]
      %v6919 = vld [vmem:[#allocation2 + $0xc4] sm:$0xff]
      %v6920 = vld [vmem:[#allocation2 + $0xcc] sm:$0xff]
      %v6921 = vld [vmem:[#allocation2 + $0xd4] sm:$0xff]
      %v6922 = vld [vmem:[#allocation2 + $0xdc] sm:$0xff]
      %v6923 = vld [vmem:[#allocation2 + $0xe4] sm:$0xff]
      %v6924 = vld [vmem:[#allocation2 + $0xec] sm:$0xff]
      %v6925 = vld [vmem:[#allocation2 + $0xf4] sm:$0xff]
      %v6926 = vld [vmem:[#allocation2 + $0xfc] sm:$0xff]
      %v6927 = vld [vmem:[#allocation2 + $0x104] sm:$0xff]
      %v6928 = vld [vmem:[#allocation2 + $0x10c] sm:$0xff]
      %v6929 = vld [vmem:[#allocation2 + $0x114] sm:$0xff]
      %v6930 = vld [vmem:[#allocation2 + $0x11c] sm:$0xff]
      %v6931 = vld [vmem:[#allocation2 + $0x124] sm:$0xff]
      %v6932 = vld [vmem:[#allocation2 + $0x12c] sm:$0xff]
      %v6933 = vld [vmem:[#allocation2 + $0x134] sm:$0xff]
      %v6934 = vld [vmem:[#allocation2 + $0x13c] sm:$0xff]
      %s6935 = scalar_lea.vmem %s2, 24
      %v6936 = vld [vmem:[%s6935] sm:$0xf]
      %v6938 = vsel %vm421, %v6899, 0
      %v6941 = vsel %vm421, %v6900, 0
      %v6944 = vsel %vm421, %v6901, 0
      %v6947 = vsel %vm421, %v6902, 0
      %v6950 = vsel %vm421, %v6903, 0
      %v6953 = vsel %vm421, %v6904, 0
      %v6956 = vsel %vm421, %v6905, 0
      %v6959 = vsel %vm421, %v6906, 0
      %v6962 = vsel %vm421, %v6907, 0
      %v6965 = vsel %vm421, %v6908, 0
      %v6968 = vsel %vm421, %v6909, 0
      %v6971 = vsel %vm421, %v6910, 0
      %v6974 = vsel %vm421, %v6911, 0
      %v6977 = vsel %vm421, %v6912, 0
      %v6980 = vsel %vm421, %v6913, 0
      %v6983 = vsel %vm421, %v6914, 0
      %v6986 = vsel %vm421, %v6915, 0
      %v6989 = vsel %vm421, %v6916, 0
      %v6992 = vsel %vm421, %v6917, 0
      %v6995 = vsel %vm421, %v6918, 0
      %v6998 = vsel %vm421, %v6919, 0
      %v7001 = vsel %vm421, %v6920, 0
      %v7004 = vsel %vm421, %v6921, 0
      %v7007 = vsel %vm421, %v6922, 0
      %v7010 = vsel %vm421, %v6923, 0
      %v7013 = vsel %vm421, %v6924, 0
      %v7016 = vsel %vm421, %v6925, 0
      %v7019 = vsel %vm421, %v6926, 0
      %v7022 = vsel %vm421, %v6927, 0
      %v7025 = vsel %vm421, %v6928, 0
      %v7028 = vsel %vm421, %v6929, 0
      %v7031 = vsel %vm421, %v6930, 0
      %v7034 = vsel %vm421, %v6931, 0
      %v7037 = vsel %vm421, %v6932, 0
      %v7040 = vsel %vm421, %v6933, 0
      %v7043 = vsel %vm421, %v6934, 0
      %v7046 = vsel %vm494, %v6936, 0
      %7048 = vmatprep.subr.mxu0 0.0
      %7049 = vmatpush1.msra.mxu0 0.0
      %7050 = vmatprep.subr.mxu0 0.0
      %7051 = vmatpush1.msra.mxu0 0.0
      %7052 = vmatprep.subr.mxu0 0.0
      %7053 = vmatpush1.msra.mxu0 0.0
      %7054 = vmatprep.subr.mxu0 0.0
      %7055 = vmatpush1.msra.mxu0 0.0
      %7056 = vmatprep.subr.mxu0 0.0
      %7057 = vmatpush1.msra.mxu0 0.0
      %7058 = vmatprep.subr.mxu0 0.0
      %7059 = vmatpush1.msra.mxu0 0.0
      %7060 = vmatprep.subr.mxu0 0.0
      %7061 = vmatpush1.msra.mxu0 0.0
      %7062 = vmatprep.subr.mxu0 0.0
      %7063 = vmatpush1.msra.mxu0 0.0
      %7064 = vmatprep.subr.mxu0 0.0
      %7065 = vmatpush1.msra.mxu0 0.0
      %7066 = vmatprep.subr.mxu0 0.0
      %7067 = vmatpush1.msra.mxu0 0.0
      %7068 = vmatprep.subr.mxu0 0.0
      %7069 = vmatpush1.msra.mxu0 0.0
      %7070 = vmatprep.subr.mxu0 0.0
      %7071 = vmatpush1.msra.mxu0 0.0
      %7072 = vmatprep.subr.mxu0 0.0
      %7073 = vmatpush1.msra.mxu0 0.0
      %7074 = vmatprep.subr.mxu0 0.0
      %7075 = vmatpush1.msra.mxu0 0.0
      %7076 = vmatprep.subr.mxu0 0.0
      %7077 = vmatpush1.msra.mxu0 0.0
      %7078 = vmatprep.subr.mxu0 0.0
      %7079 = vmatpush1.msra.mxu0 %v7046
      %7080 = vmatprep.subr.mxu0 0.0
      %7081 = vmatpush2.msra.mxu0 0.0
      %7082 = vmatprep.subr.mxu0 0.0
      %7083 = vmatpush2.msra.mxu0 0.0
      %7084 = vmatprep.subr.mxu0 0.0
      %7085 = vmatpush2.msra.mxu0 0.0
      %7086 = vmatprep.subr.mxu0 0.0
      %7087 = vmatpush2.msra.mxu0 0.0
      %7088 = vmatprep.subr.mxu0 0.0
      %7089 = vmatpush2.msra.mxu0 0.0
      %7090 = vmatprep.subr.mxu0 0.0
      %7091 = vmatpush2.msra.mxu0 0.0
      %7092 = vmatprep.subr.mxu0 0.0
      %7093 = vmatpush2.msra.mxu0 0.0
      %7094 = vmatprep.subr.mxu0 0.0
      %7095 = vmatpush2.msra.mxu0 0.0
      %7096 = vmatprep.subr.mxu0 0.0
      %7097 = vmatpush2.msra.mxu0 0.0
      %7098 = vmatprep.subr.mxu0 0.0
      %7099 = vmatpush2.msra.mxu0 0.0
      %7100 = vmatprep.subr.mxu0 0.0
      %7101 = vmatpush2.msra.mxu0 0.0
      %7102 = vmatprep.subr.mxu0 0.0
      %7103 = vmatpush2.msra.mxu0 0.0
      %7104 = vmatprep.subr.mxu0 0.0
      %7105 = vmatpush2.msra.mxu0 0.0
      %7106 = vmatprep.subr.mxu0 0.0
      %7107 = vmatpush2.msra.mxu0 0.0
      %7108 = vmatprep.subr.mxu0 0.0
      %7109 = vmatpush2.msra.mxu0 0.0
      %7110 = vmatprep.subr.mxu0 0.0
      %7111 = vmatpush2.msra.mxu0 0.0
      %7112 = vmatprep.mubr.f32.mxu0 0.0
      %7113 = vmatmul.mubr.f32.gmra.mxu0 %v6938
      %v7114 = vpop.f32.mrf.mxu0
      %v7115 = vadd.f32 0.0, %v7114
      %v7116 = vpop.f32.mrf.mxu0
      %7117 = vmatprep.mubr.f32.mxu0 0.0
      %7118 = vmatmul.mubr.f32.gmra.mxu0 %v6941
      %v7119 = vpop.f32.mrf.mxu0
      %v7120 = vadd.f32 0.0, %v7119
      %v7121 = vpop.f32.mrf.mxu0
      %7122 = vmatprep.mubr.f32.mxu0 0.0
      %7123 = vmatmul.mubr.f32.gmra.mxu0 %v6944
      %v7124 = vpop.f32.mrf.mxu0
      %v7125 = vadd.f32 0.0, %v7124
      %v7126 = vpop.f32.mrf.mxu0
      %7127 = vmatprep.mubr.f32.mxu0 0.0
      %7128 = vmatmul.mubr.f32.gmra.mxu0 %v6947
      %v7129 = vpop.f32.mrf.mxu0
      %v7130 = vadd.f32 0.0, %v7129
      %v7131 = vpop.f32.mrf.mxu0
      %7132 = vmatprep.mubr.f32.mxu0 0.0
      %7133 = vmatmul.mubr.f32.gmra.mxu0 %v6950
      %v7134 = vpop.f32.mrf.mxu0
      %v7135 = vadd.f32 0.0, %v7134
      %v7136 = vpop.f32.mrf.mxu0
      %7137 = vmatprep.mubr.f32.mxu0 0.0
      %7138 = vmatmul.mubr.f32.gmra.mxu0 %v6953
      %v7139 = vpop.f32.mrf.mxu0
      %v7140 = vadd.f32 0.0, %v7139
      %v7141 = vpop.f32.mrf.mxu0
      %7142 = vmatprep.mubr.f32.mxu0 0.0
      %7143 = vmatmul.mubr.f32.gmra.mxu0 %v6956
      %v7144 = vpop.f32.mrf.mxu0
      %v7145 = vadd.f32 0.0, %v7144
      %v7146 = vpop.f32.mrf.mxu0
      %7147 = vmatprep.mubr.f32.mxu0 0.0
      %7148 = vmatmul.mubr.f32.gmra.mxu0 %v6959
      %v7149 = vpop.f32.mrf.mxu0
      %v7150 = vadd.f32 0.0, %v7149
      %v7151 = vpop.f32.mrf.mxu0
      %7152 = vmatprep.mubr.f32.mxu0 0.0
      %7153 = vmatmul.mubr.f32.gmra.mxu0 %v6962
      %v7154 = vpop.f32.mrf.mxu0
      %v7155 = vadd.f32 0.0, %v7154
      %v7156 = vpop.f32.mrf.mxu0
      %7157 = vmatprep.mubr.f32.mxu0 0.0
      %7158 = vmatmul.mubr.f32.gmra.mxu0 %v6965
      %v7159 = vpop.f32.mrf.mxu0
      %v7160 = vadd.f32 0.0, %v7159
      %v7161 = vpop.f32.mrf.mxu0
      %7162 = vmatprep.mubr.f32.mxu0 0.0
      %7163 = vmatmul.mubr.f32.gmra.mxu0 %v6968
      %v7164 = vpop.f32.mrf.mxu0
      %v7165 = vadd.f32 0.0, %v7164
      %v7166 = vpop.f32.mrf.mxu0
      %7167 = vmatprep.mubr.f32.mxu0 0.0
      %7168 = vmatmul.mubr.f32.gmra.mxu0 %v6971
      %v7169 = vpop.f32.mrf.mxu0
      %v7170 = vadd.f32 0.0, %v7169
      %v7171 = vpop.f32.mrf.mxu0
      %7172 = vmatprep.mubr.f32.mxu0 0.0
      %7173 = vmatmul.mubr.f32.gmra.mxu0 %v6974
      %v7174 = vpop.f32.mrf.mxu0
      %v7175 = vadd.f32 0.0, %v7174
      %v7176 = vpop.f32.mrf.mxu0
      %7177 = vmatprep.mubr.f32.mxu0 0.0
      %7178 = vmatmul.mubr.f32.gmra.mxu0 %v6977
      %v7179 = vpop.f32.mrf.mxu0
      %v7180 = vadd.f32 0.0, %v7179
      %v7181 = vpop.f32.mrf.mxu0
      %7182 = vmatprep.mubr.f32.mxu0 0.0
      %7183 = vmatmul.mubr.f32.gmra.mxu0 %v6980
      %v7184 = vpop.f32.mrf.mxu0
      %v7185 = vadd.f32 0.0, %v7184
      %v7186 = vpop.f32.mrf.mxu0
      %7187 = vmatprep.mubr.f32.mxu0 0.0
      %7188 = vmatmul.mubr.f32.gmra.mxu0 %v6983
      %v7189 = vpop.f32.mrf.mxu0
      %v7190 = vadd.f32 0.0, %v7189
      %v7191 = vpop.f32.mrf.mxu0
      %7192 = vmatprep.mubr.f32.mxu0 0.0
      %7193 = vmatmul.mubr.f32.gmra.mxu0 %v6986
      %v7194 = vpop.f32.mrf.mxu0
      %v7195 = vadd.f32 0.0, %v7194
      %v7196 = vpop.f32.mrf.mxu0
      %7197 = vmatprep.mubr.f32.mxu0 0.0
      %7198 = vmatmul.mubr.f32.gmra.mxu0 %v6989
      %v7199 = vpop.f32.mrf.mxu0
      %v7200 = vadd.f32 0.0, %v7199
      %v7201 = vpop.f32.mrf.mxu0
      %7202 = vmatprep.mubr.f32.mxu0 0.0
      %7203 = vmatmul.mubr.f32.gmra.mxu0 %v6992
      %v7204 = vpop.f32.mrf.mxu0
      %v7205 = vadd.f32 0.0, %v7204
      %v7206 = vpop.f32.mrf.mxu0
      %7207 = vmatprep.mubr.f32.mxu0 0.0
      %7208 = vmatmul.mubr.f32.gmra.mxu0 %v6995
      %v7209 = vpop.f32.mrf.mxu0
      %v7210 = vadd.f32 0.0, %v7209
      %v7211 = vpop.f32.mrf.mxu0
      %7212 = vmatprep.mubr.f32.mxu0 0.0
      %7213 = vmatmul.mubr.f32.gmra.mxu0 %v6998
      %v7214 = vpop.f32.mrf.mxu0
      %v7215 = vadd.f32 0.0, %v7214
      %v7216 = vpop.f32.mrf.mxu0
      %7217 = vmatprep.mubr.f32.mxu0 0.0
      %7218 = vmatmul.mubr.f32.gmra.mxu0 %v7001
      %v7219 = vpop.f32.mrf.mxu0
      %v7220 = vadd.f32 0.0, %v7219
      %v7221 = vpop.f32.mrf.mxu0
      %7222 = vmatprep.mubr.f32.mxu0 0.0
      %7223 = vmatmul.mubr.f32.gmra.mxu0 %v7004
      %v7224 = vpop.f32.mrf.mxu0
      %v7225 = vadd.f32 0.0, %v7224
      %v7226 = vpop.f32.mrf.mxu0
      %7227 = vmatprep.mubr.f32.mxu0 0.0
      %7228 = vmatmul.mubr.f32.gmra.mxu0 %v7007
      %v7229 = vpop.f32.mrf.mxu0
      %v7230 = vadd.f32 0.0, %v7229
      %v7231 = vpop.f32.mrf.mxu0
      %7232 = vmatprep.mubr.f32.mxu0 0.0
      %7233 = vmatmul.mubr.f32.gmra.mxu0 %v7010
      %v7234 = vpop.f32.mrf.mxu0
      %v7235 = vadd.f32 0.0, %v7234
      %v7236 = vpop.f32.mrf.mxu0
      %7237 = vmatprep.mubr.f32.mxu0 0.0
      %7238 = vmatmul.mubr.f32.gmra.mxu0 %v7013
      %v7239 = vpop.f32.mrf.mxu0
      %v7240 = vadd.f32 0.0, %v7239
      %v7241 = vpop.f32.mrf.mxu0
      %7242 = vmatprep.mubr.f32.mxu0 0.0
      %7243 = vmatmul.mubr.f32.gmra.mxu0 %v7016
      %v7244 = vpop.f32.mrf.mxu0
      %v7245 = vadd.f32 0.0, %v7244
      %v7246 = vpop.f32.mrf.mxu0
      %7247 = vmatprep.mubr.f32.mxu0 0.0
      %7248 = vmatmul.mubr.f32.gmra.mxu0 %v7019
      %v7249 = vpop.f32.mrf.mxu0
      %v7250 = vadd.f32 0.0, %v7249
      %v7251 = vpop.f32.mrf.mxu0
      %7252 = vmatprep.mubr.f32.mxu0 0.0
      %7253 = vmatmul.mubr.f32.gmra.mxu0 %v7022
      %v7254 = vpop.f32.mrf.mxu0
      %v7255 = vadd.f32 0.0, %v7254
      %v7256 = vpop.f32.mrf.mxu0
      %7257 = vmatprep.mubr.f32.mxu0 0.0
      %7258 = vmatmul.mubr.f32.gmra.mxu0 %v7025
      %v7259 = vpop.f32.mrf.mxu0
      %v7260 = vadd.f32 0.0, %v7259
      %v7261 = vpop.f32.mrf.mxu0
      %7262 = vmatprep.mubr.f32.mxu0 0.0
      %7263 = vmatmul.mubr.f32.gmra.mxu0 %v7028
      %v7264 = vpop.f32.mrf.mxu0
      %v7265 = vadd.f32 0.0, %v7264
      %v7266 = vpop.f32.mrf.mxu0
      %7267 = vmatprep.mubr.f32.mxu0 0.0
      %7268 = vmatmul.mubr.f32.gmra.mxu0 %v7031
      %v7269 = vpop.f32.mrf.mxu0
      %v7270 = vadd.f32 0.0, %v7269
      %v7271 = vpop.f32.mrf.mxu0
      %7272 = vmatprep.mubr.f32.mxu0 0.0
      %7273 = vmatmul.mubr.f32.gmra.mxu0 %v7034
      %v7274 = vpop.f32.mrf.mxu0
      %v7275 = vadd.f32 0.0, %v7274
      %v7276 = vpop.f32.mrf.mxu0
      %7277 = vmatprep.mubr.f32.mxu0 0.0
      %7278 = vmatmul.mubr.f32.gmra.mxu0 %v7037
      %v7279 = vpop.f32.mrf.mxu0
      %v7280 = vadd.f32 0.0, %v7279
      %v7281 = vpop.f32.mrf.mxu0
      %7282 = vmatprep.mubr.f32.mxu0 0.0
      %7283 = vmatmul.mubr.f32.gmra.mxu0 %v7040
      %v7284 = vpop.f32.mrf.mxu0
      %v7285 = vadd.f32 0.0, %v7284
      %v7286 = vpop.f32.mrf.mxu0
      %7287 = vmatprep.mubr.f32.mxu0 0.0
      %7288 = vmatmul.mubr.f32.gmra.mxu0 %v7043
      %v7289 = vpop.f32.mrf.mxu0
      %v7290 = vadd.f32 0.0, %v7289
      %v7291 = vpop.f32.mrf.mxu0
      %7292 = vdwg.mxu0
      %v7293 = vadd.f32 %v6863, %v7115
      %v7294 = vadd.f32 %v6864, %v7120
      %v7295 = vadd.f32 %v6865, %v7125
      %v7296 = vadd.f32 %v6866, %v7130
      %v7297 = vadd.f32 %v6867, %v7135
      %v7298 = vadd.f32 %v6868, %v7140
      %v7299 = vadd.f32 %v6869, %v7145
      %v7300 = vadd.f32 %v6870, %v7150
      %v7301 = vadd.f32 %v6871, %v7155
      %v7302 = vadd.f32 %v6872, %v7160
      %v7303 = vadd.f32 %v6873, %v7165
      %v7304 = vadd.f32 %v6874, %v7170
      %v7305 = vadd.f32 %v6875, %v7175
      %v7306 = vadd.f32 %v6876, %v7180
      %v7307 = vadd.f32 %v6877, %v7185
      %v7308 = vadd.f32 %v6878, %v7190
      %v7309 = vadd.f32 %v6879, %v7195
      %v7310 = vadd.f32 %v6880, %v7200
      %v7311 = vadd.f32 %v6881, %v7205
      %v7312 = vadd.f32 %v6882, %v7210
      %v7313 = vadd.f32 %v6883, %v7215
      %v7314 = vadd.f32 %v6884, %v7220
      %v7315 = vadd.f32 %v6885, %v7225
      %v7316 = vadd.f32 %v6886, %v7230
      %v7317 = vadd.f32 %v6887, %v7235
      %v7318 = vadd.f32 %v6888, %v7240
      %v7319 = vadd.f32 %v6889, %v7245
      %v7320 = vadd.f32 %v6890, %v7250
      %v7321 = vadd.f32 %v6891, %v7255
      %v7322 = vadd.f32 %v6892, %v7260
      %v7323 = vadd.f32 %v6893, %v7265
      %v7324 = vadd.f32 %v6894, %v7270
      %v7325 = vadd.f32 %v6895, %v7275
      %v7326 = vadd.f32 %v6896, %v7280
      %v7327 = vadd.f32 %v6897, %v7285
      %v7328 = vadd.f32 %v6898, %v7290
      %v7329 = vld [vmem:[#allocation2 + $0x25] sm:$0xff]
      %v7330 = vld [vmem:[#allocation2 + $0x2d] sm:$0xff]
      %v7331 = vld [vmem:[#allocation2 + $0x35] sm:$0xff]
      %v7332 = vld [vmem:[#allocation2 + $0x3d] sm:$0xff]
      %v7333 = vld [vmem:[#allocation2 + $0x45] sm:$0xff]
      %v7334 = vld [vmem:[#allocation2 + $0x4d] sm:$0xff]
      %v7335 = vld [vmem:[#allocation2 + $0x55] sm:$0xff]
      %v7336 = vld [vmem:[#allocation2 + $0x5d] sm:$0xff]
      %v7337 = vld [vmem:[#allocation2 + $0x65] sm:$0xff]
      %v7338 = vld [vmem:[#allocation2 + $0x6d] sm:$0xff]
      %v7339 = vld [vmem:[#allocation2 + $0x75] sm:$0xff]
      %v7340 = vld [vmem:[#allocation2 + $0x7d] sm:$0xff]
      %v7341 = vld [vmem:[#allocation2 + $0x85] sm:$0xff]
      %v7342 = vld [vmem:[#allocation2 + $0x8d] sm:$0xff]
      %v7343 = vld [vmem:[#allocation2 + $0x95] sm:$0xff]
      %v7344 = vld [vmem:[#allocation2 + $0x9d] sm:$0xff]
      %v7345 = vld [vmem:[#allocation2 + $0xa5] sm:$0xff]
      %v7346 = vld [vmem:[#allocation2 + $0xad] sm:$0xff]
      %v7347 = vld [vmem:[#allocation2 + $0xb5] sm:$0xff]
      %v7348 = vld [vmem:[#allocation2 + $0xbd] sm:$0xff]
      %v7349 = vld [vmem:[#allocation2 + $0xc5] sm:$0xff]
      %v7350 = vld [vmem:[#allocation2 + $0xcd] sm:$0xff]
      %v7351 = vld [vmem:[#allocation2 + $0xd5] sm:$0xff]
      %v7352 = vld [vmem:[#allocation2 + $0xdd] sm:$0xff]
      %v7353 = vld [vmem:[#allocation2 + $0xe5] sm:$0xff]
      %v7354 = vld [vmem:[#allocation2 + $0xed] sm:$0xff]
      %v7355 = vld [vmem:[#allocation2 + $0xf5] sm:$0xff]
      %v7356 = vld [vmem:[#allocation2 + $0xfd] sm:$0xff]
      %v7357 = vld [vmem:[#allocation2 + $0x105] sm:$0xff]
      %v7358 = vld [vmem:[#allocation2 + $0x10d] sm:$0xff]
      %v7359 = vld [vmem:[#allocation2 + $0x115] sm:$0xff]
      %v7360 = vld [vmem:[#allocation2 + $0x11d] sm:$0xff]
      %v7361 = vld [vmem:[#allocation2 + $0x125] sm:$0xff]
      %v7362 = vld [vmem:[#allocation2 + $0x12d] sm:$0xff]
      %v7363 = vld [vmem:[#allocation2 + $0x135] sm:$0xff]
      %v7364 = vld [vmem:[#allocation2 + $0x13d] sm:$0xff]
      %s7365 = scalar_lea.vmem %s2, 28
      %v7366 = vld [vmem:[%s7365] sm:$0xf]
      %v7368 = vsel %vm421, %v7329, 0
      %v7371 = vsel %vm421, %v7330, 0
      %v7374 = vsel %vm421, %v7331, 0
      %v7377 = vsel %vm421, %v7332, 0
      %v7380 = vsel %vm421, %v7333, 0
      %v7383 = vsel %vm421, %v7334, 0
      %v7386 = vsel %vm421, %v7335, 0
      %v7389 = vsel %vm421, %v7336, 0
      %v7392 = vsel %vm421, %v7337, 0
      %v7395 = vsel %vm421, %v7338, 0
      %v7398 = vsel %vm421, %v7339, 0
      %v7401 = vsel %vm421, %v7340, 0
      %v7404 = vsel %vm421, %v7341, 0
      %v7407 = vsel %vm421, %v7342, 0
      %v7410 = vsel %vm421, %v7343, 0
      %v7413 = vsel %vm421, %v7344, 0
      %v7416 = vsel %vm421, %v7345, 0
      %v7419 = vsel %vm421, %v7346, 0
      %v7422 = vsel %vm421, %v7347, 0
      %v7425 = vsel %vm421, %v7348, 0
      %v7428 = vsel %vm421, %v7349, 0
      %v7431 = vsel %vm421, %v7350, 0
      %v7434 = vsel %vm421, %v7351, 0
      %v7437 = vsel %vm421, %v7352, 0
      %v7440 = vsel %vm421, %v7353, 0
      %v7443 = vsel %vm421, %v7354, 0
      %v7446 = vsel %vm421, %v7355, 0
      %v7449 = vsel %vm421, %v7356, 0
      %v7452 = vsel %vm421, %v7357, 0
      %v7455 = vsel %vm421, %v7358, 0
      %v7458 = vsel %vm421, %v7359, 0
      %v7461 = vsel %vm421, %v7360, 0
      %v7464 = vsel %vm421, %v7361, 0
      %v7467 = vsel %vm421, %v7362, 0
      %v7470 = vsel %vm421, %v7363, 0
      %v7473 = vsel %vm421, %v7364, 0
      %v7476 = vsel %vm494, %v7366, 0
      %7478 = vmatprep.subr.mxu0 0.0
      %7479 = vmatpush1.msra.mxu0 0.0
      %7480 = vmatprep.subr.mxu0 0.0
      %7481 = vmatpush1.msra.mxu0 0.0
      %7482 = vmatprep.subr.mxu0 0.0
      %7483 = vmatpush1.msra.mxu0 0.0
      %7484 = vmatprep.subr.mxu0 0.0
      %7485 = vmatpush1.msra.mxu0 0.0
      %7486 = vmatprep.subr.mxu0 0.0
      %7487 = vmatpush1.msra.mxu0 0.0
      %7488 = vmatprep.subr.mxu0 0.0
      %7489 = vmatpush1.msra.mxu0 0.0
      %7490 = vmatprep.subr.mxu0 0.0
      %7491 = vmatpush1.msra.mxu0 0.0
      %7492 = vmatprep.subr.mxu0 0.0
      %7493 = vmatpush1.msra.mxu0 0.0
      %7494 = vmatprep.subr.mxu0 0.0
      %7495 = vmatpush1.msra.mxu0 0.0
      %7496 = vmatprep.subr.mxu0 0.0
      %7497 = vmatpush1.msra.mxu0 0.0
      %7498 = vmatprep.subr.mxu0 0.0
      %7499 = vmatpush1.msra.mxu0 0.0
      %7500 = vmatprep.subr.mxu0 0.0
      %7501 = vmatpush1.msra.mxu0 0.0
      %7502 = vmatprep.subr.mxu0 0.0
      %7503 = vmatpush1.msra.mxu0 0.0
      %7504 = vmatprep.subr.mxu0 0.0
      %7505 = vmatpush1.msra.mxu0 0.0
      %7506 = vmatprep.subr.mxu0 0.0
      %7507 = vmatpush1.msra.mxu0 0.0
      %7508 = vmatprep.subr.mxu0 0.0
      %7509 = vmatpush1.msra.mxu0 %v7476
      %7510 = vmatprep.subr.mxu0 0.0
      %7511 = vmatpush2.msra.mxu0 0.0
      %7512 = vmatprep.subr.mxu0 0.0
      %7513 = vmatpush2.msra.mxu0 0.0
      %7514 = vmatprep.subr.mxu0 0.0
      %7515 = vmatpush2.msra.mxu0 0.0
      %7516 = vmatprep.subr.mxu0 0.0
      %7517 = vmatpush2.msra.mxu0 0.0
      %7518 = vmatprep.subr.mxu0 0.0
      %7519 = vmatpush2.msra.mxu0 0.0
      %7520 = vmatprep.subr.mxu0 0.0
      %7521 = vmatpush2.msra.mxu0 0.0
      %7522 = vmatprep.subr.mxu0 0.0
      %7523 = vmatpush2.msra.mxu0 0.0
      %7524 = vmatprep.subr.mxu0 0.0
      %7525 = vmatpush2.msra.mxu0 0.0
      %7526 = vmatprep.subr.mxu0 0.0
      %7527 = vmatpush2.msra.mxu0 0.0
      %7528 = vmatprep.subr.mxu0 0.0
      %7529 = vmatpush2.msra.mxu0 0.0
      %7530 = vmatprep.subr.mxu0 0.0
      %7531 = vmatpush2.msra.mxu0 0.0
      %7532 = vmatprep.subr.mxu0 0.0
      %7533 = vmatpush2.msra.mxu0 0.0
      %7534 = vmatprep.subr.mxu0 0.0
      %7535 = vmatpush2.msra.mxu0 0.0
      %7536 = vmatprep.subr.mxu0 0.0
      %7537 = vmatpush2.msra.mxu0 0.0
      %7538 = vmatprep.subr.mxu0 0.0
      %7539 = vmatpush2.msra.mxu0 0.0
      %7540 = vmatprep.subr.mxu0 0.0
      %7541 = vmatpush2.msra.mxu0 0.0
      %7542 = vmatprep.mubr.f32.mxu0 0.0
      %7543 = vmatmul.mubr.f32.gmra.mxu0 %v7368
      %v7544 = vpop.f32.mrf.mxu0
      %v7545 = vadd.f32 0.0, %v7544
      %v7546 = vpop.f32.mrf.mxu0
      %7547 = vmatprep.mubr.f32.mxu0 0.0
      %7548 = vmatmul.mubr.f32.gmra.mxu0 %v7371
      %v7549 = vpop.f32.mrf.mxu0
      %v7550 = vadd.f32 0.0, %v7549
      %v7551 = vpop.f32.mrf.mxu0
      %7552 = vmatprep.mubr.f32.mxu0 0.0
      %7553 = vmatmul.mubr.f32.gmra.mxu0 %v7374
      %v7554 = vpop.f32.mrf.mxu0
      %v7555 = vadd.f32 0.0, %v7554
      %v7556 = vpop.f32.mrf.mxu0
      %7557 = vmatprep.mubr.f32.mxu0 0.0
      %7558 = vmatmul.mubr.f32.gmra.mxu0 %v7377
      %v7559 = vpop.f32.mrf.mxu0
      %v7560 = vadd.f32 0.0, %v7559
      %v7561 = vpop.f32.mrf.mxu0
      %7562 = vmatprep.mubr.f32.mxu0 0.0
      %7563 = vmatmul.mubr.f32.gmra.mxu0 %v7380
      %v7564 = vpop.f32.mrf.mxu0
      %v7565 = vadd.f32 0.0, %v7564
      %v7566 = vpop.f32.mrf.mxu0
      %7567 = vmatprep.mubr.f32.mxu0 0.0
      %7568 = vmatmul.mubr.f32.gmra.mxu0 %v7383
      %v7569 = vpop.f32.mrf.mxu0
      %v7570 = vadd.f32 0.0, %v7569
      %v7571 = vpop.f32.mrf.mxu0
      %7572 = vmatprep.mubr.f32.mxu0 0.0
      %7573 = vmatmul.mubr.f32.gmra.mxu0 %v7386
      %v7574 = vpop.f32.mrf.mxu0
      %v7575 = vadd.f32 0.0, %v7574
      %v7576 = vpop.f32.mrf.mxu0
      %7577 = vmatprep.mubr.f32.mxu0 0.0
      %7578 = vmatmul.mubr.f32.gmra.mxu0 %v7389
      %v7579 = vpop.f32.mrf.mxu0
      %v7580 = vadd.f32 0.0, %v7579
      %v7581 = vpop.f32.mrf.mxu0
      %7582 = vmatprep.mubr.f32.mxu0 0.0
      %7583 = vmatmul.mubr.f32.gmra.mxu0 %v7392
      %v7584 = vpop.f32.mrf.mxu0
      %v7585 = vadd.f32 0.0, %v7584
      %v7586 = vpop.f32.mrf.mxu0
      %7587 = vmatprep.mubr.f32.mxu0 0.0
      %7588 = vmatmul.mubr.f32.gmra.mxu0 %v7395
      %v7589 = vpop.f32.mrf.mxu0
      %v7590 = vadd.f32 0.0, %v7589
      %v7591 = vpop.f32.mrf.mxu0
      %7592 = vmatprep.mubr.f32.mxu0 0.0
      %7593 = vmatmul.mubr.f32.gmra.mxu0 %v7398
      %v7594 = vpop.f32.mrf.mxu0
      %v7595 = vadd.f32 0.0, %v7594
      %v7596 = vpop.f32.mrf.mxu0
      %7597 = vmatprep.mubr.f32.mxu0 0.0
      %7598 = vmatmul.mubr.f32.gmra.mxu0 %v7401
      %v7599 = vpop.f32.mrf.mxu0
      %v7600 = vadd.f32 0.0, %v7599
      %v7601 = vpop.f32.mrf.mxu0
      %7602 = vmatprep.mubr.f32.mxu0 0.0
      %7603 = vmatmul.mubr.f32.gmra.mxu0 %v7404
      %v7604 = vpop.f32.mrf.mxu0
      %v7605 = vadd.f32 0.0, %v7604
      %v7606 = vpop.f32.mrf.mxu0
      %7607 = vmatprep.mubr.f32.mxu0 0.0
      %7608 = vmatmul.mubr.f32.gmra.mxu0 %v7407
      %v7609 = vpop.f32.mrf.mxu0
      %v7610 = vadd.f32 0.0, %v7609
      %v7611 = vpop.f32.mrf.mxu0
      %7612 = vmatprep.mubr.f32.mxu0 0.0
      %7613 = vmatmul.mubr.f32.gmra.mxu0 %v7410
      %v7614 = vpop.f32.mrf.mxu0
      %v7615 = vadd.f32 0.0, %v7614
      %v7616 = vpop.f32.mrf.mxu0
      %7617 = vmatprep.mubr.f32.mxu0 0.0
      %7618 = vmatmul.mubr.f32.gmra.mxu0 %v7413
      %v7619 = vpop.f32.mrf.mxu0
      %v7620 = vadd.f32 0.0, %v7619
      %v7621 = vpop.f32.mrf.mxu0
      %7622 = vmatprep.mubr.f32.mxu0 0.0
      %7623 = vmatmul.mubr.f32.gmra.mxu0 %v7416
      %v7624 = vpop.f32.mrf.mxu0
      %v7625 = vadd.f32 0.0, %v7624
      %v7626 = vpop.f32.mrf.mxu0
      %7627 = vmatprep.mubr.f32.mxu0 0.0
      %7628 = vmatmul.mubr.f32.gmra.mxu0 %v7419
      %v7629 = vpop.f32.mrf.mxu0
      %v7630 = vadd.f32 0.0, %v7629
      %v7631 = vpop.f32.mrf.mxu0
      %7632 = vmatprep.mubr.f32.mxu0 0.0
      %7633 = vmatmul.mubr.f32.gmra.mxu0 %v7422
      %v7634 = vpop.f32.mrf.mxu0
      %v7635 = vadd.f32 0.0, %v7634
      %v7636 = vpop.f32.mrf.mxu0
      %7637 = vmatprep.mubr.f32.mxu0 0.0
      %7638 = vmatmul.mubr.f32.gmra.mxu0 %v7425
      %v7639 = vpop.f32.mrf.mxu0
      %v7640 = vadd.f32 0.0, %v7639
      %v7641 = vpop.f32.mrf.mxu0
      %7642 = vmatprep.mubr.f32.mxu0 0.0
      %7643 = vmatmul.mubr.f32.gmra.mxu0 %v7428
      %v7644 = vpop.f32.mrf.mxu0
      %v7645 = vadd.f32 0.0, %v7644
      %v7646 = vpop.f32.mrf.mxu0
      %7647 = vmatprep.mubr.f32.mxu0 0.0
      %7648 = vmatmul.mubr.f32.gmra.mxu0 %v7431
      %v7649 = vpop.f32.mrf.mxu0
      %v7650 = vadd.f32 0.0, %v7649
      %v7651 = vpop.f32.mrf.mxu0
      %7652 = vmatprep.mubr.f32.mxu0 0.0
      %7653 = vmatmul.mubr.f32.gmra.mxu0 %v7434
      %v7654 = vpop.f32.mrf.mxu0
      %v7655 = vadd.f32 0.0, %v7654
      %v7656 = vpop.f32.mrf.mxu0
      %7657 = vmatprep.mubr.f32.mxu0 0.0
      %7658 = vmatmul.mubr.f32.gmra.mxu0 %v7437
      %v7659 = vpop.f32.mrf.mxu0
      %v7660 = vadd.f32 0.0, %v7659
      %v7661 = vpop.f32.mrf.mxu0
      %7662 = vmatprep.mubr.f32.mxu0 0.0
      %7663 = vmatmul.mubr.f32.gmra.mxu0 %v7440
      %v7664 = vpop.f32.mrf.mxu0
      %v7665 = vadd.f32 0.0, %v7664
      %v7666 = vpop.f32.mrf.mxu0
      %7667 = vmatprep.mubr.f32.mxu0 0.0
      %7668 = vmatmul.mubr.f32.gmra.mxu0 %v7443
      %v7669 = vpop.f32.mrf.mxu0
      %v7670 = vadd.f32 0.0, %v7669
      %v7671 = vpop.f32.mrf.mxu0
      %7672 = vmatprep.mubr.f32.mxu0 0.0
      %7673 = vmatmul.mubr.f32.gmra.mxu0 %v7446
      %v7674 = vpop.f32.mrf.mxu0
      %v7675 = vadd.f32 0.0, %v7674
      %v7676 = vpop.f32.mrf.mxu0
      %7677 = vmatprep.mubr.f32.mxu0 0.0
      %7678 = vmatmul.mubr.f32.gmra.mxu0 %v7449
      %v7679 = vpop.f32.mrf.mxu0
      %v7680 = vadd.f32 0.0, %v7679
      %v7681 = vpop.f32.mrf.mxu0
      %7682 = vmatprep.mubr.f32.mxu0 0.0
      %7683 = vmatmul.mubr.f32.gmra.mxu0 %v7452
      %v7684 = vpop.f32.mrf.mxu0
      %v7685 = vadd.f32 0.0, %v7684
      %v7686 = vpop.f32.mrf.mxu0
      %7687 = vmatprep.mubr.f32.mxu0 0.0
      %7688 = vmatmul.mubr.f32.gmra.mxu0 %v7455
      %v7689 = vpop.f32.mrf.mxu0
      %v7690 = vadd.f32 0.0, %v7689
      %v7691 = vpop.f32.mrf.mxu0
      %7692 = vmatprep.mubr.f32.mxu0 0.0
      %7693 = vmatmul.mubr.f32.gmra.mxu0 %v7458
      %v7694 = vpop.f32.mrf.mxu0
      %v7695 = vadd.f32 0.0, %v7694
      %v7696 = vpop.f32.mrf.mxu0
      %7697 = vmatprep.mubr.f32.mxu0 0.0
      %7698 = vmatmul.mubr.f32.gmra.mxu0 %v7461
      %v7699 = vpop.f32.mrf.mxu0
      %v7700 = vadd.f32 0.0, %v7699
      %v7701 = vpop.f32.mrf.mxu0
      %7702 = vmatprep.mubr.f32.mxu0 0.0
      %7703 = vmatmul.mubr.f32.gmra.mxu0 %v7464
      %v7704 = vpop.f32.mrf.mxu0
      %v7705 = vadd.f32 0.0, %v7704
      %v7706 = vpop.f32.mrf.mxu0
      %7707 = vmatprep.mubr.f32.mxu0 0.0
      %7708 = vmatmul.mubr.f32.gmra.mxu0 %v7467
      %v7709 = vpop.f32.mrf.mxu0
      %v7710 = vadd.f32 0.0, %v7709
      %v7711 = vpop.f32.mrf.mxu0
      %7712 = vmatprep.mubr.f32.mxu0 0.0
      %7713 = vmatmul.mubr.f32.gmra.mxu0 %v7470
      %v7714 = vpop.f32.mrf.mxu0
      %v7715 = vadd.f32 0.0, %v7714
      %v7716 = vpop.f32.mrf.mxu0
      %7717 = vmatprep.mubr.f32.mxu0 0.0
      %7718 = vmatmul.mubr.f32.gmra.mxu0 %v7473
      %v7719 = vpop.f32.mrf.mxu0
      %v7720 = vadd.f32 0.0, %v7719
      %v7721 = vpop.f32.mrf.mxu0
      %7722 = vdwg.mxu0
      %v7723 = vadd.f32 %v7293, %v7545
      %v7724 = vadd.f32 %v7294, %v7550
      %v7725 = vadd.f32 %v7295, %v7555
      %v7726 = vadd.f32 %v7296, %v7560
      %v7727 = vadd.f32 %v7297, %v7565
      %v7728 = vadd.f32 %v7298, %v7570
      %v7729 = vadd.f32 %v7299, %v7575
      %v7730 = vadd.f32 %v7300, %v7580
      %v7731 = vadd.f32 %v7301, %v7585
      %v7732 = vadd.f32 %v7302, %v7590
      %v7733 = vadd.f32 %v7303, %v7595
      %v7734 = vadd.f32 %v7304, %v7600
      %v7735 = vadd.f32 %v7305, %v7605
      %v7736 = vadd.f32 %v7306, %v7610
      %v7737 = vadd.f32 %v7307, %v7615
      %v7738 = vadd.f32 %v7308, %v7620
      %v7739 = vadd.f32 %v7309, %v7625
      %v7740 = vadd.f32 %v7310, %v7630
      %v7741 = vadd.f32 %v7311, %v7635
      %v7742 = vadd.f32 %v7312, %v7640
      %v7743 = vadd.f32 %v7313, %v7645
      %v7744 = vadd.f32 %v7314, %v7650
      %v7745 = vadd.f32 %v7315, %v7655
      %v7746 = vadd.f32 %v7316, %v7660
      %v7747 = vadd.f32 %v7317, %v7665
      %v7748 = vadd.f32 %v7318, %v7670
      %v7749 = vadd.f32 %v7319, %v7675
      %v7750 = vadd.f32 %v7320, %v7680
      %v7751 = vadd.f32 %v7321, %v7685
      %v7752 = vadd.f32 %v7322, %v7690
      %v7753 = vadd.f32 %v7323, %v7695
      %v7754 = vadd.f32 %v7324, %v7700
      %v7755 = vadd.f32 %v7325, %v7705
      %v7756 = vadd.f32 %v7326, %v7710
      %v7757 = vadd.f32 %v7327, %v7715
      %v7758 = vadd.f32 %v7328, %v7720
      %v7759 = vld [vmem:[#allocation2 + $0x26] sm:$0xff]
      %v7760 = vld [vmem:[#allocation2 + $0x2e] sm:$0xff]
      %v7761 = vld [vmem:[#allocation2 + $0x36] sm:$0xff]
      %v7762 = vld [vmem:[#allocation2 + $0x3e] sm:$0xff]
      %v7763 = vld [vmem:[#allocation2 + $0x46] sm:$0xff]
      %v7764 = vld [vmem:[#allocation2 + $0x4e] sm:$0xff]
      %v7765 = vld [vmem:[#allocation2 + $0x56] sm:$0xff]
      %v7766 = vld [vmem:[#allocation2 + $0x5e] sm:$0xff]
      %v7767 = vld [vmem:[#allocation2 + $0x66] sm:$0xff]
      %v7768 = vld [vmem:[#allocation2 + $0x6e] sm:$0xff]
      %v7769 = vld [vmem:[#allocation2 + $0x76] sm:$0xff]
      %v7770 = vld [vmem:[#allocation2 + $0x7e] sm:$0xff]
      %v7771 = vld [vmem:[#allocation2 + $0x86] sm:$0xff]
      %v7772 = vld [vmem:[#allocation2 + $0x8e] sm:$0xff]
      %v7773 = vld [vmem:[#allocation2 + $0x96] sm:$0xff]
      %v7774 = vld [vmem:[#allocation2 + $0x9e] sm:$0xff]
      %v7775 = vld [vmem:[#allocation2 + $0xa6] sm:$0xff]
      %v7776 = vld [vmem:[#allocation2 + $0xae] sm:$0xff]
      %v7777 = vld [vmem:[#allocation2 + $0xb6] sm:$0xff]
      %v7778 = vld [vmem:[#allocation2 + $0xbe] sm:$0xff]
      %v7779 = vld [vmem:[#allocation2 + $0xc6] sm:$0xff]
      %v7780 = vld [vmem:[#allocation2 + $0xce] sm:$0xff]
      %v7781 = vld [vmem:[#allocation2 + $0xd6] sm:$0xff]
      %v7782 = vld [vmem:[#allocation2 + $0xde] sm:$0xff]
      %v7783 = vld [vmem:[#allocation2 + $0xe6] sm:$0xff]
      %v7784 = vld [vmem:[#allocation2 + $0xee] sm:$0xff]
      %v7785 = vld [vmem:[#allocation2 + $0xf6] sm:$0xff]
      %v7786 = vld [vmem:[#allocation2 + $0xfe] sm:$0xff]
      %v7787 = vld [vmem:[#allocation2 + $0x106] sm:$0xff]
      %v7788 = vld [vmem:[#allocation2 + $0x10e] sm:$0xff]
      %v7789 = vld [vmem:[#allocation2 + $0x116] sm:$0xff]
      %v7790 = vld [vmem:[#allocation2 + $0x11e] sm:$0xff]
      %v7791 = vld [vmem:[#allocation2 + $0x126] sm:$0xff]
      %v7792 = vld [vmem:[#allocation2 + $0x12e] sm:$0xff]
      %v7793 = vld [vmem:[#allocation2 + $0x136] sm:$0xff]
      %v7794 = vld [vmem:[#allocation2 + $0x13e] sm:$0xff]
      %s7795 = scalar_lea.vmem %s2, 32
      %v7796 = vld [vmem:[%s7795] sm:$0xf]
      %v7798 = vsel %vm421, %v7759, 0
      %v7801 = vsel %vm421, %v7760, 0
      %v7804 = vsel %vm421, %v7761, 0
      %v7807 = vsel %vm421, %v7762, 0
      %v7810 = vsel %vm421, %v7763, 0
      %v7813 = vsel %vm421, %v7764, 0
      %v7816 = vsel %vm421, %v7765, 0
      %v7819 = vsel %vm421, %v7766, 0
      %v7822 = vsel %vm421, %v7767, 0
      %v7825 = vsel %vm421, %v7768, 0
      %v7828 = vsel %vm421, %v7769, 0
      %v7831 = vsel %vm421, %v7770, 0
      %v7834 = vsel %vm421, %v7771, 0
      %v7837 = vsel %vm421, %v7772, 0
      %v7840 = vsel %vm421, %v7773, 0
      %v7843 = vsel %vm421, %v7774, 0
      %v7846 = vsel %vm421, %v7775, 0
      %v7849 = vsel %vm421, %v7776, 0
      %v7852 = vsel %vm421, %v7777, 0
      %v7855 = vsel %vm421, %v7778, 0
      %v7858 = vsel %vm421, %v7779, 0
      %v7861 = vsel %vm421, %v7780, 0
      %v7864 = vsel %vm421, %v7781, 0
      %v7867 = vsel %vm421, %v7782, 0
      %v7870 = vsel %vm421, %v7783, 0
      %v7873 = vsel %vm421, %v7784, 0
      %v7876 = vsel %vm421, %v7785, 0
      %v7879 = vsel %vm421, %v7786, 0
      %v7882 = vsel %vm421, %v7787, 0
      %v7885 = vsel %vm421, %v7788, 0
      %v7888 = vsel %vm421, %v7789, 0
      %v7891 = vsel %vm421, %v7790, 0
      %v7894 = vsel %vm421, %v7791, 0
      %v7897 = vsel %vm421, %v7792, 0
      %v7900 = vsel %vm421, %v7793, 0
      %v7903 = vsel %vm421, %v7794, 0
      %v7906 = vsel %vm494, %v7796, 0
      %7908 = vmatprep.subr.mxu0 0.0
      %7909 = vmatpush1.msra.mxu0 0.0
      %7910 = vmatprep.subr.mxu0 0.0
      %7911 = vmatpush1.msra.mxu0 0.0
      %7912 = vmatprep.subr.mxu0 0.0
      %7913 = vmatpush1.msra.mxu0 0.0
      %7914 = vmatprep.subr.mxu0 0.0
      %7915 = vmatpush1.msra.mxu0 0.0
      %7916 = vmatprep.subr.mxu0 0.0
      %7917 = vmatpush1.msra.mxu0 0.0
      %7918 = vmatprep.subr.mxu0 0.0
      %7919 = vmatpush1.msra.mxu0 0.0
      %7920 = vmatprep.subr.mxu0 0.0
      %7921 = vmatpush1.msra.mxu0 0.0
      %7922 = vmatprep.subr.mxu0 0.0
      %7923 = vmatpush1.msra.mxu0 0.0
      %7924 = vmatprep.subr.mxu0 0.0
      %7925 = vmatpush1.msra.mxu0 0.0
      %7926 = vmatprep.subr.mxu0 0.0
      %7927 = vmatpush1.msra.mxu0 0.0
      %7928 = vmatprep.subr.mxu0 0.0
      %7929 = vmatpush1.msra.mxu0 0.0
      %7930 = vmatprep.subr.mxu0 0.0
      %7931 = vmatpush1.msra.mxu0 0.0
      %7932 = vmatprep.subr.mxu0 0.0
      %7933 = vmatpush1.msra.mxu0 0.0
      %7934 = vmatprep.subr.mxu0 0.0
      %7935 = vmatpush1.msra.mxu0 0.0
      %7936 = vmatprep.subr.mxu0 0.0
      %7937 = vmatpush1.msra.mxu0 0.0
      %7938 = vmatprep.subr.mxu0 0.0
      %7939 = vmatpush1.msra.mxu0 %v7906
      %7940 = vmatprep.subr.mxu0 0.0
      %7941 = vmatpush2.msra.mxu0 0.0
      %7942 = vmatprep.subr.mxu0 0.0
      %7943 = vmatpush2.msra.mxu0 0.0
      %7944 = vmatprep.subr.mxu0 0.0
      %7945 = vmatpush2.msra.mxu0 0.0
      %7946 = vmatprep.subr.mxu0 0.0
      %7947 = vmatpush2.msra.mxu0 0.0
      %7948 = vmatprep.subr.mxu0 0.0
      %7949 = vmatpush2.msra.mxu0 0.0
      %7950 = vmatprep.subr.mxu0 0.0
      %7951 = vmatpush2.msra.mxu0 0.0
      %7952 = vmatprep.subr.mxu0 0.0
      %7953 = vmatpush2.msra.mxu0 0.0
      %7954 = vmatprep.subr.mxu0 0.0
      %7955 = vmatpush2.msra.mxu0 0.0
      %7956 = vmatprep.subr.mxu0 0.0
      %7957 = vmatpush2.msra.mxu0 0.0
      %7958 = vmatprep.subr.mxu0 0.0
      %7959 = vmatpush2.msra.mxu0 0.0
      %7960 = vmatprep.subr.mxu0 0.0
      %7961 = vmatpush2.msra.mxu0 0.0
      %7962 = vmatprep.subr.mxu0 0.0
      %7963 = vmatpush2.msra.mxu0 0.0
      %7964 = vmatprep.subr.mxu0 0.0
      %7965 = vmatpush2.msra.mxu0 0.0
      %7966 = vmatprep.subr.mxu0 0.0
      %7967 = vmatpush2.msra.mxu0 0.0
      %7968 = vmatprep.subr.mxu0 0.0
      %7969 = vmatpush2.msra.mxu0 0.0
      %7970 = vmatprep.subr.mxu0 0.0
      %7971 = vmatpush2.msra.mxu0 0.0
      %7972 = vmatprep.mubr.f32.mxu0 0.0
      %7973 = vmatmul.mubr.f32.gmra.mxu0 %v7798
      %v7974 = vpop.f32.mrf.mxu0
      %v7975 = vadd.f32 0.0, %v7974
      %v7976 = vpop.f32.mrf.mxu0
      %7977 = vmatprep.mubr.f32.mxu0 0.0
      %7978 = vmatmul.mubr.f32.gmra.mxu0 %v7801
      %v7979 = vpop.f32.mrf.mxu0
      %v7980 = vadd.f32 0.0, %v7979
      %v7981 = vpop.f32.mrf.mxu0
      %7982 = vmatprep.mubr.f32.mxu0 0.0
      %7983 = vmatmul.mubr.f32.gmra.mxu0 %v7804
      %v7984 = vpop.f32.mrf.mxu0
      %v7985 = vadd.f32 0.0, %v7984
      %v7986 = vpop.f32.mrf.mxu0
      %7987 = vmatprep.mubr.f32.mxu0 0.0
      %7988 = vmatmul.mubr.f32.gmra.mxu0 %v7807
      %v7989 = vpop.f32.mrf.mxu0
      %v7990 = vadd.f32 0.0, %v7989
      %v7991 = vpop.f32.mrf.mxu0
      %7992 = vmatprep.mubr.f32.mxu0 0.0
      %7993 = vmatmul.mubr.f32.gmra.mxu0 %v7810
      %v7994 = vpop.f32.mrf.mxu0
      %v7995 = vadd.f32 0.0, %v7994
      %v7996 = vpop.f32.mrf.mxu0
      %7997 = vmatprep.mubr.f32.mxu0 0.0
      %7998 = vmatmul.mubr.f32.gmra.mxu0 %v7813
      %v7999 = vpop.f32.mrf.mxu0
      %v8000 = vadd.f32 0.0, %v7999
      %v8001 = vpop.f32.mrf.mxu0
      %8002 = vmatprep.mubr.f32.mxu0 0.0
      %8003 = vmatmul.mubr.f32.gmra.mxu0 %v7816
      %v8004 = vpop.f32.mrf.mxu0
      %v8005 = vadd.f32 0.0, %v8004
      %v8006 = vpop.f32.mrf.mxu0
      %8007 = vmatprep.mubr.f32.mxu0 0.0
      %8008 = vmatmul.mubr.f32.gmra.mxu0 %v7819
      %v8009 = vpop.f32.mrf.mxu0
      %v8010 = vadd.f32 0.0, %v8009
      %v8011 = vpop.f32.mrf.mxu0
      %8012 = vmatprep.mubr.f32.mxu0 0.0
      %8013 = vmatmul.mubr.f32.gmra.mxu0 %v7822
      %v8014 = vpop.f32.mrf.mxu0
      %v8015 = vadd.f32 0.0, %v8014
      %v8016 = vpop.f32.mrf.mxu0
      %8017 = vmatprep.mubr.f32.mxu0 0.0
      %8018 = vmatmul.mubr.f32.gmra.mxu0 %v7825
      %v8019 = vpop.f32.mrf.mxu0
      %v8020 = vadd.f32 0.0, %v8019
      %v8021 = vpop.f32.mrf.mxu0
      %8022 = vmatprep.mubr.f32.mxu0 0.0
      %8023 = vmatmul.mubr.f32.gmra.mxu0 %v7828
      %v8024 = vpop.f32.mrf.mxu0
      %v8025 = vadd.f32 0.0, %v8024
      %v8026 = vpop.f32.mrf.mxu0
      %8027 = vmatprep.mubr.f32.mxu0 0.0
      %8028 = vmatmul.mubr.f32.gmra.mxu0 %v7831
      %v8029 = vpop.f32.mrf.mxu0
      %v8030 = vadd.f32 0.0, %v8029
      %v8031 = vpop.f32.mrf.mxu0
      %8032 = vmatprep.mubr.f32.mxu0 0.0
      %8033 = vmatmul.mubr.f32.gmra.mxu0 %v7834
      %v8034 = vpop.f32.mrf.mxu0
      %v8035 = vadd.f32 0.0, %v8034
      %v8036 = vpop.f32.mrf.mxu0
      %8037 = vmatprep.mubr.f32.mxu0 0.0
      %8038 = vmatmul.mubr.f32.gmra.mxu0 %v7837
      %v8039 = vpop.f32.mrf.mxu0
      %v8040 = vadd.f32 0.0, %v8039
      %v8041 = vpop.f32.mrf.mxu0
      %8042 = vmatprep.mubr.f32.mxu0 0.0
      %8043 = vmatmul.mubr.f32.gmra.mxu0 %v7840
      %v8044 = vpop.f32.mrf.mxu0
      %v8045 = vadd.f32 0.0, %v8044
      %v8046 = vpop.f32.mrf.mxu0
      %8047 = vmatprep.mubr.f32.mxu0 0.0
      %8048 = vmatmul.mubr.f32.gmra.mxu0 %v7843
      %v8049 = vpop.f32.mrf.mxu0
      %v8050 = vadd.f32 0.0, %v8049
      %v8051 = vpop.f32.mrf.mxu0
      %8052 = vmatprep.mubr.f32.mxu0 0.0
      %8053 = vmatmul.mubr.f32.gmra.mxu0 %v7846
      %v8054 = vpop.f32.mrf.mxu0
      %v8055 = vadd.f32 0.0, %v8054
      %v8056 = vpop.f32.mrf.mxu0
      %8057 = vmatprep.mubr.f32.mxu0 0.0
      %8058 = vmatmul.mubr.f32.gmra.mxu0 %v7849
      %v8059 = vpop.f32.mrf.mxu0
      %v8060 = vadd.f32 0.0, %v8059
      %v8061 = vpop.f32.mrf.mxu0
      %8062 = vmatprep.mubr.f32.mxu0 0.0
      %8063 = vmatmul.mubr.f32.gmra.mxu0 %v7852
      %v8064 = vpop.f32.mrf.mxu0
      %v8065 = vadd.f32 0.0, %v8064
      %v8066 = vpop.f32.mrf.mxu0
      %8067 = vmatprep.mubr.f32.mxu0 0.0
      %8068 = vmatmul.mubr.f32.gmra.mxu0 %v7855
      %v8069 = vpop.f32.mrf.mxu0
      %v8070 = vadd.f32 0.0, %v8069
      %v8071 = vpop.f32.mrf.mxu0
      %8072 = vmatprep.mubr.f32.mxu0 0.0
      %8073 = vmatmul.mubr.f32.gmra.mxu0 %v7858
      %v8074 = vpop.f32.mrf.mxu0
      %v8075 = vadd.f32 0.0, %v8074
      %v8076 = vpop.f32.mrf.mxu0
      %8077 = vmatprep.mubr.f32.mxu0 0.0
      %8078 = vmatmul.mubr.f32.gmra.mxu0 %v7861
      %v8079 = vpop.f32.mrf.mxu0
      %v8080 = vadd.f32 0.0, %v8079
      %v8081 = vpop.f32.mrf.mxu0
      %8082 = vmatprep.mubr.f32.mxu0 0.0
      %8083 = vmatmul.mubr.f32.gmra.mxu0 %v7864
      %v8084 = vpop.f32.mrf.mxu0
      %v8085 = vadd.f32 0.0, %v8084
      %v8086 = vpop.f32.mrf.mxu0
      %8087 = vmatprep.mubr.f32.mxu0 0.0
      %8088 = vmatmul.mubr.f32.gmra.mxu0 %v7867
      %v8089 = vpop.f32.mrf.mxu0
      %v8090 = vadd.f32 0.0, %v8089
      %v8091 = vpop.f32.mrf.mxu0
      %8092 = vmatprep.mubr.f32.mxu0 0.0
      %8093 = vmatmul.mubr.f32.gmra.mxu0 %v7870
      %v8094 = vpop.f32.mrf.mxu0
      %v8095 = vadd.f32 0.0, %v8094
      %v8096 = vpop.f32.mrf.mxu0
      %8097 = vmatprep.mubr.f32.mxu0 0.0
      %8098 = vmatmul.mubr.f32.gmra.mxu0 %v7873
      %v8099 = vpop.f32.mrf.mxu0
      %v8100 = vadd.f32 0.0, %v8099
      %v8101 = vpop.f32.mrf.mxu0
      %8102 = vmatprep.mubr.f32.mxu0 0.0
      %8103 = vmatmul.mubr.f32.gmra.mxu0 %v7876
      %v8104 = vpop.f32.mrf.mxu0
      %v8105 = vadd.f32 0.0, %v8104
      %v8106 = vpop.f32.mrf.mxu0
      %8107 = vmatprep.mubr.f32.mxu0 0.0
      %8108 = vmatmul.mubr.f32.gmra.mxu0 %v7879
      %v8109 = vpop.f32.mrf.mxu0
      %v8110 = vadd.f32 0.0, %v8109
      %v8111 = vpop.f32.mrf.mxu0
      %8112 = vmatprep.mubr.f32.mxu0 0.0
      %8113 = vmatmul.mubr.f32.gmra.mxu0 %v7882
      %v8114 = vpop.f32.mrf.mxu0
      %v8115 = vadd.f32 0.0, %v8114
      %v8116 = vpop.f32.mrf.mxu0
      %8117 = vmatprep.mubr.f32.mxu0 0.0
      %8118 = vmatmul.mubr.f32.gmra.mxu0 %v7885
      %v8119 = vpop.f32.mrf.mxu0
      %v8120 = vadd.f32 0.0, %v8119
      %v8121 = vpop.f32.mrf.mxu0
      %8122 = vmatprep.mubr.f32.mxu0 0.0
      %8123 = vmatmul.mubr.f32.gmra.mxu0 %v7888
      %v8124 = vpop.f32.mrf.mxu0
      %v8125 = vadd.f32 0.0, %v8124
      %v8126 = vpop.f32.mrf.mxu0
      %8127 = vmatprep.mubr.f32.mxu0 0.0
      %8128 = vmatmul.mubr.f32.gmra.mxu0 %v7891
      %v8129 = vpop.f32.mrf.mxu0
      %v8130 = vadd.f32 0.0, %v8129
      %v8131 = vpop.f32.mrf.mxu0
      %8132 = vmatprep.mubr.f32.mxu0 0.0
      %8133 = vmatmul.mubr.f32.gmra.mxu0 %v7894
      %v8134 = vpop.f32.mrf.mxu0
      %v8135 = vadd.f32 0.0, %v8134
      %v8136 = vpop.f32.mrf.mxu0
      %8137 = vmatprep.mubr.f32.mxu0 0.0
      %8138 = vmatmul.mubr.f32.gmra.mxu0 %v7897
      %v8139 = vpop.f32.mrf.mxu0
      %v8140 = vadd.f32 0.0, %v8139
      %v8141 = vpop.f32.mrf.mxu0
      %8142 = vmatprep.mubr.f32.mxu0 0.0
      %8143 = vmatmul.mubr.f32.gmra.mxu0 %v7900
      %v8144 = vpop.f32.mrf.mxu0
      %v8145 = vadd.f32 0.0, %v8144
      %v8146 = vpop.f32.mrf.mxu0
      %8147 = vmatprep.mubr.f32.mxu0 0.0
      %8148 = vmatmul.mubr.f32.gmra.mxu0 %v7903
      %v8149 = vpop.f32.mrf.mxu0
      %v8150 = vadd.f32 0.0, %v8149
      %v8151 = vpop.f32.mrf.mxu0
      %8152 = vdwg.mxu0
      %v8153 = vadd.f32 %v7723, %v7975
      %v8154 = vadd.f32 %v7724, %v7980
      %v8155 = vadd.f32 %v7725, %v7985
      %v8156 = vadd.f32 %v7726, %v7990
      %v8157 = vadd.f32 %v7727, %v7995
      %v8158 = vadd.f32 %v7728, %v8000
      %v8159 = vadd.f32 %v7729, %v8005
      %v8160 = vadd.f32 %v7730, %v8010
      %v8161 = vadd.f32 %v7731, %v8015
      %v8162 = vadd.f32 %v7732, %v8020
      %v8163 = vadd.f32 %v7733, %v8025
      %v8164 = vadd.f32 %v7734, %v8030
      %v8165 = vadd.f32 %v7735, %v8035
      %v8166 = vadd.f32 %v7736, %v8040
      %v8167 = vadd.f32 %v7737, %v8045
      %v8168 = vadd.f32 %v7738, %v8050
      %v8169 = vadd.f32 %v7739, %v8055
      %v8170 = vadd.f32 %v7740, %v8060
      %v8171 = vadd.f32 %v7741, %v8065
      %v8172 = vadd.f32 %v7742, %v8070
      %v8173 = vadd.f32 %v7743, %v8075
      %v8174 = vadd.f32 %v7744, %v8080
      %v8175 = vadd.f32 %v7745, %v8085
      %v8176 = vadd.f32 %v7746, %v8090
      %v8177 = vadd.f32 %v7747, %v8095
      %v8178 = vadd.f32 %v7748, %v8100
      %v8179 = vadd.f32 %v7749, %v8105
      %v8180 = vadd.f32 %v7750, %v8110
      %v8181 = vadd.f32 %v7751, %v8115
      %v8182 = vadd.f32 %v7752, %v8120
      %v8183 = vadd.f32 %v7753, %v8125
      %v8184 = vadd.f32 %v7754, %v8130
      %v8185 = vadd.f32 %v7755, %v8135
      %v8186 = vadd.f32 %v7756, %v8140
      %v8187 = vadd.f32 %v7757, %v8145
      %v8188 = vadd.f32 %v7758, %v8150
      %vm8189 = vcmask 64512
      %8190 = vst.msk [vmem:[%s224] sm:$0xff] %vm8189, %v8153
      %8191 = vst.msk [vmem:[%s224 + $0x8] sm:$0xff] %vm8189, %v8154
      %8192 = vst.msk [vmem:[%s224 + $0x10] sm:$0xff] %vm8189, %v8155
      %8193 = vst.msk [vmem:[%s224 + $0x18] sm:$0xff] %vm8189, %v8156
      %8194 = vst.msk [vmem:[%s224 + $0x20] sm:$0xff] %vm8189, %v8157
      %8195 = vst.msk [vmem:[%s224 + $0x28] sm:$0xff] %vm8189, %v8158
      %8196 = vst.msk [vmem:[%s224 + $0x30] sm:$0xff] %vm8189, %v8159
      %8197 = vst.msk [vmem:[%s224 + $0x38] sm:$0xff] %vm8189, %v8160
      %8198 = vst.msk [vmem:[%s224 + $0x40] sm:$0xff] %vm8189, %v8161
      %8199 = vst.msk [vmem:[%s224 + $0x48] sm:$0xff] %vm8189, %v8162
      %8200 = vst.msk [vmem:[%s224 + $0x50] sm:$0xff] %vm8189, %v8163
      %8201 = vst.msk [vmem:[%s224 + $0x58] sm:$0xff] %vm8189, %v8164
      %8202 = vst.msk [vmem:[%s224 + $0x60] sm:$0xff] %vm8189, %v8165
      %8203 = vst.msk [vmem:[%s224 + $0x68] sm:$0xff] %vm8189, %v8166
      %8204 = vst.msk [vmem:[%s224 + $0x70] sm:$0xff] %vm8189, %v8167
      %8205 = vst.msk [vmem:[%s224 + $0x78] sm:$0xff] %vm8189, %v8168
      %8206 = vst.msk [vmem:[%s224 + $0x80] sm:$0xff] %vm8189, %v8169
      %8207 = vst.msk [vmem:[%s224 + $0x88] sm:$0xff] %vm8189, %v8170
      %8208 = vst.msk [vmem:[%s224 + $0x90] sm:$0xff] %vm8189, %v8171
      %8209 = vst.msk [vmem:[%s224 + $0x98] sm:$0xff] %vm8189, %v8172
      %8210 = vst.msk [vmem:[%s224 + $0xa0] sm:$0xff] %vm8189, %v8173
      %8211 = vst.msk [vmem:[%s224 + $0xa8] sm:$0xff] %vm8189, %v8174
      %8212 = vst.msk [vmem:[%s224 + $0xb0] sm:$0xff] %vm8189, %v8175
      %8213 = vst.msk [vmem:[%s224 + $0xb8] sm:$0xff] %vm8189, %v8176
      %8214 = vst.msk [vmem:[%s224 + $0xc0] sm:$0xff] %vm8189, %v8177
      %8215 = vst.msk [vmem:[%s224 + $0xc8] sm:$0xff] %vm8189, %v8178
      %8216 = vst.msk [vmem:[%s224 + $0xd0] sm:$0xff] %vm8189, %v8179
      %8217 = vst.msk [vmem:[%s224 + $0xd8] sm:$0xff] %vm8189, %v8180
      %8218 = vst.msk [vmem:[%s224 + $0xe0] sm:$0xff] %vm8189, %v8181
      %8219 = vst.msk [vmem:[%s224 + $0xe8] sm:$0xff] %vm8189, %v8182
      %8220 = vst.msk [vmem:[%s224 + $0xf0] sm:$0xff] %vm8189, %v8183
      %8221 = vst.msk [vmem:[%s224 + $0xf8] sm:$0xff] %vm8189, %v8184
      %8222 = vst.msk [vmem:[%s224 + $0x100] sm:$0xff] %vm8189, %v8185
      %8223 = vst.msk [vmem:[%s224 + $0x108] sm:$0xff] %vm8189, %v8186
      %8224 = vst.msk [vmem:[%s224 + $0x110] sm:$0xff] %vm8189, %v8187
      %8225 = vst.msk [vmem:[%s224 + $0x118] sm:$0xff] %vm8189, %v8188
      %p8226 = scmp.lt.s32.totalorder %s16, 1
      %s8227 = scalar_select %p8226, %s16, 1
      %s8228 = smul.addr %s8227, 36
      %s8229 = smul.addr %s8228, 8
      %s8230 = scalar_lea.vmem %s5, %s8229
      // Predicated region
      $region48: #{tpu_custom_call.1} parent=39 // pred_check
        %p8231 = pneg %p144
      $region49: #{tpu_custom_call.1} parent=39 // pred_check_branch
        %8233 = sbr.rel (%p8231) target = $region51
      $region50: #{tpu_custom_call.1} parent=39 // pred_region
        _
      $region51: #{tpu_custom_call.1} parent=39 // pred_fallthru
        _
    $region40: #{tpu_custom_call.1} parent=5 // pred_fallthru
      _
    %p8234 = scmp.le.s32.totalorder 2, %s11
    // Predicated region
    $region52: #{tpu_custom_call.1} parent=5 // pred_check
      %p8235 = pneg %p8234
    $region53: #{tpu_custom_call.1} parent=5 // pred_check_branch
      %8237 = sbr.rel (%p8235) target = $region55
    $region54: #{tpu_custom_call.1} parent=5 // pred_region
      %s8238 = ssub.s32 %s11, 2
      // Predicated region
      $region56: #{tpu_custom_call.1} parent=54 // pred_check
        %p8239 = pneg %p150
      $region57: #{tpu_custom_call.1} parent=54 // pred_check_branch
        %8241 = sbr.rel (%p8239) target = $region59
      $region58: #{tpu_custom_call.1} parent=54 // pred_region
        %p8242 = scmp.lt.s32.totalorder %s17, 1
        %s8243 = scalar_select %p8242, %s17, 1
        %s8244 = smul.addr %s8243, 36
        %s8245 = smul.addr %s8244, 8
        %s8246 = scalar_lea.vmem %s5, %s8245
      $region59: #{tpu_custom_call.1} parent=54 // pred_fallthru
        _
    $region55: #{tpu_custom_call.1} parent=5 // pred_fallthru
      _
  $region6: #{tpu_custom_call.1} parent=0 // loop_footer
    %s15 = sadd.s32 1, %s11
  $region7: #{tpu_custom_call.1} parent=0 // loop_footer_branch
    %10 = sbr.rel target = $region3
  $region8: #{tpu_custom_call.1} parent=0 // loop_exit
    _

</llo_original>
